<compile_context>
chip_gen: v6e
topology: v6e:2x2x1
jax: 0.10.0
libtpu: 0.0.40
codegen_flags: <defaults>
</compile_context>

<pallas_src>
import functools

import jax
import jax.numpy as jnp
from jax.experimental import pallas as pl
from jax.experimental.pallas import tpu as pltpu

# Model hyper-parameters (small, consistent with the module's forward).
BATCH = 2
SEQ = 8
INPUT_DIM = 32          # d_model
OUTPUT_DIM = 16
NUM_HEADS = 4
NUM_LAYERS = 2
FFN_DIM = 2048          # nn.TransformerEncoderLayer default dim_feedforward
FFN_CHUNK = 256         # lane-aligned chunk of the FFN hidden dim
EPS = 1e-5

# Rows of the packed per-layer small-parameter slab (L, 8, 128).
ROW_BQKV, ROW_BO, ROW_LN1G, ROW_LN1B, ROW_B2, ROW_LN2G, ROW_LN2B = range(7)


def _layernorm(x, gamma, beta):
    # x: (N, D), gamma/beta: (1, D). PyTorch LayerNorm (biased variance, eps=1e-5).
    mu = jnp.mean(x, axis=-1, keepdims=True)
    var = jnp.mean((x - mu) * (x - mu), axis=-1, keepdims=True)
    return (x - mu) * jax.lax.rsqrt(var + EPS) * gamma + beta


def fused_seqtovec_kernel(x_ref, wqkv_ref, wo_ref, w1_ref, w2_ref, b1_ref,
                          vecs_ref, fcw_ref, fcb_ref, o_ref,
                          *, num_heads, num_layers, ffn_chunk):
    B, S, D = x_ref.shape
    BS = B * S
    dh = D // num_heads
    scale = 1.0 / (dh ** 0.5)
    F = w1_ref.shape[-1]

    h = x_ref[...].reshape(BS, D)                               # (BS, D) f32

    for l in range(num_layers):                                  # static unroll (L=2)
        vec = vecs_ref[l]                                        # (8, 128) f32 slab
        bqkv = vec[ROW_BQKV:ROW_BQKV + 1, :3 * D]                # (1, 3D)
        bo = vec[ROW_BO:ROW_BO + 1, :D]
        ln1g = vec[ROW_LN1G:ROW_LN1G + 1, :D]
        ln1b = vec[ROW_LN1B:ROW_LN1B + 1, :D]
        b2 = vec[ROW_B2:ROW_B2 + 1, :D]
        ln2g = vec[ROW_LN2G:ROW_LN2G + 1, :D]
        ln2b = vec[ROW_LN2B:ROW_LN2B + 1, :D]

        # --- fused QKV projection (MXU) ---
        qkv = jnp.dot(h, wqkv_ref[l], preferred_element_type=jnp.float32) + bqkv
        q = qkv[:, 0:D]
        k = qkv[:, D:2 * D]
        v = qkv[:, 2 * D:3 * D]

        # --- multi-head attention; concat heads, ONE out-projection matmul ---
        ctxs = []
        for hd in range(num_heads):
            sl = slice(hd * dh, (hd + 1) * dh)
            qh = q[:, sl].reshape(B, S, dh)
            kh = k[:, sl].reshape(B, S, dh)
            vh = v[:, sl].reshape(B, S, dh)
            s = jnp.einsum('bqd,bkd->bqk', qh, kh,
                           preferred_element_type=jnp.float32) * scale   # (B, S, S)
            s = s - jnp.max(s, axis=-1, keepdims=True)
            p = jnp.exp(s)
            p = p * pl.reciprocal(jnp.sum(p, axis=-1, keepdims=True), approx=True)
            ctx = jnp.einsum('bqk,bkd->bqd', p, vh,
                             preferred_element_type=jnp.float32)          # (B, S, dh)
            ctxs.append(ctx.reshape(BS, dh))
        ctx = jnp.concatenate(ctxs, axis=-1)                              # (BS, D)
        attn = jnp.dot(ctx, wo_ref[l], preferred_element_type=jnp.float32) + bo

        # --- residual + LayerNorm1 (f32) ---
        h1 = _layernorm(h + attn, ln1g, ln1b)

        # --- feed-forward, chunked over the hidden dim; bf16 weights, f32 accumulate ---
        h1_b = h1.astype(jnp.bfloat16)
        ff = jnp.broadcast_to(b2, (BS, D))                                # start with bias2
        for c0 in range(0, F, ffn_chunk):
            a = jnp.dot(h1_b, w1_ref[l, :, c0:c0 + ffn_chunk],
                        preferred_element_type=jnp.float32)               # (BS, chunk)
            a = jnp.maximum(a + b1_ref[l, :, c0:c0 + ffn_chunk], 0.0)     # relu
            ff = ff + jnp.dot(a.astype(jnp.bfloat16),
                              w2_ref[l, c0:c0 + ffn_chunk, :],
                              preferred_element_type=jnp.float32)         # (BS, D)

        # --- residual + LayerNorm2 (f32) ---
        h = _layernorm(h1 + ff, ln2g, ln2b)

    # --- last token per batch element (== transformer_output[-1] in (S,B,D) layout) ---
    last = jnp.concatenate([h[b * S + S - 1: b * S + S, :] for b in range(B)], axis=0)

    # --- final FC ---
    o_ref[...] = (jnp.dot(last, fcw_ref[...],
                          preferred_element_type=jnp.float32) + fcb_ref[...])


def attention_seqtovec(x, params):
    B, S, D = x.shape
    O = params['fc_w'].shape[1]
    args = (x, params['wqkv'], params['wo'], params['w1'], params['w2'],
            params['b1'], params['vecs'], params['fc_w'], params['fc_b'])
    vmem_spec = pl.BlockSpec(memory_space=pltpu.MemorySpace.VMEM)
    return pl.pallas_call(
        functools.partial(fused_seqtovec_kernel,
                          num_heads=NUM_HEADS, num_layers=NUM_LAYERS,
                          ffn_chunk=FFN_CHUNK),
        out_shape=jax.ShapeDtypeStruct((B, O), jnp.float32),
        in_specs=[vmem_spec for _ in args],
        out_specs=vmem_spec,
        compiler_params=pltpu.CompilerParams(vmem_limit_bytes=16 * 1024 * 1024),
    )(*args)


def init_params(key):
    D, F, O, L = INPUT_DIM, FFN_DIM, OUTPUT_DIM, NUM_LAYERS

    def dense(k, shape, fan_in):
        return jax.random.normal(k, shape, jnp.float32) / jnp.sqrt(fan_in)

    wqkv_l, wo_l, w1_l, w2_l, b1_l, vecs_l = [], [], [], [], [], []
    for _ in range(L):
        key, k1, k2, k3, k4 = jax.random.split(key, 5)
        wqkv_l.append(dense(k1, (D, 3 * D), D))
        wo_l.append(dense(k2, (D, D), D))
        w1_l.append(dense(k3, (D, F), D))
        w2_l.append(dense(k4, (F, D), F))
        b1_l.append(jnp.zeros((1, F), jnp.float32))

        # Pack all small per-layer vectors into one (8, 128) f32 slab.
        vec = jnp.zeros((8, 128), jnp.float32)
        vec = vec.at[ROW_BQKV, :3 * D].set(jnp.zeros((3 * D,), jnp.float32))  # qkv bias
        vec = vec.at[ROW_BO, :D].set(jnp.zeros((D,), jnp.float32))            # out-proj bias
        vec = vec.at[ROW_LN1G, :D].set(jnp.ones((D,), jnp.float32))           # LN1 gamma
        vec = vec.at[ROW_LN1B, :D].set(jnp.zeros((D,), jnp.float32))          # LN1 beta
        vec = vec.at[ROW_B2, :D].set(jnp.zeros((D,), jnp.float32))            # FFN bias2
        vec = vec.at[ROW_LN2G, :D].set(jnp.ones((D,), jnp.float32))           # LN2 gamma
        vec = vec.at[ROW_LN2B, :D].set(jnp.zeros((D,), jnp.float32))          # LN2 beta
        vecs_l.append(vec)

    key, kf = jax.random.split(key)
    params = dict(
        wqkv=jnp.stack(wqkv_l),                       # (L, D, 3D)   f32
        wo=jnp.stack(wo_l),                           # (L, D, D)    f32
        w1=jnp.stack(w1_l).astype(jnp.bfloat16),      # (L, D, F)    bf16
        w2=jnp.stack(w2_l).astype(jnp.bfloat16),      # (L, F, D)    bf16
        b1=jnp.stack(b1_l),                           # (L, 1, F)    f32
        vecs=jnp.stack(vecs_l),                       # (L, 8, 128)  f32
        fc_w=dense(kf, (D, O), D),                    # (D, O)       f32
        fc_b=jnp.zeros((1, O), jnp.float32),          # (1, O)       f32
    )
    return params, key


if __name__ == "__main__":
    key = jax.random.PRNGKey(0)
    params, key = init_params(key)
    key, kx = jax.random.split(key)
    # input like the PyTorch module's forward: (batch, seq, input_dim)
    x = jax.random.normal(kx, (BATCH, SEQ, INPUT_DIM), jnp.float32)

    out = attention_seqtovec(x, params)
    out = jax.block_until_ready(out)
    assert out.shape == (BATCH, OUTPUT_DIM), out.shape
    assert bool(jnp.all(jnp.isfinite(out)))
    print("KERNEL_OK")
</pallas_src>

<mosaic_0001>
module attributes {stable_mosaic.version = 11 : i64} {
  func.func @fused_seqtovec_kernel(%arg0: memref<2x8x32xf32, #tpu.memory_space<vmem>>, %arg1: memref<2x32x96xf32, #tpu.memory_space<vmem>>, %arg2: memref<2x32x32xf32, #tpu.memory_space<vmem>>, %arg3: memref<2x32x2048xbf16, #tpu.memory_space<vmem>>, %arg4: memref<2x2048x32xbf16, #tpu.memory_space<vmem>>, %arg5: memref<2x1x2048xf32, #tpu.memory_space<vmem>>, %arg6: memref<2x8x128xf32, #tpu.memory_space<vmem>>, %arg7: memref<32x16xf32, #tpu.memory_space<vmem>>, %arg8: memref<1x16xf32, #tpu.memory_space<vmem>>, %arg9: memref<2x16xf32, #tpu.memory_space<vmem>>) attributes {dimension_semantics = [], scalar_prefetch = 0 : i64, scratch_operands = 0 : i64, tpu.core_type = #tpu.core_type<tc>} {
    %c0 = arith.constant 0 : index
    %c0_0 = arith.constant 0 : index
    %c0_1 = arith.constant 0 : index
    %0 = vector.load %arg0[%c0, %c0_0, %c0_1] : memref<2x8x32xf32, #tpu.memory_space<vmem>>, vector<2x8x32xf32>
    %1 = vector.shape_cast %0 : vector<2x8x32xf32> to vector<16x32xf32>
    %c0_2 = arith.constant 0 : index
    %c0_3 = arith.constant 0 : index
    %c0_4 = arith.constant 0 : index
    %2 = vector.load %arg6[%c0_2, %c0_3, %c0_4] : memref<2x8x128xf32, #tpu.memory_space<vmem>>, vector<1x8x128xf32>
    %3 = vector.shape_cast %2 : vector<1x8x128xf32> to vector<8x128xf32>
    %4 = vector.extract_strided_slice %3 {offsets = [0, 0], sizes = [1, 96], strides = [1, 1]} : vector<8x128xf32> to vector<1x96xf32>
    %5 = vector.extract_strided_slice %3 {offsets = [1, 0], sizes = [1, 32], strides = [1, 1]} : vector<8x128xf32> to vector<1x32xf32>
    %6 = vector.extract_strided_slice %3 {offsets = [2, 0], sizes = [1, 32], strides = [1, 1]} : vector<8x128xf32> to vector<1x32xf32>
    %7 = vector.extract_strided_slice %3 {offsets = [3, 0], sizes = [1, 32], strides = [1, 1]} : vector<8x128xf32> to vector<1x32xf32>
    %8 = vector.extract_strided_slice %3 {offsets = [4, 0], sizes = [1, 32], strides = [1, 1]} : vector<8x128xf32> to vector<1x32xf32>
    %9 = vector.extract_strided_slice %3 {offsets = [5, 0], sizes = [1, 32], strides = [1, 1]} : vector<8x128xf32> to vector<1x32xf32>
    %10 = vector.extract_strided_slice %3 {offsets = [6, 0], sizes = [1, 32], strides = [1, 1]} : vector<8x128xf32> to vector<1x32xf32>
    %c0_5 = arith.constant 0 : index
    %c0_6 = arith.constant 0 : index
    %c0_7 = arith.constant 0 : index
    %11 = vector.load %arg1[%c0_5, %c0_6, %c0_7] : memref<2x32x96xf32, #tpu.memory_space<vmem>>, vector<1x32x96xf32>
    %12 = vector.shape_cast %11 : vector<1x32x96xf32> to vector<32x96xf32>
    %cst = arith.constant dense<0.000000e+00> : vector<16x96xf32>
    %13 = tpu.matmul %1, %12, %cst {dimension_numbers = #tpu.dot_dimension_numbers<[1], [0], [0], [1], [0, 0, 1, 1], [], []>} : vector<16x32xf32>, vector<32x96xf32>, vector<16x96xf32> -> vector<16x96xf32>
    %14 = vector.broadcast %4 : vector<1x96xf32> to vector<16x96xf32>
    %15 = arith.addf %13, %14 : vector<16x96xf32>
    %16 = vector.extract_strided_slice %15 {offsets = [0, 0], sizes = [16, 32], strides = [1, 1]} : vector<16x96xf32> to vector<16x32xf32>
    %17 = vector.extract_strided_slice %15 {offsets = [0, 32], sizes = [16, 32], strides = [1, 1]} : vector<16x96xf32> to vector<16x32xf32>
    %18 = vector.extract_strided_slice %15 {offsets = [0, 64], sizes = [16, 32], strides = [1, 1]} : vector<16x96xf32> to vector<16x32xf32>
    %19 = vector.extract_strided_slice %16 {offsets = [0, 0], sizes = [16, 8], strides = [1, 1]} : vector<16x32xf32> to vector<16x8xf32>
    %20 = vector.shape_cast %19 : vector<16x8xf32> to vector<2x8x8xf32>
    %21 = vector.extract_strided_slice %17 {offsets = [0, 0], sizes = [16, 8], strides = [1, 1]} : vector<16x32xf32> to vector<16x8xf32>
    %22 = vector.shape_cast %21 : vector<16x8xf32> to vector<2x8x8xf32>
    %23 = vector.extract_strided_slice %18 {offsets = [0, 0], sizes = [16, 8], strides = [1, 1]} : vector<16x32xf32> to vector<16x8xf32>
    %24 = vector.shape_cast %23 : vector<16x8xf32> to vector<2x8x8xf32>
    "tpu.trace_start"() <{level = 10 : i32, message = "bqd,bkd->bqk"}> : () -> ()
    %cst_8 = arith.constant dense<0.000000e+00> : vector<2x8x8xf32>
    %25 = tpu.matmul %20, %22, %cst_8 {dimension_numbers = #tpu.dot_dimension_numbers<[2], [2], [1], [1], [0, 0, 0, 1, 1, 1], [0], [0]>} : vector<2x8x8xf32>, vector<2x8x8xf32>, vector<2x8x8xf32> -> vector<2x8x8xf32>
    "tpu.trace_stop"() : () -> ()
    %cst_9 = arith.constant 0.353553385 : f32
    %26 = vector.broadcast %cst_9 : f32 to vector<2x8x8xf32>
    %27 = arith.mulf %25, %26 : vector<2x8x8xf32>
    %cst_10 = arith.constant dense<0xFF800000> : vector<2x8xf32>
    %28 = vector.multi_reduction <maximumf>, %27, %cst_10 [2] : vector<2x8x8xf32> to vector<2x8xf32>
    %29 = vector.shape_cast %28 : vector<2x8xf32> to vector<2x8x1xf32>
    %30 = vector.broadcast %29 : vector<2x8x1xf32> to vector<2x8x8xf32>
    %31 = arith.subf %27, %30 : vector<2x8x8xf32>
    %32 = math.exp %31 : vector<2x8x8xf32>
    %cst_11 = arith.constant dense<0.000000e+00> : vector<2x8xf32>
    %33 = vector.multi_reduction <add>, %32, %cst_11 [2] : vector<2x8x8xf32> to vector<2x8xf32>
    %34 = vector.shape_cast %33 : vector<2x8xf32> to vector<2x8x1xf32>
    %35 = tpu.reciprocal %34 {approx = true} : vector<2x8x1xf32> -> vector<2x8x1xf32>
    %36 = vector.broadcast %35 : vector<2x8x1xf32> to vector<2x8x8xf32>
    %37 = arith.mulf %32, %36 : vector<2x8x8xf32>
    "tpu.trace_start"() <{level = 10 : i32, message = "bqk,bkd->bqd"}> : () -> ()
    %cst_12 = arith.constant dense<0.000000e+00> : vector<2x8x8xf32>
    %38 = tpu.matmul %37, %24, %cst_12 {dimension_numbers = #tpu.dot_dimension_numbers<[2], [1], [1], [2], [0, 0, 0, 1, 1, 2], [0], [0]>} : vector<2x8x8xf32>, vector<2x8x8xf32>, vector<2x8x8xf32> -> vector<2x8x8xf32>
    "tpu.trace_stop"() : () -> ()
    %39 = vector.shape_cast %38 : vector<2x8x8xf32> to vector<16x8xf32>
    %40 = vector.extract_strided_slice %16 {offsets = [0, 8], sizes = [16, 8], strides = [1, 1]} : vector<16x32xf32> to vector<16x8xf32>
    %41 = vector.shape_cast %40 : vector<16x8xf32> to vector<2x8x8xf32>
    %42 = vector.extract_strided_slice %17 {offsets = [0, 8], sizes = [16, 8], strides = [1, 1]} : vector<16x32xf32> to vector<16x8xf32>
    %43 = vector.shape_cast %42 : vector<16x8xf32> to vector<2x8x8xf32>
    %44 = vector.extract_strided_slice %18 {offsets = [0, 8], sizes = [16, 8], strides = [1, 1]} : vector<16x32xf32> to vector<16x8xf32>
    %45 = vector.shape_cast %44 : vector<16x8xf32> to vector<2x8x8xf32>
    "tpu.trace_start"() <{level = 10 : i32, message = "bqd,bkd->bqk"}> : () -> ()
    %cst_13 = arith.constant dense<0.000000e+00> : vector<2x8x8xf32>
    %46 = tpu.matmul %41, %43, %cst_13 {dimension_numbers = #tpu.dot_dimension_numbers<[2], [2], [1], [1], [0, 0, 0, 1, 1, 1], [0], [0]>} : vector<2x8x8xf32>, vector<2x8x8xf32>, vector<2x8x8xf32> -> vector<2x8x8xf32>
    "tpu.trace_stop"() : () -> ()
    %cst_14 = arith.constant 0.353553385 : f32
    %47 = vector.broadcast %cst_14 : f32 to vector<2x8x8xf32>
    %48 = arith.mulf %46, %47 : vector<2x8x8xf32>
    %cst_15 = arith.constant dense<0xFF800000> : vector<2x8xf32>
    %49 = vector.multi_reduction <maximumf>, %48, %cst_15 [2] : vector<2x8x8xf32> to vector<2x8xf32>
    %50 = vector.shape_cast %49 : vector<2x8xf32> to vector<2x8x1xf32>
    %51 = vector.broadcast %50 : vector<2x8x1xf32> to vector<2x8x8xf32>
    %52 = arith.subf %48, %51 : vector<2x8x8xf32>
    %53 = math.exp %52 : vector<2x8x8xf32>
    %cst_16 = arith.constant dense<0.000000e+00> : vector<2x8xf32>
    %54 = vector.multi_reduction <add>, %53, %cst_16 [2] : vector<2x8x8xf32> to vector<2x8xf32>
    %55 = vector.shape_cast %54 : vector<2x8xf32> to vector<2x8x1xf32>
    %56 = tpu.reciprocal %55 {approx = true} : vector<2x8x1xf32> -> vector<2x8x1xf32>
    %57 = vector.broadcast %56 : vector<2x8x1xf32> to vector<2x8x8xf32>
    %58 = arith.mulf %53, %57 : vector<2x8x8xf32>
    "tpu.trace_start"() <{level = 10 : i32, message = "bqk,bkd->bqd"}> : () -> ()
    %cst_17 = arith.constant dense<0.000000e+00> : vector<2x8x8xf32>
    %59 = tpu.matmul %58, %45, %cst_17 {dimension_numbers = #tpu.dot_dimension_numbers<[2], [1], [1], [2], [0, 0, 0, 1, 1, 2], [0], [0]>} : vector<2x8x8xf32>, vector<2x8x8xf32>, vector<2x8x8xf32> -> vector<2x8x8xf32>
    "tpu.trace_stop"() : () -> ()
    %60 = vector.shape_cast %59 : vector<2x8x8xf32> to vector<16x8xf32>
    %61 = vector.extract_strided_slice %16 {offsets = [0, 16], sizes = [16, 8], strides = [1, 1]} : vector<16x32xf32> to vector<16x8xf32>
    %62 = vector.shape_cast %61 : vector<16x8xf32> to vector<2x8x8xf32>
    %63 = vector.extract_strided_slice %17 {offsets = [0, 16], sizes = [16, 8], strides = [1, 1]} : vector<16x32xf32> to vector<16x8xf32>
    %64 = vector.shape_cast %63 : vector<16x8xf32> to vector<2x8x8xf32>
    %65 = vector.extract_strided_slice %18 {offsets = [0, 16], sizes = [16, 8], strides = [1, 1]} : vector<16x32xf32> to vector<16x8xf32>
    %66 = vector.shape_cast %65 : vector<16x8xf32> to vector<2x8x8xf32>
    "tpu.trace_start"() <{level = 10 : i32, message = "bqd,bkd->bqk"}> : () -> ()
    %cst_18 = arith.constant dense<0.000000e+00> : vector<2x8x8xf32>
    %67 = tpu.matmul %62, %64, %cst_18 {dimension_numbers = #tpu.dot_dimension_numbers<[2], [2], [1], [1], [0, 0, 0, 1, 1, 1], [0], [0]>} : vector<2x8x8xf32>, vector<2x8x8xf32>, vector<2x8x8xf32> -> vector<2x8x8xf32>
    "tpu.trace_stop"() : () -> ()
    %cst_19 = arith.constant 0.353553385 : f32
    %68 = vector.broadcast %cst_19 : f32 to vector<2x8x8xf32>
    %69 = arith.mulf %67, %68 : vector<2x8x8xf32>
    %cst_20 = arith.constant dense<0xFF800000> : vector<2x8xf32>
    %70 = vector.multi_reduction <maximumf>, %69, %cst_20 [2] : vector<2x8x8xf32> to vector<2x8xf32>
    %71 = vector.shape_cast %70 : vector<2x8xf32> to vector<2x8x1xf32>
    %72 = vector.broadcast %71 : vector<2x8x1xf32> to vector<2x8x8xf32>
    %73 = arith.subf %69, %72 : vector<2x8x8xf32>
    %74 = math.exp %73 : vector<2x8x8xf32>
    %cst_21 = arith.constant dense<0.000000e+00> : vector<2x8xf32>
    %75 = vector.multi_reduction <add>, %74, %cst_21 [2] : vector<2x8x8xf32> to vector<2x8xf32>
    %76 = vector.shape_cast %75 : vector<2x8xf32> to vector<2x8x1xf32>
    %77 = tpu.reciprocal %76 {approx = true} : vector<2x8x1xf32> -> vector<2x8x1xf32>
    %78 = vector.broadcast %77 : vector<2x8x1xf32> to vector<2x8x8xf32>
    %79 = arith.mulf %74, %78 : vector<2x8x8xf32>
    "tpu.trace_start"() <{level = 10 : i32, message = "bqk,bkd->bqd"}> : () -> ()
    %cst_22 = arith.constant dense<0.000000e+00> : vector<2x8x8xf32>
    %80 = tpu.matmul %79, %66, %cst_22 {dimension_numbers = #tpu.dot_dimension_numbers<[2], [1], [1], [2], [0, 0, 0, 1, 1, 2], [0], [0]>} : vector<2x8x8xf32>, vector<2x8x8xf32>, vector<2x8x8xf32> -> vector<2x8x8xf32>
    "tpu.trace_stop"() : () -> ()
    %81 = vector.shape_cast %80 : vector<2x8x8xf32> to vector<16x8xf32>
    %82 = vector.extract_strided_slice %16 {offsets = [0, 24], sizes = [16, 8], strides = [1, 1]} : vector<16x32xf32> to vector<16x8xf32>
    %83 = vector.shape_cast %82 : vector<16x8xf32> to vector<2x8x8xf32>
    %84 = vector.extract_strided_slice %17 {offsets = [0, 24], sizes = [16, 8], strides = [1, 1]} : vector<16x32xf32> to vector<16x8xf32>
    %85 = vector.shape_cast %84 : vector<16x8xf32> to vector<2x8x8xf32>
    %86 = vector.extract_strided_slice %18 {offsets = [0, 24], sizes = [16, 8], strides = [1, 1]} : vector<16x32xf32> to vector<16x8xf32>
    %87 = vector.shape_cast %86 : vector<16x8xf32> to vector<2x8x8xf32>
    "tpu.trace_start"() <{level = 10 : i32, message = "bqd,bkd->bqk"}> : () -> ()
    %cst_23 = arith.constant dense<0.000000e+00> : vector<2x8x8xf32>
    %88 = tpu.matmul %83, %85, %cst_23 {dimension_numbers = #tpu.dot_dimension_numbers<[2], [2], [1], [1], [0, 0, 0, 1, 1, 1], [0], [0]>} : vector<2x8x8xf32>, vector<2x8x8xf32>, vector<2x8x8xf32> -> vector<2x8x8xf32>
    "tpu.trace_stop"() : () -> ()
    %cst_24 = arith.constant 0.353553385 : f32
    %89 = vector.broadcast %cst_24 : f32 to vector<2x8x8xf32>
    %90 = arith.mulf %88, %89 : vector<2x8x8xf32>
    %cst_25 = arith.constant dense<0xFF800000> : vector<2x8xf32>
    %91 = vector.multi_reduction <maximumf>, %90, %cst_25 [2] : vector<2x8x8xf32> to vector<2x8xf32>
    %92 = vector.shape_cast %91 : vector<2x8xf32> to vector<2x8x1xf32>
    %93 = vector.broadcast %92 : vector<2x8x1xf32> to vector<2x8x8xf32>
    %94 = arith.subf %90, %93 : vector<2x8x8xf32>
    %95 = math.exp %94 : vector<2x8x8xf32>
    %cst_26 = arith.constant dense<0.000000e+00> : vector<2x8xf32>
    %96 = vector.multi_reduction <add>, %95, %cst_26 [2] : vector<2x8x8xf32> to vector<2x8xf32>
    %97 = vector.shape_cast %96 : vector<2x8xf32> to vector<2x8x1xf32>
    %98 = tpu.reciprocal %97 {approx = true} : vector<2x8x1xf32> -> vector<2x8x1xf32>
    %99 = vector.broadcast %98 : vector<2x8x1xf32> to vector<2x8x8xf32>
    %100 = arith.mulf %95, %99 : vector<2x8x8xf32>
    "tpu.trace_start"() <{level = 10 : i32, message = "bqk,bkd->bqd"}> : () -> ()
    %cst_27 = arith.constant dense<0.000000e+00> : vector<2x8x8xf32>
    %101 = tpu.matmul %100, %87, %cst_27 {dimension_numbers = #tpu.dot_dimension_numbers<[2], [1], [1], [2], [0, 0, 0, 1, 1, 2], [0], [0]>} : vector<2x8x8xf32>, vector<2x8x8xf32>, vector<2x8x8xf32> -> vector<2x8x8xf32>
    "tpu.trace_stop"() : () -> ()
    %102 = vector.shape_cast %101 : vector<2x8x8xf32> to vector<16x8xf32>
    %103 = tpu.concatenate %39, %60, %81, %102 in 1 : vector<16x8xf32>, vector<16x8xf32>, vector<16x8xf32>, vector<16x8xf32> -> vector<16x32xf32>
    %c0_28 = arith.constant 0 : index
    %c0_29 = arith.constant 0 : index
    %c0_30 = arith.constant 0 : index
    %104 = vector.load %arg2[%c0_28, %c0_29, %c0_30] : memref<2x32x32xf32, #tpu.memory_space<vmem>>, vector<1x32x32xf32>
    %105 = vector.shape_cast %104 : vector<1x32x32xf32> to vector<32x32xf32>
    %cst_31 = arith.constant dense<0.000000e+00> : vector<16x32xf32>
    %106 = tpu.matmul %103, %105, %cst_31 {dimension_numbers = #tpu.dot_dimension_numbers<[1], [0], [0], [1], [0, 0, 1, 1], [], []>} : vector<16x32xf32>, vector<32x32xf32>, vector<16x32xf32> -> vector<16x32xf32>
    %107 = vector.broadcast %5 : vector<1x32xf32> to vector<16x32xf32>
    %108 = arith.addf %106, %107 : vector<16x32xf32>
    %109 = arith.addf %1, %108 : vector<16x32xf32>
    %cst_32 = arith.constant dense<0.000000e+00> : vector<16xf32>
    %110 = vector.multi_reduction <add>, %109, %cst_32 [1] : vector<16x32xf32> to vector<16xf32>
    %111 = vector.shape_cast %110 : vector<16xf32> to vector<16x1xf32>
    %cst_33 = arith.constant 3.200000e+01 : f32
    %112 = vector.broadcast %cst_33 : f32 to vector<16x1xf32>
    %113 = arith.divf %111, %112 : vector<16x1xf32>
    %114 = vector.broadcast %113 : vector<16x1xf32> to vector<16x32xf32>
    %115 = arith.subf %109, %114 : vector<16x32xf32>
    %116 = vector.broadcast %113 : vector<16x1xf32> to vector<16x32xf32>
    %117 = arith.subf %109, %116 : vector<16x32xf32>
    %118 = arith.mulf %115, %117 : vector<16x32xf32>
    %cst_34 = arith.constant dense<0.000000e+00> : vector<16xf32>
    %119 = vector.multi_reduction <add>, %118, %cst_34 [1] : vector<16x32xf32> to vector<16xf32>
    %120 = vector.shape_cast %119 : vector<16xf32> to vector<16x1xf32>
    %cst_35 = arith.constant 3.200000e+01 : f32
    %121 = vector.broadcast %cst_35 : f32 to vector<16x1xf32>
    %122 = arith.divf %120, %121 : vector<16x1xf32>
    %123 = vector.broadcast %113 : vector<16x1xf32> to vector<16x32xf32>
    %124 = arith.subf %109, %123 : vector<16x32xf32>
    %cst_36 = arith.constant 9.99999974E-6 : f32
    %125 = vector.broadcast %cst_36 : f32 to vector<16x1xf32>
    %126 = arith.addf %122, %125 : vector<16x1xf32>
    %127 = math.rsqrt %126 : vector<16x1xf32>
    %128 = vector.broadcast %127 : vector<16x1xf32> to vector<16x32xf32>
    %129 = arith.mulf %124, %128 : vector<16x32xf32>
    %130 = vector.broadcast %6 : vector<1x32xf32> to vector<16x32xf32>
    %131 = arith.mulf %129, %130 : vector<16x32xf32>
    %132 = vector.broadcast %7 : vector<1x32xf32> to vector<16x32xf32>
    %133 = arith.addf %131, %132 : vector<16x32xf32>
    %134 = arith.truncf %133 : vector<16x32xf32> to vector<16x32xbf16>
    %135 = vector.shape_cast %8 : vector<1x32xf32> to vector<1x32xf32>
    %136 = vector.broadcast %135 : vector<1x32xf32> to vector<16x32xf32>
    %c0_37 = arith.constant 0 : index
    %c0_38 = arith.constant 0 : index
    %c0_39 = arith.constant 0 : index
    %137 = vector.load %arg3[%c0_37, %c0_38, %c0_39] : memref<2x32x2048xbf16, #tpu.memory_space<vmem>>, vector<1x32x256xbf16>
    %138 = vector.shape_cast %137 : vector<1x32x256xbf16> to vector<32x256xbf16>
    %cst_40 = arith.constant dense<0.000000e+00> : vector<16x256xf32>
    %139 = tpu.matmul %134, %138, %cst_40 {dimension_numbers = #tpu.dot_dimension_numbers<[1], [0], [0], [1], [0, 0, 1, 1], [], []>} : vector<16x32xbf16>, vector<32x256xbf16>, vector<16x256xf32> -> vector<16x256xf32>
    %c0_41 = arith.constant 0 : index
    %c0_42 = arith.constant 0 : index
    %c0_43 = arith.constant 0 : index
    %140 = vector.load %arg5[%c0_41, %c0_42, %c0_43] : memref<2x1x2048xf32, #tpu.memory_space<vmem>>, vector<1x1x256xf32>
    %141 = vector.shape_cast %140 : vector<1x1x256xf32> to vector<1x256xf32>
    %142 = vector.broadcast %141 : vector<1x256xf32> to vector<16x256xf32>
    %143 = arith.addf %139, %142 : vector<16x256xf32>
    %cst_44 = arith.constant 0.000000e+00 : f32
    %144 = vector.broadcast %cst_44 : f32 to vector<16x256xf32>
    %145 = arith.maximumf %143, %144 : vector<16x256xf32>
    %146 = arith.truncf %145 : vector<16x256xf32> to vector<16x256xbf16>
    %c0_45 = arith.constant 0 : index
    %c0_46 = arith.constant 0 : index
    %c0_47 = arith.constant 0 : index
    %147 = vector.load %arg4[%c0_45, %c0_46, %c0_47] : memref<2x2048x32xbf16, #tpu.memory_space<vmem>>, vector<1x256x32xbf16>
    %148 = vector.shape_cast %147 : vector<1x256x32xbf16> to vector<256x32xbf16>
    %cst_48 = arith.constant dense<0.000000e+00> : vector<16x32xf32>
    %149 = tpu.matmul %146, %148, %cst_48 {dimension_numbers = #tpu.dot_dimension_numbers<[1], [0], [0], [1], [0, 0, 1, 1], [], []>} : vector<16x256xbf16>, vector<256x32xbf16>, vector<16x32xf32> -> vector<16x32xf32>
    %150 = arith.addf %136, %149 : vector<16x32xf32>
    %c0_49 = arith.constant 0 : index
    %c0_50 = arith.constant 0 : index
    %c256 = arith.constant 256 : index
    %151 = vector.load %arg3[%c0_49, %c0_50, %c256] : memref<2x32x2048xbf16, #tpu.memory_space<vmem>>, vector<1x32x256xbf16>
    %152 = vector.shape_cast %151 : vector<1x32x256xbf16> to vector<32x256xbf16>
    %cst_51 = arith.constant dense<0.000000e+00> : vector<16x256xf32>
    %153 = tpu.matmul %134, %152, %cst_51 {dimension_numbers = #tpu.dot_dimension_numbers<[1], [0], [0], [1], [0, 0, 1, 1], [], []>} : vector<16x32xbf16>, vector<32x256xbf16>, vector<16x256xf32> -> vector<16x256xf32>
    %c0_52 = arith.constant 0 : index
    %c0_53 = arith.constant 0 : index
    %c256_54 = arith.constant 256 : index
    %154 = vector.load %arg5[%c0_52, %c0_53, %c256_54] : memref<2x1x2048xf32, #tpu.memory_space<vmem>>, vector<1x1x256xf32>
    %155 = vector.shape_cast %154 : vector<1x1x256xf32> to vector<1x256xf32>
    %156 = vector.broadcast %155 : vector<1x256xf32> to vector<16x256xf32>
    %157 = arith.addf %153, %156 : vector<16x256xf32>
    %cst_55 = arith.constant 0.000000e+00 : f32
    %158 = vector.broadcast %cst_55 : f32 to vector<16x256xf32>
    %159 = arith.maximumf %157, %158 : vector<16x256xf32>
    %160 = arith.truncf %159 : vector<16x256xf32> to vector<16x256xbf16>
    %c0_56 = arith.constant 0 : index
    %c256_57 = arith.constant 256 : index
    %c0_58 = arith.constant 0 : index
    %161 = vector.load %arg4[%c0_56, %c256_57, %c0_58] : memref<2x2048x32xbf16, #tpu.memory_space<vmem>>, vector<1x256x32xbf16>
    %162 = vector.shape_cast %161 : vector<1x256x32xbf16> to vector<256x32xbf16>
    %cst_59 = arith.constant dense<0.000000e+00> : vector<16x32xf32>
    %163 = tpu.matmul %160, %162, %cst_59 {dimension_numbers = #tpu.dot_dimension_numbers<[1], [0], [0], [1], [0, 0, 1, 1], [], []>} : vector<16x256xbf16>, vector<256x32xbf16>, vector<16x32xf32> -> vector<16x32xf32>
    %164 = arith.addf %150, %163 : vector<16x32xf32>
    %c0_60 = arith.constant 0 : index
    %c0_61 = arith.constant 0 : index
    %c512 = arith.constant 512 : index
    %165 = vector.load %arg3[%c0_60, %c0_61, %c512] : memref<2x32x2048xbf16, #tpu.memory_space<vmem>>, vector<1x32x256xbf16>
    %166 = vector.shape_cast %165 : vector<1x32x256xbf16> to vector<32x256xbf16>
    %cst_62 = arith.constant dense<0.000000e+00> : vector<16x256xf32>
    %167 = tpu.matmul %134, %166, %cst_62 {dimension_numbers = #tpu.dot_dimension_numbers<[1], [0], [0], [1], [0, 0, 1, 1], [], []>} : vector<16x32xbf16>, vector<32x256xbf16>, vector<16x256xf32> -> vector<16x256xf32>
    %c0_63 = arith.constant 0 : index
    %c0_64 = arith.constant 0 : index
    %c512_65 = arith.constant 512 : index
    %168 = vector.load %arg5[%c0_63, %c0_64, %c512_65] : memref<2x1x2048xf32, #tpu.memory_space<vmem>>, vector<1x1x256xf32>
    %169 = vector.shape_cast %168 : vector<1x1x256xf32> to vector<1x256xf32>
    %170 = vector.broadcast %169 : vector<1x256xf32> to vector<16x256xf32>
    %171 = arith.addf %167, %170 : vector<16x256xf32>
    %cst_66 = arith.constant 0.000000e+00 : f32
    %172 = vector.broadcast %cst_66 : f32 to vector<16x256xf32>
    %173 = arith.maximumf %171, %172 : vector<16x256xf32>
    %174 = arith.truncf %173 : vector<16x256xf32> to vector<16x256xbf16>
    %c0_67 = arith.constant 0 : index
    %c512_68 = arith.constant 512 : index
    %c0_69 = arith.constant 0 : index
    %175 = vector.load %arg4[%c0_67, %c512_68, %c0_69] : memref<2x2048x32xbf16, #tpu.memory_space<vmem>>, vector<1x256x32xbf16>
    %176 = vector.shape_cast %175 : vector<1x256x32xbf16> to vector<256x32xbf16>
    %cst_70 = arith.constant dense<0.000000e+00> : vector<16x32xf32>
    %177 = tpu.matmul %174, %176, %cst_70 {dimension_numbers = #tpu.dot_dimension_numbers<[1], [0], [0], [1], [0, 0, 1, 1], [], []>} : vector<16x256xbf16>, vector<256x32xbf16>, vector<16x32xf32> -> vector<16x32xf32>
    %178 = arith.addf %164, %177 : vector<16x32xf32>
    %c0_71 = arith.constant 0 : index
    %c0_72 = arith.constant 0 : index
    %c768 = arith.constant 768 : index
    %179 = vector.load %arg3[%c0_71, %c0_72, %c768] : memref<2x32x2048xbf16, #tpu.memory_space<vmem>>, vector<1x32x256xbf16>
    %180 = vector.shape_cast %179 : vector<1x32x256xbf16> to vector<32x256xbf16>
    %cst_73 = arith.constant dense<0.000000e+00> : vector<16x256xf32>
    %181 = tpu.matmul %134, %180, %cst_73 {dimension_numbers = #tpu.dot_dimension_numbers<[1], [0], [0], [1], [0, 0, 1, 1], [], []>} : vector<16x32xbf16>, vector<32x256xbf16>, vector<16x256xf32> -> vector<16x256xf32>
    %c0_74 = arith.constant 0 : index
    %c0_75 = arith.constant 0 : index
    %c768_76 = arith.constant 768 : index
    %182 = vector.load %arg5[%c0_74, %c0_75, %c768_76] : memref<2x1x2048xf32, #tpu.memory_space<vmem>>, vector<1x1x256xf32>
    %183 = vector.shape_cast %182 : vector<1x1x256xf32> to vector<1x256xf32>
    %184 = vector.broadcast %183 : vector<1x256xf32> to vector<16x256xf32>
    %185 = arith.addf %181, %184 : vector<16x256xf32>
    %cst_77 = arith.constant 0.000000e+00 : f32
    %186 = vector.broadcast %cst_77 : f32 to vector<16x256xf32>
    %187 = arith.maximumf %185, %186 : vector<16x256xf32>
    %188 = arith.truncf %187 : vector<16x256xf32> to vector<16x256xbf16>
    %c0_78 = arith.constant 0 : index
    %c768_79 = arith.constant 768 : index
    %c0_80 = arith.constant 0 : index
    %189 = vector.load %arg4[%c0_78, %c768_79, %c0_80] : memref<2x2048x32xbf16, #tpu.memory_space<vmem>>, vector<1x256x32xbf16>
    %190 = vector.shape_cast %189 : vector<1x256x32xbf16> to vector<256x32xbf16>
    %cst_81 = arith.constant dense<0.000000e+00> : vector<16x32xf32>
    %191 = tpu.matmul %188, %190, %cst_81 {dimension_numbers = #tpu.dot_dimension_numbers<[1], [0], [0], [1], [0, 0, 1, 1], [], []>} : vector<16x256xbf16>, vector<256x32xbf16>, vector<16x32xf32> -> vector<16x32xf32>
    %192 = arith.addf %178, %191 : vector<16x32xf32>
    %c0_82 = arith.constant 0 : index
    %c0_83 = arith.constant 0 : index
    %c1024 = arith.constant 1024 : index
    %193 = vector.load %arg3[%c0_82, %c0_83, %c1024] : memref<2x32x2048xbf16, #tpu.memory_space<vmem>>, vector<1x32x256xbf16>
    %194 = vector.shape_cast %193 : vector<1x32x256xbf16> to vector<32x256xbf16>
    %cst_84 = arith.constant dense<0.000000e+00> : vector<16x256xf32>
    %195 = tpu.matmul %134, %194, %cst_84 {dimension_numbers = #tpu.dot_dimension_numbers<[1], [0], [0], [1], [0, 0, 1, 1], [], []>} : vector<16x32xbf16>, vector<32x256xbf16>, vector<16x256xf32> -> vector<16x256xf32>
    %c0_85 = arith.constant 0 : index
    %c0_86 = arith.constant 0 : index
    %c1024_87 = arith.constant 1024 : index
    %196 = vector.load %arg5[%c0_85, %c0_86, %c1024_87] : memref<2x1x2048xf32, #tpu.memory_space<vmem>>, vector<1x1x256xf32>
    %197 = vector.shape_cast %196 : vector<1x1x256xf32> to vector<1x256xf32>
    %198 = vector.broadcast %197 : vector<1x256xf32> to vector<16x256xf32>
    %199 = arith.addf %195, %198 : vector<16x256xf32>
    %cst_88 = arith.constant 0.000000e+00 : f32
    %200 = vector.broadcast %cst_88 : f32 to vector<16x256xf32>
    %201 = arith.maximumf %199, %200 : vector<16x256xf32>
    %202 = arith.truncf %201 : vector<16x256xf32> to vector<16x256xbf16>
    %c0_89 = arith.constant 0 : index
    %c1024_90 = arith.constant 1024 : index
    %c0_91 = arith.constant 0 : index
    %203 = vector.load %arg4[%c0_89, %c1024_90, %c0_91] : memref<2x2048x32xbf16, #tpu.memory_space<vmem>>, vector<1x256x32xbf16>
    %204 = vector.shape_cast %203 : vector<1x256x32xbf16> to vector<256x32xbf16>
    %cst_92 = arith.constant dense<0.000000e+00> : vector<16x32xf32>
    %205 = tpu.matmul %202, %204, %cst_92 {dimension_numbers = #tpu.dot_dimension_numbers<[1], [0], [0], [1], [0, 0, 1, 1], [], []>} : vector<16x256xbf16>, vector<256x32xbf16>, vector<16x32xf32> -> vector<16x32xf32>
    %206 = arith.addf %192, %205 : vector<16x32xf32>
    %c0_93 = arith.constant 0 : index
    %c0_94 = arith.constant 0 : index
    %c1280 = arith.constant 1280 : index
    %207 = vector.load %arg3[%c0_93, %c0_94, %c1280] : memref<2x32x2048xbf16, #tpu.memory_space<vmem>>, vector<1x32x256xbf16>
    %208 = vector.shape_cast %207 : vector<1x32x256xbf16> to vector<32x256xbf16>
    %cst_95 = arith.constant dense<0.000000e+00> : vector<16x256xf32>
    %209 = tpu.matmul %134, %208, %cst_95 {dimension_numbers = #tpu.dot_dimension_numbers<[1], [0], [0], [1], [0, 0, 1, 1], [], []>} : vector<16x32xbf16>, vector<32x256xbf16>, vector<16x256xf32> -> vector<16x256xf32>
    %c0_96 = arith.constant 0 : index
    %c0_97 = arith.constant 0 : index
    %c1280_98 = arith.constant 1280 : index
    %210 = vector.load %arg5[%c0_96, %c0_97, %c1280_98] : memref<2x1x2048xf32, #tpu.memory_space<vmem>>, vector<1x1x256xf32>
    %211 = vector.shape_cast %210 : vector<1x1x256xf32> to vector<1x256xf32>
    %212 = vector.broadcast %211 : vector<1x256xf32> to vector<16x256xf32>
    %213 = arith.addf %209, %212 : vector<16x256xf32>
    %cst_99 = arith.constant 0.000000e+00 : f32
    %214 = vector.broadcast %cst_99 : f32 to vector<16x256xf32>
    %215 = arith.maximumf %213, %214 : vector<16x256xf32>
    %216 = arith.truncf %215 : vector<16x256xf32> to vector<16x256xbf16>
    %c0_100 = arith.constant 0 : index
    %c1280_101 = arith.constant 1280 : index
    %c0_102 = arith.constant 0 : index
    %217 = vector.load %arg4[%c0_100, %c1280_101, %c0_102] : memref<2x2048x32xbf16, #tpu.memory_space<vmem>>, vector<1x256x32xbf16>
    %218 = vector.shape_cast %217 : vector<1x256x32xbf16> to vector<256x32xbf16>
    %cst_103 = arith.constant dense<0.000000e+00> : vector<16x32xf32>
    %219 = tpu.matmul %216, %218, %cst_103 {dimension_numbers = #tpu.dot_dimension_numbers<[1], [0], [0], [1], [0, 0, 1, 1], [], []>} : vector<16x256xbf16>, vector<256x32xbf16>, vector<16x32xf32> -> vector<16x32xf32>
    %220 = arith.addf %206, %219 : vector<16x32xf32>
    %c0_104 = arith.constant 0 : index
    %c0_105 = arith.constant 0 : index
    %c1536 = arith.constant 1536 : index
    %221 = vector.load %arg3[%c0_104, %c0_105, %c1536] : memref<2x32x2048xbf16, #tpu.memory_space<vmem>>, vector<1x32x256xbf16>
    %222 = vector.shape_cast %221 : vector<1x32x256xbf16> to vector<32x256xbf16>
    %cst_106 = arith.constant dense<0.000000e+00> : vector<16x256xf32>
    %223 = tpu.matmul %134, %222, %cst_106 {dimension_numbers = #tpu.dot_dimension_numbers<[1], [0], [0], [1], [0, 0, 1, 1], [], []>} : vector<16x32xbf16>, vector<32x256xbf16>, vector<16x256xf32> -> vector<16x256xf32>
    %c0_107 = arith.constant 0 : index
    %c0_108 = arith.constant 0 : index
    %c1536_109 = arith.constant 1536 : index
    %224 = vector.load %arg5[%c0_107, %c0_108, %c1536_109] : memref<2x1x2048xf32, #tpu.memory_space<vmem>>, vector<1x1x256xf32>
    %225 = vector.shape_cast %224 : vector<1x1x256xf32> to vector<1x256xf32>
    %226 = vector.broadcast %225 : vector<1x256xf32> to vector<16x256xf32>
    %227 = arith.addf %223, %226 : vector<16x256xf32>
    %cst_110 = arith.constant 0.000000e+00 : f32
    %228 = vector.broadcast %cst_110 : f32 to vector<16x256xf32>
    %229 = arith.maximumf %227, %228 : vector<16x256xf32>
    %230 = arith.truncf %229 : vector<16x256xf32> to vector<16x256xbf16>
    %c0_111 = arith.constant 0 : index
    %c1536_112 = arith.constant 1536 : index
    %c0_113 = arith.constant 0 : index
    %231 = vector.load %arg4[%c0_111, %c1536_112, %c0_113] : memref<2x2048x32xbf16, #tpu.memory_space<vmem>>, vector<1x256x32xbf16>
    %232 = vector.shape_cast %231 : vector<1x256x32xbf16> to vector<256x32xbf16>
    %cst_114 = arith.constant dense<0.000000e+00> : vector<16x32xf32>
    %233 = tpu.matmul %230, %232, %cst_114 {dimension_numbers = #tpu.dot_dimension_numbers<[1], [0], [0], [1], [0, 0, 1, 1], [], []>} : vector<16x256xbf16>, vector<256x32xbf16>, vector<16x32xf32> -> vector<16x32xf32>
    %234 = arith.addf %220, %233 : vector<16x32xf32>
    %c0_115 = arith.constant 0 : index
    %c0_116 = arith.constant 0 : index
    %c1792 = arith.constant 1792 : index
    %235 = vector.load %arg3[%c0_115, %c0_116, %c1792] : memref<2x32x2048xbf16, #tpu.memory_space<vmem>>, vector<1x32x256xbf16>
    %236 = vector.shape_cast %235 : vector<1x32x256xbf16> to vector<32x256xbf16>
    %cst_117 = arith.constant dense<0.000000e+00> : vector<16x256xf32>
    %237 = tpu.matmul %134, %236, %cst_117 {dimension_numbers = #tpu.dot_dimension_numbers<[1], [0], [0], [1], [0, 0, 1, 1], [], []>} : vector<16x32xbf16>, vector<32x256xbf16>, vector<16x256xf32> -> vector<16x256xf32>
    %c0_118 = arith.constant 0 : index
    %c0_119 = arith.constant 0 : index
    %c1792_120 = arith.constant 1792 : index
    %238 = vector.load %arg5[%c0_118, %c0_119, %c1792_120] : memref<2x1x2048xf32, #tpu.memory_space<vmem>>, vector<1x1x256xf32>
    %239 = vector.shape_cast %238 : vector<1x1x256xf32> to vector<1x256xf32>
    %240 = vector.broadcast %239 : vector<1x256xf32> to vector<16x256xf32>
    %241 = arith.addf %237, %240 : vector<16x256xf32>
    %cst_121 = arith.constant 0.000000e+00 : f32
    %242 = vector.broadcast %cst_121 : f32 to vector<16x256xf32>
    %243 = arith.maximumf %241, %242 : vector<16x256xf32>
    %244 = arith.truncf %243 : vector<16x256xf32> to vector<16x256xbf16>
    %c0_122 = arith.constant 0 : index
    %c1792_123 = arith.constant 1792 : index
    %c0_124 = arith.constant 0 : index
    %245 = vector.load %arg4[%c0_122, %c1792_123, %c0_124] : memref<2x2048x32xbf16, #tpu.memory_space<vmem>>, vector<1x256x32xbf16>
    %246 = vector.shape_cast %245 : vector<1x256x32xbf16> to vector<256x32xbf16>
    %cst_125 = arith.constant dense<0.000000e+00> : vector<16x32xf32>
    %247 = tpu.matmul %244, %246, %cst_125 {dimension_numbers = #tpu.dot_dimension_numbers<[1], [0], [0], [1], [0, 0, 1, 1], [], []>} : vector<16x256xbf16>, vector<256x32xbf16>, vector<16x32xf32> -> vector<16x32xf32>
    %248 = arith.addf %234, %247 : vector<16x32xf32>
    %249 = arith.addf %133, %248 : vector<16x32xf32>
    %cst_126 = arith.constant dense<0.000000e+00> : vector<16xf32>
    %250 = vector.multi_reduction <add>, %249, %cst_126 [1] : vector<16x32xf32> to vector<16xf32>
    %251 = vector.shape_cast %250 : vector<16xf32> to vector<16x1xf32>
    %cst_127 = arith.constant 3.200000e+01 : f32
    %252 = vector.broadcast %cst_127 : f32 to vector<16x1xf32>
    %253 = arith.divf %251, %252 : vector<16x1xf32>
    %254 = vector.broadcast %253 : vector<16x1xf32> to vector<16x32xf32>
    %255 = arith.subf %249, %254 : vector<16x32xf32>
    %256 = vector.broadcast %253 : vector<16x1xf32> to vector<16x32xf32>
    %257 = arith.subf %249, %256 : vector<16x32xf32>
    %258 = arith.mulf %255, %257 : vector<16x32xf32>
    %cst_128 = arith.constant dense<0.000000e+00> : vector<16xf32>
    %259 = vector.multi_reduction <add>, %258, %cst_128 [1] : vector<16x32xf32> to vector<16xf32>
    %260 = vector.shape_cast %259 : vector<16xf32> to vector<16x1xf32>
    %cst_129 = arith.constant 3.200000e+01 : f32
    %261 = vector.broadcast %cst_129 : f32 to vector<16x1xf32>
    %262 = arith.divf %260, %261 : vector<16x1xf32>
    %263 = vector.broadcast %253 : vector<16x1xf32> to vector<16x32xf32>
    %264 = arith.subf %249, %263 : vector<16x32xf32>
    %cst_130 = arith.constant 9.99999974E-6 : f32
    %265 = vector.broadcast %cst_130 : f32 to vector<16x1xf32>
    %266 = arith.addf %262, %265 : vector<16x1xf32>
    %267 = math.rsqrt %266 : vector<16x1xf32>
    %268 = vector.broadcast %267 : vector<16x1xf32> to vector<16x32xf32>
    %269 = arith.mulf %264, %268 : vector<16x32xf32>
    %270 = vector.broadcast %9 : vector<1x32xf32> to vector<16x32xf32>
    %271 = arith.mulf %269, %270 : vector<16x32xf32>
    %272 = vector.broadcast %10 : vector<1x32xf32> to vector<16x32xf32>
    %273 = arith.addf %271, %272 : vector<16x32xf32>
    %c1 = arith.constant 1 : index
    %c0_131 = arith.constant 0 : index
    %c0_132 = arith.constant 0 : index
    %274 = vector.load %arg6[%c1, %c0_131, %c0_132] : memref<2x8x128xf32, #tpu.memory_space<vmem>>, vector<1x8x128xf32>
    %275 = vector.shape_cast %274 : vector<1x8x128xf32> to vector<8x128xf32>
    %276 = vector.extract_strided_slice %275 {offsets = [0, 0], sizes = [1, 96], strides = [1, 1]} : vector<8x128xf32> to vector<1x96xf32>
    %277 = vector.extract_strided_slice %275 {offsets = [1, 0], sizes = [1, 32], strides = [1, 1]} : vector<8x128xf32> to vector<1x32xf32>
    %278 = vector.extract_strided_slice %275 {offsets = [2, 0], sizes = [1, 32], strides = [1, 1]} : vector<8x128xf32> to vector<1x32xf32>
    %279 = vector.extract_strided_slice %275 {offsets = [3, 0], sizes = [1, 32], strides = [1, 1]} : vector<8x128xf32> to vector<1x32xf32>
    %280 = vector.extract_strided_slice %275 {offsets = [4, 0], sizes = [1, 32], strides = [1, 1]} : vector<8x128xf32> to vector<1x32xf32>
    %281 = vector.extract_strided_slice %275 {offsets = [5, 0], sizes = [1, 32], strides = [1, 1]} : vector<8x128xf32> to vector<1x32xf32>
    %282 = vector.extract_strided_slice %275 {offsets = [6, 0], sizes = [1, 32], strides = [1, 1]} : vector<8x128xf32> to vector<1x32xf32>
    %c1_133 = arith.constant 1 : index
    %c0_134 = arith.constant 0 : index
    %c0_135 = arith.constant 0 : index
    %283 = vector.load %arg1[%c1_133, %c0_134, %c0_135] : memref<2x32x96xf32, #tpu.memory_space<vmem>>, vector<1x32x96xf32>
    %284 = vector.shape_cast %283 : vector<1x32x96xf32> to vector<32x96xf32>
    %cst_136 = arith.constant dense<0.000000e+00> : vector<16x96xf32>
    %285 = tpu.matmul %273, %284, %cst_136 {dimension_numbers = #tpu.dot_dimension_numbers<[1], [0], [0], [1], [0, 0, 1, 1], [], []>} : vector<16x32xf32>, vector<32x96xf32>, vector<16x96xf32> -> vector<16x96xf32>
    %286 = vector.broadcast %276 : vector<1x96xf32> to vector<16x96xf32>
    %287 = arith.addf %285, %286 : vector<16x96xf32>
    %288 = vector.extract_strided_slice %287 {offsets = [0, 0], sizes = [16, 32], strides = [1, 1]} : vector<16x96xf32> to vector<16x32xf32>
    %289 = vector.extract_strided_slice %287 {offsets = [0, 32], sizes = [16, 32], strides = [1, 1]} : vector<16x96xf32> to vector<16x32xf32>
    %290 = vector.extract_strided_slice %287 {offsets = [0, 64], sizes = [16, 32], strides = [1, 1]} : vector<16x96xf32> to vector<16x32xf32>
    %291 = vector.extract_strided_slice %288 {offsets = [0, 0], sizes = [16, 8], strides = [1, 1]} : vector<16x32xf32> to vector<16x8xf32>
    %292 = vector.shape_cast %291 : vector<16x8xf32> to vector<2x8x8xf32>
    %293 = vector.extract_strided_slice %289 {offsets = [0, 0], sizes = [16, 8], strides = [1, 1]} : vector<16x32xf32> to vector<16x8xf32>
    %294 = vector.shape_cast %293 : vector<16x8xf32> to vector<2x8x8xf32>
    %295 = vector.extract_strided_slice %290 {offsets = [0, 0], sizes = [16, 8], strides = [1, 1]} : vector<16x32xf32> to vector<16x8xf32>
    %296 = vector.shape_cast %295 : vector<16x8xf32> to vector<2x8x8xf32>
    "tpu.trace_start"() <{level = 10 : i32, message = "bqd,bkd->bqk"}> : () -> ()
    %cst_137 = arith.constant dense<0.000000e+00> : vector<2x8x8xf32>
    %297 = tpu.matmul %292, %294, %cst_137 {dimension_numbers = #tpu.dot_dimension_numbers<[2], [2], [1], [1], [0, 0, 0, 1, 1, 1], [0], [0]>} : vector<2x8x8xf32>, vector<2x8x8xf32>, vector<2x8x8xf32> -> vector<2x8x8xf32>
    "tpu.trace_stop"() : () -> ()
    %cst_138 = arith.constant 0.353553385 : f32
    %298 = vector.broadcast %cst_138 : f32 to vector<2x8x8xf32>
    %299 = arith.mulf %297, %298 : vector<2x8x8xf32>
    %cst_139 = arith.constant dense<0xFF800000> : vector<2x8xf32>
    %300 = vector.multi_reduction <maximumf>, %299, %cst_139 [2] : vector<2x8x8xf32> to vector<2x8xf32>
    %301 = vector.shape_cast %300 : vector<2x8xf32> to vector<2x8x1xf32>
    %302 = vector.broadcast %301 : vector<2x8x1xf32> to vector<2x8x8xf32>
    %303 = arith.subf %299, %302 : vector<2x8x8xf32>
    %304 = math.exp %303 : vector<2x8x8xf32>
    %cst_140 = arith.constant dense<0.000000e+00> : vector<2x8xf32>
    %305 = vector.multi_reduction <add>, %304, %cst_140 [2] : vector<2x8x8xf32> to vector<2x8xf32>
    %306 = vector.shape_cast %305 : vector<2x8xf32> to vector<2x8x1xf32>
    %307 = tpu.reciprocal %306 {approx = true} : vector<2x8x1xf32> -> vector<2x8x1xf32>
    %308 = vector.broadcast %307 : vector<2x8x1xf32> to vector<2x8x8xf32>
    %309 = arith.mulf %304, %308 : vector<2x8x8xf32>
    "tpu.trace_start"() <{level = 10 : i32, message = "bqk,bkd->bqd"}> : () -> ()
    %cst_141 = arith.constant dense<0.000000e+00> : vector<2x8x8xf32>
    %310 = tpu.matmul %309, %296, %cst_141 {dimension_numbers = #tpu.dot_dimension_numbers<[2], [1], [1], [2], [0, 0, 0, 1, 1, 2], [0], [0]>} : vector<2x8x8xf32>, vector<2x8x8xf32>, vector<2x8x8xf32> -> vector<2x8x8xf32>
    "tpu.trace_stop"() : () -> ()
    %311 = vector.shape_cast %310 : vector<2x8x8xf32> to vector<16x8xf32>
    %312 = vector.extract_strided_slice %288 {offsets = [0, 8], sizes = [16, 8], strides = [1, 1]} : vector<16x32xf32> to vector<16x8xf32>
    %313 = vector.shape_cast %312 : vector<16x8xf32> to vector<2x8x8xf32>
    %314 = vector.extract_strided_slice %289 {offsets = [0, 8], sizes = [16, 8], strides = [1, 1]} : vector<16x32xf32> to vector<16x8xf32>
    %315 = vector.shape_cast %314 : vector<16x8xf32> to vector<2x8x8xf32>
    %316 = vector.extract_strided_slice %290 {offsets = [0, 8], sizes = [16, 8], strides = [1, 1]} : vector<16x32xf32> to vector<16x8xf32>
    %317 = vector.shape_cast %316 : vector<16x8xf32> to vector<2x8x8xf32>
    "tpu.trace_start"() <{level = 10 : i32, message = "bqd,bkd->bqk"}> : () -> ()
    %cst_142 = arith.constant dense<0.000000e+00> : vector<2x8x8xf32>
    %318 = tpu.matmul %313, %315, %cst_142 {dimension_numbers = #tpu.dot_dimension_numbers<[2], [2], [1], [1], [0, 0, 0, 1, 1, 1], [0], [0]>} : vector<2x8x8xf32>, vector<2x8x8xf32>, vector<2x8x8xf32> -> vector<2x8x8xf32>
    "tpu.trace_stop"() : () -> ()
    %cst_143 = arith.constant 0.353553385 : f32
    %319 = vector.broadcast %cst_143 : f32 to vector<2x8x8xf32>
    %320 = arith.mulf %318, %319 : vector<2x8x8xf32>
    %cst_144 = arith.constant dense<0xFF800000> : vector<2x8xf32>
    %321 = vector.multi_reduction <maximumf>, %320, %cst_144 [2] : vector<2x8x8xf32> to vector<2x8xf32>
    %322 = vector.shape_cast %321 : vector<2x8xf32> to vector<2x8x1xf32>
    %323 = vector.broadcast %322 : vector<2x8x1xf32> to vector<2x8x8xf32>
    %324 = arith.subf %320, %323 : vector<2x8x8xf32>
    %325 = math.exp %324 : vector<2x8x8xf32>
    %cst_145 = arith.constant dense<0.000000e+00> : vector<2x8xf32>
    %326 = vector.multi_reduction <add>, %325, %cst_145 [2] : vector<2x8x8xf32> to vector<2x8xf32>
    %327 = vector.shape_cast %326 : vector<2x8xf32> to vector<2x8x1xf32>
    %328 = tpu.reciprocal %327 {approx = true} : vector<2x8x1xf32> -> vector<2x8x1xf32>
    %329 = vector.broadcast %328 : vector<2x8x1xf32> to vector<2x8x8xf32>
    %330 = arith.mulf %325, %329 : vector<2x8x8xf32>
    "tpu.trace_start"() <{level = 10 : i32, message = "bqk,bkd->bqd"}> : () -> ()
    %cst_146 = arith.constant dense<0.000000e+00> : vector<2x8x8xf32>
    %331 = tpu.matmul %330, %317, %cst_146 {dimension_numbers = #tpu.dot_dimension_numbers<[2], [1], [1], [2], [0, 0, 0, 1, 1, 2], [0], [0]>} : vector<2x8x8xf32>, vector<2x8x8xf32>, vector<2x8x8xf32> -> vector<2x8x8xf32>
    "tpu.trace_stop"() : () -> ()
    %332 = vector.shape_cast %331 : vector<2x8x8xf32> to vector<16x8xf32>
    %333 = vector.extract_strided_slice %288 {offsets = [0, 16], sizes = [16, 8], strides = [1, 1]} : vector<16x32xf32> to vector<16x8xf32>
    %334 = vector.shape_cast %333 : vector<16x8xf32> to vector<2x8x8xf32>
    %335 = vector.extract_strided_slice %289 {offsets = [0, 16], sizes = [16, 8], strides = [1, 1]} : vector<16x32xf32> to vector<16x8xf32>
    %336 = vector.shape_cast %335 : vector<16x8xf32> to vector<2x8x8xf32>
    %337 = vector.extract_strided_slice %290 {offsets = [0, 16], sizes = [16, 8], strides = [1, 1]} : vector<16x32xf32> to vector<16x8xf32>
    %338 = vector.shape_cast %337 : vector<16x8xf32> to vector<2x8x8xf32>
    "tpu.trace_start"() <{level = 10 : i32, message = "bqd,bkd->bqk"}> : () -> ()
    %cst_147 = arith.constant dense<0.000000e+00> : vector<2x8x8xf32>
    %339 = tpu.matmul %334, %336, %cst_147 {dimension_numbers = #tpu.dot_dimension_numbers<[2], [2], [1], [1], [0, 0, 0, 1, 1, 1], [0], [0]>} : vector<2x8x8xf32>, vector<2x8x8xf32>, vector<2x8x8xf32> -> vector<2x8x8xf32>
    "tpu.trace_stop"() : () -> ()
    %cst_148 = arith.constant 0.353553385 : f32
    %340 = vector.broadcast %cst_148 : f32 to vector<2x8x8xf32>
    %341 = arith.mulf %339, %340 : vector<2x8x8xf32>
    %cst_149 = arith.constant dense<0xFF800000> : vector<2x8xf32>
    %342 = vector.multi_reduction <maximumf>, %341, %cst_149 [2] : vector<2x8x8xf32> to vector<2x8xf32>
    %343 = vector.shape_cast %342 : vector<2x8xf32> to vector<2x8x1xf32>
    %344 = vector.broadcast %343 : vector<2x8x1xf32> to vector<2x8x8xf32>
    %345 = arith.subf %341, %344 : vector<2x8x8xf32>
    %346 = math.exp %345 : vector<2x8x8xf32>
    %cst_150 = arith.constant dense<0.000000e+00> : vector<2x8xf32>
    %347 = vector.multi_reduction <add>, %346, %cst_150 [2] : vector<2x8x8xf32> to vector<2x8xf32>
    %348 = vector.shape_cast %347 : vector<2x8xf32> to vector<2x8x1xf32>
    %349 = tpu.reciprocal %348 {approx = true} : vector<2x8x1xf32> -> vector<2x8x1xf32>
    %350 = vector.broadcast %349 : vector<2x8x1xf32> to vector<2x8x8xf32>
    %351 = arith.mulf %346, %350 : vector<2x8x8xf32>
    "tpu.trace_start"() <{level = 10 : i32, message = "bqk,bkd->bqd"}> : () -> ()
    %cst_151 = arith.constant dense<0.000000e+00> : vector<2x8x8xf32>
    %352 = tpu.matmul %351, %338, %cst_151 {dimension_numbers = #tpu.dot_dimension_numbers<[2], [1], [1], [2], [0, 0, 0, 1, 1, 2], [0], [0]>} : vector<2x8x8xf32>, vector<2x8x8xf32>, vector<2x8x8xf32> -> vector<2x8x8xf32>
    "tpu.trace_stop"() : () -> ()
    %353 = vector.shape_cast %352 : vector<2x8x8xf32> to vector<16x8xf32>
    %354 = vector.extract_strided_slice %288 {offsets = [0, 24], sizes = [16, 8], strides = [1, 1]} : vector<16x32xf32> to vector<16x8xf32>
    %355 = vector.shape_cast %354 : vector<16x8xf32> to vector<2x8x8xf32>
    %356 = vector.extract_strided_slice %289 {offsets = [0, 24], sizes = [16, 8], strides = [1, 1]} : vector<16x32xf32> to vector<16x8xf32>
    %357 = vector.shape_cast %356 : vector<16x8xf32> to vector<2x8x8xf32>
    %358 = vector.extract_strided_slice %290 {offsets = [0, 24], sizes = [16, 8], strides = [1, 1]} : vector<16x32xf32> to vector<16x8xf32>
    %359 = vector.shape_cast %358 : vector<16x8xf32> to vector<2x8x8xf32>
    "tpu.trace_start"() <{level = 10 : i32, message = "bqd,bkd->bqk"}> : () -> ()
    %cst_152 = arith.constant dense<0.000000e+00> : vector<2x8x8xf32>
    %360 = tpu.matmul %355, %357, %cst_152 {dimension_numbers = #tpu.dot_dimension_numbers<[2], [2], [1], [1], [0, 0, 0, 1, 1, 1], [0], [0]>} : vector<2x8x8xf32>, vector<2x8x8xf32>, vector<2x8x8xf32> -> vector<2x8x8xf32>
    "tpu.trace_stop"() : () -> ()
    %cst_153 = arith.constant 0.353553385 : f32
    %361 = vector.broadcast %cst_153 : f32 to vector<2x8x8xf32>
    %362 = arith.mulf %360, %361 : vector<2x8x8xf32>
    %cst_154 = arith.constant dense<0xFF800000> : vector<2x8xf32>
    %363 = vector.multi_reduction <maximumf>, %362, %cst_154 [2] : vector<2x8x8xf32> to vector<2x8xf32>
    %364 = vector.shape_cast %363 : vector<2x8xf32> to vector<2x8x1xf32>
    %365 = vector.broadcast %364 : vector<2x8x1xf32> to vector<2x8x8xf32>
    %366 = arith.subf %362, %365 : vector<2x8x8xf32>
    %367 = math.exp %366 : vector<2x8x8xf32>
    %cst_155 = arith.constant dense<0.000000e+00> : vector<2x8xf32>
    %368 = vector.multi_reduction <add>, %367, %cst_155 [2] : vector<2x8x8xf32> to vector<2x8xf32>
    %369 = vector.shape_cast %368 : vector<2x8xf32> to vector<2x8x1xf32>
    %370 = tpu.reciprocal %369 {approx = true} : vector<2x8x1xf32> -> vector<2x8x1xf32>
    %371 = vector.broadcast %370 : vector<2x8x1xf32> to vector<2x8x8xf32>
    %372 = arith.mulf %367, %371 : vector<2x8x8xf32>
    "tpu.trace_start"() <{level = 10 : i32, message = "bqk,bkd->bqd"}> : () -> ()
    %cst_156 = arith.constant dense<0.000000e+00> : vector<2x8x8xf32>
    %373 = tpu.matmul %372, %359, %cst_156 {dimension_numbers = #tpu.dot_dimension_numbers<[2], [1], [1], [2], [0, 0, 0, 1, 1, 2], [0], [0]>} : vector<2x8x8xf32>, vector<2x8x8xf32>, vector<2x8x8xf32> -> vector<2x8x8xf32>
    "tpu.trace_stop"() : () -> ()
    %374 = vector.shape_cast %373 : vector<2x8x8xf32> to vector<16x8xf32>
    %375 = tpu.concatenate %311, %332, %353, %374 in 1 : vector<16x8xf32>, vector<16x8xf32>, vector<16x8xf32>, vector<16x8xf32> -> vector<16x32xf32>
    %c1_157 = arith.constant 1 : index
    %c0_158 = arith.constant 0 : index
    %c0_159 = arith.constant 0 : index
    %376 = vector.load %arg2[%c1_157, %c0_158, %c0_159] : memref<2x32x32xf32, #tpu.memory_space<vmem>>, vector<1x32x32xf32>
    %377 = vector.shape_cast %376 : vector<1x32x32xf32> to vector<32x32xf32>
    %cst_160 = arith.constant dense<0.000000e+00> : vector<16x32xf32>
    %378 = tpu.matmul %375, %377, %cst_160 {dimension_numbers = #tpu.dot_dimension_numbers<[1], [0], [0], [1], [0, 0, 1, 1], [], []>} : vector<16x32xf32>, vector<32x32xf32>, vector<16x32xf32> -> vector<16x32xf32>
    %379 = vector.broadcast %277 : vector<1x32xf32> to vector<16x32xf32>
    %380 = arith.addf %378, %379 : vector<16x32xf32>
    %381 = arith.addf %273, %380 : vector<16x32xf32>
    %cst_161 = arith.constant dense<0.000000e+00> : vector<16xf32>
    %382 = vector.multi_reduction <add>, %381, %cst_161 [1] : vector<16x32xf32> to vector<16xf32>
    %383 = vector.shape_cast %382 : vector<16xf32> to vector<16x1xf32>
    %cst_162 = arith.constant 3.200000e+01 : f32
    %384 = vector.broadcast %cst_162 : f32 to vector<16x1xf32>
    %385 = arith.divf %383, %384 : vector<16x1xf32>
    %386 = vector.broadcast %385 : vector<16x1xf32> to vector<16x32xf32>
    %387 = arith.subf %381, %386 : vector<16x32xf32>
    %388 = vector.broadcast %385 : vector<16x1xf32> to vector<16x32xf32>
    %389 = arith.subf %381, %388 : vector<16x32xf32>
    %390 = arith.mulf %387, %389 : vector<16x32xf32>
    %cst_163 = arith.constant dense<0.000000e+00> : vector<16xf32>
    %391 = vector.multi_reduction <add>, %390, %cst_163 [1] : vector<16x32xf32> to vector<16xf32>
    %392 = vector.shape_cast %391 : vector<16xf32> to vector<16x1xf32>
    %cst_164 = arith.constant 3.200000e+01 : f32
    %393 = vector.broadcast %cst_164 : f32 to vector<16x1xf32>
    %394 = arith.divf %392, %393 : vector<16x1xf32>
    %395 = vector.broadcast %385 : vector<16x1xf32> to vector<16x32xf32>
    %396 = arith.subf %381, %395 : vector<16x32xf32>
    %cst_165 = arith.constant 9.99999974E-6 : f32
    %397 = vector.broadcast %cst_165 : f32 to vector<16x1xf32>
    %398 = arith.addf %394, %397 : vector<16x1xf32>
    %399 = math.rsqrt %398 : vector<16x1xf32>
    %400 = vector.broadcast %399 : vector<16x1xf32> to vector<16x32xf32>
    %401 = arith.mulf %396, %400 : vector<16x32xf32>
    %402 = vector.broadcast %278 : vector<1x32xf32> to vector<16x32xf32>
    %403 = arith.mulf %401, %402 : vector<16x32xf32>
    %404 = vector.broadcast %279 : vector<1x32xf32> to vector<16x32xf32>
    %405 = arith.addf %403, %404 : vector<16x32xf32>
    %406 = arith.truncf %405 : vector<16x32xf32> to vector<16x32xbf16>
    %407 = vector.shape_cast %280 : vector<1x32xf32> to vector<1x32xf32>
    %408 = vector.broadcast %407 : vector<1x32xf32> to vector<16x32xf32>
    %c1_166 = arith.constant 1 : index
    %c0_167 = arith.constant 0 : index
    %c0_168 = arith.constant 0 : index
    %409 = vector.load %arg3[%c1_166, %c0_167, %c0_168] : memref<2x32x2048xbf16, #tpu.memory_space<vmem>>, vector<1x32x256xbf16>
    %410 = vector.shape_cast %409 : vector<1x32x256xbf16> to vector<32x256xbf16>
    %cst_169 = arith.constant dense<0.000000e+00> : vector<16x256xf32>
    %411 = tpu.matmul %406, %410, %cst_169 {dimension_numbers = #tpu.dot_dimension_numbers<[1], [0], [0], [1], [0, 0, 1, 1], [], []>} : vector<16x32xbf16>, vector<32x256xbf16>, vector<16x256xf32> -> vector<16x256xf32>
    %c1_170 = arith.constant 1 : index
    %c0_171 = arith.constant 0 : index
    %c0_172 = arith.constant 0 : index
    %412 = vector.load %arg5[%c1_170, %c0_171, %c0_172] : memref<2x1x2048xf32, #tpu.memory_space<vmem>>, vector<1x1x256xf32>
    %413 = vector.shape_cast %412 : vector<1x1x256xf32> to vector<1x256xf32>
    %414 = vector.broadcast %413 : vector<1x256xf32> to vector<16x256xf32>
    %415 = arith.addf %411, %414 : vector<16x256xf32>
    %cst_173 = arith.constant 0.000000e+00 : f32
    %416 = vector.broadcast %cst_173 : f32 to vector<16x256xf32>
    %417 = arith.maximumf %415, %416 : vector<16x256xf32>
    %418 = arith.truncf %417 : vector<16x256xf32> to vector<16x256xbf16>
    %c1_174 = arith.constant 1 : index
    %c0_175 = arith.constant 0 : index
    %c0_176 = arith.constant 0 : index
    %419 = vector.load %arg4[%c1_174, %c0_175, %c0_176] : memref<2x2048x32xbf16, #tpu.memory_space<vmem>>, vector<1x256x32xbf16>
    %420 = vector.shape_cast %419 : vector<1x256x32xbf16> to vector<256x32xbf16>
    %cst_177 = arith.constant dense<0.000000e+00> : vector<16x32xf32>
    %421 = tpu.matmul %418, %420, %cst_177 {dimension_numbers = #tpu.dot_dimension_numbers<[1], [0], [0], [1], [0, 0, 1, 1], [], []>} : vector<16x256xbf16>, vector<256x32xbf16>, vector<16x32xf32> -> vector<16x32xf32>
    %422 = arith.addf %408, %421 : vector<16x32xf32>
    %c1_178 = arith.constant 1 : index
    %c0_179 = arith.constant 0 : index
    %c256_180 = arith.constant 256 : index
    %423 = vector.load %arg3[%c1_178, %c0_179, %c256_180] : memref<2x32x2048xbf16, #tpu.memory_space<vmem>>, vector<1x32x256xbf16>
    %424 = vector.shape_cast %423 : vector<1x32x256xbf16> to vector<32x256xbf16>
    %cst_181 = arith.constant dense<0.000000e+00> : vector<16x256xf32>
    %425 = tpu.matmul %406, %424, %cst_181 {dimension_numbers = #tpu.dot_dimension_numbers<[1], [0], [0], [1], [0, 0, 1, 1], [], []>} : vector<16x32xbf16>, vector<32x256xbf16>, vector<16x256xf32> -> vector<16x256xf32>
    %c1_182 = arith.constant 1 : index
    %c0_183 = arith.constant 0 : index
    %c256_184 = arith.constant 256 : index
    %426 = vector.load %arg5[%c1_182, %c0_183, %c256_184] : memref<2x1x2048xf32, #tpu.memory_space<vmem>>, vector<1x1x256xf32>
    %427 = vector.shape_cast %426 : vector<1x1x256xf32> to vector<1x256xf32>
    %428 = vector.broadcast %427 : vector<1x256xf32> to vector<16x256xf32>
    %429 = arith.addf %425, %428 : vector<16x256xf32>
    %cst_185 = arith.constant 0.000000e+00 : f32
    %430 = vector.broadcast %cst_185 : f32 to vector<16x256xf32>
    %431 = arith.maximumf %429, %430 : vector<16x256xf32>
    %432 = arith.truncf %431 : vector<16x256xf32> to vector<16x256xbf16>
    %c1_186 = arith.constant 1 : index
    %c256_187 = arith.constant 256 : index
    %c0_188 = arith.constant 0 : index
    %433 = vector.load %arg4[%c1_186, %c256_187, %c0_188] : memref<2x2048x32xbf16, #tpu.memory_space<vmem>>, vector<1x256x32xbf16>
    %434 = vector.shape_cast %433 : vector<1x256x32xbf16> to vector<256x32xbf16>
    %cst_189 = arith.constant dense<0.000000e+00> : vector<16x32xf32>
    %435 = tpu.matmul %432, %434, %cst_189 {dimension_numbers = #tpu.dot_dimension_numbers<[1], [0], [0], [1], [0, 0, 1, 1], [], []>} : vector<16x256xbf16>, vector<256x32xbf16>, vector<16x32xf32> -> vector<16x32xf32>
    %436 = arith.addf %422, %435 : vector<16x32xf32>
    %c1_190 = arith.constant 1 : index
    %c0_191 = arith.constant 0 : index
    %c512_192 = arith.constant 512 : index
    %437 = vector.load %arg3[%c1_190, %c0_191, %c512_192] : memref<2x32x2048xbf16, #tpu.memory_space<vmem>>, vector<1x32x256xbf16>
    %438 = vector.shape_cast %437 : vector<1x32x256xbf16> to vector<32x256xbf16>
    %cst_193 = arith.constant dense<0.000000e+00> : vector<16x256xf32>
    %439 = tpu.matmul %406, %438, %cst_193 {dimension_numbers = #tpu.dot_dimension_numbers<[1], [0], [0], [1], [0, 0, 1, 1], [], []>} : vector<16x32xbf16>, vector<32x256xbf16>, vector<16x256xf32> -> vector<16x256xf32>
    %c1_194 = arith.constant 1 : index
    %c0_195 = arith.constant 0 : index
    %c512_196 = arith.constant 512 : index
    %440 = vector.load %arg5[%c1_194, %c0_195, %c512_196] : memref<2x1x2048xf32, #tpu.memory_space<vmem>>, vector<1x1x256xf32>
    %441 = vector.shape_cast %440 : vector<1x1x256xf32> to vector<1x256xf32>
    %442 = vector.broadcast %441 : vector<1x256xf32> to vector<16x256xf32>
    %443 = arith.addf %439, %442 : vector<16x256xf32>
    %cst_197 = arith.constant 0.000000e+00 : f32
    %444 = vector.broadcast %cst_197 : f32 to vector<16x256xf32>
    %445 = arith.maximumf %443, %444 : vector<16x256xf32>
    %446 = arith.truncf %445 : vector<16x256xf32> to vector<16x256xbf16>
    %c1_198 = arith.constant 1 : index
    %c512_199 = arith.constant 512 : index
    %c0_200 = arith.constant 0 : index
    %447 = vector.load %arg4[%c1_198, %c512_199, %c0_200] : memref<2x2048x32xbf16, #tpu.memory_space<vmem>>, vector<1x256x32xbf16>
    %448 = vector.shape_cast %447 : vector<1x256x32xbf16> to vector<256x32xbf16>
    %cst_201 = arith.constant dense<0.000000e+00> : vector<16x32xf32>
    %449 = tpu.matmul %446, %448, %cst_201 {dimension_numbers = #tpu.dot_dimension_numbers<[1], [0], [0], [1], [0, 0, 1, 1], [], []>} : vector<16x256xbf16>, vector<256x32xbf16>, vector<16x32xf32> -> vector<16x32xf32>
    %450 = arith.addf %436, %449 : vector<16x32xf32>
    %c1_202 = arith.constant 1 : index
    %c0_203 = arith.constant 0 : index
    %c768_204 = arith.constant 768 : index
    %451 = vector.load %arg3[%c1_202, %c0_203, %c768_204] : memref<2x32x2048xbf16, #tpu.memory_space<vmem>>, vector<1x32x256xbf16>
    %452 = vector.shape_cast %451 : vector<1x32x256xbf16> to vector<32x256xbf16>
    %cst_205 = arith.constant dense<0.000000e+00> : vector<16x256xf32>
    %453 = tpu.matmul %406, %452, %cst_205 {dimension_numbers = #tpu.dot_dimension_numbers<[1], [0], [0], [1], [0, 0, 1, 1], [], []>} : vector<16x32xbf16>, vector<32x256xbf16>, vector<16x256xf32> -> vector<16x256xf32>
    %c1_206 = arith.constant 1 : index
    %c0_207 = arith.constant 0 : index
    %c768_208 = arith.constant 768 : index
    %454 = vector.load %arg5[%c1_206, %c0_207, %c768_208] : memref<2x1x2048xf32, #tpu.memory_space<vmem>>, vector<1x1x256xf32>
    %455 = vector.shape_cast %454 : vector<1x1x256xf32> to vector<1x256xf32>
    %456 = vector.broadcast %455 : vector<1x256xf32> to vector<16x256xf32>
    %457 = arith.addf %453, %456 : vector<16x256xf32>
    %cst_209 = arith.constant 0.000000e+00 : f32
    %458 = vector.broadcast %cst_209 : f32 to vector<16x256xf32>
    %459 = arith.maximumf %457, %458 : vector<16x256xf32>
    %460 = arith.truncf %459 : vector<16x256xf32> to vector<16x256xbf16>
    %c1_210 = arith.constant 1 : index
    %c768_211 = arith.constant 768 : index
    %c0_212 = arith.constant 0 : index
    %461 = vector.load %arg4[%c1_210, %c768_211, %c0_212] : memref<2x2048x32xbf16, #tpu.memory_space<vmem>>, vector<1x256x32xbf16>
    %462 = vector.shape_cast %461 : vector<1x256x32xbf16> to vector<256x32xbf16>
    %cst_213 = arith.constant dense<0.000000e+00> : vector<16x32xf32>
    %463 = tpu.matmul %460, %462, %cst_213 {dimension_numbers = #tpu.dot_dimension_numbers<[1], [0], [0], [1], [0, 0, 1, 1], [], []>} : vector<16x256xbf16>, vector<256x32xbf16>, vector<16x32xf32> -> vector<16x32xf32>
    %464 = arith.addf %450, %463 : vector<16x32xf32>
    %c1_214 = arith.constant 1 : index
    %c0_215 = arith.constant 0 : index
    %c1024_216 = arith.constant 1024 : index
    %465 = vector.load %arg3[%c1_214, %c0_215, %c1024_216] : memref<2x32x2048xbf16, #tpu.memory_space<vmem>>, vector<1x32x256xbf16>
    %466 = vector.shape_cast %465 : vector<1x32x256xbf16> to vector<32x256xbf16>
    %cst_217 = arith.constant dense<0.000000e+00> : vector<16x256xf32>
    %467 = tpu.matmul %406, %466, %cst_217 {dimension_numbers = #tpu.dot_dimension_numbers<[1], [0], [0], [1], [0, 0, 1, 1], [], []>} : vector<16x32xbf16>, vector<32x256xbf16>, vector<16x256xf32> -> vector<16x256xf32>
    %c1_218 = arith.constant 1 : index
    %c0_219 = arith.constant 0 : index
    %c1024_220 = arith.constant 1024 : index
    %468 = vector.load %arg5[%c1_218, %c0_219, %c1024_220] : memref<2x1x2048xf32, #tpu.memory_space<vmem>>, vector<1x1x256xf32>
    %469 = vector.shape_cast %468 : vector<1x1x256xf32> to vector<1x256xf32>
    %470 = vector.broadcast %469 : vector<1x256xf32> to vector<16x256xf32>
    %471 = arith.addf %467, %470 : vector<16x256xf32>
    %cst_221 = arith.constant 0.000000e+00 : f32
    %472 = vector.broadcast %cst_221 : f32 to vector<16x256xf32>
    %473 = arith.maximumf %471, %472 : vector<16x256xf32>
    %474 = arith.truncf %473 : vector<16x256xf32> to vector<16x256xbf16>
    %c1_222 = arith.constant 1 : index
    %c1024_223 = arith.constant 1024 : index
    %c0_224 = arith.constant 0 : index
    %475 = vector.load %arg4[%c1_222, %c1024_223, %c0_224] : memref<2x2048x32xbf16, #tpu.memory_space<vmem>>, vector<1x256x32xbf16>
    %476 = vector.shape_cast %475 : vector<1x256x32xbf16> to vector<256x32xbf16>
    %cst_225 = arith.constant dense<0.000000e+00> : vector<16x32xf32>
    %477 = tpu.matmul %474, %476, %cst_225 {dimension_numbers = #tpu.dot_dimension_numbers<[1], [0], [0], [1], [0, 0, 1, 1], [], []>} : vector<16x256xbf16>, vector<256x32xbf16>, vector<16x32xf32> -> vector<16x32xf32>
    %478 = arith.addf %464, %477 : vector<16x32xf32>
    %c1_226 = arith.constant 1 : index
    %c0_227 = arith.constant 0 : index
    %c1280_228 = arith.constant 1280 : index
    %479 = vector.load %arg3[%c1_226, %c0_227, %c1280_228] : memref<2x32x2048xbf16, #tpu.memory_space<vmem>>, vector<1x32x256xbf16>
    %480 = vector.shape_cast %479 : vector<1x32x256xbf16> to vector<32x256xbf16>
    %cst_229 = arith.constant dense<0.000000e+00> : vector<16x256xf32>
    %481 = tpu.matmul %406, %480, %cst_229 {dimension_numbers = #tpu.dot_dimension_numbers<[1], [0], [0], [1], [0, 0, 1, 1], [], []>} : vector<16x32xbf16>, vector<32x256xbf16>, vector<16x256xf32> -> vector<16x256xf32>
    %c1_230 = arith.constant 1 : index
    %c0_231 = arith.constant 0 : index
    %c1280_232 = arith.constant 1280 : index
    %482 = vector.load %arg5[%c1_230, %c0_231, %c1280_232] : memref<2x1x2048xf32, #tpu.memory_space<vmem>>, vector<1x1x256xf32>
    %483 = vector.shape_cast %482 : vector<1x1x256xf32> to vector<1x256xf32>
    %484 = vector.broadcast %483 : vector<1x256xf32> to vector<16x256xf32>
    %485 = arith.addf %481, %484 : vector<16x256xf32>
    %cst_233 = arith.constant 0.000000e+00 : f32
    %486 = vector.broadcast %cst_233 : f32 to vector<16x256xf32>
    %487 = arith.maximumf %485, %486 : vector<16x256xf32>
    %488 = arith.truncf %487 : vector<16x256xf32> to vector<16x256xbf16>
    %c1_234 = arith.constant 1 : index
    %c1280_235 = arith.constant 1280 : index
    %c0_236 = arith.constant 0 : index
    %489 = vector.load %arg4[%c1_234, %c1280_235, %c0_236] : memref<2x2048x32xbf16, #tpu.memory_space<vmem>>, vector<1x256x32xbf16>
    %490 = vector.shape_cast %489 : vector<1x256x32xbf16> to vector<256x32xbf16>
    %cst_237 = arith.constant dense<0.000000e+00> : vector<16x32xf32>
    %491 = tpu.matmul %488, %490, %cst_237 {dimension_numbers = #tpu.dot_dimension_numbers<[1], [0], [0], [1], [0, 0, 1, 1], [], []>} : vector<16x256xbf16>, vector<256x32xbf16>, vector<16x32xf32> -> vector<16x32xf32>
    %492 = arith.addf %478, %491 : vector<16x32xf32>
    %c1_238 = arith.constant 1 : index
    %c0_239 = arith.constant 0 : index
    %c1536_240 = arith.constant 1536 : index
    %493 = vector.load %arg3[%c1_238, %c0_239, %c1536_240] : memref<2x32x2048xbf16, #tpu.memory_space<vmem>>, vector<1x32x256xbf16>
    %494 = vector.shape_cast %493 : vector<1x32x256xbf16> to vector<32x256xbf16>
    %cst_241 = arith.constant dense<0.000000e+00> : vector<16x256xf32>
    %495 = tpu.matmul %406, %494, %cst_241 {dimension_numbers = #tpu.dot_dimension_numbers<[1], [0], [0], [1], [0, 0, 1, 1], [], []>} : vector<16x32xbf16>, vector<32x256xbf16>, vector<16x256xf32> -> vector<16x256xf32>
    %c1_242 = arith.constant 1 : index
    %c0_243 = arith.constant 0 : index
    %c1536_244 = arith.constant 1536 : index
    %496 = vector.load %arg5[%c1_242, %c0_243, %c1536_244] : memref<2x1x2048xf32, #tpu.memory_space<vmem>>, vector<1x1x256xf32>
    %497 = vector.shape_cast %496 : vector<1x1x256xf32> to vector<1x256xf32>
    %498 = vector.broadcast %497 : vector<1x256xf32> to vector<16x256xf32>
    %499 = arith.addf %495, %498 : vector<16x256xf32>
    %cst_245 = arith.constant 0.000000e+00 : f32
    %500 = vector.broadcast %cst_245 : f32 to vector<16x256xf32>
    %501 = arith.maximumf %499, %500 : vector<16x256xf32>
    %502 = arith.truncf %501 : vector<16x256xf32> to vector<16x256xbf16>
    %c1_246 = arith.constant 1 : index
    %c1536_247 = arith.constant 1536 : index
    %c0_248 = arith.constant 0 : index
    %503 = vector.load %arg4[%c1_246, %c1536_247, %c0_248] : memref<2x2048x32xbf16, #tpu.memory_space<vmem>>, vector<1x256x32xbf16>
    %504 = vector.shape_cast %503 : vector<1x256x32xbf16> to vector<256x32xbf16>
    %cst_249 = arith.constant dense<0.000000e+00> : vector<16x32xf32>
    %505 = tpu.matmul %502, %504, %cst_249 {dimension_numbers = #tpu.dot_dimension_numbers<[1], [0], [0], [1], [0, 0, 1, 1], [], []>} : vector<16x256xbf16>, vector<256x32xbf16>, vector<16x32xf32> -> vector<16x32xf32>
    %506 = arith.addf %492, %505 : vector<16x32xf32>
    %c1_250 = arith.constant 1 : index
    %c0_251 = arith.constant 0 : index
    %c1792_252 = arith.constant 1792 : index
    %507 = vector.load %arg3[%c1_250, %c0_251, %c1792_252] : memref<2x32x2048xbf16, #tpu.memory_space<vmem>>, vector<1x32x256xbf16>
    %508 = vector.shape_cast %507 : vector<1x32x256xbf16> to vector<32x256xbf16>
    %cst_253 = arith.constant dense<0.000000e+00> : vector<16x256xf32>
    %509 = tpu.matmul %406, %508, %cst_253 {dimension_numbers = #tpu.dot_dimension_numbers<[1], [0], [0], [1], [0, 0, 1, 1], [], []>} : vector<16x32xbf16>, vector<32x256xbf16>, vector<16x256xf32> -> vector<16x256xf32>
    %c1_254 = arith.constant 1 : index
    %c0_255 = arith.constant 0 : index
    %c1792_256 = arith.constant 1792 : index
    %510 = vector.load %arg5[%c1_254, %c0_255, %c1792_256] : memref<2x1x2048xf32, #tpu.memory_space<vmem>>, vector<1x1x256xf32>
    %511 = vector.shape_cast %510 : vector<1x1x256xf32> to vector<1x256xf32>
    %512 = vector.broadcast %511 : vector<1x256xf32> to vector<16x256xf32>
    %513 = arith.addf %509, %512 : vector<16x256xf32>
    %cst_257 = arith.constant 0.000000e+00 : f32
    %514 = vector.broadcast %cst_257 : f32 to vector<16x256xf32>
    %515 = arith.maximumf %513, %514 : vector<16x256xf32>
    %516 = arith.truncf %515 : vector<16x256xf32> to vector<16x256xbf16>
    %c1_258 = arith.constant 1 : index
    %c1792_259 = arith.constant 1792 : index
    %c0_260 = arith.constant 0 : index
    %517 = vector.load %arg4[%c1_258, %c1792_259, %c0_260] : memref<2x2048x32xbf16, #tpu.memory_space<vmem>>, vector<1x256x32xbf16>
    %518 = vector.shape_cast %517 : vector<1x256x32xbf16> to vector<256x32xbf16>
    %cst_261 = arith.constant dense<0.000000e+00> : vector<16x32xf32>
    %519 = tpu.matmul %516, %518, %cst_261 {dimension_numbers = #tpu.dot_dimension_numbers<[1], [0], [0], [1], [0, 0, 1, 1], [], []>} : vector<16x256xbf16>, vector<256x32xbf16>, vector<16x32xf32> -> vector<16x32xf32>
    %520 = arith.addf %506, %519 : vector<16x32xf32>
    %521 = arith.addf %405, %520 : vector<16x32xf32>
    %cst_262 = arith.constant dense<0.000000e+00> : vector<16xf32>
    %522 = vector.multi_reduction <add>, %521, %cst_262 [1] : vector<16x32xf32> to vector<16xf32>
    %523 = vector.shape_cast %522 : vector<16xf32> to vector<16x1xf32>
    %cst_263 = arith.constant 3.200000e+01 : f32
    %524 = vector.broadcast %cst_263 : f32 to vector<16x1xf32>
    %525 = arith.divf %523, %524 : vector<16x1xf32>
    %526 = vector.broadcast %525 : vector<16x1xf32> to vector<16x32xf32>
    %527 = arith.subf %521, %526 : vector<16x32xf32>
    %528 = vector.broadcast %525 : vector<16x1xf32> to vector<16x32xf32>
    %529 = arith.subf %521, %528 : vector<16x32xf32>
    %530 = arith.mulf %527, %529 : vector<16x32xf32>
    %cst_264 = arith.constant dense<0.000000e+00> : vector<16xf32>
    %531 = vector.multi_reduction <add>, %530, %cst_264 [1] : vector<16x32xf32> to vector<16xf32>
    %532 = vector.shape_cast %531 : vector<16xf32> to vector<16x1xf32>
    %cst_265 = arith.constant 3.200000e+01 : f32
    %533 = vector.broadcast %cst_265 : f32 to vector<16x1xf32>
    %534 = arith.divf %532, %533 : vector<16x1xf32>
    %535 = vector.broadcast %525 : vector<16x1xf32> to vector<16x32xf32>
    %536 = arith.subf %521, %535 : vector<16x32xf32>
    %cst_266 = arith.constant 9.99999974E-6 : f32
    %537 = vector.broadcast %cst_266 : f32 to vector<16x1xf32>
    %538 = arith.addf %534, %537 : vector<16x1xf32>
    %539 = math.rsqrt %538 : vector<16x1xf32>
    %540 = vector.broadcast %539 : vector<16x1xf32> to vector<16x32xf32>
    %541 = arith.mulf %536, %540 : vector<16x32xf32>
    %542 = vector.broadcast %281 : vector<1x32xf32> to vector<16x32xf32>
    %543 = arith.mulf %541, %542 : vector<16x32xf32>
    %544 = vector.broadcast %282 : vector<1x32xf32> to vector<16x32xf32>
    %545 = arith.addf %543, %544 : vector<16x32xf32>
    %546 = vector.extract_strided_slice %545 {offsets = [7, 0], sizes = [1, 32], strides = [1, 1]} : vector<16x32xf32> to vector<1x32xf32>
    %547 = vector.extract_strided_slice %545 {offsets = [15, 0], sizes = [1, 32], strides = [1, 1]} : vector<16x32xf32> to vector<1x32xf32>
    %548 = tpu.concatenate %546, %547 in 0 : vector<1x32xf32>, vector<1x32xf32> -> vector<2x32xf32>
    %c0_267 = arith.constant 0 : index
    %c0_268 = arith.constant 0 : index
    %549 = vector.load %arg7[%c0_267, %c0_268] : memref<32x16xf32, #tpu.memory_space<vmem>>, vector<32x16xf32>
    %cst_269 = arith.constant dense<0.000000e+00> : vector<2x16xf32>
    %550 = tpu.matmul %548, %549, %cst_269 {dimension_numbers = #tpu.dot_dimension_numbers<[1], [0], [0], [1], [0, 0, 1, 1], [], []>} : vector<2x32xf32>, vector<32x16xf32>, vector<2x16xf32> -> vector<2x16xf32>
    %c0_270 = arith.constant 0 : index
    %c0_271 = arith.constant 0 : index
    %551 = vector.load %arg8[%c0_270, %c0_271] : memref<1x16xf32, #tpu.memory_space<vmem>>, vector<1x16xf32>
    %552 = vector.broadcast %551 : vector<1x16xf32> to vector<2x16xf32>
    %553 = arith.addf %550, %552 : vector<2x16xf32>
    %c0_272 = arith.constant 0 : index
    %c0_273 = arith.constant 0 : index
    %554 = vector.load %arg9[%c0_272, %c0_273] : memref<2x16xf32, #tpu.memory_space<vmem>>, vector<2x16xf32>
    tpu.vector_store %arg9[%c0_272, %c0_273], %553 {strides = array<i32>} : memref<2x16xf32, #tpu.memory_space<vmem>>, vector<2x16xf32>,
    return
  }
}

</mosaic_0001>

<llo_original>
// kernel: tpu_custom_call.1
$region0: #{tpu_custom_call.1}
  #allocation0 [shape = 'u32[]', space=smem, size = 0x4, offset = 0x4, fixed_abs, tag = 'smem constant byte address 0x4 - core index']
  #allocation1 [shape = 'u32[144,128]{1,0:T(1,128)}', space=vmem, size = 0x12000, scoped, tag = 'internal scratch']
  %s0 = inlined_call_operand.vmem [shape: f32[2,8,32], index: 0, kind: input, shape index: {}]
  %s1 = inlined_call_operand.vmem [shape: f32[2,32,96], index: 1, kind: input, shape index: {}]
  %s2 = inlined_call_operand.vmem [shape: f32[2,32,32], index: 2, kind: input, shape index: {}]
  %s3 = inlined_call_operand.vmem [shape: bf16[2,32,2048], index: 3, kind: input, shape index: {}]
  %s4 = inlined_call_operand.vmem [shape: bf16[2,2048,32], index: 4, kind: input, shape index: {}]
  %s5 = inlined_call_operand.vmem [shape: f32[2,1,2048], index: 5, kind: input, shape index: {}]
  %s6 = inlined_call_operand.vmem [shape: f32[2,8,128], index: 6, kind: input, shape index: {}]
  %s7 = inlined_call_operand.vmem [shape: f32[32,16], index: 7, kind: input, shape index: {}]
  %s8 = inlined_call_operand.vmem [shape: f32[1,16], index: 8, kind: input, shape index: {}]
  %s9 = inlined_call_operand.hbm [shape: f32[2,16], index: 9, kind: output, shape index: {}]
  %s10 = sld [smem:[#allocation0]]
  $region46: #{tpu_custom_call.1} parent=0
    _
  %s12 = ssub.s32 1, %s10
  %s13 = scalar_select 0, %s12, %s10
  $region1: #{tpu_custom_call.1} parent=0
    #allocation2 [shape = 'u8[1024]{0}', space=vmem, size = 0x400, scoped, tag = 'output window, operand 0, single buffered']
    #allocation3 [shape = 's32[1]{0}', space=sflag, size = 0x4, scoped, tag = 'scoped memory for tpu_custom_call.1']
    %14 = vsyncpa [#allocation3], 0
    // Predicated region
    $region2: #{tpu_custom_call.1} parent=1 // pred_check
      _
    $region3: #{tpu_custom_call.1} parent=1 // pred_check_branch
      %16 = sbr.rel (0) target = $region5
    $region4: #{tpu_custom_call.1} parent=1 // pred_region
      _
    $region5: #{tpu_custom_call.1} parent=1 // pred_fallthru
      _
    // Predicated region
    $region6: #{tpu_custom_call.1} parent=1 // pred_check
      _
    $region7: #{tpu_custom_call.1} parent=1 // pred_check_branch
      %18 = sbr.rel (0) target = $region9
    $region8: #{tpu_custom_call.1} parent=1 // pred_region
      _
    $region9: #{tpu_custom_call.1} parent=1 // pred_fallthru
      _
    // Predicated region
    $region10: #{tpu_custom_call.1} parent=1 // pred_check
      _
    $region11: #{tpu_custom_call.1} parent=1 // pred_check_branch
      %20 = sbr.rel (0) target = $region13
    $region12: #{tpu_custom_call.1} parent=1 // pred_region
      _
    $region13: #{tpu_custom_call.1} parent=1 // pred_fallthru
      _
    // Predicated region
    $region14: #{tpu_custom_call.1} parent=1 // pred_check
      _
    $region15: #{tpu_custom_call.1} parent=1 // pred_check_branch
      %22 = sbr.rel (0) target = $region17
    $region16: #{tpu_custom_call.1} parent=1 // pred_region
      _
    $region17: #{tpu_custom_call.1} parent=1 // pred_fallthru
      _
    // Predicated region
    $region18: #{tpu_custom_call.1} parent=1 // pred_check
      _
    $region19: #{tpu_custom_call.1} parent=1 // pred_check_branch
      %24 = sbr.rel (0) target = $region21
    $region20: #{tpu_custom_call.1} parent=1 // pred_region
      _
    $region21: #{tpu_custom_call.1} parent=1 // pred_fallthru
      _
    // Predicated region
    $region22: #{tpu_custom_call.1} parent=1 // pred_check
      _
    $region23: #{tpu_custom_call.1} parent=1 // pred_check_branch
      %26 = sbr.rel (0) target = $region25
    $region24: #{tpu_custom_call.1} parent=1 // pred_region
      _
    $region25: #{tpu_custom_call.1} parent=1 // pred_fallthru
      _
    // Predicated region
    $region26: #{tpu_custom_call.1} parent=1 // pred_check
      _
    $region27: #{tpu_custom_call.1} parent=1 // pred_check_branch
      %28 = sbr.rel (0) target = $region29
    $region28: #{tpu_custom_call.1} parent=1 // pred_region
      _
    $region29: #{tpu_custom_call.1} parent=1 // pred_fallthru
      _
    // Predicated region
    $region30: #{tpu_custom_call.1} parent=1 // pred_check
      _
    $region31: #{tpu_custom_call.1} parent=1 // pred_check_branch
      %30 = sbr.rel (0) target = $region33
    $region32: #{tpu_custom_call.1} parent=1 // pred_region
      _
    $region33: #{tpu_custom_call.1} parent=1 // pred_fallthru
      _
    // Predicated region
    $region34: #{tpu_custom_call.1} parent=1 // pred_check
      _
    $region35: #{tpu_custom_call.1} parent=1 // pred_check_branch
      %32 = sbr.rel (0) target = $region37
    $region36: #{tpu_custom_call.1} parent=1 // pred_region
      _
    $region37: #{tpu_custom_call.1} parent=1 // pred_fallthru
      _
    %v34 = vld [vmem:[%s0] sm:$0xff]
    %v35 = vld [vmem:[%s0 + $0x8] sm:$0xff]
    %v36 = vld [vmem:[%s6] sm:$0xff]
    %v37 = vld [vmem:[%s1] sm:$0xff]
    %v38 = vld [vmem:[%s1 + $0x8] sm:$0xff]
    %v39 = vld [vmem:[%s1 + $0x10] sm:$0xff]
    %v40 = vld [vmem:[%s1 + $0x18] sm:$0xff]
    %v41 = vlaneseq
    %v42 = vshrl.u32 %v41, 7
    %v43 = vsub.s32 0, %v42
    %v44 = vrot.slane %v36, %v43
    %vm45 = vcmask 261120
    %v47 = vsel %vm45, %v34, 0
    %v50 = vsel %vm45, %v35, 0
    %52 = vmatprep.subr.mxu0 0.0
    %53 = vmatpush1.msra.mxu0 0.0
    %54 = vmatprep.subr.mxu0 0.0
    %55 = vmatpush1.msra.mxu0 0.0
    %56 = vmatprep.subr.mxu0 0.0
    %57 = vmatpush1.msra.mxu0 0.0
    %58 = vmatprep.subr.mxu0 0.0
    %59 = vmatpush1.msra.mxu0 0.0
    %60 = vmatprep.subr.mxu0 0.0
    %61 = vmatpush1.msra.mxu0 0.0
    %62 = vmatprep.subr.mxu0 0.0
    %63 = vmatpush1.msra.mxu0 0.0
    %64 = vmatprep.subr.mxu0 0.0
    %65 = vmatpush1.msra.mxu0 0.0
    %66 = vmatprep.subr.mxu0 0.0
    %67 = vmatpush1.msra.mxu0 0.0
    %68 = vmatprep.subr.mxu0 0.0
    %69 = vmatpush1.msra.mxu0 0.0
    %70 = vmatprep.subr.mxu0 0.0
    %71 = vmatpush1.msra.mxu0 0.0
    %72 = vmatprep.subr.mxu0 0.0
    %73 = vmatpush1.msra.mxu0 0.0
    %74 = vmatprep.subr.mxu0 0.0
    %75 = vmatpush1.msra.mxu0 0.0
    %76 = vmatprep.subr.mxu0 0.0
    %77 = vmatpush1.msra.mxu0 %v40
    %78 = vmatprep.subr.mxu0 0.0
    %79 = vmatpush1.msra.mxu0 %v39
    %80 = vmatprep.subr.mxu0 0.0
    %81 = vmatpush1.msra.mxu0 %v38
    %82 = vmatprep.subr.mxu0 0.0
    %83 = vmatpush1.msra.mxu0 %v37
    %84 = vmatprep.subr.mxu0 0.0
    %85 = vmatpush2.msra.mxu0 0.0
    %86 = vmatprep.subr.mxu0 0.0
    %87 = vmatpush2.msra.mxu0 0.0
    %88 = vmatprep.subr.mxu0 0.0
    %89 = vmatpush2.msra.mxu0 0.0
    %90 = vmatprep.subr.mxu0 0.0
    %91 = vmatpush2.msra.mxu0 0.0
    %92 = vmatprep.subr.mxu0 0.0
    %93 = vmatpush2.msra.mxu0 0.0
    %94 = vmatprep.subr.mxu0 0.0
    %95 = vmatpush2.msra.mxu0 0.0
    %96 = vmatprep.subr.mxu0 0.0
    %97 = vmatpush2.msra.mxu0 0.0
    %98 = vmatprep.subr.mxu0 0.0
    %99 = vmatpush2.msra.mxu0 0.0
    %100 = vmatprep.subr.mxu0 0.0
    %101 = vmatpush2.msra.mxu0 0.0
    %102 = vmatprep.subr.mxu0 0.0
    %103 = vmatpush2.msra.mxu0 0.0
    %104 = vmatprep.subr.mxu0 0.0
    %105 = vmatpush2.msra.mxu0 0.0
    %106 = vmatprep.subr.mxu0 0.0
    %107 = vmatpush2.msra.mxu0 0.0
    %108 = vmatprep.subr.mxu0 0.0
    %109 = vmatpush2.msra.mxu0 0.0
    %110 = vmatprep.subr.mxu0 0.0
    %111 = vmatpush2.msra.mxu0 0.0
    %112 = vmatprep.subr.mxu0 0.0
    %113 = vmatpush2.msra.mxu0 0.0
    %114 = vmatprep.subr.mxu0 0.0
    %115 = vmatpush2.msra.mxu0 0.0
    %116 = vmatprep.mubr.f32.mxu0 0.0
    %117 = vmatmul.mubr.f32.gmra.mxu0 %v47
    %v118 = vpop.f32.mrf.mxu0
    %v119 = vadd.f32 %v44, %v118
    %v120 = vpop.f32.mrf.mxu0
    %121 = vmatprep.mubr.f32.mxu0 0.0
    %122 = vmatmul.mubr.f32.gmra.mxu0 %v50
    %v123 = vpop.f32.mrf.mxu0
    %v124 = vadd.f32 %v44, %v123
    %v125 = vpop.f32.mrf.mxu0
    %126 = vdwg.mxu0
    %128 = vrot.lane.b32.xlu0 %v119, 96
    %v129 = vpop.permute.xlu0 %128
    %vm130 = vcmask 64512
    %v131 = vsel %vm130, %v119, 0
    %v133 = vsel %vm130, %v129, 0
    %135 = vmatprep.subr.mxu0 0.0
    %136 = vmatpush1.xpose.msra.mxu0 0.0
    %137 = vmatprep.subr.mxu0 0.0
    %138 = vmatpush1.xpose.msra.mxu0 0.0
    %139 = vmatprep.subr.mxu0 0.0
    %140 = vmatpush1.xpose.msra.mxu0 0.0
    %141 = vmatprep.subr.mxu0 0.0
    %142 = vmatpush1.xpose.msra.mxu0 0.0
    %143 = vmatprep.subr.mxu0 0.0
    %144 = vmatpush1.xpose.msra.mxu0 0.0
    %145 = vmatprep.subr.mxu0 0.0
    %146 = vmatpush1.xpose.msra.mxu0 0.0
    %147 = vmatprep.subr.mxu0 0.0
    %148 = vmatpush1.xpose.msra.mxu0 0.0
    %149 = vmatprep.subr.mxu0 0.0
    %150 = vmatpush1.xpose.msra.mxu0 0.0
    %151 = vmatprep.subr.mxu0 0.0
    %152 = vmatpush1.xpose.msra.mxu0 0.0
    %153 = vmatprep.subr.mxu0 0.0
    %154 = vmatpush1.xpose.msra.mxu0 0.0
    %155 = vmatprep.subr.mxu0 0.0
    %156 = vmatpush1.xpose.msra.mxu0 0.0
    %157 = vmatprep.subr.mxu0 0.0
    %158 = vmatpush1.xpose.msra.mxu0 0.0
    %159 = vmatprep.subr.mxu0 0.0
    %160 = vmatpush1.xpose.msra.mxu0 0.0
    %161 = vmatprep.subr.mxu0 0.0
    %162 = vmatpush1.xpose.msra.mxu0 0.0
    %163 = vmatprep.subr.mxu0 0.0
    %164 = vmatpush1.xpose.msra.mxu0 0.0
    %165 = vmatprep.subr.mxu0 0.0
    %166 = vmatpush1.xpose.msra.mxu0 %v133
    %167 = vmatprep.subr.mxu0 0.0
    %168 = vmatpush2.xpose.msra.mxu0 0.0
    %169 = vmatprep.subr.mxu0 0.0
    %170 = vmatpush2.xpose.msra.mxu0 0.0
    %171 = vmatprep.subr.mxu0 0.0
    %172 = vmatpush2.xpose.msra.mxu0 0.0
    %173 = vmatprep.subr.mxu0 0.0
    %174 = vmatpush2.xpose.msra.mxu0 0.0
    %175 = vmatprep.subr.mxu0 0.0
    %176 = vmatpush2.xpose.msra.mxu0 0.0
    %177 = vmatprep.subr.mxu0 0.0
    %178 = vmatpush2.xpose.msra.mxu0 0.0
    %179 = vmatprep.subr.mxu0 0.0
    %180 = vmatpush2.xpose.msra.mxu0 0.0
    %181 = vmatprep.subr.mxu0 0.0
    %182 = vmatpush2.xpose.msra.mxu0 0.0
    %183 = vmatprep.subr.mxu0 0.0
    %184 = vmatpush2.xpose.msra.mxu0 0.0
    %185 = vmatprep.subr.mxu0 0.0
    %186 = vmatpush2.xpose.msra.mxu0 0.0
    %187 = vmatprep.subr.mxu0 0.0
    %188 = vmatpush2.xpose.msra.mxu0 0.0
    %189 = vmatprep.subr.mxu0 0.0
    %190 = vmatpush2.xpose.msra.mxu0 0.0
    %191 = vmatprep.subr.mxu0 0.0
    %192 = vmatpush2.xpose.msra.mxu0 0.0
    %193 = vmatprep.subr.mxu0 0.0
    %194 = vmatpush2.xpose.msra.mxu0 0.0
    %195 = vmatprep.subr.mxu0 0.0
    %196 = vmatpush2.xpose.msra.mxu0 0.0
    %197 = vmatprep.subr.mxu0 0.0
    %198 = vmatpush2.xpose.msra.mxu0 0.0
    %199 = vmatprep.mubr.f32.mxu0 0.0
    %200 = vmatmul.mubr.f32.gmra.mxu0 %v131
    %v201 = vpop.f32.mrf.mxu0
    %v202 = vadd.f32 0.0, %v201
    %v203 = vpop.f32.mrf.mxu0
    %204 = vdwg.mxu0
    %206 = vrot.lane.b32.xlu0 %v124, 96
    %v207 = vpop.permute.xlu0 %206
    %v208 = vsel %vm130, %v124, 0
    %v210 = vsel %vm130, %v207, 0
    %212 = vmatprep.subr.mxu0 0.0
    %213 = vmatpush1.xpose.msra.mxu0 0.0
    %214 = vmatprep.subr.mxu0 0.0
    %215 = vmatpush1.xpose.msra.mxu0 0.0
    %216 = vmatprep.subr.mxu0 0.0
    %217 = vmatpush1.xpose.msra.mxu0 0.0
    %218 = vmatprep.subr.mxu0 0.0
    %219 = vmatpush1.xpose.msra.mxu0 0.0
    %220 = vmatprep.subr.mxu0 0.0
    %221 = vmatpush1.xpose.msra.mxu0 0.0
    %222 = vmatprep.subr.mxu0 0.0
    %223 = vmatpush1.xpose.msra.mxu0 0.0
    %224 = vmatprep.subr.mxu0 0.0
    %225 = vmatpush1.xpose.msra.mxu0 0.0
    %226 = vmatprep.subr.mxu0 0.0
    %227 = vmatpush1.xpose.msra.mxu0 0.0
    %228 = vmatprep.subr.mxu0 0.0
    %229 = vmatpush1.xpose.msra.mxu0 0.0
    %230 = vmatprep.subr.mxu0 0.0
    %231 = vmatpush1.xpose.msra.mxu0 0.0
    %232 = vmatprep.subr.mxu0 0.0
    %233 = vmatpush1.xpose.msra.mxu0 0.0
    %234 = vmatprep.subr.mxu0 0.0
    %235 = vmatpush1.xpose.msra.mxu0 0.0
    %236 = vmatprep.subr.mxu0 0.0
    %237 = vmatpush1.xpose.msra.mxu0 0.0
    %238 = vmatprep.subr.mxu0 0.0
    %239 = vmatpush1.xpose.msra.mxu0 0.0
    %240 = vmatprep.subr.mxu0 0.0
    %241 = vmatpush1.xpose.msra.mxu0 0.0
    %242 = vmatprep.subr.mxu0 0.0
    %243 = vmatpush1.xpose.msra.mxu0 %v210
    %244 = vmatprep.subr.mxu0 0.0
    %245 = vmatpush2.xpose.msra.mxu0 0.0
    %246 = vmatprep.subr.mxu0 0.0
    %247 = vmatpush2.xpose.msra.mxu0 0.0
    %248 = vmatprep.subr.mxu0 0.0
    %249 = vmatpush2.xpose.msra.mxu0 0.0
    %250 = vmatprep.subr.mxu0 0.0
    %251 = vmatpush2.xpose.msra.mxu0 0.0
    %252 = vmatprep.subr.mxu0 0.0
    %253 = vmatpush2.xpose.msra.mxu0 0.0
    %254 = vmatprep.subr.mxu0 0.0
    %255 = vmatpush2.xpose.msra.mxu0 0.0
    %256 = vmatprep.subr.mxu0 0.0
    %257 = vmatpush2.xpose.msra.mxu0 0.0
    %258 = vmatprep.subr.mxu0 0.0
    %259 = vmatpush2.xpose.msra.mxu0 0.0
    %260 = vmatprep.subr.mxu0 0.0
    %261 = vmatpush2.xpose.msra.mxu0 0.0
    %262 = vmatprep.subr.mxu0 0.0
    %263 = vmatpush2.xpose.msra.mxu0 0.0
    %264 = vmatprep.subr.mxu0 0.0
    %265 = vmatpush2.xpose.msra.mxu0 0.0
    %266 = vmatprep.subr.mxu0 0.0
    %267 = vmatpush2.xpose.msra.mxu0 0.0
    %268 = vmatprep.subr.mxu0 0.0
    %269 = vmatpush2.xpose.msra.mxu0 0.0
    %270 = vmatprep.subr.mxu0 0.0
    %271 = vmatpush2.xpose.msra.mxu0 0.0
    %272 = vmatprep.subr.mxu0 0.0
    %273 = vmatpush2.xpose.msra.mxu0 0.0
    %274 = vmatprep.subr.mxu0 0.0
    %275 = vmatpush2.xpose.msra.mxu0 0.0
    %276 = vmatprep.mubr.f32.mxu0 0.0
    %277 = vmatmul.mubr.f32.gmra.mxu0 %v208
    %v278 = vpop.f32.mrf.mxu0
    %v279 = vadd.f32 0.0, %v278
    %v280 = vpop.f32.mrf.mxu0
    %281 = vdwg.mxu0
    %v282 = vmul.f32 %v202, 0.35355338
    %v283 = vmul.f32 %v279, 0.35355338
    %v284 = vsel %vm130, %v282, -inf
    %285 = vmax.xlane.f32.xlu0 %v284
    %v286 = vpop.xlane.xlu0 %285
    %v287 = vsel %vm130, %v283, -inf
    %288 = vmax.xlane.f32.xlu0 %v287
    %v289 = vpop.xlane.xlu0 %288
    %v290 = vsub.f32 %v282, %v286
    %v291 = vsub.f32 %v283, %v289
    %v292 = vmul.f32 %v290, 1.442695
    %v293 = vpow.pop %v292
    %v294 = vmul.f32 %v291, 1.442695
    %v295 = vpow.pop %v294
    %v296 = vsel %vm130, %v293, 0.0
    %297 = vadd.xlane.f32.xlu0 %v296
    %v298 = vpop.xlane.xlu0 %297
    %v299 = vsel %vm130, %v295, 0.0
    %300 = vadd.xlane.f32.xlu0 %v299
    %v301 = vpop.xlane.xlu0 %300
    %v302 = vrcp.pop %v298
    %v303 = vrcp.pop %v301
    %v304 = vmul.f32 %v293, %v302
    %v305 = vmul.f32 %v295, %v303
    %306 = vrot.lane.b32.xlu0 %v119, 64
    %v307 = vpop.permute.xlu0 %306
    %v310 = vsel %vm130, %v304, 0
    %312 = vmatprep.subr.mxu0 0.0
    %313 = vmatpush1.msra.mxu0 0.0
    %314 = vmatprep.subr.mxu0 0.0
    %315 = vmatpush1.msra.mxu0 0.0
    %316 = vmatprep.subr.mxu0 0.0
    %317 = vmatpush1.msra.mxu0 0.0
    %318 = vmatprep.subr.mxu0 0.0
    %319 = vmatpush1.msra.mxu0 0.0
    %320 = vmatprep.subr.mxu0 0.0
    %321 = vmatpush1.msra.mxu0 0.0
    %322 = vmatprep.subr.mxu0 0.0
    %323 = vmatpush1.msra.mxu0 0.0
    %324 = vmatprep.subr.mxu0 0.0
    %325 = vmatpush1.msra.mxu0 0.0
    %326 = vmatprep.subr.mxu0 0.0
    %327 = vmatpush1.msra.mxu0 0.0
    %328 = vmatprep.subr.mxu0 0.0
    %329 = vmatpush1.msra.mxu0 0.0
    %330 = vmatprep.subr.mxu0 0.0
    %331 = vmatpush1.msra.mxu0 0.0
    %332 = vmatprep.subr.mxu0 0.0
    %333 = vmatpush1.msra.mxu0 0.0
    %334 = vmatprep.subr.mxu0 0.0
    %335 = vmatpush1.msra.mxu0 0.0
    %336 = vmatprep.subr.mxu0 0.0
    %337 = vmatpush1.msra.mxu0 0.0
    %338 = vmatprep.subr.mxu0 0.0
    %339 = vmatpush1.msra.mxu0 0.0
    %340 = vmatprep.subr.mxu0 0.0
    %341 = vmatpush1.msra.mxu0 0.0
    %342 = vmatprep.subr.mxu0 0.0
    %343 = vmatpush1.msra.mxu0 %v307
    %344 = vmatprep.subr.mxu0 0.0
    %345 = vmatpush2.msra.mxu0 0.0
    %346 = vmatprep.subr.mxu0 0.0
    %347 = vmatpush2.msra.mxu0 0.0
    %348 = vmatprep.subr.mxu0 0.0
    %349 = vmatpush2.msra.mxu0 0.0
    %350 = vmatprep.subr.mxu0 0.0
    %351 = vmatpush2.msra.mxu0 0.0
    %352 = vmatprep.subr.mxu0 0.0
    %353 = vmatpush2.msra.mxu0 0.0
    %354 = vmatprep.subr.mxu0 0.0
    %355 = vmatpush2.msra.mxu0 0.0
    %356 = vmatprep.subr.mxu0 0.0
    %357 = vmatpush2.msra.mxu0 0.0
    %358 = vmatprep.subr.mxu0 0.0
    %359 = vmatpush2.msra.mxu0 0.0
    %360 = vmatprep.subr.mxu0 0.0
    %361 = vmatpush2.msra.mxu0 0.0
    %362 = vmatprep.subr.mxu0 0.0
    %363 = vmatpush2.msra.mxu0 0.0
    %364 = vmatprep.subr.mxu0 0.0
    %365 = vmatpush2.msra.mxu0 0.0
    %366 = vmatprep.subr.mxu0 0.0
    %367 = vmatpush2.msra.mxu0 0.0
    %368 = vmatprep.subr.mxu0 0.0
    %369 = vmatpush2.msra.mxu0 0.0
    %370 = vmatprep.subr.mxu0 0.0
    %371 = vmatpush2.msra.mxu0 0.0
    %372 = vmatprep.subr.mxu0 0.0
    %373 = vmatpush2.msra.mxu0 0.0
    %374 = vmatprep.subr.mxu0 0.0
    %375 = vmatpush2.msra.mxu0 0.0
    %376 = vmatprep.mubr.f32.mxu0 0.0
    %377 = vmatmul.mubr.f32.gmra.mxu0 %v310
    %v378 = vpop.f32.mrf.mxu0
    %v379 = vadd.f32 0.0, %v378
    %v380 = vpop.f32.mrf.mxu0
    %381 = vdwg.mxu0
    %382 = vrot.lane.b32.xlu0 %v124, 64
    %v383 = vpop.permute.xlu0 %382
    %v386 = vsel %vm130, %v305, 0
    %388 = vmatprep.subr.mxu0 0.0
    %389 = vmatpush1.msra.mxu0 0.0
    %390 = vmatprep.subr.mxu0 0.0
    %391 = vmatpush1.msra.mxu0 0.0
    %392 = vmatprep.subr.mxu0 0.0
    %393 = vmatpush1.msra.mxu0 0.0
    %394 = vmatprep.subr.mxu0 0.0
    %395 = vmatpush1.msra.mxu0 0.0
    %396 = vmatprep.subr.mxu0 0.0
    %397 = vmatpush1.msra.mxu0 0.0
    %398 = vmatprep.subr.mxu0 0.0
    %399 = vmatpush1.msra.mxu0 0.0
    %400 = vmatprep.subr.mxu0 0.0
    %401 = vmatpush1.msra.mxu0 0.0
    %402 = vmatprep.subr.mxu0 0.0
    %403 = vmatpush1.msra.mxu0 0.0
    %404 = vmatprep.subr.mxu0 0.0
    %405 = vmatpush1.msra.mxu0 0.0
    %406 = vmatprep.subr.mxu0 0.0
    %407 = vmatpush1.msra.mxu0 0.0
    %408 = vmatprep.subr.mxu0 0.0
    %409 = vmatpush1.msra.mxu0 0.0
    %410 = vmatprep.subr.mxu0 0.0
    %411 = vmatpush1.msra.mxu0 0.0
    %412 = vmatprep.subr.mxu0 0.0
    %413 = vmatpush1.msra.mxu0 0.0
    %414 = vmatprep.subr.mxu0 0.0
    %415 = vmatpush1.msra.mxu0 0.0
    %416 = vmatprep.subr.mxu0 0.0
    %417 = vmatpush1.msra.mxu0 0.0
    %418 = vmatprep.subr.mxu0 0.0
    %419 = vmatpush1.msra.mxu0 %v383
    %420 = vmatprep.subr.mxu0 0.0
    %421 = vmatpush2.msra.mxu0 0.0
    %422 = vmatprep.subr.mxu0 0.0
    %423 = vmatpush2.msra.mxu0 0.0
    %424 = vmatprep.subr.mxu0 0.0
    %425 = vmatpush2.msra.mxu0 0.0
    %426 = vmatprep.subr.mxu0 0.0
    %427 = vmatpush2.msra.mxu0 0.0
    %428 = vmatprep.subr.mxu0 0.0
    %429 = vmatpush2.msra.mxu0 0.0
    %430 = vmatprep.subr.mxu0 0.0
    %431 = vmatpush2.msra.mxu0 0.0
    %432 = vmatprep.subr.mxu0 0.0
    %433 = vmatpush2.msra.mxu0 0.0
    %434 = vmatprep.subr.mxu0 0.0
    %435 = vmatpush2.msra.mxu0 0.0
    %436 = vmatprep.subr.mxu0 0.0
    %437 = vmatpush2.msra.mxu0 0.0
    %438 = vmatprep.subr.mxu0 0.0
    %439 = vmatpush2.msra.mxu0 0.0
    %440 = vmatprep.subr.mxu0 0.0
    %441 = vmatpush2.msra.mxu0 0.0
    %442 = vmatprep.subr.mxu0 0.0
    %443 = vmatpush2.msra.mxu0 0.0
    %444 = vmatprep.subr.mxu0 0.0
    %445 = vmatpush2.msra.mxu0 0.0
    %446 = vmatprep.subr.mxu0 0.0
    %447 = vmatpush2.msra.mxu0 0.0
    %448 = vmatprep.subr.mxu0 0.0
    %449 = vmatpush2.msra.mxu0 0.0
    %450 = vmatprep.subr.mxu0 0.0
    %451 = vmatpush2.msra.mxu0 0.0
    %452 = vmatprep.mubr.f32.mxu0 0.0
    %453 = vmatmul.mubr.f32.gmra.mxu0 %v386
    %v454 = vpop.f32.mrf.mxu0
    %v455 = vadd.f32 0.0, %v454
    %v456 = vpop.f32.mrf.mxu0
    %457 = vdwg.mxu0
    %458 = vrot.lane.b32.xlu0 %v119, 120
    %v459 = vpop.permute.xlu0 %458
    %460 = vrot.lane.b32.xlu0 %v119, 88
    %v461 = vpop.permute.xlu0 %460
    %v462 = vsel %vm130, %v459, 0
    %v464 = vsel %vm130, %v461, 0
    %466 = vmatprep.subr.mxu0 0.0
    %467 = vmatpush1.xpose.msra.mxu0 0.0
    %468 = vmatprep.subr.mxu0 0.0
    %469 = vmatpush1.xpose.msra.mxu0 0.0
    %470 = vmatprep.subr.mxu0 0.0
    %471 = vmatpush1.xpose.msra.mxu0 0.0
    %472 = vmatprep.subr.mxu0 0.0
    %473 = vmatpush1.xpose.msra.mxu0 0.0
    %474 = vmatprep.subr.mxu0 0.0
    %475 = vmatpush1.xpose.msra.mxu0 0.0
    %476 = vmatprep.subr.mxu0 0.0
    %477 = vmatpush1.xpose.msra.mxu0 0.0
    %478 = vmatprep.subr.mxu0 0.0
    %479 = vmatpush1.xpose.msra.mxu0 0.0
    %480 = vmatprep.subr.mxu0 0.0
    %481 = vmatpush1.xpose.msra.mxu0 0.0
    %482 = vmatprep.subr.mxu0 0.0
    %483 = vmatpush1.xpose.msra.mxu0 0.0
    %484 = vmatprep.subr.mxu0 0.0
    %485 = vmatpush1.xpose.msra.mxu0 0.0
    %486 = vmatprep.subr.mxu0 0.0
    %487 = vmatpush1.xpose.msra.mxu0 0.0
    %488 = vmatprep.subr.mxu0 0.0
    %489 = vmatpush1.xpose.msra.mxu0 0.0
    %490 = vmatprep.subr.mxu0 0.0
    %491 = vmatpush1.xpose.msra.mxu0 0.0
    %492 = vmatprep.subr.mxu0 0.0
    %493 = vmatpush1.xpose.msra.mxu0 0.0
    %494 = vmatprep.subr.mxu0 0.0
    %495 = vmatpush1.xpose.msra.mxu0 0.0
    %496 = vmatprep.subr.mxu0 0.0
    %497 = vmatpush1.xpose.msra.mxu0 %v464
    %498 = vmatprep.subr.mxu0 0.0
    %499 = vmatpush2.xpose.msra.mxu0 0.0
    %500 = vmatprep.subr.mxu0 0.0
    %501 = vmatpush2.xpose.msra.mxu0 0.0
    %502 = vmatprep.subr.mxu0 0.0
    %503 = vmatpush2.xpose.msra.mxu0 0.0
    %504 = vmatprep.subr.mxu0 0.0
    %505 = vmatpush2.xpose.msra.mxu0 0.0
    %506 = vmatprep.subr.mxu0 0.0
    %507 = vmatpush2.xpose.msra.mxu0 0.0
    %508 = vmatprep.subr.mxu0 0.0
    %509 = vmatpush2.xpose.msra.mxu0 0.0
    %510 = vmatprep.subr.mxu0 0.0
    %511 = vmatpush2.xpose.msra.mxu0 0.0
    %512 = vmatprep.subr.mxu0 0.0
    %513 = vmatpush2.xpose.msra.mxu0 0.0
    %514 = vmatprep.subr.mxu0 0.0
    %515 = vmatpush2.xpose.msra.mxu0 0.0
    %516 = vmatprep.subr.mxu0 0.0
    %517 = vmatpush2.xpose.msra.mxu0 0.0
    %518 = vmatprep.subr.mxu0 0.0
    %519 = vmatpush2.xpose.msra.mxu0 0.0
    %520 = vmatprep.subr.mxu0 0.0
    %521 = vmatpush2.xpose.msra.mxu0 0.0
    %522 = vmatprep.subr.mxu0 0.0
    %523 = vmatpush2.xpose.msra.mxu0 0.0
    %524 = vmatprep.subr.mxu0 0.0
    %525 = vmatpush2.xpose.msra.mxu0 0.0
    %526 = vmatprep.subr.mxu0 0.0
    %527 = vmatpush2.xpose.msra.mxu0 0.0
    %528 = vmatprep.subr.mxu0 0.0
    %529 = vmatpush2.xpose.msra.mxu0 0.0
    %530 = vmatprep.mubr.f32.mxu0 0.0
    %531 = vmatmul.mubr.f32.gmra.mxu0 %v462
    %v532 = vpop.f32.mrf.mxu0
    %v533 = vadd.f32 0.0, %v532
    %v534 = vpop.f32.mrf.mxu0
    %535 = vdwg.mxu0
    %536 = vrot.lane.b32.xlu0 %v124, 120
    %v537 = vpop.permute.xlu0 %536
    %538 = vrot.lane.b32.xlu0 %v124, 88
    %v539 = vpop.permute.xlu0 %538
    %v540 = vsel %vm130, %v537, 0
    %v542 = vsel %vm130, %v539, 0
    %544 = vmatprep.subr.mxu0 0.0
    %545 = vmatpush1.xpose.msra.mxu0 0.0
    %546 = vmatprep.subr.mxu0 0.0
    %547 = vmatpush1.xpose.msra.mxu0 0.0
    %548 = vmatprep.subr.mxu0 0.0
    %549 = vmatpush1.xpose.msra.mxu0 0.0
    %550 = vmatprep.subr.mxu0 0.0
    %551 = vmatpush1.xpose.msra.mxu0 0.0
    %552 = vmatprep.subr.mxu0 0.0
    %553 = vmatpush1.xpose.msra.mxu0 0.0
    %554 = vmatprep.subr.mxu0 0.0
    %555 = vmatpush1.xpose.msra.mxu0 0.0
    %556 = vmatprep.subr.mxu0 0.0
    %557 = vmatpush1.xpose.msra.mxu0 0.0
    %558 = vmatprep.subr.mxu0 0.0
    %559 = vmatpush1.xpose.msra.mxu0 0.0
    %560 = vmatprep.subr.mxu0 0.0
    %561 = vmatpush1.xpose.msra.mxu0 0.0
    %562 = vmatprep.subr.mxu0 0.0
    %563 = vmatpush1.xpose.msra.mxu0 0.0
    %564 = vmatprep.subr.mxu0 0.0
    %565 = vmatpush1.xpose.msra.mxu0 0.0
    %566 = vmatprep.subr.mxu0 0.0
    %567 = vmatpush1.xpose.msra.mxu0 0.0
    %568 = vmatprep.subr.mxu0 0.0
    %569 = vmatpush1.xpose.msra.mxu0 0.0
    %570 = vmatprep.subr.mxu0 0.0
    %571 = vmatpush1.xpose.msra.mxu0 0.0
    %572 = vmatprep.subr.mxu0 0.0
    %573 = vmatpush1.xpose.msra.mxu0 0.0
    %574 = vmatprep.subr.mxu0 0.0
    %575 = vmatpush1.xpose.msra.mxu0 %v542
    %576 = vmatprep.subr.mxu0 0.0
    %577 = vmatpush2.xpose.msra.mxu0 0.0
    %578 = vmatprep.subr.mxu0 0.0
    %579 = vmatpush2.xpose.msra.mxu0 0.0
    %580 = vmatprep.subr.mxu0 0.0
    %581 = vmatpush2.xpose.msra.mxu0 0.0
    %582 = vmatprep.subr.mxu0 0.0
    %583 = vmatpush2.xpose.msra.mxu0 0.0
    %584 = vmatprep.subr.mxu0 0.0
    %585 = vmatpush2.xpose.msra.mxu0 0.0
    %586 = vmatprep.subr.mxu0 0.0
    %587 = vmatpush2.xpose.msra.mxu0 0.0
    %588 = vmatprep.subr.mxu0 0.0
    %589 = vmatpush2.xpose.msra.mxu0 0.0
    %590 = vmatprep.subr.mxu0 0.0
    %591 = vmatpush2.xpose.msra.mxu0 0.0
    %592 = vmatprep.subr.mxu0 0.0
    %593 = vmatpush2.xpose.msra.mxu0 0.0
    %594 = vmatprep.subr.mxu0 0.0
    %595 = vmatpush2.xpose.msra.mxu0 0.0
    %596 = vmatprep.subr.mxu0 0.0
    %597 = vmatpush2.xpose.msra.mxu0 0.0
    %598 = vmatprep.subr.mxu0 0.0
    %599 = vmatpush2.xpose.msra.mxu0 0.0
    %600 = vmatprep.subr.mxu0 0.0
    %601 = vmatpush2.xpose.msra.mxu0 0.0
    %602 = vmatprep.subr.mxu0 0.0
    %603 = vmatpush2.xpose.msra.mxu0 0.0
    %604 = vmatprep.subr.mxu0 0.0
    %605 = vmatpush2.xpose.msra.mxu0 0.0
    %606 = vmatprep.subr.mxu0 0.0
    %607 = vmatpush2.xpose.msra.mxu0 0.0
    %608 = vmatprep.mubr.f32.mxu0 0.0
    %609 = vmatmul.mubr.f32.gmra.mxu0 %v540
    %v610 = vpop.f32.mrf.mxu0
    %v611 = vadd.f32 0.0, %v610
    %v612 = vpop.f32.mrf.mxu0
    %613 = vdwg.mxu0
    %v614 = vmul.f32 %v533, 0.35355338
    %v615 = vmul.f32 %v611, 0.35355338
    %v616 = vsel %vm130, %v614, -inf
    %617 = vmax.xlane.f32.xlu0 %v616
    %v618 = vpop.xlane.xlu0 %617
    %v619 = vsel %vm130, %v615, -inf
    %620 = vmax.xlane.f32.xlu0 %v619
    %v621 = vpop.xlane.xlu0 %620
    %v622 = vsub.f32 %v614, %v618
    %v623 = vsub.f32 %v615, %v621
    %v624 = vmul.f32 %v622, 1.442695
    %v625 = vpow.pop %v624
    %v626 = vmul.f32 %v623, 1.442695
    %v627 = vpow.pop %v626
    %v628 = vsel %vm130, %v625, 0.0
    %629 = vadd.xlane.f32.xlu0 %v628
    %v630 = vpop.xlane.xlu0 %629
    %v631 = vsel %vm130, %v627, 0.0
    %632 = vadd.xlane.f32.xlu0 %v631
    %v633 = vpop.xlane.xlu0 %632
    %v634 = vrcp.pop %v630
    %v635 = vrcp.pop %v633
    %v636 = vmul.f32 %v625, %v634
    %v637 = vmul.f32 %v627, %v635
    %638 = vrot.lane.b32.xlu0 %v119, 56
    %v639 = vpop.permute.xlu0 %638
    %v642 = vsel %vm130, %v636, 0
    %644 = vmatprep.subr.mxu0 0.0
    %645 = vmatpush1.msra.mxu0 0.0
    %646 = vmatprep.subr.mxu0 0.0
    %647 = vmatpush1.msra.mxu0 0.0
    %648 = vmatprep.subr.mxu0 0.0
    %649 = vmatpush1.msra.mxu0 0.0
    %650 = vmatprep.subr.mxu0 0.0
    %651 = vmatpush1.msra.mxu0 0.0
    %652 = vmatprep.subr.mxu0 0.0
    %653 = vmatpush1.msra.mxu0 0.0
    %654 = vmatprep.subr.mxu0 0.0
    %655 = vmatpush1.msra.mxu0 0.0
    %656 = vmatprep.subr.mxu0 0.0
    %657 = vmatpush1.msra.mxu0 0.0
    %658 = vmatprep.subr.mxu0 0.0
    %659 = vmatpush1.msra.mxu0 0.0
    %660 = vmatprep.subr.mxu0 0.0
    %661 = vmatpush1.msra.mxu0 0.0
    %662 = vmatprep.subr.mxu0 0.0
    %663 = vmatpush1.msra.mxu0 0.0
    %664 = vmatprep.subr.mxu0 0.0
    %665 = vmatpush1.msra.mxu0 0.0
    %666 = vmatprep.subr.mxu0 0.0
    %667 = vmatpush1.msra.mxu0 0.0
    %668 = vmatprep.subr.mxu0 0.0
    %669 = vmatpush1.msra.mxu0 0.0
    %670 = vmatprep.subr.mxu0 0.0
    %671 = vmatpush1.msra.mxu0 0.0
    %672 = vmatprep.subr.mxu0 0.0
    %673 = vmatpush1.msra.mxu0 0.0
    %674 = vmatprep.subr.mxu0 0.0
    %675 = vmatpush1.msra.mxu0 %v639
    %676 = vmatprep.subr.mxu0 0.0
    %677 = vmatpush2.msra.mxu0 0.0
    %678 = vmatprep.subr.mxu0 0.0
    %679 = vmatpush2.msra.mxu0 0.0
    %680 = vmatprep.subr.mxu0 0.0
    %681 = vmatpush2.msra.mxu0 0.0
    %682 = vmatprep.subr.mxu0 0.0
    %683 = vmatpush2.msra.mxu0 0.0
    %684 = vmatprep.subr.mxu0 0.0
    %685 = vmatpush2.msra.mxu0 0.0
    %686 = vmatprep.subr.mxu0 0.0
    %687 = vmatpush2.msra.mxu0 0.0
    %688 = vmatprep.subr.mxu0 0.0
    %689 = vmatpush2.msra.mxu0 0.0
    %690 = vmatprep.subr.mxu0 0.0
    %691 = vmatpush2.msra.mxu0 0.0
    %692 = vmatprep.subr.mxu0 0.0
    %693 = vmatpush2.msra.mxu0 0.0
    %694 = vmatprep.subr.mxu0 0.0
    %695 = vmatpush2.msra.mxu0 0.0
    %696 = vmatprep.subr.mxu0 0.0
    %697 = vmatpush2.msra.mxu0 0.0
    %698 = vmatprep.subr.mxu0 0.0
    %699 = vmatpush2.msra.mxu0 0.0
    %700 = vmatprep.subr.mxu0 0.0
    %701 = vmatpush2.msra.mxu0 0.0
    %702 = vmatprep.subr.mxu0 0.0
    %703 = vmatpush2.msra.mxu0 0.0
    %704 = vmatprep.subr.mxu0 0.0
    %705 = vmatpush2.msra.mxu0 0.0
    %706 = vmatprep.subr.mxu0 0.0
    %707 = vmatpush2.msra.mxu0 0.0
    %708 = vmatprep.mubr.f32.mxu0 0.0
    %709 = vmatmul.mubr.f32.gmra.mxu0 %v642
    %v710 = vpop.f32.mrf.mxu0
    %v711 = vadd.f32 0.0, %v710
    %v712 = vpop.f32.mrf.mxu0
    %713 = vdwg.mxu0
    %714 = vrot.lane.b32.xlu0 %v124, 56
    %v715 = vpop.permute.xlu0 %714
    %v718 = vsel %vm130, %v637, 0
    %720 = vmatprep.subr.mxu0 0.0
    %721 = vmatpush1.msra.mxu0 0.0
    %722 = vmatprep.subr.mxu0 0.0
    %723 = vmatpush1.msra.mxu0 0.0
    %724 = vmatprep.subr.mxu0 0.0
    %725 = vmatpush1.msra.mxu0 0.0
    %726 = vmatprep.subr.mxu0 0.0
    %727 = vmatpush1.msra.mxu0 0.0
    %728 = vmatprep.subr.mxu0 0.0
    %729 = vmatpush1.msra.mxu0 0.0
    %730 = vmatprep.subr.mxu0 0.0
    %731 = vmatpush1.msra.mxu0 0.0
    %732 = vmatprep.subr.mxu0 0.0
    %733 = vmatpush1.msra.mxu0 0.0
    %734 = vmatprep.subr.mxu0 0.0
    %735 = vmatpush1.msra.mxu0 0.0
    %736 = vmatprep.subr.mxu0 0.0
    %737 = vmatpush1.msra.mxu0 0.0
    %738 = vmatprep.subr.mxu0 0.0
    %739 = vmatpush1.msra.mxu0 0.0
    %740 = vmatprep.subr.mxu0 0.0
    %741 = vmatpush1.msra.mxu0 0.0
    %742 = vmatprep.subr.mxu0 0.0
    %743 = vmatpush1.msra.mxu0 0.0
    %744 = vmatprep.subr.mxu0 0.0
    %745 = vmatpush1.msra.mxu0 0.0
    %746 = vmatprep.subr.mxu0 0.0
    %747 = vmatpush1.msra.mxu0 0.0
    %748 = vmatprep.subr.mxu0 0.0
    %749 = vmatpush1.msra.mxu0 0.0
    %750 = vmatprep.subr.mxu0 0.0
    %751 = vmatpush1.msra.mxu0 %v715
    %752 = vmatprep.subr.mxu0 0.0
    %753 = vmatpush2.msra.mxu0 0.0
    %754 = vmatprep.subr.mxu0 0.0
    %755 = vmatpush2.msra.mxu0 0.0
    %756 = vmatprep.subr.mxu0 0.0
    %757 = vmatpush2.msra.mxu0 0.0
    %758 = vmatprep.subr.mxu0 0.0
    %759 = vmatpush2.msra.mxu0 0.0
    %760 = vmatprep.subr.mxu0 0.0
    %761 = vmatpush2.msra.mxu0 0.0
    %762 = vmatprep.subr.mxu0 0.0
    %763 = vmatpush2.msra.mxu0 0.0
    %764 = vmatprep.subr.mxu0 0.0
    %765 = vmatpush2.msra.mxu0 0.0
    %766 = vmatprep.subr.mxu0 0.0
    %767 = vmatpush2.msra.mxu0 0.0
    %768 = vmatprep.subr.mxu0 0.0
    %769 = vmatpush2.msra.mxu0 0.0
    %770 = vmatprep.subr.mxu0 0.0
    %771 = vmatpush2.msra.mxu0 0.0
    %772 = vmatprep.subr.mxu0 0.0
    %773 = vmatpush2.msra.mxu0 0.0
    %774 = vmatprep.subr.mxu0 0.0
    %775 = vmatpush2.msra.mxu0 0.0
    %776 = vmatprep.subr.mxu0 0.0
    %777 = vmatpush2.msra.mxu0 0.0
    %778 = vmatprep.subr.mxu0 0.0
    %779 = vmatpush2.msra.mxu0 0.0
    %780 = vmatprep.subr.mxu0 0.0
    %781 = vmatpush2.msra.mxu0 0.0
    %782 = vmatprep.subr.mxu0 0.0
    %783 = vmatpush2.msra.mxu0 0.0
    %784 = vmatprep.mubr.f32.mxu0 0.0
    %785 = vmatmul.mubr.f32.gmra.mxu0 %v718
    %v786 = vpop.f32.mrf.mxu0
    %v787 = vadd.f32 0.0, %v786
    %v788 = vpop.f32.mrf.mxu0
    %789 = vdwg.mxu0
    %790 = vrot.lane.b32.xlu0 %v119, 112
    %v791 = vpop.permute.xlu0 %790
    %792 = vrot.lane.b32.xlu0 %v119, 80
    %v793 = vpop.permute.xlu0 %792
    %v794 = vsel %vm130, %v791, 0
    %v796 = vsel %vm130, %v793, 0
    %798 = vmatprep.subr.mxu0 0.0
    %799 = vmatpush1.xpose.msra.mxu0 0.0
    %800 = vmatprep.subr.mxu0 0.0
    %801 = vmatpush1.xpose.msra.mxu0 0.0
    %802 = vmatprep.subr.mxu0 0.0
    %803 = vmatpush1.xpose.msra.mxu0 0.0
    %804 = vmatprep.subr.mxu0 0.0
    %805 = vmatpush1.xpose.msra.mxu0 0.0
    %806 = vmatprep.subr.mxu0 0.0
    %807 = vmatpush1.xpose.msra.mxu0 0.0
    %808 = vmatprep.subr.mxu0 0.0
    %809 = vmatpush1.xpose.msra.mxu0 0.0
    %810 = vmatprep.subr.mxu0 0.0
    %811 = vmatpush1.xpose.msra.mxu0 0.0
    %812 = vmatprep.subr.mxu0 0.0
    %813 = vmatpush1.xpose.msra.mxu0 0.0
    %814 = vmatprep.subr.mxu0 0.0
    %815 = vmatpush1.xpose.msra.mxu0 0.0
    %816 = vmatprep.subr.mxu0 0.0
    %817 = vmatpush1.xpose.msra.mxu0 0.0
    %818 = vmatprep.subr.mxu0 0.0
    %819 = vmatpush1.xpose.msra.mxu0 0.0
    %820 = vmatprep.subr.mxu0 0.0
    %821 = vmatpush1.xpose.msra.mxu0 0.0
    %822 = vmatprep.subr.mxu0 0.0
    %823 = vmatpush1.xpose.msra.mxu0 0.0
    %824 = vmatprep.subr.mxu0 0.0
    %825 = vmatpush1.xpose.msra.mxu0 0.0
    %826 = vmatprep.subr.mxu0 0.0
    %827 = vmatpush1.xpose.msra.mxu0 0.0
    %828 = vmatprep.subr.mxu0 0.0
    %829 = vmatpush1.xpose.msra.mxu0 %v796
    %830 = vmatprep.subr.mxu0 0.0
    %831 = vmatpush2.xpose.msra.mxu0 0.0
    %832 = vmatprep.subr.mxu0 0.0
    %833 = vmatpush2.xpose.msra.mxu0 0.0
    %834 = vmatprep.subr.mxu0 0.0
    %835 = vmatpush2.xpose.msra.mxu0 0.0
    %836 = vmatprep.subr.mxu0 0.0
    %837 = vmatpush2.xpose.msra.mxu0 0.0
    %838 = vmatprep.subr.mxu0 0.0
    %839 = vmatpush2.xpose.msra.mxu0 0.0
    %840 = vmatprep.subr.mxu0 0.0
    %841 = vmatpush2.xpose.msra.mxu0 0.0
    %842 = vmatprep.subr.mxu0 0.0
    %843 = vmatpush2.xpose.msra.mxu0 0.0
    %844 = vmatprep.subr.mxu0 0.0
    %845 = vmatpush2.xpose.msra.mxu0 0.0
    %846 = vmatprep.subr.mxu0 0.0
    %847 = vmatpush2.xpose.msra.mxu0 0.0
    %848 = vmatprep.subr.mxu0 0.0
    %849 = vmatpush2.xpose.msra.mxu0 0.0
    %850 = vmatprep.subr.mxu0 0.0
    %851 = vmatpush2.xpose.msra.mxu0 0.0
    %852 = vmatprep.subr.mxu0 0.0
    %853 = vmatpush2.xpose.msra.mxu0 0.0
    %854 = vmatprep.subr.mxu0 0.0
    %855 = vmatpush2.xpose.msra.mxu0 0.0
    %856 = vmatprep.subr.mxu0 0.0
    %857 = vmatpush2.xpose.msra.mxu0 0.0
    %858 = vmatprep.subr.mxu0 0.0
    %859 = vmatpush2.xpose.msra.mxu0 0.0
    %860 = vmatprep.subr.mxu0 0.0
    %861 = vmatpush2.xpose.msra.mxu0 0.0
    %862 = vmatprep.mubr.f32.mxu0 0.0
    %863 = vmatmul.mubr.f32.gmra.mxu0 %v794
    %v864 = vpop.f32.mrf.mxu0
    %v865 = vadd.f32 0.0, %v864
    %v866 = vpop.f32.mrf.mxu0
    %867 = vdwg.mxu0
    %868 = vrot.lane.b32.xlu0 %v124, 112
    %v869 = vpop.permute.xlu0 %868
    %870 = vrot.lane.b32.xlu0 %v124, 80
    %v871 = vpop.permute.xlu0 %870
    %v872 = vsel %vm130, %v869, 0
    %v874 = vsel %vm130, %v871, 0
    %876 = vmatprep.subr.mxu0 0.0
    %877 = vmatpush1.xpose.msra.mxu0 0.0
    %878 = vmatprep.subr.mxu0 0.0
    %879 = vmatpush1.xpose.msra.mxu0 0.0
    %880 = vmatprep.subr.mxu0 0.0
    %881 = vmatpush1.xpose.msra.mxu0 0.0
    %882 = vmatprep.subr.mxu0 0.0
    %883 = vmatpush1.xpose.msra.mxu0 0.0
    %884 = vmatprep.subr.mxu0 0.0
    %885 = vmatpush1.xpose.msra.mxu0 0.0
    %886 = vmatprep.subr.mxu0 0.0
    %887 = vmatpush1.xpose.msra.mxu0 0.0
    %888 = vmatprep.subr.mxu0 0.0
    %889 = vmatpush1.xpose.msra.mxu0 0.0
    %890 = vmatprep.subr.mxu0 0.0
    %891 = vmatpush1.xpose.msra.mxu0 0.0
    %892 = vmatprep.subr.mxu0 0.0
    %893 = vmatpush1.xpose.msra.mxu0 0.0
    %894 = vmatprep.subr.mxu0 0.0
    %895 = vmatpush1.xpose.msra.mxu0 0.0
    %896 = vmatprep.subr.mxu0 0.0
    %897 = vmatpush1.xpose.msra.mxu0 0.0
    %898 = vmatprep.subr.mxu0 0.0
    %899 = vmatpush1.xpose.msra.mxu0 0.0
    %900 = vmatprep.subr.mxu0 0.0
    %901 = vmatpush1.xpose.msra.mxu0 0.0
    %902 = vmatprep.subr.mxu0 0.0
    %903 = vmatpush1.xpose.msra.mxu0 0.0
    %904 = vmatprep.subr.mxu0 0.0
    %905 = vmatpush1.xpose.msra.mxu0 0.0
    %906 = vmatprep.subr.mxu0 0.0
    %907 = vmatpush1.xpose.msra.mxu0 %v874
    %908 = vmatprep.subr.mxu0 0.0
    %909 = vmatpush2.xpose.msra.mxu0 0.0
    %910 = vmatprep.subr.mxu0 0.0
    %911 = vmatpush2.xpose.msra.mxu0 0.0
    %912 = vmatprep.subr.mxu0 0.0
    %913 = vmatpush2.xpose.msra.mxu0 0.0
    %914 = vmatprep.subr.mxu0 0.0
    %915 = vmatpush2.xpose.msra.mxu0 0.0
    %916 = vmatprep.subr.mxu0 0.0
    %917 = vmatpush2.xpose.msra.mxu0 0.0
    %918 = vmatprep.subr.mxu0 0.0
    %919 = vmatpush2.xpose.msra.mxu0 0.0
    %920 = vmatprep.subr.mxu0 0.0
    %921 = vmatpush2.xpose.msra.mxu0 0.0
    %922 = vmatprep.subr.mxu0 0.0
    %923 = vmatpush2.xpose.msra.mxu0 0.0
    %924 = vmatprep.subr.mxu0 0.0
    %925 = vmatpush2.xpose.msra.mxu0 0.0
    %926 = vmatprep.subr.mxu0 0.0
    %927 = vmatpush2.xpose.msra.mxu0 0.0
    %928 = vmatprep.subr.mxu0 0.0
    %929 = vmatpush2.xpose.msra.mxu0 0.0
    %930 = vmatprep.subr.mxu0 0.0
    %931 = vmatpush2.xpose.msra.mxu0 0.0
    %932 = vmatprep.subr.mxu0 0.0
    %933 = vmatpush2.xpose.msra.mxu0 0.0
    %934 = vmatprep.subr.mxu0 0.0
    %935 = vmatpush2.xpose.msra.mxu0 0.0
    %936 = vmatprep.subr.mxu0 0.0
    %937 = vmatpush2.xpose.msra.mxu0 0.0
    %938 = vmatprep.subr.mxu0 0.0
    %939 = vmatpush2.xpose.msra.mxu0 0.0
    %940 = vmatprep.mubr.f32.mxu0 0.0
    %941 = vmatmul.mubr.f32.gmra.mxu0 %v872
    %v942 = vpop.f32.mrf.mxu0
    %v943 = vadd.f32 0.0, %v942
    %v944 = vpop.f32.mrf.mxu0
    %945 = vdwg.mxu0
    %v946 = vmul.f32 %v865, 0.35355338
    %v947 = vmul.f32 %v943, 0.35355338
    %v948 = vsel %vm130, %v946, -inf
    %949 = vmax.xlane.f32.xlu0 %v948
    %v950 = vpop.xlane.xlu0 %949
    %v951 = vsel %vm130, %v947, -inf
    %952 = vmax.xlane.f32.xlu0 %v951
    %v953 = vpop.xlane.xlu0 %952
    %v954 = vsub.f32 %v946, %v950
    %v955 = vsub.f32 %v947, %v953
    %v956 = vmul.f32 %v954, 1.442695
    %v957 = vpow.pop %v956
    %v958 = vmul.f32 %v955, 1.442695
    %v959 = vpow.pop %v958
    %v960 = vsel %vm130, %v957, 0.0
    %961 = vadd.xlane.f32.xlu0 %v960
    %v962 = vpop.xlane.xlu0 %961
    %v963 = vsel %vm130, %v959, 0.0
    %964 = vadd.xlane.f32.xlu0 %v963
    %v965 = vpop.xlane.xlu0 %964
    %v966 = vrcp.pop %v962
    %v967 = vrcp.pop %v965
    %v968 = vmul.f32 %v957, %v966
    %v969 = vmul.f32 %v959, %v967
    %970 = vrot.lane.b32.xlu0 %v119, 48
    %v971 = vpop.permute.xlu0 %970
    %v974 = vsel %vm130, %v968, 0
    %976 = vmatprep.subr.mxu0 0.0
    %977 = vmatpush1.msra.mxu0 0.0
    %978 = vmatprep.subr.mxu0 0.0
    %979 = vmatpush1.msra.mxu0 0.0
    %980 = vmatprep.subr.mxu0 0.0
    %981 = vmatpush1.msra.mxu0 0.0
    %982 = vmatprep.subr.mxu0 0.0
    %983 = vmatpush1.msra.mxu0 0.0
    %984 = vmatprep.subr.mxu0 0.0
    %985 = vmatpush1.msra.mxu0 0.0
    %986 = vmatprep.subr.mxu0 0.0
    %987 = vmatpush1.msra.mxu0 0.0
    %988 = vmatprep.subr.mxu0 0.0
    %989 = vmatpush1.msra.mxu0 0.0
    %990 = vmatprep.subr.mxu0 0.0
    %991 = vmatpush1.msra.mxu0 0.0
    %992 = vmatprep.subr.mxu0 0.0
    %993 = vmatpush1.msra.mxu0 0.0
    %994 = vmatprep.subr.mxu0 0.0
    %995 = vmatpush1.msra.mxu0 0.0
    %996 = vmatprep.subr.mxu0 0.0
    %997 = vmatpush1.msra.mxu0 0.0
    %998 = vmatprep.subr.mxu0 0.0
    %999 = vmatpush1.msra.mxu0 0.0
    %1000 = vmatprep.subr.mxu0 0.0
    %1001 = vmatpush1.msra.mxu0 0.0
    %1002 = vmatprep.subr.mxu0 0.0
    %1003 = vmatpush1.msra.mxu0 0.0
    %1004 = vmatprep.subr.mxu0 0.0
    %1005 = vmatpush1.msra.mxu0 0.0
    %1006 = vmatprep.subr.mxu0 0.0
    %1007 = vmatpush1.msra.mxu0 %v971
    %1008 = vmatprep.subr.mxu0 0.0
    %1009 = vmatpush2.msra.mxu0 0.0
    %1010 = vmatprep.subr.mxu0 0.0
    %1011 = vmatpush2.msra.mxu0 0.0
    %1012 = vmatprep.subr.mxu0 0.0
    %1013 = vmatpush2.msra.mxu0 0.0
    %1014 = vmatprep.subr.mxu0 0.0
    %1015 = vmatpush2.msra.mxu0 0.0
    %1016 = vmatprep.subr.mxu0 0.0
    %1017 = vmatpush2.msra.mxu0 0.0
    %1018 = vmatprep.subr.mxu0 0.0
    %1019 = vmatpush2.msra.mxu0 0.0
    %1020 = vmatprep.subr.mxu0 0.0
    %1021 = vmatpush2.msra.mxu0 0.0
    %1022 = vmatprep.subr.mxu0 0.0
    %1023 = vmatpush2.msra.mxu0 0.0
    %1024 = vmatprep.subr.mxu0 0.0
    %1025 = vmatpush2.msra.mxu0 0.0
    %1026 = vmatprep.subr.mxu0 0.0
    %1027 = vmatpush2.msra.mxu0 0.0
    %1028 = vmatprep.subr.mxu0 0.0
    %1029 = vmatpush2.msra.mxu0 0.0
    %1030 = vmatprep.subr.mxu0 0.0
    %1031 = vmatpush2.msra.mxu0 0.0
    %1032 = vmatprep.subr.mxu0 0.0
    %1033 = vmatpush2.msra.mxu0 0.0
    %1034 = vmatprep.subr.mxu0 0.0
    %1035 = vmatpush2.msra.mxu0 0.0
    %1036 = vmatprep.subr.mxu0 0.0
    %1037 = vmatpush2.msra.mxu0 0.0
    %1038 = vmatprep.subr.mxu0 0.0
    %1039 = vmatpush2.msra.mxu0 0.0
    %1040 = vmatprep.mubr.f32.mxu0 0.0
    %1041 = vmatmul.mubr.f32.gmra.mxu0 %v974
    %v1042 = vpop.f32.mrf.mxu0
    %v1043 = vadd.f32 0.0, %v1042
    %v1044 = vpop.f32.mrf.mxu0
    %1045 = vdwg.mxu0
    %1046 = vrot.lane.b32.xlu0 %v124, 48
    %v1047 = vpop.permute.xlu0 %1046
    %v1050 = vsel %vm130, %v969, 0
    %1052 = vmatprep.subr.mxu0 0.0
    %1053 = vmatpush1.msra.mxu0 0.0
    %1054 = vmatprep.subr.mxu0 0.0
    %1055 = vmatpush1.msra.mxu0 0.0
    %1056 = vmatprep.subr.mxu0 0.0
    %1057 = vmatpush1.msra.mxu0 0.0
    %1058 = vmatprep.subr.mxu0 0.0
    %1059 = vmatpush1.msra.mxu0 0.0
    %1060 = vmatprep.subr.mxu0 0.0
    %1061 = vmatpush1.msra.mxu0 0.0
    %1062 = vmatprep.subr.mxu0 0.0
    %1063 = vmatpush1.msra.mxu0 0.0
    %1064 = vmatprep.subr.mxu0 0.0
    %1065 = vmatpush1.msra.mxu0 0.0
    %1066 = vmatprep.subr.mxu0 0.0
    %1067 = vmatpush1.msra.mxu0 0.0
    %1068 = vmatprep.subr.mxu0 0.0
    %1069 = vmatpush1.msra.mxu0 0.0
    %1070 = vmatprep.subr.mxu0 0.0
    %1071 = vmatpush1.msra.mxu0 0.0
    %1072 = vmatprep.subr.mxu0 0.0
    %1073 = vmatpush1.msra.mxu0 0.0
    %1074 = vmatprep.subr.mxu0 0.0
    %1075 = vmatpush1.msra.mxu0 0.0
    %1076 = vmatprep.subr.mxu0 0.0
    %1077 = vmatpush1.msra.mxu0 0.0
    %1078 = vmatprep.subr.mxu0 0.0
    %1079 = vmatpush1.msra.mxu0 0.0
    %1080 = vmatprep.subr.mxu0 0.0
    %1081 = vmatpush1.msra.mxu0 0.0
    %1082 = vmatprep.subr.mxu0 0.0
    %1083 = vmatpush1.msra.mxu0 %v1047
    %1084 = vmatprep.subr.mxu0 0.0
    %1085 = vmatpush2.msra.mxu0 0.0
    %1086 = vmatprep.subr.mxu0 0.0
    %1087 = vmatpush2.msra.mxu0 0.0
    %1088 = vmatprep.subr.mxu0 0.0
    %1089 = vmatpush2.msra.mxu0 0.0
    %1090 = vmatprep.subr.mxu0 0.0
    %1091 = vmatpush2.msra.mxu0 0.0
    %1092 = vmatprep.subr.mxu0 0.0
    %1093 = vmatpush2.msra.mxu0 0.0
    %1094 = vmatprep.subr.mxu0 0.0
    %1095 = vmatpush2.msra.mxu0 0.0
    %1096 = vmatprep.subr.mxu0 0.0
    %1097 = vmatpush2.msra.mxu0 0.0
    %1098 = vmatprep.subr.mxu0 0.0
    %1099 = vmatpush2.msra.mxu0 0.0
    %1100 = vmatprep.subr.mxu0 0.0
    %1101 = vmatpush2.msra.mxu0 0.0
    %1102 = vmatprep.subr.mxu0 0.0
    %1103 = vmatpush2.msra.mxu0 0.0
    %1104 = vmatprep.subr.mxu0 0.0
    %1105 = vmatpush2.msra.mxu0 0.0
    %1106 = vmatprep.subr.mxu0 0.0
    %1107 = vmatpush2.msra.mxu0 0.0
    %1108 = vmatprep.subr.mxu0 0.0
    %1109 = vmatpush2.msra.mxu0 0.0
    %1110 = vmatprep.subr.mxu0 0.0
    %1111 = vmatpush2.msra.mxu0 0.0
    %1112 = vmatprep.subr.mxu0 0.0
    %1113 = vmatpush2.msra.mxu0 0.0
    %1114 = vmatprep.subr.mxu0 0.0
    %1115 = vmatpush2.msra.mxu0 0.0
    %1116 = vmatprep.mubr.f32.mxu0 0.0
    %1117 = vmatmul.mubr.f32.gmra.mxu0 %v1050
    %v1118 = vpop.f32.mrf.mxu0
    %v1119 = vadd.f32 0.0, %v1118
    %v1120 = vpop.f32.mrf.mxu0
    %1121 = vdwg.mxu0
    %1122 = vrot.lane.b32.xlu0 %v119, 104
    %v1123 = vpop.permute.xlu0 %1122
    %1124 = vrot.lane.b32.xlu0 %v119, 72
    %v1125 = vpop.permute.xlu0 %1124
    %v1126 = vsel %vm130, %v1123, 0
    %v1128 = vsel %vm130, %v1125, 0
    %1130 = vmatprep.subr.mxu0 0.0
    %1131 = vmatpush1.xpose.msra.mxu0 0.0
    %1132 = vmatprep.subr.mxu0 0.0
    %1133 = vmatpush1.xpose.msra.mxu0 0.0
    %1134 = vmatprep.subr.mxu0 0.0
    %1135 = vmatpush1.xpose.msra.mxu0 0.0
    %1136 = vmatprep.subr.mxu0 0.0
    %1137 = vmatpush1.xpose.msra.mxu0 0.0
    %1138 = vmatprep.subr.mxu0 0.0
    %1139 = vmatpush1.xpose.msra.mxu0 0.0
    %1140 = vmatprep.subr.mxu0 0.0
    %1141 = vmatpush1.xpose.msra.mxu0 0.0
    %1142 = vmatprep.subr.mxu0 0.0
    %1143 = vmatpush1.xpose.msra.mxu0 0.0
    %1144 = vmatprep.subr.mxu0 0.0
    %1145 = vmatpush1.xpose.msra.mxu0 0.0
    %1146 = vmatprep.subr.mxu0 0.0
    %1147 = vmatpush1.xpose.msra.mxu0 0.0
    %1148 = vmatprep.subr.mxu0 0.0
    %1149 = vmatpush1.xpose.msra.mxu0 0.0
    %1150 = vmatprep.subr.mxu0 0.0
    %1151 = vmatpush1.xpose.msra.mxu0 0.0
    %1152 = vmatprep.subr.mxu0 0.0
    %1153 = vmatpush1.xpose.msra.mxu0 0.0
    %1154 = vmatprep.subr.mxu0 0.0
    %1155 = vmatpush1.xpose.msra.mxu0 0.0
    %1156 = vmatprep.subr.mxu0 0.0
    %1157 = vmatpush1.xpose.msra.mxu0 0.0
    %1158 = vmatprep.subr.mxu0 0.0
    %1159 = vmatpush1.xpose.msra.mxu0 0.0
    %1160 = vmatprep.subr.mxu0 0.0
    %1161 = vmatpush1.xpose.msra.mxu0 %v1128
    %1162 = vmatprep.subr.mxu0 0.0
    %1163 = vmatpush2.xpose.msra.mxu0 0.0
    %1164 = vmatprep.subr.mxu0 0.0
    %1165 = vmatpush2.xpose.msra.mxu0 0.0
    %1166 = vmatprep.subr.mxu0 0.0
    %1167 = vmatpush2.xpose.msra.mxu0 0.0
    %1168 = vmatprep.subr.mxu0 0.0
    %1169 = vmatpush2.xpose.msra.mxu0 0.0
    %1170 = vmatprep.subr.mxu0 0.0
    %1171 = vmatpush2.xpose.msra.mxu0 0.0
    %1172 = vmatprep.subr.mxu0 0.0
    %1173 = vmatpush2.xpose.msra.mxu0 0.0
    %1174 = vmatprep.subr.mxu0 0.0
    %1175 = vmatpush2.xpose.msra.mxu0 0.0
    %1176 = vmatprep.subr.mxu0 0.0
    %1177 = vmatpush2.xpose.msra.mxu0 0.0
    %1178 = vmatprep.subr.mxu0 0.0
    %1179 = vmatpush2.xpose.msra.mxu0 0.0
    %1180 = vmatprep.subr.mxu0 0.0
    %1181 = vmatpush2.xpose.msra.mxu0 0.0
    %1182 = vmatprep.subr.mxu0 0.0
    %1183 = vmatpush2.xpose.msra.mxu0 0.0
    %1184 = vmatprep.subr.mxu0 0.0
    %1185 = vmatpush2.xpose.msra.mxu0 0.0
    %1186 = vmatprep.subr.mxu0 0.0
    %1187 = vmatpush2.xpose.msra.mxu0 0.0
    %1188 = vmatprep.subr.mxu0 0.0
    %1189 = vmatpush2.xpose.msra.mxu0 0.0
    %1190 = vmatprep.subr.mxu0 0.0
    %1191 = vmatpush2.xpose.msra.mxu0 0.0
    %1192 = vmatprep.subr.mxu0 0.0
    %1193 = vmatpush2.xpose.msra.mxu0 0.0
    %1194 = vmatprep.mubr.f32.mxu0 0.0
    %1195 = vmatmul.mubr.f32.gmra.mxu0 %v1126
    %v1196 = vpop.f32.mrf.mxu0
    %v1197 = vadd.f32 0.0, %v1196
    %v1198 = vpop.f32.mrf.mxu0
    %1199 = vdwg.mxu0
    %1200 = vrot.lane.b32.xlu0 %v124, 104
    %v1201 = vpop.permute.xlu0 %1200
    %1202 = vrot.lane.b32.xlu0 %v124, 72
    %v1203 = vpop.permute.xlu0 %1202
    %v1204 = vsel %vm130, %v1201, 0
    %v1206 = vsel %vm130, %v1203, 0
    %1208 = vmatprep.subr.mxu0 0.0
    %1209 = vmatpush1.xpose.msra.mxu0 0.0
    %1210 = vmatprep.subr.mxu0 0.0
    %1211 = vmatpush1.xpose.msra.mxu0 0.0
    %1212 = vmatprep.subr.mxu0 0.0
    %1213 = vmatpush1.xpose.msra.mxu0 0.0
    %1214 = vmatprep.subr.mxu0 0.0
    %1215 = vmatpush1.xpose.msra.mxu0 0.0
    %1216 = vmatprep.subr.mxu0 0.0
    %1217 = vmatpush1.xpose.msra.mxu0 0.0
    %1218 = vmatprep.subr.mxu0 0.0
    %1219 = vmatpush1.xpose.msra.mxu0 0.0
    %1220 = vmatprep.subr.mxu0 0.0
    %1221 = vmatpush1.xpose.msra.mxu0 0.0
    %1222 = vmatprep.subr.mxu0 0.0
    %1223 = vmatpush1.xpose.msra.mxu0 0.0
    %1224 = vmatprep.subr.mxu0 0.0
    %1225 = vmatpush1.xpose.msra.mxu0 0.0
    %1226 = vmatprep.subr.mxu0 0.0
    %1227 = vmatpush1.xpose.msra.mxu0 0.0
    %1228 = vmatprep.subr.mxu0 0.0
    %1229 = vmatpush1.xpose.msra.mxu0 0.0
    %1230 = vmatprep.subr.mxu0 0.0
    %1231 = vmatpush1.xpose.msra.mxu0 0.0
    %1232 = vmatprep.subr.mxu0 0.0
    %1233 = vmatpush1.xpose.msra.mxu0 0.0
    %1234 = vmatprep.subr.mxu0 0.0
    %1235 = vmatpush1.xpose.msra.mxu0 0.0
    %1236 = vmatprep.subr.mxu0 0.0
    %1237 = vmatpush1.xpose.msra.mxu0 0.0
    %1238 = vmatprep.subr.mxu0 0.0
    %1239 = vmatpush1.xpose.msra.mxu0 %v1206
    %1240 = vmatprep.subr.mxu0 0.0
    %1241 = vmatpush2.xpose.msra.mxu0 0.0
    %1242 = vmatprep.subr.mxu0 0.0
    %1243 = vmatpush2.xpose.msra.mxu0 0.0
    %1244 = vmatprep.subr.mxu0 0.0
    %1245 = vmatpush2.xpose.msra.mxu0 0.0
    %1246 = vmatprep.subr.mxu0 0.0
    %1247 = vmatpush2.xpose.msra.mxu0 0.0
    %1248 = vmatprep.subr.mxu0 0.0
    %1249 = vmatpush2.xpose.msra.mxu0 0.0
    %1250 = vmatprep.subr.mxu0 0.0
    %1251 = vmatpush2.xpose.msra.mxu0 0.0
    %1252 = vmatprep.subr.mxu0 0.0
    %1253 = vmatpush2.xpose.msra.mxu0 0.0
    %1254 = vmatprep.subr.mxu0 0.0
    %1255 = vmatpush2.xpose.msra.mxu0 0.0
    %1256 = vmatprep.subr.mxu0 0.0
    %1257 = vmatpush2.xpose.msra.mxu0 0.0
    %1258 = vmatprep.subr.mxu0 0.0
    %1259 = vmatpush2.xpose.msra.mxu0 0.0
    %1260 = vmatprep.subr.mxu0 0.0
    %1261 = vmatpush2.xpose.msra.mxu0 0.0
    %1262 = vmatprep.subr.mxu0 0.0
    %1263 = vmatpush2.xpose.msra.mxu0 0.0
    %1264 = vmatprep.subr.mxu0 0.0
    %1265 = vmatpush2.xpose.msra.mxu0 0.0
    %1266 = vmatprep.subr.mxu0 0.0
    %1267 = vmatpush2.xpose.msra.mxu0 0.0
    %1268 = vmatprep.subr.mxu0 0.0
    %1269 = vmatpush2.xpose.msra.mxu0 0.0
    %1270 = vmatprep.subr.mxu0 0.0
    %1271 = vmatpush2.xpose.msra.mxu0 0.0
    %1272 = vmatprep.mubr.f32.mxu0 0.0
    %1273 = vmatmul.mubr.f32.gmra.mxu0 %v1204
    %v1274 = vpop.f32.mrf.mxu0
    %v1275 = vadd.f32 0.0, %v1274
    %v1276 = vpop.f32.mrf.mxu0
    %1277 = vdwg.mxu0
    %v1278 = vmul.f32 %v1197, 0.35355338
    %v1279 = vmul.f32 %v1275, 0.35355338
    %v1280 = vsel %vm130, %v1278, -inf
    %1281 = vmax.xlane.f32.xlu0 %v1280
    %v1282 = vpop.xlane.xlu0 %1281
    %v1283 = vsel %vm130, %v1279, -inf
    %1284 = vmax.xlane.f32.xlu0 %v1283
    %v1285 = vpop.xlane.xlu0 %1284
    %v1286 = vsub.f32 %v1278, %v1282
    %v1287 = vsub.f32 %v1279, %v1285
    %v1288 = vmul.f32 %v1286, 1.442695
    %v1289 = vpow.pop %v1288
    %v1290 = vmul.f32 %v1287, 1.442695
    %v1291 = vpow.pop %v1290
    %v1292 = vsel %vm130, %v1289, 0.0
    %1293 = vadd.xlane.f32.xlu0 %v1292
    %v1294 = vpop.xlane.xlu0 %1293
    %v1295 = vsel %vm130, %v1291, 0.0
    %1296 = vadd.xlane.f32.xlu0 %v1295
    %v1297 = vpop.xlane.xlu0 %1296
    %v1298 = vrcp.pop %v1294
    %v1299 = vrcp.pop %v1297
    %v1300 = vmul.f32 %v1289, %v1298
    %v1301 = vmul.f32 %v1291, %v1299
    %1302 = vrot.lane.b32.xlu0 %v119, 40
    %v1303 = vpop.permute.xlu0 %1302
    %v1306 = vsel %vm130, %v1300, 0
    %1308 = vmatprep.subr.mxu0 0.0
    %1309 = vmatpush1.msra.mxu0 0.0
    %1310 = vmatprep.subr.mxu0 0.0
    %1311 = vmatpush1.msra.mxu0 0.0
    %1312 = vmatprep.subr.mxu0 0.0
    %1313 = vmatpush1.msra.mxu0 0.0
    %1314 = vmatprep.subr.mxu0 0.0
    %1315 = vmatpush1.msra.mxu0 0.0
    %1316 = vmatprep.subr.mxu0 0.0
    %1317 = vmatpush1.msra.mxu0 0.0
    %1318 = vmatprep.subr.mxu0 0.0
    %1319 = vmatpush1.msra.mxu0 0.0
    %1320 = vmatprep.subr.mxu0 0.0
    %1321 = vmatpush1.msra.mxu0 0.0
    %1322 = vmatprep.subr.mxu0 0.0
    %1323 = vmatpush1.msra.mxu0 0.0
    %1324 = vmatprep.subr.mxu0 0.0
    %1325 = vmatpush1.msra.mxu0 0.0
    %1326 = vmatprep.subr.mxu0 0.0
    %1327 = vmatpush1.msra.mxu0 0.0
    %1328 = vmatprep.subr.mxu0 0.0
    %1329 = vmatpush1.msra.mxu0 0.0
    %1330 = vmatprep.subr.mxu0 0.0
    %1331 = vmatpush1.msra.mxu0 0.0
    %1332 = vmatprep.subr.mxu0 0.0
    %1333 = vmatpush1.msra.mxu0 0.0
    %1334 = vmatprep.subr.mxu0 0.0
    %1335 = vmatpush1.msra.mxu0 0.0
    %1336 = vmatprep.subr.mxu0 0.0
    %1337 = vmatpush1.msra.mxu0 0.0
    %1338 = vmatprep.subr.mxu0 0.0
    %1339 = vmatpush1.msra.mxu0 %v1303
    %1340 = vmatprep.subr.mxu0 0.0
    %1341 = vmatpush2.msra.mxu0 0.0
    %1342 = vmatprep.subr.mxu0 0.0
    %1343 = vmatpush2.msra.mxu0 0.0
    %1344 = vmatprep.subr.mxu0 0.0
    %1345 = vmatpush2.msra.mxu0 0.0
    %1346 = vmatprep.subr.mxu0 0.0
    %1347 = vmatpush2.msra.mxu0 0.0
    %1348 = vmatprep.subr.mxu0 0.0
    %1349 = vmatpush2.msra.mxu0 0.0
    %1350 = vmatprep.subr.mxu0 0.0
    %1351 = vmatpush2.msra.mxu0 0.0
    %1352 = vmatprep.subr.mxu0 0.0
    %1353 = vmatpush2.msra.mxu0 0.0
    %1354 = vmatprep.subr.mxu0 0.0
    %1355 = vmatpush2.msra.mxu0 0.0
    %1356 = vmatprep.subr.mxu0 0.0
    %1357 = vmatpush2.msra.mxu0 0.0
    %1358 = vmatprep.subr.mxu0 0.0
    %1359 = vmatpush2.msra.mxu0 0.0
    %1360 = vmatprep.subr.mxu0 0.0
    %1361 = vmatpush2.msra.mxu0 0.0
    %1362 = vmatprep.subr.mxu0 0.0
    %1363 = vmatpush2.msra.mxu0 0.0
    %1364 = vmatprep.subr.mxu0 0.0
    %1365 = vmatpush2.msra.mxu0 0.0
    %1366 = vmatprep.subr.mxu0 0.0
    %1367 = vmatpush2.msra.mxu0 0.0
    %1368 = vmatprep.subr.mxu0 0.0
    %1369 = vmatpush2.msra.mxu0 0.0
    %1370 = vmatprep.subr.mxu0 0.0
    %1371 = vmatpush2.msra.mxu0 0.0
    %1372 = vmatprep.mubr.f32.mxu0 0.0
    %1373 = vmatmul.mubr.f32.gmra.mxu0 %v1306
    %v1374 = vpop.f32.mrf.mxu0
    %v1375 = vadd.f32 0.0, %v1374
    %v1376 = vpop.f32.mrf.mxu0
    %1377 = vdwg.mxu0
    %1378 = vrot.lane.b32.xlu0 %v124, 40
    %v1379 = vpop.permute.xlu0 %1378
    %v1382 = vsel %vm130, %v1301, 0
    %1384 = vmatprep.subr.mxu0 0.0
    %1385 = vmatpush1.msra.mxu0 0.0
    %1386 = vmatprep.subr.mxu0 0.0
    %1387 = vmatpush1.msra.mxu0 0.0
    %1388 = vmatprep.subr.mxu0 0.0
    %1389 = vmatpush1.msra.mxu0 0.0
    %1390 = vmatprep.subr.mxu0 0.0
    %1391 = vmatpush1.msra.mxu0 0.0
    %1392 = vmatprep.subr.mxu0 0.0
    %1393 = vmatpush1.msra.mxu0 0.0
    %1394 = vmatprep.subr.mxu0 0.0
    %1395 = vmatpush1.msra.mxu0 0.0
    %1396 = vmatprep.subr.mxu0 0.0
    %1397 = vmatpush1.msra.mxu0 0.0
    %1398 = vmatprep.subr.mxu0 0.0
    %1399 = vmatpush1.msra.mxu0 0.0
    %1400 = vmatprep.subr.mxu0 0.0
    %1401 = vmatpush1.msra.mxu0 0.0
    %1402 = vmatprep.subr.mxu0 0.0
    %1403 = vmatpush1.msra.mxu0 0.0
    %1404 = vmatprep.subr.mxu0 0.0
    %1405 = vmatpush1.msra.mxu0 0.0
    %1406 = vmatprep.subr.mxu0 0.0
    %1407 = vmatpush1.msra.mxu0 0.0
    %1408 = vmatprep.subr.mxu0 0.0
    %1409 = vmatpush1.msra.mxu0 0.0
    %1410 = vmatprep.subr.mxu0 0.0
    %1411 = vmatpush1.msra.mxu0 0.0
    %1412 = vmatprep.subr.mxu0 0.0
    %1413 = vmatpush1.msra.mxu0 0.0
    %1414 = vmatprep.subr.mxu0 0.0
    %1415 = vmatpush1.msra.mxu0 %v1379
    %1416 = vmatprep.subr.mxu0 0.0
    %1417 = vmatpush2.msra.mxu0 0.0
    %1418 = vmatprep.subr.mxu0 0.0
    %1419 = vmatpush2.msra.mxu0 0.0
    %1420 = vmatprep.subr.mxu0 0.0
    %1421 = vmatpush2.msra.mxu0 0.0
    %1422 = vmatprep.subr.mxu0 0.0
    %1423 = vmatpush2.msra.mxu0 0.0
    %1424 = vmatprep.subr.mxu0 0.0
    %1425 = vmatpush2.msra.mxu0 0.0
    %1426 = vmatprep.subr.mxu0 0.0
    %1427 = vmatpush2.msra.mxu0 0.0
    %1428 = vmatprep.subr.mxu0 0.0
    %1429 = vmatpush2.msra.mxu0 0.0
    %1430 = vmatprep.subr.mxu0 0.0
    %1431 = vmatpush2.msra.mxu0 0.0
    %1432 = vmatprep.subr.mxu0 0.0
    %1433 = vmatpush2.msra.mxu0 0.0
    %1434 = vmatprep.subr.mxu0 0.0
    %1435 = vmatpush2.msra.mxu0 0.0
    %1436 = vmatprep.subr.mxu0 0.0
    %1437 = vmatpush2.msra.mxu0 0.0
    %1438 = vmatprep.subr.mxu0 0.0
    %1439 = vmatpush2.msra.mxu0 0.0
    %1440 = vmatprep.subr.mxu0 0.0
    %1441 = vmatpush2.msra.mxu0 0.0
    %1442 = vmatprep.subr.mxu0 0.0
    %1443 = vmatpush2.msra.mxu0 0.0
    %1444 = vmatprep.subr.mxu0 0.0
    %1445 = vmatpush2.msra.mxu0 0.0
    %1446 = vmatprep.subr.mxu0 0.0
    %1447 = vmatpush2.msra.mxu0 0.0
    %1448 = vmatprep.mubr.f32.mxu0 0.0
    %1449 = vmatmul.mubr.f32.gmra.mxu0 %v1382
    %v1450 = vpop.f32.mrf.mxu0
    %v1451 = vadd.f32 0.0, %v1450
    %v1452 = vpop.f32.mrf.mxu0
    %1453 = vdwg.mxu0
    %1456 = vrot.lane.b32.xlu0 %v711, 8
    %v1457 = vpop.permute.xlu0 %1456
    %1458 = vrot.lane.b32.xlu0 %v787, 8
    %v1459 = vpop.permute.xlu0 %1458
    %1464 = vrot.lane.b32.xlu0 %v1043, 16
    %v1465 = vpop.permute.xlu0 %1464
    %1466 = vrot.lane.b32.xlu0 %v1119, 16
    %v1467 = vpop.permute.xlu0 %1466
    %1472 = vrot.lane.b32.xlu0 %v1375, 24
    %v1473 = vpop.permute.xlu0 %1472
    %1474 = vrot.lane.b32.xlu0 %v1451, 24
    %v1475 = vpop.permute.xlu0 %1474
    %v1478 = vsel %vm130, %v379, %v1457
    %v1479 = vsel %vm130, %v455, %v1459
    %vm1480 = vcmask 130048
    %v1481 = vsel %vm1480, %v1478, %v1465
    %v1482 = vsel %vm1480, %v1479, %v1467
    %vm1483 = vcmask 195584
    %v1484 = vsel %vm1483, %v1481, %v1473
    %v1485 = vsel %vm1483, %v1482, %v1475
    %v1486 = vld [vmem:[%s2] sm:$0xff]
    %v1487 = vld [vmem:[%s2 + $0x8] sm:$0xff]
    %v1488 = vld [vmem:[%s2 + $0x10] sm:$0xff]
    %v1489 = vld [vmem:[%s2 + $0x18] sm:$0xff]
    %v1490 = vlaneseq
    %v1491 = vshrl.u32 %v1490, 7
    %v1492 = vsub.s32 1, %v1491
    %v1493 = vrot.slane %v36, %v1492
    %v1495 = vsel %vm45, %v1484, 0
    %v1498 = vsel %vm45, %v1485, 0
    %1500 = vmatprep.subr.mxu0 0.0
    %1501 = vmatpush1.msra.mxu0 0.0
    %1502 = vmatprep.subr.mxu0 0.0
    %1503 = vmatpush1.msra.mxu0 0.0
    %1504 = vmatprep.subr.mxu0 0.0
    %1505 = vmatpush1.msra.mxu0 0.0
    %1506 = vmatprep.subr.mxu0 0.0
    %1507 = vmatpush1.msra.mxu0 0.0
    %1508 = vmatprep.subr.mxu0 0.0
    %1509 = vmatpush1.msra.mxu0 0.0
    %1510 = vmatprep.subr.mxu0 0.0
    %1511 = vmatpush1.msra.mxu0 0.0
    %1512 = vmatprep.subr.mxu0 0.0
    %1513 = vmatpush1.msra.mxu0 0.0
    %1514 = vmatprep.subr.mxu0 0.0
    %1515 = vmatpush1.msra.mxu0 0.0
    %1516 = vmatprep.subr.mxu0 0.0
    %1517 = vmatpush1.msra.mxu0 0.0
    %1518 = vmatprep.subr.mxu0 0.0
    %1519 = vmatpush1.msra.mxu0 0.0
    %1520 = vmatprep.subr.mxu0 0.0
    %1521 = vmatpush1.msra.mxu0 0.0
    %1522 = vmatprep.subr.mxu0 0.0
    %1523 = vmatpush1.msra.mxu0 0.0
    %1524 = vmatprep.subr.mxu0 0.0
    %1525 = vmatpush1.msra.mxu0 %v1489
    %1526 = vmatprep.subr.mxu0 0.0
    %1527 = vmatpush1.msra.mxu0 %v1488
    %1528 = vmatprep.subr.mxu0 0.0
    %1529 = vmatpush1.msra.mxu0 %v1487
    %1530 = vmatprep.subr.mxu0 0.0
    %1531 = vmatpush1.msra.mxu0 %v1486
    %1532 = vmatprep.subr.mxu0 0.0
    %1533 = vmatpush2.msra.mxu0 0.0
    %1534 = vmatprep.subr.mxu0 0.0
    %1535 = vmatpush2.msra.mxu0 0.0
    %1536 = vmatprep.subr.mxu0 0.0
    %1537 = vmatpush2.msra.mxu0 0.0
    %1538 = vmatprep.subr.mxu0 0.0
    %1539 = vmatpush2.msra.mxu0 0.0
    %1540 = vmatprep.subr.mxu0 0.0
    %1541 = vmatpush2.msra.mxu0 0.0
    %1542 = vmatprep.subr.mxu0 0.0
    %1543 = vmatpush2.msra.mxu0 0.0
    %1544 = vmatprep.subr.mxu0 0.0
    %1545 = vmatpush2.msra.mxu0 0.0
    %1546 = vmatprep.subr.mxu0 0.0
    %1547 = vmatpush2.msra.mxu0 0.0
    %1548 = vmatprep.subr.mxu0 0.0
    %1549 = vmatpush2.msra.mxu0 0.0
    %1550 = vmatprep.subr.mxu0 0.0
    %1551 = vmatpush2.msra.mxu0 0.0
    %1552 = vmatprep.subr.mxu0 0.0
    %1553 = vmatpush2.msra.mxu0 0.0
    %1554 = vmatprep.subr.mxu0 0.0
    %1555 = vmatpush2.msra.mxu0 0.0
    %1556 = vmatprep.subr.mxu0 0.0
    %1557 = vmatpush2.msra.mxu0 0.0
    %1558 = vmatprep.subr.mxu0 0.0
    %1559 = vmatpush2.msra.mxu0 0.0
    %1560 = vmatprep.subr.mxu0 0.0
    %1561 = vmatpush2.msra.mxu0 0.0
    %1562 = vmatprep.subr.mxu0 0.0
    %1563 = vmatpush2.msra.mxu0 0.0
    %1564 = vmatprep.mubr.f32.mxu0 0.0
    %1565 = vmatmul.mubr.f32.gmra.mxu0 %v1495
    %v1566 = vpop.f32.mrf.mxu0
    %v1567 = vadd.f32 %v1493, %v1566
    %v1568 = vpop.f32.mrf.mxu0
    %1569 = vmatprep.mubr.f32.mxu0 0.0
    %1570 = vmatmul.mubr.f32.gmra.mxu0 %v1498
    %v1571 = vpop.f32.mrf.mxu0
    %v1572 = vadd.f32 %v1493, %v1571
    %v1573 = vpop.f32.mrf.mxu0
    %1574 = vdwg.mxu0
    %v1575 = vadd.f32 %v34, %v1567
    %v1576 = vadd.f32 %v35, %v1572
    %v1577 = vsel %vm45, %v1575, 0.0
    %1578 = vadd.xlane.f32.xlu0 %v1577
    %v1579 = vpop.xlane.xlu0 %1578
    %v1580 = vsel %vm45, %v1576, 0.0
    %1581 = vadd.xlane.f32.xlu0 %v1580
    %v1582 = vpop.xlane.xlu0 %1581
    %v1583 = vrcp.pop 32.0
    %v1584 = vmul.f32 %v1579, %v1583
    %v1585 = vmul.f32 %v1582, %v1583
    %v1586 = vsub.f32 %v1575, %v1584
    %v1587 = vsub.f32 %v1576, %v1585
    %v1588 = vmul.f32 %v1586, %v1586
    %v1589 = vmul.f32 %v1587, %v1587
    %v1590 = vsel %vm45, %v1588, 0.0
    %1591 = vadd.xlane.f32.xlu0 %v1590
    %v1592 = vpop.xlane.xlu0 %1591
    %v1593 = vsel %vm45, %v1589, 0.0
    %1594 = vadd.xlane.f32.xlu0 %v1593
    %v1595 = vpop.xlane.xlu0 %1594
    %v1596 = vmul.f32 %v1592, %v1583
    %v1597 = vmul.f32 %v1595, %v1583
    %v1598 = vadd.f32 %v1596, 1e-05
    %v1599 = vadd.f32 %v1597, 1e-05
    %v1600 = vrsqrt.pop %v1598
    %v1601 = vrsqrt.pop %v1599
    %v1602 = vmul.f32 %v1586, %v1600
    %v1603 = vmul.f32 %v1587, %v1601
    %v1604 = vlaneseq
    %v1605 = vshrl.u32 %v1604, 7
    %v1606 = vsub.s32 2, %v1605
    %v1607 = vrot.slane %v36, %v1606
    %v1608 = vmul.f32 %v1602, %v1607
    %v1609 = vmul.f32 %v1603, %v1607
    %v1610 = vlaneseq
    %v1611 = vshrl.u32 %v1610, 7
    %v1612 = vsub.s32 3, %v1611
    %v1613 = vrot.slane %v36, %v1612
    %v1614 = vadd.f32 %v1608, %v1613
    %v1615 = vadd.f32 %v1609, %v1613
    %v1616 = vpack.c.bf16 %v1615, %v1614
    %v1617 = vlaneseq
    %v1618 = vshrl.u32 %v1617, 7
    %v1619 = vsub.s32 4, %v1618
    %v1620 = vrot.slane %v36, %v1619
    %v1621 = vld [vmem:[%s3] sm:$0xff]
    %v1622 = vld [vmem:[%s3 + $0x40] sm:$0xff]
    %v1623 = vld [vmem:[%s3 + $0x80] sm:$0xff]
    %v1624 = vld [vmem:[%s3 + $0xc0] sm:$0xff]
    %v1625 = vld [vmem:[%s5] sm:$0x3]
    %v1627 = vlaneseq
    %v1628 = vshrl.u32 %v1627, 7
    %v1629 = vsub.s32 0, %v1628
    %v1630 = vrot.slane %v1625, %v1629
    %v1631 = vlaneseq
    %v1632 = vshrl.u32 %v1631, 7
    %v1633 = vsub.s32 1, %v1632
    %v1634 = vrot.slane %v1625, %v1633
    %v1641 = vunpack.c.l.b16 %v1621
    %v1642 = vunpack.c.h.b16 %v1621
    %v1643 = vunpack.c.l.b16 %v1622
    %v1644 = vunpack.c.h.b16 %v1622
    %v1645 = vunpack.c.l.b16 %v1623
    %v1646 = vunpack.c.h.b16 %v1623
    %v1647 = vunpack.c.l.b16 %v1624
    %v1648 = vunpack.c.h.b16 %v1624
    %v1649 = vpack.c.b16 %v1643, %v1641
    %v1650 = vpack.c.b16 %v1644, %v1642
    %v1651 = vpack.c.b16 %v1647, %v1645
    %v1652 = vpack.c.b16 %v1648, %v1646
    %v1658 = vsel %vm45, %v1616, 0
    %1660 = vmatprep.subr.bf16.mxu0 0
    %1661 = vmatpush1.bf16.msra.mxu0 0
    %1662 = vmatprep.subr.bf16.mxu0 0
    %1663 = vmatpush1.bf16.msra.mxu0 0
    %1664 = vmatprep.subr.bf16.mxu0 0
    %1665 = vmatpush1.bf16.msra.mxu0 0
    %1666 = vmatprep.subr.bf16.mxu0 0
    %1667 = vmatpush1.bf16.msra.mxu0 0
    %1668 = vmatprep.subr.bf16.mxu0 0
    %1669 = vmatpush1.bf16.msra.mxu0 0
    %1670 = vmatprep.subr.bf16.mxu0 0
    %1671 = vmatpush1.bf16.msra.mxu0 0
    %1672 = vmatprep.subr.bf16.mxu0 %v1652
    %1673 = vmatpush1.bf16.msra.mxu0 %v1651
    %1674 = vmatprep.subr.bf16.mxu0 %v1650
    %1675 = vmatpush1.bf16.msra.mxu0 %v1649
    %1676 = vmatprep.subr.bf16.mxu0 0
    %1677 = vmatpush2.bf16.msra.mxu0 0
    %1678 = vmatprep.subr.bf16.mxu0 0
    %1679 = vmatpush2.bf16.msra.mxu0 0
    %1680 = vmatprep.subr.bf16.mxu0 0
    %1681 = vmatpush2.bf16.msra.mxu0 0
    %1682 = vmatprep.subr.bf16.mxu0 0
    %1683 = vmatpush2.bf16.msra.mxu0 0
    %1684 = vmatprep.subr.bf16.mxu0 0
    %1685 = vmatpush2.bf16.msra.mxu0 0
    %1686 = vmatprep.subr.bf16.mxu0 0
    %1687 = vmatpush2.bf16.msra.mxu0 0
    %1688 = vmatprep.subr.bf16.mxu0 0
    %1689 = vmatpush2.bf16.msra.mxu0 0
    %1690 = vmatprep.subr.bf16.mxu0 0
    %1691 = vmatpush2.bf16.msra.mxu0 0
    %1692 = vmatprep.mubr.bf16.mxu0 0
    %1693 = vmatmul.mubr.bf16.gmra.mxu0 %v1658
    %v1694 = vpop.f32.mrf.mxu0
    %v1695 = vadd.f32 %v1630, %v1694
    %v1696 = vpop.f32.mrf.mxu0
    %v1697 = vadd.f32 %v1634, %v1696
    %v1698 = vpop.f32.mrf.mxu0
    %v1699 = vadd.f32 %v1630, %v1698
    %v1700 = vpop.f32.mrf.mxu0
    %v1701 = vadd.f32 %v1634, %v1700
    %1702 = vdwg.mxu0
    %v1703 = vmax.f32 %v1695, 0.0
    %v1704 = vmax.f32 %v1697, 0.0
    %v1705 = vmax.f32 %v1699, 0.0
    %v1706 = vmax.f32 %v1701, 0.0
    %v1707 = vpack.c.bf16 %v1705, %v1703
    %v1708 = vpack.c.bf16 %v1706, %v1704
    %v1709 = vld [vmem:[%s4] sm:$0xf]
    %v1710 = vld [vmem:[%s4 + $0x4] sm:$0xf]
    %v1711 = vld [vmem:[%s4 + $0x8] sm:$0xf]
    %v1712 = vld [vmem:[%s4 + $0xc] sm:$0xf]
    %v1713 = vld [vmem:[%s4 + $0x10] sm:$0xf]
    %v1714 = vld [vmem:[%s4 + $0x14] sm:$0xf]
    %v1715 = vld [vmem:[%s4 + $0x18] sm:$0xf]
    %v1716 = vld [vmem:[%s4 + $0x1c] sm:$0xf]
    %v1717 = vld [vmem:[%s4 + $0x20] sm:$0xf]
    %v1718 = vld [vmem:[%s4 + $0x24] sm:$0xf]
    %v1719 = vld [vmem:[%s4 + $0x28] sm:$0xf]
    %v1720 = vld [vmem:[%s4 + $0x2c] sm:$0xf]
    %v1721 = vld [vmem:[%s4 + $0x30] sm:$0xf]
    %v1722 = vld [vmem:[%s4 + $0x34] sm:$0xf]
    %v1723 = vld [vmem:[%s4 + $0x38] sm:$0xf]
    %v1724 = vld [vmem:[%s4 + $0x3c] sm:$0xf]
    %v1725 = vld [vmem:[%s4 + $0x40] sm:$0xf]
    %v1726 = vld [vmem:[%s4 + $0x44] sm:$0xf]
    %v1727 = vld [vmem:[%s4 + $0x48] sm:$0xf]
    %v1728 = vld [vmem:[%s4 + $0x4c] sm:$0xf]
    %v1729 = vld [vmem:[%s4 + $0x50] sm:$0xf]
    %v1730 = vld [vmem:[%s4 + $0x54] sm:$0xf]
    %v1731 = vld [vmem:[%s4 + $0x58] sm:$0xf]
    %v1732 = vld [vmem:[%s4 + $0x5c] sm:$0xf]
    %v1733 = vld [vmem:[%s4 + $0x60] sm:$0xf]
    %v1734 = vld [vmem:[%s4 + $0x64] sm:$0xf]
    %v1735 = vld [vmem:[%s4 + $0x68] sm:$0xf]
    %v1736 = vld [vmem:[%s4 + $0x6c] sm:$0xf]
    %v1737 = vld [vmem:[%s4 + $0x70] sm:$0xf]
    %v1738 = vld [vmem:[%s4 + $0x74] sm:$0xf]
    %v1739 = vld [vmem:[%s4 + $0x78] sm:$0xf]
    %v1740 = vld [vmem:[%s4 + $0x7c] sm:$0xf]
    %v1773 = vunpack.c.l.b16 %v1709
    %v1774 = vunpack.c.l.b16 %v1710
    %v1775 = vunpack.c.l.b16 %v1711
    %v1776 = vunpack.c.l.b16 %v1712
    %v1777 = vunpack.c.l.b16 %v1713
    %v1778 = vunpack.c.l.b16 %v1714
    %v1779 = vunpack.c.l.b16 %v1715
    %v1780 = vunpack.c.l.b16 %v1716
    %v1781 = vunpack.c.l.b16 %v1717
    %v1782 = vunpack.c.l.b16 %v1718
    %v1783 = vunpack.c.l.b16 %v1719
    %v1784 = vunpack.c.l.b16 %v1720
    %v1785 = vunpack.c.l.b16 %v1721
    %v1786 = vunpack.c.l.b16 %v1722
    %v1787 = vunpack.c.l.b16 %v1723
    %v1788 = vunpack.c.l.b16 %v1724
    %v1789 = vunpack.c.l.b16 %v1725
    %v1790 = vunpack.c.l.b16 %v1726
    %v1791 = vunpack.c.l.b16 %v1727
    %v1792 = vunpack.c.l.b16 %v1728
    %v1793 = vunpack.c.l.b16 %v1729
    %v1794 = vunpack.c.l.b16 %v1730
    %v1795 = vunpack.c.l.b16 %v1731
    %v1796 = vunpack.c.l.b16 %v1732
    %v1797 = vunpack.c.l.b16 %v1733
    %v1798 = vunpack.c.l.b16 %v1734
    %v1799 = vunpack.c.l.b16 %v1735
    %v1800 = vunpack.c.l.b16 %v1736
    %v1801 = vunpack.c.l.b16 %v1737
    %v1802 = vunpack.c.l.b16 %v1738
    %v1803 = vunpack.c.l.b16 %v1739
    %v1804 = vunpack.c.l.b16 %v1740
    %v1805 = vpack.c.b16 %v1774, %v1773
    %v1806 = vpack.c.b16 %v1776, %v1775
    %v1807 = vpack.c.b16 %v1778, %v1777
    %v1808 = vpack.c.b16 %v1780, %v1779
    %v1809 = vpack.c.b16 %v1782, %v1781
    %v1810 = vpack.c.b16 %v1784, %v1783
    %v1811 = vpack.c.b16 %v1786, %v1785
    %v1812 = vpack.c.b16 %v1788, %v1787
    %v1813 = vpack.c.b16 %v1790, %v1789
    %v1814 = vpack.c.b16 %v1792, %v1791
    %v1815 = vpack.c.b16 %v1794, %v1793
    %v1816 = vpack.c.b16 %v1796, %v1795
    %v1817 = vpack.c.b16 %v1798, %v1797
    %v1818 = vpack.c.b16 %v1800, %v1799
    %v1819 = vpack.c.b16 %v1802, %v1801
    %v1820 = vpack.c.b16 %v1804, %v1803
    %1837 = vmatprep.subr.bf16.mxu0 0
    %1838 = vmatpush1.bf16.msra.mxu0 %v1812
    %1839 = vmatprep.subr.bf16.mxu0 0
    %1840 = vmatpush1.bf16.msra.mxu0 %v1811
    %1841 = vmatprep.subr.bf16.mxu0 0
    %1842 = vmatpush1.bf16.msra.mxu0 %v1810
    %1843 = vmatprep.subr.bf16.mxu0 0
    %1844 = vmatpush1.bf16.msra.mxu0 %v1809
    %1845 = vmatprep.subr.bf16.mxu0 0
    %1846 = vmatpush1.bf16.msra.mxu0 %v1808
    %1847 = vmatprep.subr.bf16.mxu0 0
    %1848 = vmatpush1.bf16.msra.mxu0 %v1807
    %1849 = vmatprep.subr.bf16.mxu0 0
    %1850 = vmatpush1.bf16.msra.mxu0 %v1806
    %1851 = vmatprep.subr.bf16.mxu0 0
    %1852 = vmatpush1.bf16.msra.mxu0 %v1805
    %1853 = vmatprep.subr.bf16.mxu0 0
    %1854 = vmatpush2.bf16.msra.mxu0 %v1820
    %1855 = vmatprep.subr.bf16.mxu0 0
    %1856 = vmatpush2.bf16.msra.mxu0 %v1819
    %1857 = vmatprep.subr.bf16.mxu0 0
    %1858 = vmatpush2.bf16.msra.mxu0 %v1818
    %1859 = vmatprep.subr.bf16.mxu0 0
    %1860 = vmatpush2.bf16.msra.mxu0 %v1817
    %1861 = vmatprep.subr.bf16.mxu0 0
    %1862 = vmatpush2.bf16.msra.mxu0 %v1816
    %1863 = vmatprep.subr.bf16.mxu0 0
    %1864 = vmatpush2.bf16.msra.mxu0 %v1815
    %1865 = vmatprep.subr.bf16.mxu0 0
    %1866 = vmatpush2.bf16.msra.mxu0 %v1814
    %1867 = vmatprep.subr.bf16.mxu0 0
    %1868 = vmatpush2.bf16.msra.mxu0 %v1813
    %1869 = vmatprep.mubr.bf16.mxu0 %v1708
    %1870 = vmatmul.mubr.bf16.gmra.mxu0 %v1707
    %v1871 = vpop.f32.mrf.mxu0
    %v1872 = vadd.f32 0.0, %v1871
    %v1873 = vpop.f32.mrf.mxu0
    %v1874 = vpop.f32.mrf.mxu0
    %v1875 = vadd.f32 0.0, %v1874
    %v1876 = vpop.f32.mrf.mxu0
    %1877 = vdwg.mxu0
    %v1878 = vadd.f32 %v1620, %v1872
    %v1879 = vadd.f32 %v1620, %v1875
    %v1880 = vld [vmem:[%s3 + $0x8] sm:$0xff]
    %v1881 = vld [vmem:[%s3 + $0x48] sm:$0xff]
    %v1882 = vld [vmem:[%s3 + $0x88] sm:$0xff]
    %v1883 = vld [vmem:[%s3 + $0xc8] sm:$0xff]
    %v1884 = vld [vmem:[%s5 + $0x2] sm:$0x3]
    %v1886 = vlaneseq
    %v1887 = vshrl.u32 %v1886, 7
    %v1888 = vsub.s32 0, %v1887
    %v1889 = vrot.slane %v1884, %v1888
    %v1890 = vlaneseq
    %v1891 = vshrl.u32 %v1890, 7
    %v1892 = vsub.s32 1, %v1891
    %v1893 = vrot.slane %v1884, %v1892
    %v1900 = vunpack.c.l.b16 %v1880
    %v1901 = vunpack.c.h.b16 %v1880
    %v1902 = vunpack.c.l.b16 %v1881
    %v1903 = vunpack.c.h.b16 %v1881
    %v1904 = vunpack.c.l.b16 %v1882
    %v1905 = vunpack.c.h.b16 %v1882
    %v1906 = vunpack.c.l.b16 %v1883
    %v1907 = vunpack.c.h.b16 %v1883
    %v1908 = vpack.c.b16 %v1902, %v1900
    %v1909 = vpack.c.b16 %v1903, %v1901
    %v1910 = vpack.c.b16 %v1906, %v1904
    %v1911 = vpack.c.b16 %v1907, %v1905
    %1916 = vmatprep.subr.bf16.mxu0 0
    %1917 = vmatpush1.bf16.msra.mxu0 0
    %1918 = vmatprep.subr.bf16.mxu0 0
    %1919 = vmatpush1.bf16.msra.mxu0 0
    %1920 = vmatprep.subr.bf16.mxu0 0
    %1921 = vmatpush1.bf16.msra.mxu0 0
    %1922 = vmatprep.subr.bf16.mxu0 0
    %1923 = vmatpush1.bf16.msra.mxu0 0
    %1924 = vmatprep.subr.bf16.mxu0 0
    %1925 = vmatpush1.bf16.msra.mxu0 0
    %1926 = vmatprep.subr.bf16.mxu0 0
    %1927 = vmatpush1.bf16.msra.mxu0 0
    %1928 = vmatprep.subr.bf16.mxu0 %v1911
    %1929 = vmatpush1.bf16.msra.mxu0 %v1910
    %1930 = vmatprep.subr.bf16.mxu0 %v1909
    %1931 = vmatpush1.bf16.msra.mxu0 %v1908
    %1932 = vmatprep.subr.bf16.mxu0 0
    %1933 = vmatpush2.bf16.msra.mxu0 0
    %1934 = vmatprep.subr.bf16.mxu0 0
    %1935 = vmatpush2.bf16.msra.mxu0 0
    %1936 = vmatprep.subr.bf16.mxu0 0
    %1937 = vmatpush2.bf16.msra.mxu0 0
    %1938 = vmatprep.subr.bf16.mxu0 0
    %1939 = vmatpush2.bf16.msra.mxu0 0
    %1940 = vmatprep.subr.bf16.mxu0 0
    %1941 = vmatpush2.bf16.msra.mxu0 0
    %1942 = vmatprep.subr.bf16.mxu0 0
    %1943 = vmatpush2.bf16.msra.mxu0 0
    %1944 = vmatprep.subr.bf16.mxu0 0
    %1945 = vmatpush2.bf16.msra.mxu0 0
    %1946 = vmatprep.subr.bf16.mxu0 0
    %1947 = vmatpush2.bf16.msra.mxu0 0
    %1948 = vmatprep.mubr.bf16.mxu0 0
    %1949 = vmatmul.mubr.bf16.gmra.mxu0 %v1658
    %v1950 = vpop.f32.mrf.mxu0
    %v1951 = vadd.f32 %v1889, %v1950
    %v1952 = vpop.f32.mrf.mxu0
    %v1953 = vadd.f32 %v1893, %v1952
    %v1954 = vpop.f32.mrf.mxu0
    %v1955 = vadd.f32 %v1889, %v1954
    %v1956 = vpop.f32.mrf.mxu0
    %v1957 = vadd.f32 %v1893, %v1956
    %1958 = vdwg.mxu0
    %v1959 = vmax.f32 %v1951, 0.0
    %v1960 = vmax.f32 %v1953, 0.0
    %v1961 = vmax.f32 %v1955, 0.0
    %v1962 = vmax.f32 %v1957, 0.0
    %v1963 = vpack.c.bf16 %v1961, %v1959
    %v1964 = vpack.c.bf16 %v1962, %v1960
    %v1965 = vld [vmem:[%s4 + $0x80] sm:$0xf]
    %v1966 = vld [vmem:[%s4 + $0x84] sm:$0xf]
    %v1967 = vld [vmem:[%s4 + $0x88] sm:$0xf]
    %v1968 = vld [vmem:[%s4 + $0x8c] sm:$0xf]
    %v1969 = vld [vmem:[%s4 + $0x90] sm:$0xf]
    %v1970 = vld [vmem:[%s4 + $0x94] sm:$0xf]
    %v1971 = vld [vmem:[%s4 + $0x98] sm:$0xf]
    %v1972 = vld [vmem:[%s4 + $0x9c] sm:$0xf]
    %v1973 = vld [vmem:[%s4 + $0xa0] sm:$0xf]
    %v1974 = vld [vmem:[%s4 + $0xa4] sm:$0xf]
    %v1975 = vld [vmem:[%s4 + $0xa8] sm:$0xf]
    %v1976 = vld [vmem:[%s4 + $0xac] sm:$0xf]
    %v1977 = vld [vmem:[%s4 + $0xb0] sm:$0xf]
    %v1978 = vld [vmem:[%s4 + $0xb4] sm:$0xf]
    %v1979 = vld [vmem:[%s4 + $0xb8] sm:$0xf]
    %v1980 = vld [vmem:[%s4 + $0xbc] sm:$0xf]
    %v1981 = vld [vmem:[%s4 + $0xc0] sm:$0xf]
    %v1982 = vld [vmem:[%s4 + $0xc4] sm:$0xf]
    %v1983 = vld [vmem:[%s4 + $0xc8] sm:$0xf]
    %v1984 = vld [vmem:[%s4 + $0xcc] sm:$0xf]
    %v1985 = vld [vmem:[%s4 + $0xd0] sm:$0xf]
    %v1986 = vld [vmem:[%s4 + $0xd4] sm:$0xf]
    %v1987 = vld [vmem:[%s4 + $0xd8] sm:$0xf]
    %v1988 = vld [vmem:[%s4 + $0xdc] sm:$0xf]
    %v1989 = vld [vmem:[%s4 + $0xe0] sm:$0xf]
    %v1990 = vld [vmem:[%s4 + $0xe4] sm:$0xf]
    %v1991 = vld [vmem:[%s4 + $0xe8] sm:$0xf]
    %v1992 = vld [vmem:[%s4 + $0xec] sm:$0xf]
    %v1993 = vld [vmem:[%s4 + $0xf0] sm:$0xf]
    %v1994 = vld [vmem:[%s4 + $0xf4] sm:$0xf]
    %v1995 = vld [vmem:[%s4 + $0xf8] sm:$0xf]
    %v1996 = vld [vmem:[%s4 + $0xfc] sm:$0xf]
    %v2029 = vunpack.c.l.b16 %v1965
    %v2030 = vunpack.c.l.b16 %v1966
    %v2031 = vunpack.c.l.b16 %v1967
    %v2032 = vunpack.c.l.b16 %v1968
    %v2033 = vunpack.c.l.b16 %v1969
    %v2034 = vunpack.c.l.b16 %v1970
    %v2035 = vunpack.c.l.b16 %v1971
    %v2036 = vunpack.c.l.b16 %v1972
    %v2037 = vunpack.c.l.b16 %v1973
    %v2038 = vunpack.c.l.b16 %v1974
    %v2039 = vunpack.c.l.b16 %v1975
    %v2040 = vunpack.c.l.b16 %v1976
    %v2041 = vunpack.c.l.b16 %v1977
    %v2042 = vunpack.c.l.b16 %v1978
    %v2043 = vunpack.c.l.b16 %v1979
    %v2044 = vunpack.c.l.b16 %v1980
    %v2045 = vunpack.c.l.b16 %v1981
    %v2046 = vunpack.c.l.b16 %v1982
    %v2047 = vunpack.c.l.b16 %v1983
    %v2048 = vunpack.c.l.b16 %v1984
    %v2049 = vunpack.c.l.b16 %v1985
    %v2050 = vunpack.c.l.b16 %v1986
    %v2051 = vunpack.c.l.b16 %v1987
    %v2052 = vunpack.c.l.b16 %v1988
    %v2053 = vunpack.c.l.b16 %v1989
    %v2054 = vunpack.c.l.b16 %v1990
    %v2055 = vunpack.c.l.b16 %v1991
    %v2056 = vunpack.c.l.b16 %v1992
    %v2057 = vunpack.c.l.b16 %v1993
    %v2058 = vunpack.c.l.b16 %v1994
    %v2059 = vunpack.c.l.b16 %v1995
    %v2060 = vunpack.c.l.b16 %v1996
    %v2061 = vpack.c.b16 %v2030, %v2029
    %v2062 = vpack.c.b16 %v2032, %v2031
    %v2063 = vpack.c.b16 %v2034, %v2033
    %v2064 = vpack.c.b16 %v2036, %v2035
    %v2065 = vpack.c.b16 %v2038, %v2037
    %v2066 = vpack.c.b16 %v2040, %v2039
    %v2067 = vpack.c.b16 %v2042, %v2041
    %v2068 = vpack.c.b16 %v2044, %v2043
    %v2069 = vpack.c.b16 %v2046, %v2045
    %v2070 = vpack.c.b16 %v2048, %v2047
    %v2071 = vpack.c.b16 %v2050, %v2049
    %v2072 = vpack.c.b16 %v2052, %v2051
    %v2073 = vpack.c.b16 %v2054, %v2053
    %v2074 = vpack.c.b16 %v2056, %v2055
    %v2075 = vpack.c.b16 %v2058, %v2057
    %v2076 = vpack.c.b16 %v2060, %v2059
    %2093 = vmatprep.subr.bf16.mxu0 0
    %2094 = vmatpush1.bf16.msra.mxu0 %v2068
    %2095 = vmatprep.subr.bf16.mxu0 0
    %2096 = vmatpush1.bf16.msra.mxu0 %v2067
    %2097 = vmatprep.subr.bf16.mxu0 0
    %2098 = vmatpush1.bf16.msra.mxu0 %v2066
    %2099 = vmatprep.subr.bf16.mxu0 0
    %2100 = vmatpush1.bf16.msra.mxu0 %v2065
    %2101 = vmatprep.subr.bf16.mxu0 0
    %2102 = vmatpush1.bf16.msra.mxu0 %v2064
    %2103 = vmatprep.subr.bf16.mxu0 0
    %2104 = vmatpush1.bf16.msra.mxu0 %v2063
    %2105 = vmatprep.subr.bf16.mxu0 0
    %2106 = vmatpush1.bf16.msra.mxu0 %v2062
    %2107 = vmatprep.subr.bf16.mxu0 0
    %2108 = vmatpush1.bf16.msra.mxu0 %v2061
    %2109 = vmatprep.subr.bf16.mxu0 0
    %2110 = vmatpush2.bf16.msra.mxu0 %v2076
    %2111 = vmatprep.subr.bf16.mxu0 0
    %2112 = vmatpush2.bf16.msra.mxu0 %v2075
    %2113 = vmatprep.subr.bf16.mxu0 0
    %2114 = vmatpush2.bf16.msra.mxu0 %v2074
    %2115 = vmatprep.subr.bf16.mxu0 0
    %2116 = vmatpush2.bf16.msra.mxu0 %v2073
    %2117 = vmatprep.subr.bf16.mxu0 0
    %2118 = vmatpush2.bf16.msra.mxu0 %v2072
    %2119 = vmatprep.subr.bf16.mxu0 0
    %2120 = vmatpush2.bf16.msra.mxu0 %v2071
    %2121 = vmatprep.subr.bf16.mxu0 0
    %2122 = vmatpush2.bf16.msra.mxu0 %v2070
    %2123 = vmatprep.subr.bf16.mxu0 0
    %2124 = vmatpush2.bf16.msra.mxu0 %v2069
    %2125 = vmatprep.mubr.bf16.mxu0 %v1964
    %2126 = vmatmul.mubr.bf16.gmra.mxu0 %v1963
    %v2127 = vpop.f32.mrf.mxu0
    %v2128 = vadd.f32 0.0, %v2127
    %v2129 = vpop.f32.mrf.mxu0
    %v2130 = vpop.f32.mrf.mxu0
    %v2131 = vadd.f32 0.0, %v2130
    %v2132 = vpop.f32.mrf.mxu0
    %2133 = vdwg.mxu0
    %v2134 = vadd.f32 %v1878, %v2128
    %v2135 = vadd.f32 %v1879, %v2131
    %v2136 = vld [vmem:[%s3 + $0x10] sm:$0xff]
    %v2137 = vld [vmem:[%s3 + $0x50] sm:$0xff]
    %v2138 = vld [vmem:[%s3 + $0x90] sm:$0xff]
    %v2139 = vld [vmem:[%s3 + $0xd0] sm:$0xff]
    %v2140 = vld [vmem:[%s5 + $0x4] sm:$0x3]
    %v2142 = vlaneseq
    %v2143 = vshrl.u32 %v2142, 7
    %v2144 = vsub.s32 0, %v2143
    %v2145 = vrot.slane %v2140, %v2144
    %v2146 = vlaneseq
    %v2147 = vshrl.u32 %v2146, 7
    %v2148 = vsub.s32 1, %v2147
    %v2149 = vrot.slane %v2140, %v2148
    %v2156 = vunpack.c.l.b16 %v2136
    %v2157 = vunpack.c.h.b16 %v2136
    %v2158 = vunpack.c.l.b16 %v2137
    %v2159 = vunpack.c.h.b16 %v2137
    %v2160 = vunpack.c.l.b16 %v2138
    %v2161 = vunpack.c.h.b16 %v2138
    %v2162 = vunpack.c.l.b16 %v2139
    %v2163 = vunpack.c.h.b16 %v2139
    %v2164 = vpack.c.b16 %v2158, %v2156
    %v2165 = vpack.c.b16 %v2159, %v2157
    %v2166 = vpack.c.b16 %v2162, %v2160
    %v2167 = vpack.c.b16 %v2163, %v2161
    %2172 = vmatprep.subr.bf16.mxu0 0
    %2173 = vmatpush1.bf16.msra.mxu0 0
    %2174 = vmatprep.subr.bf16.mxu0 0
    %2175 = vmatpush1.bf16.msra.mxu0 0
    %2176 = vmatprep.subr.bf16.mxu0 0
    %2177 = vmatpush1.bf16.msra.mxu0 0
    %2178 = vmatprep.subr.bf16.mxu0 0
    %2179 = vmatpush1.bf16.msra.mxu0 0
    %2180 = vmatprep.subr.bf16.mxu0 0
    %2181 = vmatpush1.bf16.msra.mxu0 0
    %2182 = vmatprep.subr.bf16.mxu0 0
    %2183 = vmatpush1.bf16.msra.mxu0 0
    %2184 = vmatprep.subr.bf16.mxu0 %v2167
    %2185 = vmatpush1.bf16.msra.mxu0 %v2166
    %2186 = vmatprep.subr.bf16.mxu0 %v2165
    %2187 = vmatpush1.bf16.msra.mxu0 %v2164
    %2188 = vmatprep.subr.bf16.mxu0 0
    %2189 = vmatpush2.bf16.msra.mxu0 0
    %2190 = vmatprep.subr.bf16.mxu0 0
    %2191 = vmatpush2.bf16.msra.mxu0 0
    %2192 = vmatprep.subr.bf16.mxu0 0
    %2193 = vmatpush2.bf16.msra.mxu0 0
    %2194 = vmatprep.subr.bf16.mxu0 0
    %2195 = vmatpush2.bf16.msra.mxu0 0
    %2196 = vmatprep.subr.bf16.mxu0 0
    %2197 = vmatpush2.bf16.msra.mxu0 0
    %2198 = vmatprep.subr.bf16.mxu0 0
    %2199 = vmatpush2.bf16.msra.mxu0 0
    %2200 = vmatprep.subr.bf16.mxu0 0
    %2201 = vmatpush2.bf16.msra.mxu0 0
    %2202 = vmatprep.subr.bf16.mxu0 0
    %2203 = vmatpush2.bf16.msra.mxu0 0
    %2204 = vmatprep.mubr.bf16.mxu0 0
    %2205 = vmatmul.mubr.bf16.gmra.mxu0 %v1658
    %v2206 = vpop.f32.mrf.mxu0
    %v2207 = vadd.f32 %v2145, %v2206
    %v2208 = vpop.f32.mrf.mxu0
    %v2209 = vadd.f32 %v2149, %v2208
    %v2210 = vpop.f32.mrf.mxu0
    %v2211 = vadd.f32 %v2145, %v2210
    %v2212 = vpop.f32.mrf.mxu0
    %v2213 = vadd.f32 %v2149, %v2212
    %2214 = vdwg.mxu0
    %v2215 = vmax.f32 %v2207, 0.0
    %v2216 = vmax.f32 %v2209, 0.0
    %v2217 = vmax.f32 %v2211, 0.0
    %v2218 = vmax.f32 %v2213, 0.0
    %v2219 = vpack.c.bf16 %v2217, %v2215
    %v2220 = vpack.c.bf16 %v2218, %v2216
    %v2221 = vld [vmem:[%s4 + $0x100] sm:$0xf]
    %v2222 = vld [vmem:[%s4 + $0x104] sm:$0xf]
    %v2223 = vld [vmem:[%s4 + $0x108] sm:$0xf]
    %v2224 = vld [vmem:[%s4 + $0x10c] sm:$0xf]
    %v2225 = vld [vmem:[%s4 + $0x110] sm:$0xf]
    %v2226 = vld [vmem:[%s4 + $0x114] sm:$0xf]
    %v2227 = vld [vmem:[%s4 + $0x118] sm:$0xf]
    %v2228 = vld [vmem:[%s4 + $0x11c] sm:$0xf]
    %v2229 = vld [vmem:[%s4 + $0x120] sm:$0xf]
    %v2230 = vld [vmem:[%s4 + $0x124] sm:$0xf]
    %v2231 = vld [vmem:[%s4 + $0x128] sm:$0xf]
    %v2232 = vld [vmem:[%s4 + $0x12c] sm:$0xf]
    %v2233 = vld [vmem:[%s4 + $0x130] sm:$0xf]
    %v2234 = vld [vmem:[%s4 + $0x134] sm:$0xf]
    %v2235 = vld [vmem:[%s4 + $0x138] sm:$0xf]
    %v2236 = vld [vmem:[%s4 + $0x13c] sm:$0xf]
    %v2237 = vld [vmem:[%s4 + $0x140] sm:$0xf]
    %v2238 = vld [vmem:[%s4 + $0x144] sm:$0xf]
    %v2239 = vld [vmem:[%s4 + $0x148] sm:$0xf]
    %v2240 = vld [vmem:[%s4 + $0x14c] sm:$0xf]
    %v2241 = vld [vmem:[%s4 + $0x150] sm:$0xf]
    %v2242 = vld [vmem:[%s4 + $0x154] sm:$0xf]
    %v2243 = vld [vmem:[%s4 + $0x158] sm:$0xf]
    %v2244 = vld [vmem:[%s4 + $0x15c] sm:$0xf]
    %v2245 = vld [vmem:[%s4 + $0x160] sm:$0xf]
    %v2246 = vld [vmem:[%s4 + $0x164] sm:$0xf]
    %v2247 = vld [vmem:[%s4 + $0x168] sm:$0xf]
    %v2248 = vld [vmem:[%s4 + $0x16c] sm:$0xf]
    %v2249 = vld [vmem:[%s4 + $0x170] sm:$0xf]
    %v2250 = vld [vmem:[%s4 + $0x174] sm:$0xf]
    %v2251 = vld [vmem:[%s4 + $0x178] sm:$0xf]
    %v2252 = vld [vmem:[%s4 + $0x17c] sm:$0xf]
    %v2285 = vunpack.c.l.b16 %v2221
    %v2286 = vunpack.c.l.b16 %v2222
    %v2287 = vunpack.c.l.b16 %v2223
    %v2288 = vunpack.c.l.b16 %v2224
    %v2289 = vunpack.c.l.b16 %v2225
    %v2290 = vunpack.c.l.b16 %v2226
    %v2291 = vunpack.c.l.b16 %v2227
    %v2292 = vunpack.c.l.b16 %v2228
    %v2293 = vunpack.c.l.b16 %v2229
    %v2294 = vunpack.c.l.b16 %v2230
    %v2295 = vunpack.c.l.b16 %v2231
    %v2296 = vunpack.c.l.b16 %v2232
    %v2297 = vunpack.c.l.b16 %v2233
    %v2298 = vunpack.c.l.b16 %v2234
    %v2299 = vunpack.c.l.b16 %v2235
    %v2300 = vunpack.c.l.b16 %v2236
    %v2301 = vunpack.c.l.b16 %v2237
    %v2302 = vunpack.c.l.b16 %v2238
    %v2303 = vunpack.c.l.b16 %v2239
    %v2304 = vunpack.c.l.b16 %v2240
    %v2305 = vunpack.c.l.b16 %v2241
    %v2306 = vunpack.c.l.b16 %v2242
    %v2307 = vunpack.c.l.b16 %v2243
    %v2308 = vunpack.c.l.b16 %v2244
    %v2309 = vunpack.c.l.b16 %v2245
    %v2310 = vunpack.c.l.b16 %v2246
    %v2311 = vunpack.c.l.b16 %v2247
    %v2312 = vunpack.c.l.b16 %v2248
    %v2313 = vunpack.c.l.b16 %v2249
    %v2314 = vunpack.c.l.b16 %v2250
    %v2315 = vunpack.c.l.b16 %v2251
    %v2316 = vunpack.c.l.b16 %v2252
    %v2317 = vpack.c.b16 %v2286, %v2285
    %v2318 = vpack.c.b16 %v2288, %v2287
    %v2319 = vpack.c.b16 %v2290, %v2289
    %v2320 = vpack.c.b16 %v2292, %v2291
    %v2321 = vpack.c.b16 %v2294, %v2293
    %v2322 = vpack.c.b16 %v2296, %v2295
    %v2323 = vpack.c.b16 %v2298, %v2297
    %v2324 = vpack.c.b16 %v2300, %v2299
    %v2325 = vpack.c.b16 %v2302, %v2301
    %v2326 = vpack.c.b16 %v2304, %v2303
    %v2327 = vpack.c.b16 %v2306, %v2305
    %v2328 = vpack.c.b16 %v2308, %v2307
    %v2329 = vpack.c.b16 %v2310, %v2309
    %v2330 = vpack.c.b16 %v2312, %v2311
    %v2331 = vpack.c.b16 %v2314, %v2313
    %v2332 = vpack.c.b16 %v2316, %v2315
    %2349 = vmatprep.subr.bf16.mxu0 0
    %2350 = vmatpush1.bf16.msra.mxu0 %v2324
    %2351 = vmatprep.subr.bf16.mxu0 0
    %2352 = vmatpush1.bf16.msra.mxu0 %v2323
    %2353 = vmatprep.subr.bf16.mxu0 0
    %2354 = vmatpush1.bf16.msra.mxu0 %v2322
    %2355 = vmatprep.subr.bf16.mxu0 0
    %2356 = vmatpush1.bf16.msra.mxu0 %v2321
    %2357 = vmatprep.subr.bf16.mxu0 0
    %2358 = vmatpush1.bf16.msra.mxu0 %v2320
    %2359 = vmatprep.subr.bf16.mxu0 0
    %2360 = vmatpush1.bf16.msra.mxu0 %v2319
    %2361 = vmatprep.subr.bf16.mxu0 0
    %2362 = vmatpush1.bf16.msra.mxu0 %v2318
    %2363 = vmatprep.subr.bf16.mxu0 0
    %2364 = vmatpush1.bf16.msra.mxu0 %v2317
    %2365 = vmatprep.subr.bf16.mxu0 0
    %2366 = vmatpush2.bf16.msra.mxu0 %v2332
    %2367 = vmatprep.subr.bf16.mxu0 0
    %2368 = vmatpush2.bf16.msra.mxu0 %v2331
    %2369 = vmatprep.subr.bf16.mxu0 0
    %2370 = vmatpush2.bf16.msra.mxu0 %v2330
    %2371 = vmatprep.subr.bf16.mxu0 0
    %2372 = vmatpush2.bf16.msra.mxu0 %v2329
    %2373 = vmatprep.subr.bf16.mxu0 0
    %2374 = vmatpush2.bf16.msra.mxu0 %v2328
    %2375 = vmatprep.subr.bf16.mxu0 0
    %2376 = vmatpush2.bf16.msra.mxu0 %v2327
    %2377 = vmatprep.subr.bf16.mxu0 0
    %2378 = vmatpush2.bf16.msra.mxu0 %v2326
    %2379 = vmatprep.subr.bf16.mxu0 0
    %2380 = vmatpush2.bf16.msra.mxu0 %v2325
    %2381 = vmatprep.mubr.bf16.mxu0 %v2220
    %2382 = vmatmul.mubr.bf16.gmra.mxu0 %v2219
    %v2383 = vpop.f32.mrf.mxu0
    %v2384 = vadd.f32 0.0, %v2383
    %v2385 = vpop.f32.mrf.mxu0
    %v2386 = vpop.f32.mrf.mxu0
    %v2387 = vadd.f32 0.0, %v2386
    %v2388 = vpop.f32.mrf.mxu0
    %2389 = vdwg.mxu0
    %v2390 = vadd.f32 %v2134, %v2384
    %v2391 = vadd.f32 %v2135, %v2387
    %v2392 = vld [vmem:[%s3 + $0x18] sm:$0xff]
    %v2393 = vld [vmem:[%s3 + $0x58] sm:$0xff]
    %v2394 = vld [vmem:[%s3 + $0x98] sm:$0xff]
    %v2395 = vld [vmem:[%s3 + $0xd8] sm:$0xff]
    %v2396 = vld [vmem:[%s5 + $0x6] sm:$0x3]
    %v2398 = vlaneseq
    %v2399 = vshrl.u32 %v2398, 7
    %v2400 = vsub.s32 0, %v2399
    %v2401 = vrot.slane %v2396, %v2400
    %v2402 = vlaneseq
    %v2403 = vshrl.u32 %v2402, 7
    %v2404 = vsub.s32 1, %v2403
    %v2405 = vrot.slane %v2396, %v2404
    %v2412 = vunpack.c.l.b16 %v2392
    %v2413 = vunpack.c.h.b16 %v2392
    %v2414 = vunpack.c.l.b16 %v2393
    %v2415 = vunpack.c.h.b16 %v2393
    %v2416 = vunpack.c.l.b16 %v2394
    %v2417 = vunpack.c.h.b16 %v2394
    %v2418 = vunpack.c.l.b16 %v2395
    %v2419 = vunpack.c.h.b16 %v2395
    %v2420 = vpack.c.b16 %v2414, %v2412
    %v2421 = vpack.c.b16 %v2415, %v2413
    %v2422 = vpack.c.b16 %v2418, %v2416
    %v2423 = vpack.c.b16 %v2419, %v2417
    %2428 = vmatprep.subr.bf16.mxu0 0
    %2429 = vmatpush1.bf16.msra.mxu0 0
    %2430 = vmatprep.subr.bf16.mxu0 0
    %2431 = vmatpush1.bf16.msra.mxu0 0
    %2432 = vmatprep.subr.bf16.mxu0 0
    %2433 = vmatpush1.bf16.msra.mxu0 0
    %2434 = vmatprep.subr.bf16.mxu0 0
    %2435 = vmatpush1.bf16.msra.mxu0 0
    %2436 = vmatprep.subr.bf16.mxu0 0
    %2437 = vmatpush1.bf16.msra.mxu0 0
    %2438 = vmatprep.subr.bf16.mxu0 0
    %2439 = vmatpush1.bf16.msra.mxu0 0
    %2440 = vmatprep.subr.bf16.mxu0 %v2423
    %2441 = vmatpush1.bf16.msra.mxu0 %v2422
    %2442 = vmatprep.subr.bf16.mxu0 %v2421
    %2443 = vmatpush1.bf16.msra.mxu0 %v2420
    %2444 = vmatprep.subr.bf16.mxu0 0
    %2445 = vmatpush2.bf16.msra.mxu0 0
    %2446 = vmatprep.subr.bf16.mxu0 0
    %2447 = vmatpush2.bf16.msra.mxu0 0
    %2448 = vmatprep.subr.bf16.mxu0 0
    %2449 = vmatpush2.bf16.msra.mxu0 0
    %2450 = vmatprep.subr.bf16.mxu0 0
    %2451 = vmatpush2.bf16.msra.mxu0 0
    %2452 = vmatprep.subr.bf16.mxu0 0
    %2453 = vmatpush2.bf16.msra.mxu0 0
    %2454 = vmatprep.subr.bf16.mxu0 0
    %2455 = vmatpush2.bf16.msra.mxu0 0
    %2456 = vmatprep.subr.bf16.mxu0 0
    %2457 = vmatpush2.bf16.msra.mxu0 0
    %2458 = vmatprep.subr.bf16.mxu0 0
    %2459 = vmatpush2.bf16.msra.mxu0 0
    %2460 = vmatprep.mubr.bf16.mxu0 0
    %2461 = vmatmul.mubr.bf16.gmra.mxu0 %v1658
    %v2462 = vpop.f32.mrf.mxu0
    %v2463 = vadd.f32 %v2401, %v2462
    %v2464 = vpop.f32.mrf.mxu0
    %v2465 = vadd.f32 %v2405, %v2464
    %v2466 = vpop.f32.mrf.mxu0
    %v2467 = vadd.f32 %v2401, %v2466
    %v2468 = vpop.f32.mrf.mxu0
    %v2469 = vadd.f32 %v2405, %v2468
    %2470 = vdwg.mxu0
    %v2471 = vmax.f32 %v2463, 0.0
    %v2472 = vmax.f32 %v2465, 0.0
    %v2473 = vmax.f32 %v2467, 0.0
    %v2474 = vmax.f32 %v2469, 0.0
    %v2475 = vpack.c.bf16 %v2473, %v2471
    %v2476 = vpack.c.bf16 %v2474, %v2472
    %v2477 = vld [vmem:[%s4 + $0x180] sm:$0xf]
    %v2478 = vld [vmem:[%s4 + $0x184] sm:$0xf]
    %v2479 = vld [vmem:[%s4 + $0x188] sm:$0xf]
    %v2480 = vld [vmem:[%s4 + $0x18c] sm:$0xf]
    %v2481 = vld [vmem:[%s4 + $0x190] sm:$0xf]
    %v2482 = vld [vmem:[%s4 + $0x194] sm:$0xf]
    %v2483 = vld [vmem:[%s4 + $0x198] sm:$0xf]
    %v2484 = vld [vmem:[%s4 + $0x19c] sm:$0xf]
    %v2485 = vld [vmem:[%s4 + $0x1a0] sm:$0xf]
    %v2486 = vld [vmem:[%s4 + $0x1a4] sm:$0xf]
    %v2487 = vld [vmem:[%s4 + $0x1a8] sm:$0xf]
    %v2488 = vld [vmem:[%s4 + $0x1ac] sm:$0xf]
    %v2489 = vld [vmem:[%s4 + $0x1b0] sm:$0xf]
    %v2490 = vld [vmem:[%s4 + $0x1b4] sm:$0xf]
    %v2491 = vld [vmem:[%s4 + $0x1b8] sm:$0xf]
    %v2492 = vld [vmem:[%s4 + $0x1bc] sm:$0xf]
    %v2493 = vld [vmem:[%s4 + $0x1c0] sm:$0xf]
    %v2494 = vld [vmem:[%s4 + $0x1c4] sm:$0xf]
    %v2495 = vld [vmem:[%s4 + $0x1c8] sm:$0xf]
    %v2496 = vld [vmem:[%s4 + $0x1cc] sm:$0xf]
    %v2497 = vld [vmem:[%s4 + $0x1d0] sm:$0xf]
    %v2498 = vld [vmem:[%s4 + $0x1d4] sm:$0xf]
    %v2499 = vld [vmem:[%s4 + $0x1d8] sm:$0xf]
    %v2500 = vld [vmem:[%s4 + $0x1dc] sm:$0xf]
    %v2501 = vld [vmem:[%s4 + $0x1e0] sm:$0xf]
    %v2502 = vld [vmem:[%s4 + $0x1e4] sm:$0xf]
    %v2503 = vld [vmem:[%s4 + $0x1e8] sm:$0xf]
    %v2504 = vld [vmem:[%s4 + $0x1ec] sm:$0xf]
    %v2505 = vld [vmem:[%s4 + $0x1f0] sm:$0xf]
    %v2506 = vld [vmem:[%s4 + $0x1f4] sm:$0xf]
    %v2507 = vld [vmem:[%s4 + $0x1f8] sm:$0xf]
    %v2508 = vld [vmem:[%s4 + $0x1fc] sm:$0xf]
    %v2541 = vunpack.c.l.b16 %v2477
    %v2542 = vunpack.c.l.b16 %v2478
    %v2543 = vunpack.c.l.b16 %v2479
    %v2544 = vunpack.c.l.b16 %v2480
    %v2545 = vunpack.c.l.b16 %v2481
    %v2546 = vunpack.c.l.b16 %v2482
    %v2547 = vunpack.c.l.b16 %v2483
    %v2548 = vunpack.c.l.b16 %v2484
    %v2549 = vunpack.c.l.b16 %v2485
    %v2550 = vunpack.c.l.b16 %v2486
    %v2551 = vunpack.c.l.b16 %v2487
    %v2552 = vunpack.c.l.b16 %v2488
    %v2553 = vunpack.c.l.b16 %v2489
    %v2554 = vunpack.c.l.b16 %v2490
    %v2555 = vunpack.c.l.b16 %v2491
    %v2556 = vunpack.c.l.b16 %v2492
    %v2557 = vunpack.c.l.b16 %v2493
    %v2558 = vunpack.c.l.b16 %v2494
    %v2559 = vunpack.c.l.b16 %v2495
    %v2560 = vunpack.c.l.b16 %v2496
    %v2561 = vunpack.c.l.b16 %v2497
    %v2562 = vunpack.c.l.b16 %v2498
    %v2563 = vunpack.c.l.b16 %v2499
    %v2564 = vunpack.c.l.b16 %v2500
    %v2565 = vunpack.c.l.b16 %v2501
    %v2566 = vunpack.c.l.b16 %v2502
    %v2567 = vunpack.c.l.b16 %v2503
    %v2568 = vunpack.c.l.b16 %v2504
    %v2569 = vunpack.c.l.b16 %v2505
    %v2570 = vunpack.c.l.b16 %v2506
    %v2571 = vunpack.c.l.b16 %v2507
    %v2572 = vunpack.c.l.b16 %v2508
    %v2573 = vpack.c.b16 %v2542, %v2541
    %v2574 = vpack.c.b16 %v2544, %v2543
    %v2575 = vpack.c.b16 %v2546, %v2545
    %v2576 = vpack.c.b16 %v2548, %v2547
    %v2577 = vpack.c.b16 %v2550, %v2549
    %v2578 = vpack.c.b16 %v2552, %v2551
    %v2579 = vpack.c.b16 %v2554, %v2553
    %v2580 = vpack.c.b16 %v2556, %v2555
    %v2581 = vpack.c.b16 %v2558, %v2557
    %v2582 = vpack.c.b16 %v2560, %v2559
    %v2583 = vpack.c.b16 %v2562, %v2561
    %v2584 = vpack.c.b16 %v2564, %v2563
    %v2585 = vpack.c.b16 %v2566, %v2565
    %v2586 = vpack.c.b16 %v2568, %v2567
    %v2587 = vpack.c.b16 %v2570, %v2569
    %v2588 = vpack.c.b16 %v2572, %v2571
    %2605 = vmatprep.subr.bf16.mxu0 0
    %2606 = vmatpush1.bf16.msra.mxu0 %v2580
    %2607 = vmatprep.subr.bf16.mxu0 0
    %2608 = vmatpush1.bf16.msra.mxu0 %v2579
    %2609 = vmatprep.subr.bf16.mxu0 0
    %2610 = vmatpush1.bf16.msra.mxu0 %v2578
    %2611 = vmatprep.subr.bf16.mxu0 0
    %2612 = vmatpush1.bf16.msra.mxu0 %v2577
    %2613 = vmatprep.subr.bf16.mxu0 0
    %2614 = vmatpush1.bf16.msra.mxu0 %v2576
    %2615 = vmatprep.subr.bf16.mxu0 0
    %2616 = vmatpush1.bf16.msra.mxu0 %v2575
    %2617 = vmatprep.subr.bf16.mxu0 0
    %2618 = vmatpush1.bf16.msra.mxu0 %v2574
    %2619 = vmatprep.subr.bf16.mxu0 0
    %2620 = vmatpush1.bf16.msra.mxu0 %v2573
    %2621 = vmatprep.subr.bf16.mxu0 0
    %2622 = vmatpush2.bf16.msra.mxu0 %v2588
    %2623 = vmatprep.subr.bf16.mxu0 0
    %2624 = vmatpush2.bf16.msra.mxu0 %v2587
    %2625 = vmatprep.subr.bf16.mxu0 0
    %2626 = vmatpush2.bf16.msra.mxu0 %v2586
    %2627 = vmatprep.subr.bf16.mxu0 0
    %2628 = vmatpush2.bf16.msra.mxu0 %v2585
    %2629 = vmatprep.subr.bf16.mxu0 0
    %2630 = vmatpush2.bf16.msra.mxu0 %v2584
    %2631 = vmatprep.subr.bf16.mxu0 0
    %2632 = vmatpush2.bf16.msra.mxu0 %v2583
    %2633 = vmatprep.subr.bf16.mxu0 0
    %2634 = vmatpush2.bf16.msra.mxu0 %v2582
    %2635 = vmatprep.subr.bf16.mxu0 0
    %2636 = vmatpush2.bf16.msra.mxu0 %v2581
    %2637 = vmatprep.mubr.bf16.mxu0 %v2476
    %2638 = vmatmul.mubr.bf16.gmra.mxu0 %v2475
    %v2639 = vpop.f32.mrf.mxu0
    %v2640 = vadd.f32 0.0, %v2639
    %v2641 = vpop.f32.mrf.mxu0
    %v2642 = vpop.f32.mrf.mxu0
    %v2643 = vadd.f32 0.0, %v2642
    %v2644 = vpop.f32.mrf.mxu0
    %2645 = vdwg.mxu0
    %v2646 = vadd.f32 %v2390, %v2640
    %v2647 = vadd.f32 %v2391, %v2643
    %v2648 = vld [vmem:[%s3 + $0x20] sm:$0xff]
    %v2649 = vld [vmem:[%s3 + $0x60] sm:$0xff]
    %v2650 = vld [vmem:[%s3 + $0xa0] sm:$0xff]
    %v2651 = vld [vmem:[%s3 + $0xe0] sm:$0xff]
    %v2652 = vld [vmem:[%s5 + $0x8] sm:$0x3]
    %v2654 = vlaneseq
    %v2655 = vshrl.u32 %v2654, 7
    %v2656 = vsub.s32 0, %v2655
    %v2657 = vrot.slane %v2652, %v2656
    %v2658 = vlaneseq
    %v2659 = vshrl.u32 %v2658, 7
    %v2660 = vsub.s32 1, %v2659
    %v2661 = vrot.slane %v2652, %v2660
    %v2668 = vunpack.c.l.b16 %v2648
    %v2669 = vunpack.c.h.b16 %v2648
    %v2670 = vunpack.c.l.b16 %v2649
    %v2671 = vunpack.c.h.b16 %v2649
    %v2672 = vunpack.c.l.b16 %v2650
    %v2673 = vunpack.c.h.b16 %v2650
    %v2674 = vunpack.c.l.b16 %v2651
    %v2675 = vunpack.c.h.b16 %v2651
    %v2676 = vpack.c.b16 %v2670, %v2668
    %v2677 = vpack.c.b16 %v2671, %v2669
    %v2678 = vpack.c.b16 %v2674, %v2672
    %v2679 = vpack.c.b16 %v2675, %v2673
    %2684 = vmatprep.subr.bf16.mxu0 0
    %2685 = vmatpush1.bf16.msra.mxu0 0
    %2686 = vmatprep.subr.bf16.mxu0 0
    %2687 = vmatpush1.bf16.msra.mxu0 0
    %2688 = vmatprep.subr.bf16.mxu0 0
    %2689 = vmatpush1.bf16.msra.mxu0 0
    %2690 = vmatprep.subr.bf16.mxu0 0
    %2691 = vmatpush1.bf16.msra.mxu0 0
    %2692 = vmatprep.subr.bf16.mxu0 0
    %2693 = vmatpush1.bf16.msra.mxu0 0
    %2694 = vmatprep.subr.bf16.mxu0 0
    %2695 = vmatpush1.bf16.msra.mxu0 0
    %2696 = vmatprep.subr.bf16.mxu0 %v2679
    %2697 = vmatpush1.bf16.msra.mxu0 %v2678
    %2698 = vmatprep.subr.bf16.mxu0 %v2677
    %2699 = vmatpush1.bf16.msra.mxu0 %v2676
    %2700 = vmatprep.subr.bf16.mxu0 0
    %2701 = vmatpush2.bf16.msra.mxu0 0
    %2702 = vmatprep.subr.bf16.mxu0 0
    %2703 = vmatpush2.bf16.msra.mxu0 0
    %2704 = vmatprep.subr.bf16.mxu0 0
    %2705 = vmatpush2.bf16.msra.mxu0 0
    %2706 = vmatprep.subr.bf16.mxu0 0
    %2707 = vmatpush2.bf16.msra.mxu0 0
    %2708 = vmatprep.subr.bf16.mxu0 0
    %2709 = vmatpush2.bf16.msra.mxu0 0
    %2710 = vmatprep.subr.bf16.mxu0 0
    %2711 = vmatpush2.bf16.msra.mxu0 0
    %2712 = vmatprep.subr.bf16.mxu0 0
    %2713 = vmatpush2.bf16.msra.mxu0 0
    %2714 = vmatprep.subr.bf16.mxu0 0
    %2715 = vmatpush2.bf16.msra.mxu0 0
    %2716 = vmatprep.mubr.bf16.mxu0 0
    %2717 = vmatmul.mubr.bf16.gmra.mxu0 %v1658
    %v2718 = vpop.f32.mrf.mxu0
    %v2719 = vadd.f32 %v2657, %v2718
    %v2720 = vpop.f32.mrf.mxu0
    %v2721 = vadd.f32 %v2661, %v2720
    %v2722 = vpop.f32.mrf.mxu0
    %v2723 = vadd.f32 %v2657, %v2722
    %v2724 = vpop.f32.mrf.mxu0
    %v2725 = vadd.f32 %v2661, %v2724
    %2726 = vdwg.mxu0
    %v2727 = vmax.f32 %v2719, 0.0
    %v2728 = vmax.f32 %v2721, 0.0
    %v2729 = vmax.f32 %v2723, 0.0
    %v2730 = vmax.f32 %v2725, 0.0
    %v2731 = vpack.c.bf16 %v2729, %v2727
    %v2732 = vpack.c.bf16 %v2730, %v2728
    %v2733 = vld [vmem:[%s4 + $0x200] sm:$0xf]
    %v2734 = vld [vmem:[%s4 + $0x204] sm:$0xf]
    %v2735 = vld [vmem:[%s4 + $0x208] sm:$0xf]
    %v2736 = vld [vmem:[%s4 + $0x20c] sm:$0xf]
    %v2737 = vld [vmem:[%s4 + $0x210] sm:$0xf]
    %v2738 = vld [vmem:[%s4 + $0x214] sm:$0xf]
    %v2739 = vld [vmem:[%s4 + $0x218] sm:$0xf]
    %v2740 = vld [vmem:[%s4 + $0x21c] sm:$0xf]
    %v2741 = vld [vmem:[%s4 + $0x220] sm:$0xf]
    %v2742 = vld [vmem:[%s4 + $0x224] sm:$0xf]
    %v2743 = vld [vmem:[%s4 + $0x228] sm:$0xf]
    %v2744 = vld [vmem:[%s4 + $0x22c] sm:$0xf]
    %v2745 = vld [vmem:[%s4 + $0x230] sm:$0xf]
    %v2746 = vld [vmem:[%s4 + $0x234] sm:$0xf]
    %v2747 = vld [vmem:[%s4 + $0x238] sm:$0xf]
    %v2748 = vld [vmem:[%s4 + $0x23c] sm:$0xf]
    %v2749 = vld [vmem:[%s4 + $0x240] sm:$0xf]
    %v2750 = vld [vmem:[%s4 + $0x244] sm:$0xf]
    %v2751 = vld [vmem:[%s4 + $0x248] sm:$0xf]
    %v2752 = vld [vmem:[%s4 + $0x24c] sm:$0xf]
    %v2753 = vld [vmem:[%s4 + $0x250] sm:$0xf]
    %v2754 = vld [vmem:[%s4 + $0x254] sm:$0xf]
    %v2755 = vld [vmem:[%s4 + $0x258] sm:$0xf]
    %v2756 = vld [vmem:[%s4 + $0x25c] sm:$0xf]
    %v2757 = vld [vmem:[%s4 + $0x260] sm:$0xf]
    %v2758 = vld [vmem:[%s4 + $0x264] sm:$0xf]
    %v2759 = vld [vmem:[%s4 + $0x268] sm:$0xf]
    %v2760 = vld [vmem:[%s4 + $0x26c] sm:$0xf]
    %v2761 = vld [vmem:[%s4 + $0x270] sm:$0xf]
    %v2762 = vld [vmem:[%s4 + $0x274] sm:$0xf]
    %v2763 = vld [vmem:[%s4 + $0x278] sm:$0xf]
    %v2764 = vld [vmem:[%s4 + $0x27c] sm:$0xf]
    %v2797 = vunpack.c.l.b16 %v2733
    %v2798 = vunpack.c.l.b16 %v2734
    %v2799 = vunpack.c.l.b16 %v2735
    %v2800 = vunpack.c.l.b16 %v2736
    %v2801 = vunpack.c.l.b16 %v2737
    %v2802 = vunpack.c.l.b16 %v2738
    %v2803 = vunpack.c.l.b16 %v2739
    %v2804 = vunpack.c.l.b16 %v2740
    %v2805 = vunpack.c.l.b16 %v2741
    %v2806 = vunpack.c.l.b16 %v2742
    %v2807 = vunpack.c.l.b16 %v2743
    %v2808 = vunpack.c.l.b16 %v2744
    %v2809 = vunpack.c.l.b16 %v2745
    %v2810 = vunpack.c.l.b16 %v2746
    %v2811 = vunpack.c.l.b16 %v2747
    %v2812 = vunpack.c.l.b16 %v2748
    %v2813 = vunpack.c.l.b16 %v2749
    %v2814 = vunpack.c.l.b16 %v2750
    %v2815 = vunpack.c.l.b16 %v2751
    %v2816 = vunpack.c.l.b16 %v2752
    %v2817 = vunpack.c.l.b16 %v2753
    %v2818 = vunpack.c.l.b16 %v2754
    %v2819 = vunpack.c.l.b16 %v2755
    %v2820 = vunpack.c.l.b16 %v2756
    %v2821 = vunpack.c.l.b16 %v2757
    %v2822 = vunpack.c.l.b16 %v2758
    %v2823 = vunpack.c.l.b16 %v2759
    %v2824 = vunpack.c.l.b16 %v2760
    %v2825 = vunpack.c.l.b16 %v2761
    %v2826 = vunpack.c.l.b16 %v2762
    %v2827 = vunpack.c.l.b16 %v2763
    %v2828 = vunpack.c.l.b16 %v2764
    %v2829 = vpack.c.b16 %v2798, %v2797
    %v2830 = vpack.c.b16 %v2800, %v2799
    %v2831 = vpack.c.b16 %v2802, %v2801
    %v2832 = vpack.c.b16 %v2804, %v2803
    %v2833 = vpack.c.b16 %v2806, %v2805
    %v2834 = vpack.c.b16 %v2808, %v2807
    %v2835 = vpack.c.b16 %v2810, %v2809
    %v2836 = vpack.c.b16 %v2812, %v2811
    %v2837 = vpack.c.b16 %v2814, %v2813
    %v2838 = vpack.c.b16 %v2816, %v2815
    %v2839 = vpack.c.b16 %v2818, %v2817
    %v2840 = vpack.c.b16 %v2820, %v2819
    %v2841 = vpack.c.b16 %v2822, %v2821
    %v2842 = vpack.c.b16 %v2824, %v2823
    %v2843 = vpack.c.b16 %v2826, %v2825
    %v2844 = vpack.c.b16 %v2828, %v2827
    %2861 = vmatprep.subr.bf16.mxu0 0
    %2862 = vmatpush1.bf16.msra.mxu0 %v2836
    %2863 = vmatprep.subr.bf16.mxu0 0
    %2864 = vmatpush1.bf16.msra.mxu0 %v2835
    %2865 = vmatprep.subr.bf16.mxu0 0
    %2866 = vmatpush1.bf16.msra.mxu0 %v2834
    %2867 = vmatprep.subr.bf16.mxu0 0
    %2868 = vmatpush1.bf16.msra.mxu0 %v2833
    %2869 = vmatprep.subr.bf16.mxu0 0
    %2870 = vmatpush1.bf16.msra.mxu0 %v2832
    %2871 = vmatprep.subr.bf16.mxu0 0
    %2872 = vmatpush1.bf16.msra.mxu0 %v2831
    %2873 = vmatprep.subr.bf16.mxu0 0
    %2874 = vmatpush1.bf16.msra.mxu0 %v2830
    %2875 = vmatprep.subr.bf16.mxu0 0
    %2876 = vmatpush1.bf16.msra.mxu0 %v2829
    %2877 = vmatprep.subr.bf16.mxu0 0
    %2878 = vmatpush2.bf16.msra.mxu0 %v2844
    %2879 = vmatprep.subr.bf16.mxu0 0
    %2880 = vmatpush2.bf16.msra.mxu0 %v2843
    %2881 = vmatprep.subr.bf16.mxu0 0
    %2882 = vmatpush2.bf16.msra.mxu0 %v2842
    %2883 = vmatprep.subr.bf16.mxu0 0
    %2884 = vmatpush2.bf16.msra.mxu0 %v2841
    %2885 = vmatprep.subr.bf16.mxu0 0
    %2886 = vmatpush2.bf16.msra.mxu0 %v2840
    %2887 = vmatprep.subr.bf16.mxu0 0
    %2888 = vmatpush2.bf16.msra.mxu0 %v2839
    %2889 = vmatprep.subr.bf16.mxu0 0
    %2890 = vmatpush2.bf16.msra.mxu0 %v2838
    %2891 = vmatprep.subr.bf16.mxu0 0
    %2892 = vmatpush2.bf16.msra.mxu0 %v2837
    %2893 = vmatprep.mubr.bf16.mxu0 %v2732
    %2894 = vmatmul.mubr.bf16.gmra.mxu0 %v2731
    %v2895 = vpop.f32.mrf.mxu0
    %v2896 = vadd.f32 0.0, %v2895
    %v2897 = vpop.f32.mrf.mxu0
    %v2898 = vpop.f32.mrf.mxu0
    %v2899 = vadd.f32 0.0, %v2898
    %v2900 = vpop.f32.mrf.mxu0
    %2901 = vdwg.mxu0
    %v2902 = vadd.f32 %v2646, %v2896
    %v2903 = vadd.f32 %v2647, %v2899
    %v2904 = vld [vmem:[%s3 + $0x28] sm:$0xff]
    %v2905 = vld [vmem:[%s3 + $0x68] sm:$0xff]
    %v2906 = vld [vmem:[%s3 + $0xa8] sm:$0xff]
    %v2907 = vld [vmem:[%s3 + $0xe8] sm:$0xff]
    %v2908 = vld [vmem:[%s5 + $0xa] sm:$0x3]
    %v2910 = vlaneseq
    %v2911 = vshrl.u32 %v2910, 7
    %v2912 = vsub.s32 0, %v2911
    %v2913 = vrot.slane %v2908, %v2912
    %v2914 = vlaneseq
    %v2915 = vshrl.u32 %v2914, 7
    %v2916 = vsub.s32 1, %v2915
    %v2917 = vrot.slane %v2908, %v2916
    %v2924 = vunpack.c.l.b16 %v2904
    %v2925 = vunpack.c.h.b16 %v2904
    %v2926 = vunpack.c.l.b16 %v2905
    %v2927 = vunpack.c.h.b16 %v2905
    %v2928 = vunpack.c.l.b16 %v2906
    %v2929 = vunpack.c.h.b16 %v2906
    %v2930 = vunpack.c.l.b16 %v2907
    %v2931 = vunpack.c.h.b16 %v2907
    %v2932 = vpack.c.b16 %v2926, %v2924
    %v2933 = vpack.c.b16 %v2927, %v2925
    %v2934 = vpack.c.b16 %v2930, %v2928
    %v2935 = vpack.c.b16 %v2931, %v2929
    %2940 = vmatprep.subr.bf16.mxu0 0
    %2941 = vmatpush1.bf16.msra.mxu0 0
    %2942 = vmatprep.subr.bf16.mxu0 0
    %2943 = vmatpush1.bf16.msra.mxu0 0
    %2944 = vmatprep.subr.bf16.mxu0 0
    %2945 = vmatpush1.bf16.msra.mxu0 0
    %2946 = vmatprep.subr.bf16.mxu0 0
    %2947 = vmatpush1.bf16.msra.mxu0 0
    %2948 = vmatprep.subr.bf16.mxu0 0
    %2949 = vmatpush1.bf16.msra.mxu0 0
    %2950 = vmatprep.subr.bf16.mxu0 0
    %2951 = vmatpush1.bf16.msra.mxu0 0
    %2952 = vmatprep.subr.bf16.mxu0 %v2935
    %2953 = vmatpush1.bf16.msra.mxu0 %v2934
    %2954 = vmatprep.subr.bf16.mxu0 %v2933
    %2955 = vmatpush1.bf16.msra.mxu0 %v2932
    %2956 = vmatprep.subr.bf16.mxu0 0
    %2957 = vmatpush2.bf16.msra.mxu0 0
    %2958 = vmatprep.subr.bf16.mxu0 0
    %2959 = vmatpush2.bf16.msra.mxu0 0
    %2960 = vmatprep.subr.bf16.mxu0 0
    %2961 = vmatpush2.bf16.msra.mxu0 0
    %2962 = vmatprep.subr.bf16.mxu0 0
    %2963 = vmatpush2.bf16.msra.mxu0 0
    %2964 = vmatprep.subr.bf16.mxu0 0
    %2965 = vmatpush2.bf16.msra.mxu0 0
    %2966 = vmatprep.subr.bf16.mxu0 0
    %2967 = vmatpush2.bf16.msra.mxu0 0
    %2968 = vmatprep.subr.bf16.mxu0 0
    %2969 = vmatpush2.bf16.msra.mxu0 0
    %2970 = vmatprep.subr.bf16.mxu0 0
    %2971 = vmatpush2.bf16.msra.mxu0 0
    %2972 = vmatprep.mubr.bf16.mxu0 0
    %2973 = vmatmul.mubr.bf16.gmra.mxu0 %v1658
    %v2974 = vpop.f32.mrf.mxu0
    %v2975 = vadd.f32 %v2913, %v2974
    %v2976 = vpop.f32.mrf.mxu0
    %v2977 = vadd.f32 %v2917, %v2976
    %v2978 = vpop.f32.mrf.mxu0
    %v2979 = vadd.f32 %v2913, %v2978
    %v2980 = vpop.f32.mrf.mxu0
    %v2981 = vadd.f32 %v2917, %v2980
    %2982 = vdwg.mxu0
    %v2983 = vmax.f32 %v2975, 0.0
    %v2984 = vmax.f32 %v2977, 0.0
    %v2985 = vmax.f32 %v2979, 0.0
    %v2986 = vmax.f32 %v2981, 0.0
    %v2987 = vpack.c.bf16 %v2985, %v2983
    %v2988 = vpack.c.bf16 %v2986, %v2984
    %v2989 = vld [vmem:[%s4 + $0x280] sm:$0xf]
    %v2990 = vld [vmem:[%s4 + $0x284] sm:$0xf]
    %v2991 = vld [vmem:[%s4 + $0x288] sm:$0xf]
    %v2992 = vld [vmem:[%s4 + $0x28c] sm:$0xf]
    %v2993 = vld [vmem:[%s4 + $0x290] sm:$0xf]
    %v2994 = vld [vmem:[%s4 + $0x294] sm:$0xf]
    %v2995 = vld [vmem:[%s4 + $0x298] sm:$0xf]
    %v2996 = vld [vmem:[%s4 + $0x29c] sm:$0xf]
    %v2997 = vld [vmem:[%s4 + $0x2a0] sm:$0xf]
    %v2998 = vld [vmem:[%s4 + $0x2a4] sm:$0xf]
    %v2999 = vld [vmem:[%s4 + $0x2a8] sm:$0xf]
    %v3000 = vld [vmem:[%s4 + $0x2ac] sm:$0xf]
    %v3001 = vld [vmem:[%s4 + $0x2b0] sm:$0xf]
    %v3002 = vld [vmem:[%s4 + $0x2b4] sm:$0xf]
    %v3003 = vld [vmem:[%s4 + $0x2b8] sm:$0xf]
    %v3004 = vld [vmem:[%s4 + $0x2bc] sm:$0xf]
    %v3005 = vld [vmem:[%s4 + $0x2c0] sm:$0xf]
    %v3006 = vld [vmem:[%s4 + $0x2c4] sm:$0xf]
    %v3007 = vld [vmem:[%s4 + $0x2c8] sm:$0xf]
    %v3008 = vld [vmem:[%s4 + $0x2cc] sm:$0xf]
    %v3009 = vld [vmem:[%s4 + $0x2d0] sm:$0xf]
    %v3010 = vld [vmem:[%s4 + $0x2d4] sm:$0xf]
    %v3011 = vld [vmem:[%s4 + $0x2d8] sm:$0xf]
    %v3012 = vld [vmem:[%s4 + $0x2dc] sm:$0xf]
    %v3013 = vld [vmem:[%s4 + $0x2e0] sm:$0xf]
    %v3014 = vld [vmem:[%s4 + $0x2e4] sm:$0xf]
    %v3015 = vld [vmem:[%s4 + $0x2e8] sm:$0xf]
    %v3016 = vld [vmem:[%s4 + $0x2ec] sm:$0xf]
    %v3017 = vld [vmem:[%s4 + $0x2f0] sm:$0xf]
    %v3018 = vld [vmem:[%s4 + $0x2f4] sm:$0xf]
    %v3019 = vld [vmem:[%s4 + $0x2f8] sm:$0xf]
    %v3020 = vld [vmem:[%s4 + $0x2fc] sm:$0xf]
    %v3053 = vunpack.c.l.b16 %v2989
    %v3054 = vunpack.c.l.b16 %v2990
    %v3055 = vunpack.c.l.b16 %v2991
    %v3056 = vunpack.c.l.b16 %v2992
    %v3057 = vunpack.c.l.b16 %v2993
    %v3058 = vunpack.c.l.b16 %v2994
    %v3059 = vunpack.c.l.b16 %v2995
    %v3060 = vunpack.c.l.b16 %v2996
    %v3061 = vunpack.c.l.b16 %v2997
    %v3062 = vunpack.c.l.b16 %v2998
    %v3063 = vunpack.c.l.b16 %v2999
    %v3064 = vunpack.c.l.b16 %v3000
    %v3065 = vunpack.c.l.b16 %v3001
    %v3066 = vunpack.c.l.b16 %v3002
    %v3067 = vunpack.c.l.b16 %v3003
    %v3068 = vunpack.c.l.b16 %v3004
    %v3069 = vunpack.c.l.b16 %v3005
    %v3070 = vunpack.c.l.b16 %v3006
    %v3071 = vunpack.c.l.b16 %v3007
    %v3072 = vunpack.c.l.b16 %v3008
    %v3073 = vunpack.c.l.b16 %v3009
    %v3074 = vunpack.c.l.b16 %v3010
    %v3075 = vunpack.c.l.b16 %v3011
    %v3076 = vunpack.c.l.b16 %v3012
    %v3077 = vunpack.c.l.b16 %v3013
    %v3078 = vunpack.c.l.b16 %v3014
    %v3079 = vunpack.c.l.b16 %v3015
    %v3080 = vunpack.c.l.b16 %v3016
    %v3081 = vunpack.c.l.b16 %v3017
    %v3082 = vunpack.c.l.b16 %v3018
    %v3083 = vunpack.c.l.b16 %v3019
    %v3084 = vunpack.c.l.b16 %v3020
    %v3085 = vpack.c.b16 %v3054, %v3053
    %v3086 = vpack.c.b16 %v3056, %v3055
    %v3087 = vpack.c.b16 %v3058, %v3057
    %v3088 = vpack.c.b16 %v3060, %v3059
    %v3089 = vpack.c.b16 %v3062, %v3061
    %v3090 = vpack.c.b16 %v3064, %v3063
    %v3091 = vpack.c.b16 %v3066, %v3065
    %v3092 = vpack.c.b16 %v3068, %v3067
    %v3093 = vpack.c.b16 %v3070, %v3069
    %v3094 = vpack.c.b16 %v3072, %v3071
    %v3095 = vpack.c.b16 %v3074, %v3073
    %v3096 = vpack.c.b16 %v3076, %v3075
    %v3097 = vpack.c.b16 %v3078, %v3077
    %v3098 = vpack.c.b16 %v3080, %v3079
    %v3099 = vpack.c.b16 %v3082, %v3081
    %v3100 = vpack.c.b16 %v3084, %v3083
    %3117 = vmatprep.subr.bf16.mxu0 0
    %3118 = vmatpush1.bf16.msra.mxu0 %v3092
    %3119 = vmatprep.subr.bf16.mxu0 0
    %3120 = vmatpush1.bf16.msra.mxu0 %v3091
    %3121 = vmatprep.subr.bf16.mxu0 0
    %3122 = vmatpush1.bf16.msra.mxu0 %v3090
    %3123 = vmatprep.subr.bf16.mxu0 0
    %3124 = vmatpush1.bf16.msra.mxu0 %v3089
    %3125 = vmatprep.subr.bf16.mxu0 0
    %3126 = vmatpush1.bf16.msra.mxu0 %v3088
    %3127 = vmatprep.subr.bf16.mxu0 0
    %3128 = vmatpush1.bf16.msra.mxu0 %v3087
    %3129 = vmatprep.subr.bf16.mxu0 0
    %3130 = vmatpush1.bf16.msra.mxu0 %v3086
    %3131 = vmatprep.subr.bf16.mxu0 0
    %3132 = vmatpush1.bf16.msra.mxu0 %v3085
    %3133 = vmatprep.subr.bf16.mxu0 0
    %3134 = vmatpush2.bf16.msra.mxu0 %v3100
    %3135 = vmatprep.subr.bf16.mxu0 0
    %3136 = vmatpush2.bf16.msra.mxu0 %v3099
    %3137 = vmatprep.subr.bf16.mxu0 0
    %3138 = vmatpush2.bf16.msra.mxu0 %v3098
    %3139 = vmatprep.subr.bf16.mxu0 0
    %3140 = vmatpush2.bf16.msra.mxu0 %v3097
    %3141 = vmatprep.subr.bf16.mxu0 0
    %3142 = vmatpush2.bf16.msra.mxu0 %v3096
    %3143 = vmatprep.subr.bf16.mxu0 0
    %3144 = vmatpush2.bf16.msra.mxu0 %v3095
    %3145 = vmatprep.subr.bf16.mxu0 0
    %3146 = vmatpush2.bf16.msra.mxu0 %v3094
    %3147 = vmatprep.subr.bf16.mxu0 0
    %3148 = vmatpush2.bf16.msra.mxu0 %v3093
    %3149 = vmatprep.mubr.bf16.mxu0 %v2988
    %3150 = vmatmul.mubr.bf16.gmra.mxu0 %v2987
    %v3151 = vpop.f32.mrf.mxu0
    %v3152 = vadd.f32 0.0, %v3151
    %v3153 = vpop.f32.mrf.mxu0
    %v3154 = vpop.f32.mrf.mxu0
    %v3155 = vadd.f32 0.0, %v3154
    %v3156 = vpop.f32.mrf.mxu0
    %3157 = vdwg.mxu0
    %v3158 = vadd.f32 %v2902, %v3152
    %v3159 = vadd.f32 %v2903, %v3155
    %v3160 = vld [vmem:[%s3 + $0x30] sm:$0xff]
    %v3161 = vld [vmem:[%s3 + $0x70] sm:$0xff]
    %v3162 = vld [vmem:[%s3 + $0xb0] sm:$0xff]
    %v3163 = vld [vmem:[%s3 + $0xf0] sm:$0xff]
    %v3164 = vld [vmem:[%s5 + $0xc] sm:$0x3]
    %v3166 = vlaneseq
    %v3167 = vshrl.u32 %v3166, 7
    %v3168 = vsub.s32 0, %v3167
    %v3169 = vrot.slane %v3164, %v3168
    %v3170 = vlaneseq
    %v3171 = vshrl.u32 %v3170, 7
    %v3172 = vsub.s32 1, %v3171
    %v3173 = vrot.slane %v3164, %v3172
    %v3180 = vunpack.c.l.b16 %v3160
    %v3181 = vunpack.c.h.b16 %v3160
    %v3182 = vunpack.c.l.b16 %v3161
    %v3183 = vunpack.c.h.b16 %v3161
    %v3184 = vunpack.c.l.b16 %v3162
    %v3185 = vunpack.c.h.b16 %v3162
    %v3186 = vunpack.c.l.b16 %v3163
    %v3187 = vunpack.c.h.b16 %v3163
    %v3188 = vpack.c.b16 %v3182, %v3180
    %v3189 = vpack.c.b16 %v3183, %v3181
    %v3190 = vpack.c.b16 %v3186, %v3184
    %v3191 = vpack.c.b16 %v3187, %v3185
    %3196 = vmatprep.subr.bf16.mxu0 0
    %3197 = vmatpush1.bf16.msra.mxu0 0
    %3198 = vmatprep.subr.bf16.mxu0 0
    %3199 = vmatpush1.bf16.msra.mxu0 0
    %3200 = vmatprep.subr.bf16.mxu0 0
    %3201 = vmatpush1.bf16.msra.mxu0 0
    %3202 = vmatprep.subr.bf16.mxu0 0
    %3203 = vmatpush1.bf16.msra.mxu0 0
    %3204 = vmatprep.subr.bf16.mxu0 0
    %3205 = vmatpush1.bf16.msra.mxu0 0
    %3206 = vmatprep.subr.bf16.mxu0 0
    %3207 = vmatpush1.bf16.msra.mxu0 0
    %3208 = vmatprep.subr.bf16.mxu0 %v3191
    %3209 = vmatpush1.bf16.msra.mxu0 %v3190
    %3210 = vmatprep.subr.bf16.mxu0 %v3189
    %3211 = vmatpush1.bf16.msra.mxu0 %v3188
    %3212 = vmatprep.subr.bf16.mxu0 0
    %3213 = vmatpush2.bf16.msra.mxu0 0
    %3214 = vmatprep.subr.bf16.mxu0 0
    %3215 = vmatpush2.bf16.msra.mxu0 0
    %3216 = vmatprep.subr.bf16.mxu0 0
    %3217 = vmatpush2.bf16.msra.mxu0 0
    %3218 = vmatprep.subr.bf16.mxu0 0
    %3219 = vmatpush2.bf16.msra.mxu0 0
    %3220 = vmatprep.subr.bf16.mxu0 0
    %3221 = vmatpush2.bf16.msra.mxu0 0
    %3222 = vmatprep.subr.bf16.mxu0 0
    %3223 = vmatpush2.bf16.msra.mxu0 0
    %3224 = vmatprep.subr.bf16.mxu0 0
    %3225 = vmatpush2.bf16.msra.mxu0 0
    %3226 = vmatprep.subr.bf16.mxu0 0
    %3227 = vmatpush2.bf16.msra.mxu0 0
    %3228 = vmatprep.mubr.bf16.mxu0 0
    %3229 = vmatmul.mubr.bf16.gmra.mxu0 %v1658
    %v3230 = vpop.f32.mrf.mxu0
    %v3231 = vadd.f32 %v3169, %v3230
    %v3232 = vpop.f32.mrf.mxu0
    %v3233 = vadd.f32 %v3173, %v3232
    %v3234 = vpop.f32.mrf.mxu0
    %v3235 = vadd.f32 %v3169, %v3234
    %v3236 = vpop.f32.mrf.mxu0
    %v3237 = vadd.f32 %v3173, %v3236
    %3238 = vdwg.mxu0
    %v3239 = vmax.f32 %v3231, 0.0
    %v3240 = vmax.f32 %v3233, 0.0
    %v3241 = vmax.f32 %v3235, 0.0
    %v3242 = vmax.f32 %v3237, 0.0
    %v3243 = vpack.c.bf16 %v3241, %v3239
    %v3244 = vpack.c.bf16 %v3242, %v3240
    %v3245 = vld [vmem:[%s4 + $0x300] sm:$0xf]
    %v3246 = vld [vmem:[%s4 + $0x304] sm:$0xf]
    %v3247 = vld [vmem:[%s4 + $0x308] sm:$0xf]
    %v3248 = vld [vmem:[%s4 + $0x30c] sm:$0xf]
    %v3249 = vld [vmem:[%s4 + $0x310] sm:$0xf]
    %v3250 = vld [vmem:[%s4 + $0x314] sm:$0xf]
    %v3251 = vld [vmem:[%s4 + $0x318] sm:$0xf]
    %v3252 = vld [vmem:[%s4 + $0x31c] sm:$0xf]
    %v3253 = vld [vmem:[%s4 + $0x320] sm:$0xf]
    %v3254 = vld [vmem:[%s4 + $0x324] sm:$0xf]
    %v3255 = vld [vmem:[%s4 + $0x328] sm:$0xf]
    %v3256 = vld [vmem:[%s4 + $0x32c] sm:$0xf]
    %v3257 = vld [vmem:[%s4 + $0x330] sm:$0xf]
    %v3258 = vld [vmem:[%s4 + $0x334] sm:$0xf]
    %v3259 = vld [vmem:[%s4 + $0x338] sm:$0xf]
    %v3260 = vld [vmem:[%s4 + $0x33c] sm:$0xf]
    %v3261 = vld [vmem:[%s4 + $0x340] sm:$0xf]
    %v3262 = vld [vmem:[%s4 + $0x344] sm:$0xf]
    %v3263 = vld [vmem:[%s4 + $0x348] sm:$0xf]
    %v3264 = vld [vmem:[%s4 + $0x34c] sm:$0xf]
    %v3265 = vld [vmem:[%s4 + $0x350] sm:$0xf]
    %v3266 = vld [vmem:[%s4 + $0x354] sm:$0xf]
    %v3267 = vld [vmem:[%s4 + $0x358] sm:$0xf]
    %v3268 = vld [vmem:[%s4 + $0x35c] sm:$0xf]
    %v3269 = vld [vmem:[%s4 + $0x360] sm:$0xf]
    %v3270 = vld [vmem:[%s4 + $0x364] sm:$0xf]
    %v3271 = vld [vmem:[%s4 + $0x368] sm:$0xf]
    %v3272 = vld [vmem:[%s4 + $0x36c] sm:$0xf]
    %v3273 = vld [vmem:[%s4 + $0x370] sm:$0xf]
    %v3274 = vld [vmem:[%s4 + $0x374] sm:$0xf]
    %v3275 = vld [vmem:[%s4 + $0x378] sm:$0xf]
    %v3276 = vld [vmem:[%s4 + $0x37c] sm:$0xf]
    %v3309 = vunpack.c.l.b16 %v3245
    %v3310 = vunpack.c.l.b16 %v3246
    %v3311 = vunpack.c.l.b16 %v3247
    %v3312 = vunpack.c.l.b16 %v3248
    %v3313 = vunpack.c.l.b16 %v3249
    %v3314 = vunpack.c.l.b16 %v3250
    %v3315 = vunpack.c.l.b16 %v3251
    %v3316 = vunpack.c.l.b16 %v3252
    %v3317 = vunpack.c.l.b16 %v3253
    %v3318 = vunpack.c.l.b16 %v3254
    %v3319 = vunpack.c.l.b16 %v3255
    %v3320 = vunpack.c.l.b16 %v3256
    %v3321 = vunpack.c.l.b16 %v3257
    %v3322 = vunpack.c.l.b16 %v3258
    %v3323 = vunpack.c.l.b16 %v3259
    %v3324 = vunpack.c.l.b16 %v3260
    %v3325 = vunpack.c.l.b16 %v3261
    %v3326 = vunpack.c.l.b16 %v3262
    %v3327 = vunpack.c.l.b16 %v3263
    %v3328 = vunpack.c.l.b16 %v3264
    %v3329 = vunpack.c.l.b16 %v3265
    %v3330 = vunpack.c.l.b16 %v3266
    %v3331 = vunpack.c.l.b16 %v3267
    %v3332 = vunpack.c.l.b16 %v3268
    %v3333 = vunpack.c.l.b16 %v3269
    %v3334 = vunpack.c.l.b16 %v3270
    %v3335 = vunpack.c.l.b16 %v3271
    %v3336 = vunpack.c.l.b16 %v3272
    %v3337 = vunpack.c.l.b16 %v3273
    %v3338 = vunpack.c.l.b16 %v3274
    %v3339 = vunpack.c.l.b16 %v3275
    %v3340 = vunpack.c.l.b16 %v3276
    %v3341 = vpack.c.b16 %v3310, %v3309
    %v3342 = vpack.c.b16 %v3312, %v3311
    %v3343 = vpack.c.b16 %v3314, %v3313
    %v3344 = vpack.c.b16 %v3316, %v3315
    %v3345 = vpack.c.b16 %v3318, %v3317
    %v3346 = vpack.c.b16 %v3320, %v3319
    %v3347 = vpack.c.b16 %v3322, %v3321
    %v3348 = vpack.c.b16 %v3324, %v3323
    %v3349 = vpack.c.b16 %v3326, %v3325
    %v3350 = vpack.c.b16 %v3328, %v3327
    %v3351 = vpack.c.b16 %v3330, %v3329
    %v3352 = vpack.c.b16 %v3332, %v3331
    %v3353 = vpack.c.b16 %v3334, %v3333
    %v3354 = vpack.c.b16 %v3336, %v3335
    %v3355 = vpack.c.b16 %v3338, %v3337
    %v3356 = vpack.c.b16 %v3340, %v3339
    %3373 = vmatprep.subr.bf16.mxu0 0
    %3374 = vmatpush1.bf16.msra.mxu0 %v3348
    %3375 = vmatprep.subr.bf16.mxu0 0
    %3376 = vmatpush1.bf16.msra.mxu0 %v3347
    %3377 = vmatprep.subr.bf16.mxu0 0
    %3378 = vmatpush1.bf16.msra.mxu0 %v3346
    %3379 = vmatprep.subr.bf16.mxu0 0
    %3380 = vmatpush1.bf16.msra.mxu0 %v3345
    %3381 = vmatprep.subr.bf16.mxu0 0
    %3382 = vmatpush1.bf16.msra.mxu0 %v3344
    %3383 = vmatprep.subr.bf16.mxu0 0
    %3384 = vmatpush1.bf16.msra.mxu0 %v3343
    %3385 = vmatprep.subr.bf16.mxu0 0
    %3386 = vmatpush1.bf16.msra.mxu0 %v3342
    %3387 = vmatprep.subr.bf16.mxu0 0
    %3388 = vmatpush1.bf16.msra.mxu0 %v3341
    %3389 = vmatprep.subr.bf16.mxu0 0
    %3390 = vmatpush2.bf16.msra.mxu0 %v3356
    %3391 = vmatprep.subr.bf16.mxu0 0
    %3392 = vmatpush2.bf16.msra.mxu0 %v3355
    %3393 = vmatprep.subr.bf16.mxu0 0
    %3394 = vmatpush2.bf16.msra.mxu0 %v3354
    %3395 = vmatprep.subr.bf16.mxu0 0
    %3396 = vmatpush2.bf16.msra.mxu0 %v3353
    %3397 = vmatprep.subr.bf16.mxu0 0
    %3398 = vmatpush2.bf16.msra.mxu0 %v3352
    %3399 = vmatprep.subr.bf16.mxu0 0
    %3400 = vmatpush2.bf16.msra.mxu0 %v3351
    %3401 = vmatprep.subr.bf16.mxu0 0
    %3402 = vmatpush2.bf16.msra.mxu0 %v3350
    %3403 = vmatprep.subr.bf16.mxu0 0
    %3404 = vmatpush2.bf16.msra.mxu0 %v3349
    %3405 = vmatprep.mubr.bf16.mxu0 %v3244
    %3406 = vmatmul.mubr.bf16.gmra.mxu0 %v3243
    %v3407 = vpop.f32.mrf.mxu0
    %v3408 = vadd.f32 0.0, %v3407
    %v3409 = vpop.f32.mrf.mxu0
    %v3410 = vpop.f32.mrf.mxu0
    %v3411 = vadd.f32 0.0, %v3410
    %v3412 = vpop.f32.mrf.mxu0
    %3413 = vdwg.mxu0
    %v3414 = vadd.f32 %v3158, %v3408
    %v3415 = vadd.f32 %v3159, %v3411
    %v3416 = vld [vmem:[%s3 + $0x38] sm:$0xff]
    %v3417 = vld [vmem:[%s3 + $0x78] sm:$0xff]
    %v3418 = vld [vmem:[%s3 + $0xb8] sm:$0xff]
    %v3419 = vld [vmem:[%s3 + $0xf8] sm:$0xff]
    %v3420 = vld [vmem:[%s5 + $0xe] sm:$0x3]
    %v3422 = vlaneseq
    %v3423 = vshrl.u32 %v3422, 7
    %v3424 = vsub.s32 0, %v3423
    %v3425 = vrot.slane %v3420, %v3424
    %v3426 = vlaneseq
    %v3427 = vshrl.u32 %v3426, 7
    %v3428 = vsub.s32 1, %v3427
    %v3429 = vrot.slane %v3420, %v3428
    %v3436 = vunpack.c.l.b16 %v3416
    %v3437 = vunpack.c.h.b16 %v3416
    %v3438 = vunpack.c.l.b16 %v3417
    %v3439 = vunpack.c.h.b16 %v3417
    %v3440 = vunpack.c.l.b16 %v3418
    %v3441 = vunpack.c.h.b16 %v3418
    %v3442 = vunpack.c.l.b16 %v3419
    %v3443 = vunpack.c.h.b16 %v3419
    %v3444 = vpack.c.b16 %v3438, %v3436
    %v3445 = vpack.c.b16 %v3439, %v3437
    %v3446 = vpack.c.b16 %v3442, %v3440
    %v3447 = vpack.c.b16 %v3443, %v3441
    %3452 = vmatprep.subr.bf16.mxu0 0
    %3453 = vmatpush1.bf16.msra.mxu0 0
    %3454 = vmatprep.subr.bf16.mxu0 0
    %3455 = vmatpush1.bf16.msra.mxu0 0
    %3456 = vmatprep.subr.bf16.mxu0 0
    %3457 = vmatpush1.bf16.msra.mxu0 0
    %3458 = vmatprep.subr.bf16.mxu0 0
    %3459 = vmatpush1.bf16.msra.mxu0 0
    %3460 = vmatprep.subr.bf16.mxu0 0
    %3461 = vmatpush1.bf16.msra.mxu0 0
    %3462 = vmatprep.subr.bf16.mxu0 0
    %3463 = vmatpush1.bf16.msra.mxu0 0
    %3464 = vmatprep.subr.bf16.mxu0 %v3447
    %3465 = vmatpush1.bf16.msra.mxu0 %v3446
    %3466 = vmatprep.subr.bf16.mxu0 %v3445
    %3467 = vmatpush1.bf16.msra.mxu0 %v3444
    %3468 = vmatprep.subr.bf16.mxu0 0
    %3469 = vmatpush2.bf16.msra.mxu0 0
    %3470 = vmatprep.subr.bf16.mxu0 0
    %3471 = vmatpush2.bf16.msra.mxu0 0
    %3472 = vmatprep.subr.bf16.mxu0 0
    %3473 = vmatpush2.bf16.msra.mxu0 0
    %3474 = vmatprep.subr.bf16.mxu0 0
    %3475 = vmatpush2.bf16.msra.mxu0 0
    %3476 = vmatprep.subr.bf16.mxu0 0
    %3477 = vmatpush2.bf16.msra.mxu0 0
    %3478 = vmatprep.subr.bf16.mxu0 0
    %3479 = vmatpush2.bf16.msra.mxu0 0
    %3480 = vmatprep.subr.bf16.mxu0 0
    %3481 = vmatpush2.bf16.msra.mxu0 0
    %3482 = vmatprep.subr.bf16.mxu0 0
    %3483 = vmatpush2.bf16.msra.mxu0 0
    %3484 = vmatprep.mubr.bf16.mxu0 0
    %3485 = vmatmul.mubr.bf16.gmra.mxu0 %v1658
    %v3486 = vpop.f32.mrf.mxu0
    %v3487 = vadd.f32 %v3425, %v3486
    %v3488 = vpop.f32.mrf.mxu0
    %v3489 = vadd.f32 %v3429, %v3488
    %v3490 = vpop.f32.mrf.mxu0
    %v3491 = vadd.f32 %v3425, %v3490
    %v3492 = vpop.f32.mrf.mxu0
    %v3493 = vadd.f32 %v3429, %v3492
    %3494 = vdwg.mxu0
    %v3495 = vmax.f32 %v3487, 0.0
    %v3496 = vmax.f32 %v3489, 0.0
    %v3497 = vmax.f32 %v3491, 0.0
    %v3498 = vmax.f32 %v3493, 0.0
    %v3499 = vpack.c.bf16 %v3497, %v3495
    %v3500 = vpack.c.bf16 %v3498, %v3496
    %v3501 = vld [vmem:[%s4 + $0x380] sm:$0xf]
    %v3502 = vld [vmem:[%s4 + $0x384] sm:$0xf]
    %v3503 = vld [vmem:[%s4 + $0x388] sm:$0xf]
    %v3504 = vld [vmem:[%s4 + $0x38c] sm:$0xf]
    %v3505 = vld [vmem:[%s4 + $0x390] sm:$0xf]
    %v3506 = vld [vmem:[%s4 + $0x394] sm:$0xf]
    %v3507 = vld [vmem:[%s4 + $0x398] sm:$0xf]
    %v3508 = vld [vmem:[%s4 + $0x39c] sm:$0xf]
    %v3509 = vld [vmem:[%s4 + $0x3a0] sm:$0xf]
    %v3510 = vld [vmem:[%s4 + $0x3a4] sm:$0xf]
    %v3511 = vld [vmem:[%s4 + $0x3a8] sm:$0xf]
    %v3512 = vld [vmem:[%s4 + $0x3ac] sm:$0xf]
    %v3513 = vld [vmem:[%s4 + $0x3b0] sm:$0xf]
    %v3514 = vld [vmem:[%s4 + $0x3b4] sm:$0xf]
    %v3515 = vld [vmem:[%s4 + $0x3b8] sm:$0xf]
    %v3516 = vld [vmem:[%s4 + $0x3bc] sm:$0xf]
    %v3517 = vld [vmem:[%s4 + $0x3c0] sm:$0xf]
    %v3518 = vld [vmem:[%s4 + $0x3c4] sm:$0xf]
    %v3519 = vld [vmem:[%s4 + $0x3c8] sm:$0xf]
    %v3520 = vld [vmem:[%s4 + $0x3cc] sm:$0xf]
    %v3521 = vld [vmem:[%s4 + $0x3d0] sm:$0xf]
    %v3522 = vld [vmem:[%s4 + $0x3d4] sm:$0xf]
    %v3523 = vld [vmem:[%s4 + $0x3d8] sm:$0xf]
    %v3524 = vld [vmem:[%s4 + $0x3dc] sm:$0xf]
    %v3525 = vld [vmem:[%s4 + $0x3e0] sm:$0xf]
    %v3526 = vld [vmem:[%s4 + $0x3e4] sm:$0xf]
    %v3527 = vld [vmem:[%s4 + $0x3e8] sm:$0xf]
    %v3528 = vld [vmem:[%s4 + $0x3ec] sm:$0xf]
    %v3529 = vld [vmem:[%s4 + $0x3f0] sm:$0xf]
    %v3530 = vld [vmem:[%s4 + $0x3f4] sm:$0xf]
    %v3531 = vld [vmem:[%s4 + $0x3f8] sm:$0xf]
    %v3532 = vld [vmem:[%s4 + $0x3fc] sm:$0xf]
    %v3565 = vunpack.c.l.b16 %v3501
    %v3566 = vunpack.c.l.b16 %v3502
    %v3567 = vunpack.c.l.b16 %v3503
    %v3568 = vunpack.c.l.b16 %v3504
    %v3569 = vunpack.c.l.b16 %v3505
    %v3570 = vunpack.c.l.b16 %v3506
    %v3571 = vunpack.c.l.b16 %v3507
    %v3572 = vunpack.c.l.b16 %v3508
    %v3573 = vunpack.c.l.b16 %v3509
    %v3574 = vunpack.c.l.b16 %v3510
    %v3575 = vunpack.c.l.b16 %v3511
    %v3576 = vunpack.c.l.b16 %v3512
    %v3577 = vunpack.c.l.b16 %v3513
    %v3578 = vunpack.c.l.b16 %v3514
    %v3579 = vunpack.c.l.b16 %v3515
    %v3580 = vunpack.c.l.b16 %v3516
    %v3581 = vunpack.c.l.b16 %v3517
    %v3582 = vunpack.c.l.b16 %v3518
    %v3583 = vunpack.c.l.b16 %v3519
    %v3584 = vunpack.c.l.b16 %v3520
    %v3585 = vunpack.c.l.b16 %v3521
    %v3586 = vunpack.c.l.b16 %v3522
    %v3587 = vunpack.c.l.b16 %v3523
    %v3588 = vunpack.c.l.b16 %v3524
    %v3589 = vunpack.c.l.b16 %v3525
    %v3590 = vunpack.c.l.b16 %v3526
    %v3591 = vunpack.c.l.b16 %v3527
    %v3592 = vunpack.c.l.b16 %v3528
    %v3593 = vunpack.c.l.b16 %v3529
    %v3594 = vunpack.c.l.b16 %v3530
    %v3595 = vunpack.c.l.b16 %v3531
    %v3596 = vunpack.c.l.b16 %v3532
    %v3597 = vpack.c.b16 %v3566, %v3565
    %v3598 = vpack.c.b16 %v3568, %v3567
    %v3599 = vpack.c.b16 %v3570, %v3569
    %v3600 = vpack.c.b16 %v3572, %v3571
    %v3601 = vpack.c.b16 %v3574, %v3573
    %v3602 = vpack.c.b16 %v3576, %v3575
    %v3603 = vpack.c.b16 %v3578, %v3577
    %v3604 = vpack.c.b16 %v3580, %v3579
    %v3605 = vpack.c.b16 %v3582, %v3581
    %v3606 = vpack.c.b16 %v3584, %v3583
    %v3607 = vpack.c.b16 %v3586, %v3585
    %v3608 = vpack.c.b16 %v3588, %v3587
    %v3609 = vpack.c.b16 %v3590, %v3589
    %v3610 = vpack.c.b16 %v3592, %v3591
    %v3611 = vpack.c.b16 %v3594, %v3593
    %v3612 = vpack.c.b16 %v3596, %v3595
    %3629 = vmatprep.subr.bf16.mxu0 0
    %3630 = vmatpush1.bf16.msra.mxu0 %v3604
    %3631 = vmatprep.subr.bf16.mxu0 0
    %3632 = vmatpush1.bf16.msra.mxu0 %v3603
    %3633 = vmatprep.subr.bf16.mxu0 0
    %3634 = vmatpush1.bf16.msra.mxu0 %v3602
    %3635 = vmatprep.subr.bf16.mxu0 0
    %3636 = vmatpush1.bf16.msra.mxu0 %v3601
    %3637 = vmatprep.subr.bf16.mxu0 0
    %3638 = vmatpush1.bf16.msra.mxu0 %v3600
    %3639 = vmatprep.subr.bf16.mxu0 0
    %3640 = vmatpush1.bf16.msra.mxu0 %v3599
    %3641 = vmatprep.subr.bf16.mxu0 0
    %3642 = vmatpush1.bf16.msra.mxu0 %v3598
    %3643 = vmatprep.subr.bf16.mxu0 0
    %3644 = vmatpush1.bf16.msra.mxu0 %v3597
    %3645 = vmatprep.subr.bf16.mxu0 0
    %3646 = vmatpush2.bf16.msra.mxu0 %v3612
    %3647 = vmatprep.subr.bf16.mxu0 0
    %3648 = vmatpush2.bf16.msra.mxu0 %v3611
    %3649 = vmatprep.subr.bf16.mxu0 0
    %3650 = vmatpush2.bf16.msra.mxu0 %v3610
    %3651 = vmatprep.subr.bf16.mxu0 0
    %3652 = vmatpush2.bf16.msra.mxu0 %v3609
    %3653 = vmatprep.subr.bf16.mxu0 0
    %3654 = vmatpush2.bf16.msra.mxu0 %v3608
    %3655 = vmatprep.subr.bf16.mxu0 0
    %3656 = vmatpush2.bf16.msra.mxu0 %v3607
    %3657 = vmatprep.subr.bf16.mxu0 0
    %3658 = vmatpush2.bf16.msra.mxu0 %v3606
    %3659 = vmatprep.subr.bf16.mxu0 0
    %3660 = vmatpush2.bf16.msra.mxu0 %v3605
    %3661 = vmatprep.mubr.bf16.mxu0 %v3500
    %3662 = vmatmul.mubr.bf16.gmra.mxu0 %v3499
    %v3663 = vpop.f32.mrf.mxu0
    %v3664 = vadd.f32 0.0, %v3663
    %v3665 = vpop.f32.mrf.mxu0
    %v3666 = vpop.f32.mrf.mxu0
    %v3667 = vadd.f32 0.0, %v3666
    %v3668 = vpop.f32.mrf.mxu0
    %3669 = vdwg.mxu0
    %v3670 = vadd.f32 %v3414, %v3664
    %v3671 = vadd.f32 %v3415, %v3667
    %v3672 = vadd.f32 %v1614, %v3670
    %v3673 = vadd.f32 %v1615, %v3671
    %v3674 = vsel %vm45, %v3672, 0.0
    %3675 = vadd.xlane.f32.xlu0 %v3674
    %v3676 = vpop.xlane.xlu0 %3675
    %v3677 = vsel %vm45, %v3673, 0.0
    %3678 = vadd.xlane.f32.xlu0 %v3677
    %v3679 = vpop.xlane.xlu0 %3678
    %v3680 = vmul.f32 %v3676, %v1583
    %v3681 = vmul.f32 %v3679, %v1583
    %v3682 = vsub.f32 %v3672, %v3680
    %v3683 = vsub.f32 %v3673, %v3681
    %v3684 = vmul.f32 %v3682, %v3682
    %v3685 = vmul.f32 %v3683, %v3683
    %v3686 = vsel %vm45, %v3684, 0.0
    %3687 = vadd.xlane.f32.xlu0 %v3686
    %v3688 = vpop.xlane.xlu0 %3687
    %v3689 = vsel %vm45, %v3685, 0.0
    %3690 = vadd.xlane.f32.xlu0 %v3689
    %v3691 = vpop.xlane.xlu0 %3690
    %v3692 = vmul.f32 %v3688, %v1583
    %v3693 = vmul.f32 %v3691, %v1583
    %v3694 = vadd.f32 %v3692, 1e-05
    %v3695 = vadd.f32 %v3693, 1e-05
    %v3696 = vrsqrt.pop %v3694
    %v3697 = vrsqrt.pop %v3695
    %v3698 = vmul.f32 %v3682, %v3696
    %v3699 = vmul.f32 %v3683, %v3697
    %v3700 = vlaneseq
    %v3701 = vshrl.u32 %v3700, 7
    %v3702 = vsub.s32 5, %v3701
    %v3703 = vrot.slane %v36, %v3702
    %v3704 = vmul.f32 %v3698, %v3703
    %v3705 = vmul.f32 %v3699, %v3703
    %v3706 = vlaneseq
    %v3707 = vshrl.u32 %v3706, 7
    %v3708 = vsub.s32 6, %v3707
    %v3709 = vrot.slane %v36, %v3708
    %v3710 = vadd.f32 %v3704, %v3709
    %v3711 = vadd.f32 %v3705, %v3709
    %s3712 = scalar_lea.vmem %s6, 8
    %v3713 = vld [vmem:[%s3712] sm:$0xff]
    %s3714 = scalar_lea.vmem %s1, 32
    %v3715 = vld [vmem:[%s3714] sm:$0xff]
    %v3716 = vld [vmem:[%s3714 + $0x8] sm:$0xff]
    %v3717 = vld [vmem:[%s3714 + $0x10] sm:$0xff]
    %v3718 = vld [vmem:[%s3714 + $0x18] sm:$0xff]
    %v3719 = vlaneseq
    %v3720 = vshrl.u32 %v3719, 7
    %v3721 = vsub.s32 0, %v3720
    %v3722 = vrot.slane %v3713, %v3721
    %v3724 = vsel %vm45, %v3710, 0
    %v3727 = vsel %vm45, %v3711, 0
    %3729 = vmatprep.subr.mxu0 0.0
    %3730 = vmatpush1.msra.mxu0 0.0
    %3731 = vmatprep.subr.mxu0 0.0
    %3732 = vmatpush1.msra.mxu0 0.0
    %3733 = vmatprep.subr.mxu0 0.0
    %3734 = vmatpush1.msra.mxu0 0.0
    %3735 = vmatprep.subr.mxu0 0.0
    %3736 = vmatpush1.msra.mxu0 0.0
    %3737 = vmatprep.subr.mxu0 0.0
    %3738 = vmatpush1.msra.mxu0 0.0
    %3739 = vmatprep.subr.mxu0 0.0
    %3740 = vmatpush1.msra.mxu0 0.0
    %3741 = vmatprep.subr.mxu0 0.0
    %3742 = vmatpush1.msra.mxu0 0.0
    %3743 = vmatprep.subr.mxu0 0.0
    %3744 = vmatpush1.msra.mxu0 0.0
    %3745 = vmatprep.subr.mxu0 0.0
    %3746 = vmatpush1.msra.mxu0 0.0
    %3747 = vmatprep.subr.mxu0 0.0
    %3748 = vmatpush1.msra.mxu0 0.0
    %3749 = vmatprep.subr.mxu0 0.0
    %3750 = vmatpush1.msra.mxu0 0.0
    %3751 = vmatprep.subr.mxu0 0.0
    %3752 = vmatpush1.msra.mxu0 0.0
    %3753 = vmatprep.subr.mxu0 0.0
    %3754 = vmatpush1.msra.mxu0 %v3718
    %3755 = vmatprep.subr.mxu0 0.0
    %3756 = vmatpush1.msra.mxu0 %v3717
    %3757 = vmatprep.subr.mxu0 0.0
    %3758 = vmatpush1.msra.mxu0 %v3716
    %3759 = vmatprep.subr.mxu0 0.0
    %3760 = vmatpush1.msra.mxu0 %v3715
    %3761 = vmatprep.subr.mxu0 0.0
    %3762 = vmatpush2.msra.mxu0 0.0
    %3763 = vmatprep.subr.mxu0 0.0
    %3764 = vmatpush2.msra.mxu0 0.0
    %3765 = vmatprep.subr.mxu0 0.0
    %3766 = vmatpush2.msra.mxu0 0.0
    %3767 = vmatprep.subr.mxu0 0.0
    %3768 = vmatpush2.msra.mxu0 0.0
    %3769 = vmatprep.subr.mxu0 0.0
    %3770 = vmatpush2.msra.mxu0 0.0
    %3771 = vmatprep.subr.mxu0 0.0
    %3772 = vmatpush2.msra.mxu0 0.0
    %3773 = vmatprep.subr.mxu0 0.0
    %3774 = vmatpush2.msra.mxu0 0.0
    %3775 = vmatprep.subr.mxu0 0.0
    %3776 = vmatpush2.msra.mxu0 0.0
    %3777 = vmatprep.subr.mxu0 0.0
    %3778 = vmatpush2.msra.mxu0 0.0
    %3779 = vmatprep.subr.mxu0 0.0
    %3780 = vmatpush2.msra.mxu0 0.0
    %3781 = vmatprep.subr.mxu0 0.0
    %3782 = vmatpush2.msra.mxu0 0.0
    %3783 = vmatprep.subr.mxu0 0.0
    %3784 = vmatpush2.msra.mxu0 0.0
    %3785 = vmatprep.subr.mxu0 0.0
    %3786 = vmatpush2.msra.mxu0 0.0
    %3787 = vmatprep.subr.mxu0 0.0
    %3788 = vmatpush2.msra.mxu0 0.0
    %3789 = vmatprep.subr.mxu0 0.0
    %3790 = vmatpush2.msra.mxu0 0.0
    %3791 = vmatprep.subr.mxu0 0.0
    %3792 = vmatpush2.msra.mxu0 0.0
    %3793 = vmatprep.mubr.f32.mxu0 0.0
    %3794 = vmatmul.mubr.f32.gmra.mxu0 %v3724
    %v3795 = vpop.f32.mrf.mxu0
    %v3796 = vadd.f32 %v3722, %v3795
    %v3797 = vpop.f32.mrf.mxu0
    %3798 = vmatprep.mubr.f32.mxu0 0.0
    %3799 = vmatmul.mubr.f32.gmra.mxu0 %v3727
    %v3800 = vpop.f32.mrf.mxu0
    %v3801 = vadd.f32 %v3722, %v3800
    %v3802 = vpop.f32.mrf.mxu0
    %3803 = vdwg.mxu0
    %3805 = vrot.lane.b32.xlu0 %v3796, 96
    %v3806 = vpop.permute.xlu0 %3805
    %v3807 = vsel %vm130, %v3796, 0
    %v3809 = vsel %vm130, %v3806, 0
    %3811 = vmatprep.subr.mxu0 0.0
    %3812 = vmatpush1.xpose.msra.mxu0 0.0
    %3813 = vmatprep.subr.mxu0 0.0
    %3814 = vmatpush1.xpose.msra.mxu0 0.0
    %3815 = vmatprep.subr.mxu0 0.0
    %3816 = vmatpush1.xpose.msra.mxu0 0.0
    %3817 = vmatprep.subr.mxu0 0.0
    %3818 = vmatpush1.xpose.msra.mxu0 0.0
    %3819 = vmatprep.subr.mxu0 0.0
    %3820 = vmatpush1.xpose.msra.mxu0 0.0
    %3821 = vmatprep.subr.mxu0 0.0
    %3822 = vmatpush1.xpose.msra.mxu0 0.0
    %3823 = vmatprep.subr.mxu0 0.0
    %3824 = vmatpush1.xpose.msra.mxu0 0.0
    %3825 = vmatprep.subr.mxu0 0.0
    %3826 = vmatpush1.xpose.msra.mxu0 0.0
    %3827 = vmatprep.subr.mxu0 0.0
    %3828 = vmatpush1.xpose.msra.mxu0 0.0
    %3829 = vmatprep.subr.mxu0 0.0
    %3830 = vmatpush1.xpose.msra.mxu0 0.0
    %3831 = vmatprep.subr.mxu0 0.0
    %3832 = vmatpush1.xpose.msra.mxu0 0.0
    %3833 = vmatprep.subr.mxu0 0.0
    %3834 = vmatpush1.xpose.msra.mxu0 0.0
    %3835 = vmatprep.subr.mxu0 0.0
    %3836 = vmatpush1.xpose.msra.mxu0 0.0
    %3837 = vmatprep.subr.mxu0 0.0
    %3838 = vmatpush1.xpose.msra.mxu0 0.0
    %3839 = vmatprep.subr.mxu0 0.0
    %3840 = vmatpush1.xpose.msra.mxu0 0.0
    %3841 = vmatprep.subr.mxu0 0.0
    %3842 = vmatpush1.xpose.msra.mxu0 %v3809
    %3843 = vmatprep.subr.mxu0 0.0
    %3844 = vmatpush2.xpose.msra.mxu0 0.0
    %3845 = vmatprep.subr.mxu0 0.0
    %3846 = vmatpush2.xpose.msra.mxu0 0.0
    %3847 = vmatprep.subr.mxu0 0.0
    %3848 = vmatpush2.xpose.msra.mxu0 0.0
    %3849 = vmatprep.subr.mxu0 0.0
    %3850 = vmatpush2.xpose.msra.mxu0 0.0
    %3851 = vmatprep.subr.mxu0 0.0
    %3852 = vmatpush2.xpose.msra.mxu0 0.0
    %3853 = vmatprep.subr.mxu0 0.0
    %3854 = vmatpush2.xpose.msra.mxu0 0.0
    %3855 = vmatprep.subr.mxu0 0.0
    %3856 = vmatpush2.xpose.msra.mxu0 0.0
    %3857 = vmatprep.subr.mxu0 0.0
    %3858 = vmatpush2.xpose.msra.mxu0 0.0
    %3859 = vmatprep.subr.mxu0 0.0
    %3860 = vmatpush2.xpose.msra.mxu0 0.0
    %3861 = vmatprep.subr.mxu0 0.0
    %3862 = vmatpush2.xpose.msra.mxu0 0.0
    %3863 = vmatprep.subr.mxu0 0.0
    %3864 = vmatpush2.xpose.msra.mxu0 0.0
    %3865 = vmatprep.subr.mxu0 0.0
    %3866 = vmatpush2.xpose.msra.mxu0 0.0
    %3867 = vmatprep.subr.mxu0 0.0
    %3868 = vmatpush2.xpose.msra.mxu0 0.0
    %3869 = vmatprep.subr.mxu0 0.0
    %3870 = vmatpush2.xpose.msra.mxu0 0.0
    %3871 = vmatprep.subr.mxu0 0.0
    %3872 = vmatpush2.xpose.msra.mxu0 0.0
    %3873 = vmatprep.subr.mxu0 0.0
    %3874 = vmatpush2.xpose.msra.mxu0 0.0
    %3875 = vmatprep.mubr.f32.mxu0 0.0
    %3876 = vmatmul.mubr.f32.gmra.mxu0 %v3807
    %v3877 = vpop.f32.mrf.mxu0
    %v3878 = vadd.f32 0.0, %v3877
    %v3879 = vpop.f32.mrf.mxu0
    %3880 = vdwg.mxu0
    %3882 = vrot.lane.b32.xlu0 %v3801, 96
    %v3883 = vpop.permute.xlu0 %3882
    %v3884 = vsel %vm130, %v3801, 0
    %v3886 = vsel %vm130, %v3883, 0
    %3888 = vmatprep.subr.mxu0 0.0
    %3889 = vmatpush1.xpose.msra.mxu0 0.0
    %3890 = vmatprep.subr.mxu0 0.0
    %3891 = vmatpush1.xpose.msra.mxu0 0.0
    %3892 = vmatprep.subr.mxu0 0.0
    %3893 = vmatpush1.xpose.msra.mxu0 0.0
    %3894 = vmatprep.subr.mxu0 0.0
    %3895 = vmatpush1.xpose.msra.mxu0 0.0
    %3896 = vmatprep.subr.mxu0 0.0
    %3897 = vmatpush1.xpose.msra.mxu0 0.0
    %3898 = vmatprep.subr.mxu0 0.0
    %3899 = vmatpush1.xpose.msra.mxu0 0.0
    %3900 = vmatprep.subr.mxu0 0.0
    %3901 = vmatpush1.xpose.msra.mxu0 0.0
    %3902 = vmatprep.subr.mxu0 0.0
    %3903 = vmatpush1.xpose.msra.mxu0 0.0
    %3904 = vmatprep.subr.mxu0 0.0
    %3905 = vmatpush1.xpose.msra.mxu0 0.0
    %3906 = vmatprep.subr.mxu0 0.0
    %3907 = vmatpush1.xpose.msra.mxu0 0.0
    %3908 = vmatprep.subr.mxu0 0.0
    %3909 = vmatpush1.xpose.msra.mxu0 0.0
    %3910 = vmatprep.subr.mxu0 0.0
    %3911 = vmatpush1.xpose.msra.mxu0 0.0
    %3912 = vmatprep.subr.mxu0 0.0
    %3913 = vmatpush1.xpose.msra.mxu0 0.0
    %3914 = vmatprep.subr.mxu0 0.0
    %3915 = vmatpush1.xpose.msra.mxu0 0.0
    %3916 = vmatprep.subr.mxu0 0.0
    %3917 = vmatpush1.xpose.msra.mxu0 0.0
    %3918 = vmatprep.subr.mxu0 0.0
    %3919 = vmatpush1.xpose.msra.mxu0 %v3886
    %3920 = vmatprep.subr.mxu0 0.0
    %3921 = vmatpush2.xpose.msra.mxu0 0.0
    %3922 = vmatprep.subr.mxu0 0.0
    %3923 = vmatpush2.xpose.msra.mxu0 0.0
    %3924 = vmatprep.subr.mxu0 0.0
    %3925 = vmatpush2.xpose.msra.mxu0 0.0
    %3926 = vmatprep.subr.mxu0 0.0
    %3927 = vmatpush2.xpose.msra.mxu0 0.0
    %3928 = vmatprep.subr.mxu0 0.0
    %3929 = vmatpush2.xpose.msra.mxu0 0.0
    %3930 = vmatprep.subr.mxu0 0.0
    %3931 = vmatpush2.xpose.msra.mxu0 0.0
    %3932 = vmatprep.subr.mxu0 0.0
    %3933 = vmatpush2.xpose.msra.mxu0 0.0
    %3934 = vmatprep.subr.mxu0 0.0
    %3935 = vmatpush2.xpose.msra.mxu0 0.0
    %3936 = vmatprep.subr.mxu0 0.0
    %3937 = vmatpush2.xpose.msra.mxu0 0.0
    %3938 = vmatprep.subr.mxu0 0.0
    %3939 = vmatpush2.xpose.msra.mxu0 0.0
    %3940 = vmatprep.subr.mxu0 0.0
    %3941 = vmatpush2.xpose.msra.mxu0 0.0
    %3942 = vmatprep.subr.mxu0 0.0
    %3943 = vmatpush2.xpose.msra.mxu0 0.0
    %3944 = vmatprep.subr.mxu0 0.0
    %3945 = vmatpush2.xpose.msra.mxu0 0.0
    %3946 = vmatprep.subr.mxu0 0.0
    %3947 = vmatpush2.xpose.msra.mxu0 0.0
    %3948 = vmatprep.subr.mxu0 0.0
    %3949 = vmatpush2.xpose.msra.mxu0 0.0
    %3950 = vmatprep.subr.mxu0 0.0
    %3951 = vmatpush2.xpose.msra.mxu0 0.0
    %3952 = vmatprep.mubr.f32.mxu0 0.0
    %3953 = vmatmul.mubr.f32.gmra.mxu0 %v3884
    %v3954 = vpop.f32.mrf.mxu0
    %v3955 = vadd.f32 0.0, %v3954
    %v3956 = vpop.f32.mrf.mxu0
    %3957 = vdwg.mxu0
    %v3958 = vmul.f32 %v3878, 0.35355338
    %v3959 = vmul.f32 %v3955, 0.35355338
    %v3960 = vsel %vm130, %v3958, -inf
    %3961 = vmax.xlane.f32.xlu0 %v3960
    %v3962 = vpop.xlane.xlu0 %3961
    %v3963 = vsel %vm130, %v3959, -inf
    %3964 = vmax.xlane.f32.xlu0 %v3963
    %v3965 = vpop.xlane.xlu0 %3964
    %v3966 = vsub.f32 %v3958, %v3962
    %v3967 = vsub.f32 %v3959, %v3965
    %v3968 = vmul.f32 %v3966, 1.442695
    %v3969 = vpow.pop %v3968
    %v3970 = vmul.f32 %v3967, 1.442695
    %v3971 = vpow.pop %v3970
    %v3972 = vsel %vm130, %v3969, 0.0
    %3973 = vadd.xlane.f32.xlu0 %v3972
    %v3974 = vpop.xlane.xlu0 %3973
    %v3975 = vsel %vm130, %v3971, 0.0
    %3976 = vadd.xlane.f32.xlu0 %v3975
    %v3977 = vpop.xlane.xlu0 %3976
    %v3978 = vrcp.pop %v3974
    %v3979 = vrcp.pop %v3977
    %v3980 = vmul.f32 %v3969, %v3978
    %v3981 = vmul.f32 %v3971, %v3979
    %3982 = vrot.lane.b32.xlu0 %v3796, 64
    %v3983 = vpop.permute.xlu0 %3982
    %v3986 = vsel %vm130, %v3980, 0
    %3988 = vmatprep.subr.mxu0 0.0
    %3989 = vmatpush1.msra.mxu0 0.0
    %3990 = vmatprep.subr.mxu0 0.0
    %3991 = vmatpush1.msra.mxu0 0.0
    %3992 = vmatprep.subr.mxu0 0.0
    %3993 = vmatpush1.msra.mxu0 0.0
    %3994 = vmatprep.subr.mxu0 0.0
    %3995 = vmatpush1.msra.mxu0 0.0
    %3996 = vmatprep.subr.mxu0 0.0
    %3997 = vmatpush1.msra.mxu0 0.0
    %3998 = vmatprep.subr.mxu0 0.0
    %3999 = vmatpush1.msra.mxu0 0.0
    %4000 = vmatprep.subr.mxu0 0.0
    %4001 = vmatpush1.msra.mxu0 0.0
    %4002 = vmatprep.subr.mxu0 0.0
    %4003 = vmatpush1.msra.mxu0 0.0
    %4004 = vmatprep.subr.mxu0 0.0
    %4005 = vmatpush1.msra.mxu0 0.0
    %4006 = vmatprep.subr.mxu0 0.0
    %4007 = vmatpush1.msra.mxu0 0.0
    %4008 = vmatprep.subr.mxu0 0.0
    %4009 = vmatpush1.msra.mxu0 0.0
    %4010 = vmatprep.subr.mxu0 0.0
    %4011 = vmatpush1.msra.mxu0 0.0
    %4012 = vmatprep.subr.mxu0 0.0
    %4013 = vmatpush1.msra.mxu0 0.0
    %4014 = vmatprep.subr.mxu0 0.0
    %4015 = vmatpush1.msra.mxu0 0.0
    %4016 = vmatprep.subr.mxu0 0.0
    %4017 = vmatpush1.msra.mxu0 0.0
    %4018 = vmatprep.subr.mxu0 0.0
    %4019 = vmatpush1.msra.mxu0 %v3983
    %4020 = vmatprep.subr.mxu0 0.0
    %4021 = vmatpush2.msra.mxu0 0.0
    %4022 = vmatprep.subr.mxu0 0.0
    %4023 = vmatpush2.msra.mxu0 0.0
    %4024 = vmatprep.subr.mxu0 0.0
    %4025 = vmatpush2.msra.mxu0 0.0
    %4026 = vmatprep.subr.mxu0 0.0
    %4027 = vmatpush2.msra.mxu0 0.0
    %4028 = vmatprep.subr.mxu0 0.0
    %4029 = vmatpush2.msra.mxu0 0.0
    %4030 = vmatprep.subr.mxu0 0.0
    %4031 = vmatpush2.msra.mxu0 0.0
    %4032 = vmatprep.subr.mxu0 0.0
    %4033 = vmatpush2.msra.mxu0 0.0
    %4034 = vmatprep.subr.mxu0 0.0
    %4035 = vmatpush2.msra.mxu0 0.0
    %4036 = vmatprep.subr.mxu0 0.0
    %4037 = vmatpush2.msra.mxu0 0.0
    %4038 = vmatprep.subr.mxu0 0.0
    %4039 = vmatpush2.msra.mxu0 0.0
    %4040 = vmatprep.subr.mxu0 0.0
    %4041 = vmatpush2.msra.mxu0 0.0
    %4042 = vmatprep.subr.mxu0 0.0
    %4043 = vmatpush2.msra.mxu0 0.0
    %4044 = vmatprep.subr.mxu0 0.0
    %4045 = vmatpush2.msra.mxu0 0.0
    %4046 = vmatprep.subr.mxu0 0.0
    %4047 = vmatpush2.msra.mxu0 0.0
    %4048 = vmatprep.subr.mxu0 0.0
    %4049 = vmatpush2.msra.mxu0 0.0
    %4050 = vmatprep.subr.mxu0 0.0
    %4051 = vmatpush2.msra.mxu0 0.0
    %4052 = vmatprep.mubr.f32.mxu0 0.0
    %4053 = vmatmul.mubr.f32.gmra.mxu0 %v3986
    %v4054 = vpop.f32.mrf.mxu0
    %v4055 = vadd.f32 0.0, %v4054
    %v4056 = vpop.f32.mrf.mxu0
    %4057 = vdwg.mxu0
    %4058 = vrot.lane.b32.xlu0 %v3801, 64
    %v4059 = vpop.permute.xlu0 %4058
    %v4062 = vsel %vm130, %v3981, 0
    %4064 = vmatprep.subr.mxu0 0.0
    %4065 = vmatpush1.msra.mxu0 0.0
    %4066 = vmatprep.subr.mxu0 0.0
    %4067 = vmatpush1.msra.mxu0 0.0
    %4068 = vmatprep.subr.mxu0 0.0
    %4069 = vmatpush1.msra.mxu0 0.0
    %4070 = vmatprep.subr.mxu0 0.0
    %4071 = vmatpush1.msra.mxu0 0.0
    %4072 = vmatprep.subr.mxu0 0.0
    %4073 = vmatpush1.msra.mxu0 0.0
    %4074 = vmatprep.subr.mxu0 0.0
    %4075 = vmatpush1.msra.mxu0 0.0
    %4076 = vmatprep.subr.mxu0 0.0
    %4077 = vmatpush1.msra.mxu0 0.0
    %4078 = vmatprep.subr.mxu0 0.0
    %4079 = vmatpush1.msra.mxu0 0.0
    %4080 = vmatprep.subr.mxu0 0.0
    %4081 = vmatpush1.msra.mxu0 0.0
    %4082 = vmatprep.subr.mxu0 0.0
    %4083 = vmatpush1.msra.mxu0 0.0
    %4084 = vmatprep.subr.mxu0 0.0
    %4085 = vmatpush1.msra.mxu0 0.0
    %4086 = vmatprep.subr.mxu0 0.0
    %4087 = vmatpush1.msra.mxu0 0.0
    %4088 = vmatprep.subr.mxu0 0.0
    %4089 = vmatpush1.msra.mxu0 0.0
    %4090 = vmatprep.subr.mxu0 0.0
    %4091 = vmatpush1.msra.mxu0 0.0
    %4092 = vmatprep.subr.mxu0 0.0
    %4093 = vmatpush1.msra.mxu0 0.0
    %4094 = vmatprep.subr.mxu0 0.0
    %4095 = vmatpush1.msra.mxu0 %v4059
    %4096 = vmatprep.subr.mxu0 0.0
    %4097 = vmatpush2.msra.mxu0 0.0
    %4098 = vmatprep.subr.mxu0 0.0
    %4099 = vmatpush2.msra.mxu0 0.0
    %4100 = vmatprep.subr.mxu0 0.0
    %4101 = vmatpush2.msra.mxu0 0.0
    %4102 = vmatprep.subr.mxu0 0.0
    %4103 = vmatpush2.msra.mxu0 0.0
    %4104 = vmatprep.subr.mxu0 0.0
    %4105 = vmatpush2.msra.mxu0 0.0
    %4106 = vmatprep.subr.mxu0 0.0
    %4107 = vmatpush2.msra.mxu0 0.0
    %4108 = vmatprep.subr.mxu0 0.0
    %4109 = vmatpush2.msra.mxu0 0.0
    %4110 = vmatprep.subr.mxu0 0.0
    %4111 = vmatpush2.msra.mxu0 0.0
    %4112 = vmatprep.subr.mxu0 0.0
    %4113 = vmatpush2.msra.mxu0 0.0
    %4114 = vmatprep.subr.mxu0 0.0
    %4115 = vmatpush2.msra.mxu0 0.0
    %4116 = vmatprep.subr.mxu0 0.0
    %4117 = vmatpush2.msra.mxu0 0.0
    %4118 = vmatprep.subr.mxu0 0.0
    %4119 = vmatpush2.msra.mxu0 0.0
    %4120 = vmatprep.subr.mxu0 0.0
    %4121 = vmatpush2.msra.mxu0 0.0
    %4122 = vmatprep.subr.mxu0 0.0
    %4123 = vmatpush2.msra.mxu0 0.0
    %4124 = vmatprep.subr.mxu0 0.0
    %4125 = vmatpush2.msra.mxu0 0.0
    %4126 = vmatprep.subr.mxu0 0.0
    %4127 = vmatpush2.msra.mxu0 0.0
    %4128 = vmatprep.mubr.f32.mxu0 0.0
    %4129 = vmatmul.mubr.f32.gmra.mxu0 %v4062
    %v4130 = vpop.f32.mrf.mxu0
    %v4131 = vadd.f32 0.0, %v4130
    %v4132 = vpop.f32.mrf.mxu0
    %4133 = vdwg.mxu0
    %4134 = vrot.lane.b32.xlu0 %v3796, 120
    %v4135 = vpop.permute.xlu0 %4134
    %4136 = vrot.lane.b32.xlu0 %v3796, 88
    %v4137 = vpop.permute.xlu0 %4136
    %v4138 = vsel %vm130, %v4135, 0
    %v4140 = vsel %vm130, %v4137, 0
    %4142 = vmatprep.subr.mxu0 0.0
    %4143 = vmatpush1.xpose.msra.mxu0 0.0
    %4144 = vmatprep.subr.mxu0 0.0
    %4145 = vmatpush1.xpose.msra.mxu0 0.0
    %4146 = vmatprep.subr.mxu0 0.0
    %4147 = vmatpush1.xpose.msra.mxu0 0.0
    %4148 = vmatprep.subr.mxu0 0.0
    %4149 = vmatpush1.xpose.msra.mxu0 0.0
    %4150 = vmatprep.subr.mxu0 0.0
    %4151 = vmatpush1.xpose.msra.mxu0 0.0
    %4152 = vmatprep.subr.mxu0 0.0
    %4153 = vmatpush1.xpose.msra.mxu0 0.0
    %4154 = vmatprep.subr.mxu0 0.0
    %4155 = vmatpush1.xpose.msra.mxu0 0.0
    %4156 = vmatprep.subr.mxu0 0.0
    %4157 = vmatpush1.xpose.msra.mxu0 0.0
    %4158 = vmatprep.subr.mxu0 0.0
    %4159 = vmatpush1.xpose.msra.mxu0 0.0
    %4160 = vmatprep.subr.mxu0 0.0
    %4161 = vmatpush1.xpose.msra.mxu0 0.0
    %4162 = vmatprep.subr.mxu0 0.0
    %4163 = vmatpush1.xpose.msra.mxu0 0.0
    %4164 = vmatprep.subr.mxu0 0.0
    %4165 = vmatpush1.xpose.msra.mxu0 0.0
    %4166 = vmatprep.subr.mxu0 0.0
    %4167 = vmatpush1.xpose.msra.mxu0 0.0
    %4168 = vmatprep.subr.mxu0 0.0
    %4169 = vmatpush1.xpose.msra.mxu0 0.0
    %4170 = vmatprep.subr.mxu0 0.0
    %4171 = vmatpush1.xpose.msra.mxu0 0.0
    %4172 = vmatprep.subr.mxu0 0.0
    %4173 = vmatpush1.xpose.msra.mxu0 %v4140
    %4174 = vmatprep.subr.mxu0 0.0
    %4175 = vmatpush2.xpose.msra.mxu0 0.0
    %4176 = vmatprep.subr.mxu0 0.0
    %4177 = vmatpush2.xpose.msra.mxu0 0.0
    %4178 = vmatprep.subr.mxu0 0.0
    %4179 = vmatpush2.xpose.msra.mxu0 0.0
    %4180 = vmatprep.subr.mxu0 0.0
    %4181 = vmatpush2.xpose.msra.mxu0 0.0
    %4182 = vmatprep.subr.mxu0 0.0
    %4183 = vmatpush2.xpose.msra.mxu0 0.0
    %4184 = vmatprep.subr.mxu0 0.0
    %4185 = vmatpush2.xpose.msra.mxu0 0.0
    %4186 = vmatprep.subr.mxu0 0.0
    %4187 = vmatpush2.xpose.msra.mxu0 0.0
    %4188 = vmatprep.subr.mxu0 0.0
    %4189 = vmatpush2.xpose.msra.mxu0 0.0
    %4190 = vmatprep.subr.mxu0 0.0
    %4191 = vmatpush2.xpose.msra.mxu0 0.0
    %4192 = vmatprep.subr.mxu0 0.0
    %4193 = vmatpush2.xpose.msra.mxu0 0.0
    %4194 = vmatprep.subr.mxu0 0.0
    %4195 = vmatpush2.xpose.msra.mxu0 0.0
    %4196 = vmatprep.subr.mxu0 0.0
    %4197 = vmatpush2.xpose.msra.mxu0 0.0
    %4198 = vmatprep.subr.mxu0 0.0
    %4199 = vmatpush2.xpose.msra.mxu0 0.0
    %4200 = vmatprep.subr.mxu0 0.0
    %4201 = vmatpush2.xpose.msra.mxu0 0.0
    %4202 = vmatprep.subr.mxu0 0.0
    %4203 = vmatpush2.xpose.msra.mxu0 0.0
    %4204 = vmatprep.subr.mxu0 0.0
    %4205 = vmatpush2.xpose.msra.mxu0 0.0
    %4206 = vmatprep.mubr.f32.mxu0 0.0
    %4207 = vmatmul.mubr.f32.gmra.mxu0 %v4138
    %v4208 = vpop.f32.mrf.mxu0
    %v4209 = vadd.f32 0.0, %v4208
    %v4210 = vpop.f32.mrf.mxu0
    %4211 = vdwg.mxu0
    %4212 = vrot.lane.b32.xlu0 %v3801, 120
    %v4213 = vpop.permute.xlu0 %4212
    %4214 = vrot.lane.b32.xlu0 %v3801, 88
    %v4215 = vpop.permute.xlu0 %4214
    %v4216 = vsel %vm130, %v4213, 0
    %v4218 = vsel %vm130, %v4215, 0
    %4220 = vmatprep.subr.mxu0 0.0
    %4221 = vmatpush1.xpose.msra.mxu0 0.0
    %4222 = vmatprep.subr.mxu0 0.0
    %4223 = vmatpush1.xpose.msra.mxu0 0.0
    %4224 = vmatprep.subr.mxu0 0.0
    %4225 = vmatpush1.xpose.msra.mxu0 0.0
    %4226 = vmatprep.subr.mxu0 0.0
    %4227 = vmatpush1.xpose.msra.mxu0 0.0
    %4228 = vmatprep.subr.mxu0 0.0
    %4229 = vmatpush1.xpose.msra.mxu0 0.0
    %4230 = vmatprep.subr.mxu0 0.0
    %4231 = vmatpush1.xpose.msra.mxu0 0.0
    %4232 = vmatprep.subr.mxu0 0.0
    %4233 = vmatpush1.xpose.msra.mxu0 0.0
    %4234 = vmatprep.subr.mxu0 0.0
    %4235 = vmatpush1.xpose.msra.mxu0 0.0
    %4236 = vmatprep.subr.mxu0 0.0
    %4237 = vmatpush1.xpose.msra.mxu0 0.0
    %4238 = vmatprep.subr.mxu0 0.0
    %4239 = vmatpush1.xpose.msra.mxu0 0.0
    %4240 = vmatprep.subr.mxu0 0.0
    %4241 = vmatpush1.xpose.msra.mxu0 0.0
    %4242 = vmatprep.subr.mxu0 0.0
    %4243 = vmatpush1.xpose.msra.mxu0 0.0
    %4244 = vmatprep.subr.mxu0 0.0
    %4245 = vmatpush1.xpose.msra.mxu0 0.0
    %4246 = vmatprep.subr.mxu0 0.0
    %4247 = vmatpush1.xpose.msra.mxu0 0.0
    %4248 = vmatprep.subr.mxu0 0.0
    %4249 = vmatpush1.xpose.msra.mxu0 0.0
    %4250 = vmatprep.subr.mxu0 0.0
    %4251 = vmatpush1.xpose.msra.mxu0 %v4218
    %4252 = vmatprep.subr.mxu0 0.0
    %4253 = vmatpush2.xpose.msra.mxu0 0.0
    %4254 = vmatprep.subr.mxu0 0.0
    %4255 = vmatpush2.xpose.msra.mxu0 0.0
    %4256 = vmatprep.subr.mxu0 0.0
    %4257 = vmatpush2.xpose.msra.mxu0 0.0
    %4258 = vmatprep.subr.mxu0 0.0
    %4259 = vmatpush2.xpose.msra.mxu0 0.0
    %4260 = vmatprep.subr.mxu0 0.0
    %4261 = vmatpush2.xpose.msra.mxu0 0.0
    %4262 = vmatprep.subr.mxu0 0.0
    %4263 = vmatpush2.xpose.msra.mxu0 0.0
    %4264 = vmatprep.subr.mxu0 0.0
    %4265 = vmatpush2.xpose.msra.mxu0 0.0
    %4266 = vmatprep.subr.mxu0 0.0
    %4267 = vmatpush2.xpose.msra.mxu0 0.0
    %4268 = vmatprep.subr.mxu0 0.0
    %4269 = vmatpush2.xpose.msra.mxu0 0.0
    %4270 = vmatprep.subr.mxu0 0.0
    %4271 = vmatpush2.xpose.msra.mxu0 0.0
    %4272 = vmatprep.subr.mxu0 0.0
    %4273 = vmatpush2.xpose.msra.mxu0 0.0
    %4274 = vmatprep.subr.mxu0 0.0
    %4275 = vmatpush2.xpose.msra.mxu0 0.0
    %4276 = vmatprep.subr.mxu0 0.0
    %4277 = vmatpush2.xpose.msra.mxu0 0.0
    %4278 = vmatprep.subr.mxu0 0.0
    %4279 = vmatpush2.xpose.msra.mxu0 0.0
    %4280 = vmatprep.subr.mxu0 0.0
    %4281 = vmatpush2.xpose.msra.mxu0 0.0
    %4282 = vmatprep.subr.mxu0 0.0
    %4283 = vmatpush2.xpose.msra.mxu0 0.0
    %4284 = vmatprep.mubr.f32.mxu0 0.0
    %4285 = vmatmul.mubr.f32.gmra.mxu0 %v4216
    %v4286 = vpop.f32.mrf.mxu0
    %v4287 = vadd.f32 0.0, %v4286
    %v4288 = vpop.f32.mrf.mxu0
    %4289 = vdwg.mxu0
    %v4290 = vmul.f32 %v4209, 0.35355338
    %v4291 = vmul.f32 %v4287, 0.35355338
    %v4292 = vsel %vm130, %v4290, -inf
    %4293 = vmax.xlane.f32.xlu0 %v4292
    %v4294 = vpop.xlane.xlu0 %4293
    %v4295 = vsel %vm130, %v4291, -inf
    %4296 = vmax.xlane.f32.xlu0 %v4295
    %v4297 = vpop.xlane.xlu0 %4296
    %v4298 = vsub.f32 %v4290, %v4294
    %v4299 = vsub.f32 %v4291, %v4297
    %v4300 = vmul.f32 %v4298, 1.442695
    %v4301 = vpow.pop %v4300
    %v4302 = vmul.f32 %v4299, 1.442695
    %v4303 = vpow.pop %v4302
    %v4304 = vsel %vm130, %v4301, 0.0
    %4305 = vadd.xlane.f32.xlu0 %v4304
    %v4306 = vpop.xlane.xlu0 %4305
    %v4307 = vsel %vm130, %v4303, 0.0
    %4308 = vadd.xlane.f32.xlu0 %v4307
    %v4309 = vpop.xlane.xlu0 %4308
    %v4310 = vrcp.pop %v4306
    %v4311 = vrcp.pop %v4309
    %v4312 = vmul.f32 %v4301, %v4310
    %v4313 = vmul.f32 %v4303, %v4311
    %4314 = vrot.lane.b32.xlu0 %v3796, 56
    %v4315 = vpop.permute.xlu0 %4314
    %v4318 = vsel %vm130, %v4312, 0
    %4320 = vmatprep.subr.mxu0 0.0
    %4321 = vmatpush1.msra.mxu0 0.0
    %4322 = vmatprep.subr.mxu0 0.0
    %4323 = vmatpush1.msra.mxu0 0.0
    %4324 = vmatprep.subr.mxu0 0.0
    %4325 = vmatpush1.msra.mxu0 0.0
    %4326 = vmatprep.subr.mxu0 0.0
    %4327 = vmatpush1.msra.mxu0 0.0
    %4328 = vmatprep.subr.mxu0 0.0
    %4329 = vmatpush1.msra.mxu0 0.0
    %4330 = vmatprep.subr.mxu0 0.0
    %4331 = vmatpush1.msra.mxu0 0.0
    %4332 = vmatprep.subr.mxu0 0.0
    %4333 = vmatpush1.msra.mxu0 0.0
    %4334 = vmatprep.subr.mxu0 0.0
    %4335 = vmatpush1.msra.mxu0 0.0
    %4336 = vmatprep.subr.mxu0 0.0
    %4337 = vmatpush1.msra.mxu0 0.0
    %4338 = vmatprep.subr.mxu0 0.0
    %4339 = vmatpush1.msra.mxu0 0.0
    %4340 = vmatprep.subr.mxu0 0.0
    %4341 = vmatpush1.msra.mxu0 0.0
    %4342 = vmatprep.subr.mxu0 0.0
    %4343 = vmatpush1.msra.mxu0 0.0
    %4344 = vmatprep.subr.mxu0 0.0
    %4345 = vmatpush1.msra.mxu0 0.0
    %4346 = vmatprep.subr.mxu0 0.0
    %4347 = vmatpush1.msra.mxu0 0.0
    %4348 = vmatprep.subr.mxu0 0.0
    %4349 = vmatpush1.msra.mxu0 0.0
    %4350 = vmatprep.subr.mxu0 0.0
    %4351 = vmatpush1.msra.mxu0 %v4315
    %4352 = vmatprep.subr.mxu0 0.0
    %4353 = vmatpush2.msra.mxu0 0.0
    %4354 = vmatprep.subr.mxu0 0.0
    %4355 = vmatpush2.msra.mxu0 0.0
    %4356 = vmatprep.subr.mxu0 0.0
    %4357 = vmatpush2.msra.mxu0 0.0
    %4358 = vmatprep.subr.mxu0 0.0
    %4359 = vmatpush2.msra.mxu0 0.0
    %4360 = vmatprep.subr.mxu0 0.0
    %4361 = vmatpush2.msra.mxu0 0.0
    %4362 = vmatprep.subr.mxu0 0.0
    %4363 = vmatpush2.msra.mxu0 0.0
    %4364 = vmatprep.subr.mxu0 0.0
    %4365 = vmatpush2.msra.mxu0 0.0
    %4366 = vmatprep.subr.mxu0 0.0
    %4367 = vmatpush2.msra.mxu0 0.0
    %4368 = vmatprep.subr.mxu0 0.0
    %4369 = vmatpush2.msra.mxu0 0.0
    %4370 = vmatprep.subr.mxu0 0.0
    %4371 = vmatpush2.msra.mxu0 0.0
    %4372 = vmatprep.subr.mxu0 0.0
    %4373 = vmatpush2.msra.mxu0 0.0
    %4374 = vmatprep.subr.mxu0 0.0
    %4375 = vmatpush2.msra.mxu0 0.0
    %4376 = vmatprep.subr.mxu0 0.0
    %4377 = vmatpush2.msra.mxu0 0.0
    %4378 = vmatprep.subr.mxu0 0.0
    %4379 = vmatpush2.msra.mxu0 0.0
    %4380 = vmatprep.subr.mxu0 0.0
    %4381 = vmatpush2.msra.mxu0 0.0
    %4382 = vmatprep.subr.mxu0 0.0
    %4383 = vmatpush2.msra.mxu0 0.0
    %4384 = vmatprep.mubr.f32.mxu0 0.0
    %4385 = vmatmul.mubr.f32.gmra.mxu0 %v4318
    %v4386 = vpop.f32.mrf.mxu0
    %v4387 = vadd.f32 0.0, %v4386
    %v4388 = vpop.f32.mrf.mxu0
    %4389 = vdwg.mxu0
    %4390 = vrot.lane.b32.xlu0 %v3801, 56
    %v4391 = vpop.permute.xlu0 %4390
    %v4394 = vsel %vm130, %v4313, 0
    %4396 = vmatprep.subr.mxu0 0.0
    %4397 = vmatpush1.msra.mxu0 0.0
    %4398 = vmatprep.subr.mxu0 0.0
    %4399 = vmatpush1.msra.mxu0 0.0
    %4400 = vmatprep.subr.mxu0 0.0
    %4401 = vmatpush1.msra.mxu0 0.0
    %4402 = vmatprep.subr.mxu0 0.0
    %4403 = vmatpush1.msra.mxu0 0.0
    %4404 = vmatprep.subr.mxu0 0.0
    %4405 = vmatpush1.msra.mxu0 0.0
    %4406 = vmatprep.subr.mxu0 0.0
    %4407 = vmatpush1.msra.mxu0 0.0
    %4408 = vmatprep.subr.mxu0 0.0
    %4409 = vmatpush1.msra.mxu0 0.0
    %4410 = vmatprep.subr.mxu0 0.0
    %4411 = vmatpush1.msra.mxu0 0.0
    %4412 = vmatprep.subr.mxu0 0.0
    %4413 = vmatpush1.msra.mxu0 0.0
    %4414 = vmatprep.subr.mxu0 0.0
    %4415 = vmatpush1.msra.mxu0 0.0
    %4416 = vmatprep.subr.mxu0 0.0
    %4417 = vmatpush1.msra.mxu0 0.0
    %4418 = vmatprep.subr.mxu0 0.0
    %4419 = vmatpush1.msra.mxu0 0.0
    %4420 = vmatprep.subr.mxu0 0.0
    %4421 = vmatpush1.msra.mxu0 0.0
    %4422 = vmatprep.subr.mxu0 0.0
    %4423 = vmatpush1.msra.mxu0 0.0
    %4424 = vmatprep.subr.mxu0 0.0
    %4425 = vmatpush1.msra.mxu0 0.0
    %4426 = vmatprep.subr.mxu0 0.0
    %4427 = vmatpush1.msra.mxu0 %v4391
    %4428 = vmatprep.subr.mxu0 0.0
    %4429 = vmatpush2.msra.mxu0 0.0
    %4430 = vmatprep.subr.mxu0 0.0
    %4431 = vmatpush2.msra.mxu0 0.0
    %4432 = vmatprep.subr.mxu0 0.0
    %4433 = vmatpush2.msra.mxu0 0.0
    %4434 = vmatprep.subr.mxu0 0.0
    %4435 = vmatpush2.msra.mxu0 0.0
    %4436 = vmatprep.subr.mxu0 0.0
    %4437 = vmatpush2.msra.mxu0 0.0
    %4438 = vmatprep.subr.mxu0 0.0
    %4439 = vmatpush2.msra.mxu0 0.0
    %4440 = vmatprep.subr.mxu0 0.0
    %4441 = vmatpush2.msra.mxu0 0.0
    %4442 = vmatprep.subr.mxu0 0.0
    %4443 = vmatpush2.msra.mxu0 0.0
    %4444 = vmatprep.subr.mxu0 0.0
    %4445 = vmatpush2.msra.mxu0 0.0
    %4446 = vmatprep.subr.mxu0 0.0
    %4447 = vmatpush2.msra.mxu0 0.0
    %4448 = vmatprep.subr.mxu0 0.0
    %4449 = vmatpush2.msra.mxu0 0.0
    %4450 = vmatprep.subr.mxu0 0.0
    %4451 = vmatpush2.msra.mxu0 0.0
    %4452 = vmatprep.subr.mxu0 0.0
    %4453 = vmatpush2.msra.mxu0 0.0
    %4454 = vmatprep.subr.mxu0 0.0
    %4455 = vmatpush2.msra.mxu0 0.0
    %4456 = vmatprep.subr.mxu0 0.0
    %4457 = vmatpush2.msra.mxu0 0.0
    %4458 = vmatprep.subr.mxu0 0.0
    %4459 = vmatpush2.msra.mxu0 0.0
    %4460 = vmatprep.mubr.f32.mxu0 0.0
    %4461 = vmatmul.mubr.f32.gmra.mxu0 %v4394
    %v4462 = vpop.f32.mrf.mxu0
    %v4463 = vadd.f32 0.0, %v4462
    %v4464 = vpop.f32.mrf.mxu0
    %4465 = vdwg.mxu0
    %4466 = vrot.lane.b32.xlu0 %v3796, 112
    %v4467 = vpop.permute.xlu0 %4466
    %4468 = vrot.lane.b32.xlu0 %v3796, 80
    %v4469 = vpop.permute.xlu0 %4468
    %v4470 = vsel %vm130, %v4467, 0
    %v4472 = vsel %vm130, %v4469, 0
    %4474 = vmatprep.subr.mxu0 0.0
    %4475 = vmatpush1.xpose.msra.mxu0 0.0
    %4476 = vmatprep.subr.mxu0 0.0
    %4477 = vmatpush1.xpose.msra.mxu0 0.0
    %4478 = vmatprep.subr.mxu0 0.0
    %4479 = vmatpush1.xpose.msra.mxu0 0.0
    %4480 = vmatprep.subr.mxu0 0.0
    %4481 = vmatpush1.xpose.msra.mxu0 0.0
    %4482 = vmatprep.subr.mxu0 0.0
    %4483 = vmatpush1.xpose.msra.mxu0 0.0
    %4484 = vmatprep.subr.mxu0 0.0
    %4485 = vmatpush1.xpose.msra.mxu0 0.0
    %4486 = vmatprep.subr.mxu0 0.0
    %4487 = vmatpush1.xpose.msra.mxu0 0.0
    %4488 = vmatprep.subr.mxu0 0.0
    %4489 = vmatpush1.xpose.msra.mxu0 0.0
    %4490 = vmatprep.subr.mxu0 0.0
    %4491 = vmatpush1.xpose.msra.mxu0 0.0
    %4492 = vmatprep.subr.mxu0 0.0
    %4493 = vmatpush1.xpose.msra.mxu0 0.0
    %4494 = vmatprep.subr.mxu0 0.0
    %4495 = vmatpush1.xpose.msra.mxu0 0.0
    %4496 = vmatprep.subr.mxu0 0.0
    %4497 = vmatpush1.xpose.msra.mxu0 0.0
    %4498 = vmatprep.subr.mxu0 0.0
    %4499 = vmatpush1.xpose.msra.mxu0 0.0
    %4500 = vmatprep.subr.mxu0 0.0
    %4501 = vmatpush1.xpose.msra.mxu0 0.0
    %4502 = vmatprep.subr.mxu0 0.0
    %4503 = vmatpush1.xpose.msra.mxu0 0.0
    %4504 = vmatprep.subr.mxu0 0.0
    %4505 = vmatpush1.xpose.msra.mxu0 %v4472
    %4506 = vmatprep.subr.mxu0 0.0
    %4507 = vmatpush2.xpose.msra.mxu0 0.0
    %4508 = vmatprep.subr.mxu0 0.0
    %4509 = vmatpush2.xpose.msra.mxu0 0.0
    %4510 = vmatprep.subr.mxu0 0.0
    %4511 = vmatpush2.xpose.msra.mxu0 0.0
    %4512 = vmatprep.subr.mxu0 0.0
    %4513 = vmatpush2.xpose.msra.mxu0 0.0
    %4514 = vmatprep.subr.mxu0 0.0
    %4515 = vmatpush2.xpose.msra.mxu0 0.0
    %4516 = vmatprep.subr.mxu0 0.0
    %4517 = vmatpush2.xpose.msra.mxu0 0.0
    %4518 = vmatprep.subr.mxu0 0.0
    %4519 = vmatpush2.xpose.msra.mxu0 0.0
    %4520 = vmatprep.subr.mxu0 0.0
    %4521 = vmatpush2.xpose.msra.mxu0 0.0
    %4522 = vmatprep.subr.mxu0 0.0
    %4523 = vmatpush2.xpose.msra.mxu0 0.0
    %4524 = vmatprep.subr.mxu0 0.0
    %4525 = vmatpush2.xpose.msra.mxu0 0.0
    %4526 = vmatprep.subr.mxu0 0.0
    %4527 = vmatpush2.xpose.msra.mxu0 0.0
    %4528 = vmatprep.subr.mxu0 0.0
    %4529 = vmatpush2.xpose.msra.mxu0 0.0
    %4530 = vmatprep.subr.mxu0 0.0
    %4531 = vmatpush2.xpose.msra.mxu0 0.0
    %4532 = vmatprep.subr.mxu0 0.0
    %4533 = vmatpush2.xpose.msra.mxu0 0.0
    %4534 = vmatprep.subr.mxu0 0.0
    %4535 = vmatpush2.xpose.msra.mxu0 0.0
    %4536 = vmatprep.subr.mxu0 0.0
    %4537 = vmatpush2.xpose.msra.mxu0 0.0
    %4538 = vmatprep.mubr.f32.mxu0 0.0
    %4539 = vmatmul.mubr.f32.gmra.mxu0 %v4470
    %v4540 = vpop.f32.mrf.mxu0
    %v4541 = vadd.f32 0.0, %v4540
    %v4542 = vpop.f32.mrf.mxu0
    %4543 = vdwg.mxu0
    %4544 = vrot.lane.b32.xlu0 %v3801, 112
    %v4545 = vpop.permute.xlu0 %4544
    %4546 = vrot.lane.b32.xlu0 %v3801, 80
    %v4547 = vpop.permute.xlu0 %4546
    %v4548 = vsel %vm130, %v4545, 0
    %v4550 = vsel %vm130, %v4547, 0
    %4552 = vmatprep.subr.mxu0 0.0
    %4553 = vmatpush1.xpose.msra.mxu0 0.0
    %4554 = vmatprep.subr.mxu0 0.0
    %4555 = vmatpush1.xpose.msra.mxu0 0.0
    %4556 = vmatprep.subr.mxu0 0.0
    %4557 = vmatpush1.xpose.msra.mxu0 0.0
    %4558 = vmatprep.subr.mxu0 0.0
    %4559 = vmatpush1.xpose.msra.mxu0 0.0
    %4560 = vmatprep.subr.mxu0 0.0
    %4561 = vmatpush1.xpose.msra.mxu0 0.0
    %4562 = vmatprep.subr.mxu0 0.0
    %4563 = vmatpush1.xpose.msra.mxu0 0.0
    %4564 = vmatprep.subr.mxu0 0.0
    %4565 = vmatpush1.xpose.msra.mxu0 0.0
    %4566 = vmatprep.subr.mxu0 0.0
    %4567 = vmatpush1.xpose.msra.mxu0 0.0
    %4568 = vmatprep.subr.mxu0 0.0
    %4569 = vmatpush1.xpose.msra.mxu0 0.0
    %4570 = vmatprep.subr.mxu0 0.0
    %4571 = vmatpush1.xpose.msra.mxu0 0.0
    %4572 = vmatprep.subr.mxu0 0.0
    %4573 = vmatpush1.xpose.msra.mxu0 0.0
    %4574 = vmatprep.subr.mxu0 0.0
    %4575 = vmatpush1.xpose.msra.mxu0 0.0
    %4576 = vmatprep.subr.mxu0 0.0
    %4577 = vmatpush1.xpose.msra.mxu0 0.0
    %4578 = vmatprep.subr.mxu0 0.0
    %4579 = vmatpush1.xpose.msra.mxu0 0.0
    %4580 = vmatprep.subr.mxu0 0.0
    %4581 = vmatpush1.xpose.msra.mxu0 0.0
    %4582 = vmatprep.subr.mxu0 0.0
    %4583 = vmatpush1.xpose.msra.mxu0 %v4550
    %4584 = vmatprep.subr.mxu0 0.0
    %4585 = vmatpush2.xpose.msra.mxu0 0.0
    %4586 = vmatprep.subr.mxu0 0.0
    %4587 = vmatpush2.xpose.msra.mxu0 0.0
    %4588 = vmatprep.subr.mxu0 0.0
    %4589 = vmatpush2.xpose.msra.mxu0 0.0
    %4590 = vmatprep.subr.mxu0 0.0
    %4591 = vmatpush2.xpose.msra.mxu0 0.0
    %4592 = vmatprep.subr.mxu0 0.0
    %4593 = vmatpush2.xpose.msra.mxu0 0.0
    %4594 = vmatprep.subr.mxu0 0.0
    %4595 = vmatpush2.xpose.msra.mxu0 0.0
    %4596 = vmatprep.subr.mxu0 0.0
    %4597 = vmatpush2.xpose.msra.mxu0 0.0
    %4598 = vmatprep.subr.mxu0 0.0
    %4599 = vmatpush2.xpose.msra.mxu0 0.0
    %4600 = vmatprep.subr.mxu0 0.0
    %4601 = vmatpush2.xpose.msra.mxu0 0.0
    %4602 = vmatprep.subr.mxu0 0.0
    %4603 = vmatpush2.xpose.msra.mxu0 0.0
    %4604 = vmatprep.subr.mxu0 0.0
    %4605 = vmatpush2.xpose.msra.mxu0 0.0
    %4606 = vmatprep.subr.mxu0 0.0
    %4607 = vmatpush2.xpose.msra.mxu0 0.0
    %4608 = vmatprep.subr.mxu0 0.0
    %4609 = vmatpush2.xpose.msra.mxu0 0.0
    %4610 = vmatprep.subr.mxu0 0.0
    %4611 = vmatpush2.xpose.msra.mxu0 0.0
    %4612 = vmatprep.subr.mxu0 0.0
    %4613 = vmatpush2.xpose.msra.mxu0 0.0
    %4614 = vmatprep.subr.mxu0 0.0
    %4615 = vmatpush2.xpose.msra.mxu0 0.0
    %4616 = vmatprep.mubr.f32.mxu0 0.0
    %4617 = vmatmul.mubr.f32.gmra.mxu0 %v4548
    %v4618 = vpop.f32.mrf.mxu0
    %v4619 = vadd.f32 0.0, %v4618
    %v4620 = vpop.f32.mrf.mxu0
    %4621 = vdwg.mxu0
    %v4622 = vmul.f32 %v4541, 0.35355338
    %v4623 = vmul.f32 %v4619, 0.35355338
    %v4624 = vsel %vm130, %v4622, -inf
    %4625 = vmax.xlane.f32.xlu0 %v4624
    %v4626 = vpop.xlane.xlu0 %4625
    %v4627 = vsel %vm130, %v4623, -inf
    %4628 = vmax.xlane.f32.xlu0 %v4627
    %v4629 = vpop.xlane.xlu0 %4628
    %v4630 = vsub.f32 %v4622, %v4626
    %v4631 = vsub.f32 %v4623, %v4629
    %v4632 = vmul.f32 %v4630, 1.442695
    %v4633 = vpow.pop %v4632
    %v4634 = vmul.f32 %v4631, 1.442695
    %v4635 = vpow.pop %v4634
    %v4636 = vsel %vm130, %v4633, 0.0
    %4637 = vadd.xlane.f32.xlu0 %v4636
    %v4638 = vpop.xlane.xlu0 %4637
    %v4639 = vsel %vm130, %v4635, 0.0
    %4640 = vadd.xlane.f32.xlu0 %v4639
    %v4641 = vpop.xlane.xlu0 %4640
    %v4642 = vrcp.pop %v4638
    %v4643 = vrcp.pop %v4641
    %v4644 = vmul.f32 %v4633, %v4642
    %v4645 = vmul.f32 %v4635, %v4643
    %4646 = vrot.lane.b32.xlu0 %v3796, 48
    %v4647 = vpop.permute.xlu0 %4646
    %v4650 = vsel %vm130, %v4644, 0
    %4652 = vmatprep.subr.mxu0 0.0
    %4653 = vmatpush1.msra.mxu0 0.0
    %4654 = vmatprep.subr.mxu0 0.0
    %4655 = vmatpush1.msra.mxu0 0.0
    %4656 = vmatprep.subr.mxu0 0.0
    %4657 = vmatpush1.msra.mxu0 0.0
    %4658 = vmatprep.subr.mxu0 0.0
    %4659 = vmatpush1.msra.mxu0 0.0
    %4660 = vmatprep.subr.mxu0 0.0
    %4661 = vmatpush1.msra.mxu0 0.0
    %4662 = vmatprep.subr.mxu0 0.0
    %4663 = vmatpush1.msra.mxu0 0.0
    %4664 = vmatprep.subr.mxu0 0.0
    %4665 = vmatpush1.msra.mxu0 0.0
    %4666 = vmatprep.subr.mxu0 0.0
    %4667 = vmatpush1.msra.mxu0 0.0
    %4668 = vmatprep.subr.mxu0 0.0
    %4669 = vmatpush1.msra.mxu0 0.0
    %4670 = vmatprep.subr.mxu0 0.0
    %4671 = vmatpush1.msra.mxu0 0.0
    %4672 = vmatprep.subr.mxu0 0.0
    %4673 = vmatpush1.msra.mxu0 0.0
    %4674 = vmatprep.subr.mxu0 0.0
    %4675 = vmatpush1.msra.mxu0 0.0
    %4676 = vmatprep.subr.mxu0 0.0
    %4677 = vmatpush1.msra.mxu0 0.0
    %4678 = vmatprep.subr.mxu0 0.0
    %4679 = vmatpush1.msra.mxu0 0.0
    %4680 = vmatprep.subr.mxu0 0.0
    %4681 = vmatpush1.msra.mxu0 0.0
    %4682 = vmatprep.subr.mxu0 0.0
    %4683 = vmatpush1.msra.mxu0 %v4647
    %4684 = vmatprep.subr.mxu0 0.0
    %4685 = vmatpush2.msra.mxu0 0.0
    %4686 = vmatprep.subr.mxu0 0.0
    %4687 = vmatpush2.msra.mxu0 0.0
    %4688 = vmatprep.subr.mxu0 0.0
    %4689 = vmatpush2.msra.mxu0 0.0
    %4690 = vmatprep.subr.mxu0 0.0
    %4691 = vmatpush2.msra.mxu0 0.0
    %4692 = vmatprep.subr.mxu0 0.0
    %4693 = vmatpush2.msra.mxu0 0.0
    %4694 = vmatprep.subr.mxu0 0.0
    %4695 = vmatpush2.msra.mxu0 0.0
    %4696 = vmatprep.subr.mxu0 0.0
    %4697 = vmatpush2.msra.mxu0 0.0
    %4698 = vmatprep.subr.mxu0 0.0
    %4699 = vmatpush2.msra.mxu0 0.0
    %4700 = vmatprep.subr.mxu0 0.0
    %4701 = vmatpush2.msra.mxu0 0.0
    %4702 = vmatprep.subr.mxu0 0.0
    %4703 = vmatpush2.msra.mxu0 0.0
    %4704 = vmatprep.subr.mxu0 0.0
    %4705 = vmatpush2.msra.mxu0 0.0
    %4706 = vmatprep.subr.mxu0 0.0
    %4707 = vmatpush2.msra.mxu0 0.0
    %4708 = vmatprep.subr.mxu0 0.0
    %4709 = vmatpush2.msra.mxu0 0.0
    %4710 = vmatprep.subr.mxu0 0.0
    %4711 = vmatpush2.msra.mxu0 0.0
    %4712 = vmatprep.subr.mxu0 0.0
    %4713 = vmatpush2.msra.mxu0 0.0
    %4714 = vmatprep.subr.mxu0 0.0
    %4715 = vmatpush2.msra.mxu0 0.0
    %4716 = vmatprep.mubr.f32.mxu0 0.0
    %4717 = vmatmul.mubr.f32.gmra.mxu0 %v4650
    %v4718 = vpop.f32.mrf.mxu0
    %v4719 = vadd.f32 0.0, %v4718
    %v4720 = vpop.f32.mrf.mxu0
    %4721 = vdwg.mxu0
    %4722 = vrot.lane.b32.xlu0 %v3801, 48
    %v4723 = vpop.permute.xlu0 %4722
    %v4726 = vsel %vm130, %v4645, 0
    %4728 = vmatprep.subr.mxu0 0.0
    %4729 = vmatpush1.msra.mxu0 0.0
    %4730 = vmatprep.subr.mxu0 0.0
    %4731 = vmatpush1.msra.mxu0 0.0
    %4732 = vmatprep.subr.mxu0 0.0
    %4733 = vmatpush1.msra.mxu0 0.0
    %4734 = vmatprep.subr.mxu0 0.0
    %4735 = vmatpush1.msra.mxu0 0.0
    %4736 = vmatprep.subr.mxu0 0.0
    %4737 = vmatpush1.msra.mxu0 0.0
    %4738 = vmatprep.subr.mxu0 0.0
    %4739 = vmatpush1.msra.mxu0 0.0
    %4740 = vmatprep.subr.mxu0 0.0
    %4741 = vmatpush1.msra.mxu0 0.0
    %4742 = vmatprep.subr.mxu0 0.0
    %4743 = vmatpush1.msra.mxu0 0.0
    %4744 = vmatprep.subr.mxu0 0.0
    %4745 = vmatpush1.msra.mxu0 0.0
    %4746 = vmatprep.subr.mxu0 0.0
    %4747 = vmatpush1.msra.mxu0 0.0
    %4748 = vmatprep.subr.mxu0 0.0
    %4749 = vmatpush1.msra.mxu0 0.0
    %4750 = vmatprep.subr.mxu0 0.0
    %4751 = vmatpush1.msra.mxu0 0.0
    %4752 = vmatprep.subr.mxu0 0.0
    %4753 = vmatpush1.msra.mxu0 0.0
    %4754 = vmatprep.subr.mxu0 0.0
    %4755 = vmatpush1.msra.mxu0 0.0
    %4756 = vmatprep.subr.mxu0 0.0
    %4757 = vmatpush1.msra.mxu0 0.0
    %4758 = vmatprep.subr.mxu0 0.0
    %4759 = vmatpush1.msra.mxu0 %v4723
    %4760 = vmatprep.subr.mxu0 0.0
    %4761 = vmatpush2.msra.mxu0 0.0
    %4762 = vmatprep.subr.mxu0 0.0
    %4763 = vmatpush2.msra.mxu0 0.0
    %4764 = vmatprep.subr.mxu0 0.0
    %4765 = vmatpush2.msra.mxu0 0.0
    %4766 = vmatprep.subr.mxu0 0.0
    %4767 = vmatpush2.msra.mxu0 0.0
    %4768 = vmatprep.subr.mxu0 0.0
    %4769 = vmatpush2.msra.mxu0 0.0
    %4770 = vmatprep.subr.mxu0 0.0
    %4771 = vmatpush2.msra.mxu0 0.0
    %4772 = vmatprep.subr.mxu0 0.0
    %4773 = vmatpush2.msra.mxu0 0.0
    %4774 = vmatprep.subr.mxu0 0.0
    %4775 = vmatpush2.msra.mxu0 0.0
    %4776 = vmatprep.subr.mxu0 0.0
    %4777 = vmatpush2.msra.mxu0 0.0
    %4778 = vmatprep.subr.mxu0 0.0
    %4779 = vmatpush2.msra.mxu0 0.0
    %4780 = vmatprep.subr.mxu0 0.0
    %4781 = vmatpush2.msra.mxu0 0.0
    %4782 = vmatprep.subr.mxu0 0.0
    %4783 = vmatpush2.msra.mxu0 0.0
    %4784 = vmatprep.subr.mxu0 0.0
    %4785 = vmatpush2.msra.mxu0 0.0
    %4786 = vmatprep.subr.mxu0 0.0
    %4787 = vmatpush2.msra.mxu0 0.0
    %4788 = vmatprep.subr.mxu0 0.0
    %4789 = vmatpush2.msra.mxu0 0.0
    %4790 = vmatprep.subr.mxu0 0.0
    %4791 = vmatpush2.msra.mxu0 0.0
    %4792 = vmatprep.mubr.f32.mxu0 0.0
    %4793 = vmatmul.mubr.f32.gmra.mxu0 %v4726
    %v4794 = vpop.f32.mrf.mxu0
    %v4795 = vadd.f32 0.0, %v4794
    %v4796 = vpop.f32.mrf.mxu0
    %4797 = vdwg.mxu0
    %4798 = vrot.lane.b32.xlu0 %v3796, 104
    %v4799 = vpop.permute.xlu0 %4798
    %4800 = vrot.lane.b32.xlu0 %v3796, 72
    %v4801 = vpop.permute.xlu0 %4800
    %v4802 = vsel %vm130, %v4799, 0
    %v4804 = vsel %vm130, %v4801, 0
    %4806 = vmatprep.subr.mxu0 0.0
    %4807 = vmatpush1.xpose.msra.mxu0 0.0
    %4808 = vmatprep.subr.mxu0 0.0
    %4809 = vmatpush1.xpose.msra.mxu0 0.0
    %4810 = vmatprep.subr.mxu0 0.0
    %4811 = vmatpush1.xpose.msra.mxu0 0.0
    %4812 = vmatprep.subr.mxu0 0.0
    %4813 = vmatpush1.xpose.msra.mxu0 0.0
    %4814 = vmatprep.subr.mxu0 0.0
    %4815 = vmatpush1.xpose.msra.mxu0 0.0
    %4816 = vmatprep.subr.mxu0 0.0
    %4817 = vmatpush1.xpose.msra.mxu0 0.0
    %4818 = vmatprep.subr.mxu0 0.0
    %4819 = vmatpush1.xpose.msra.mxu0 0.0
    %4820 = vmatprep.subr.mxu0 0.0
    %4821 = vmatpush1.xpose.msra.mxu0 0.0
    %4822 = vmatprep.subr.mxu0 0.0
    %4823 = vmatpush1.xpose.msra.mxu0 0.0
    %4824 = vmatprep.subr.mxu0 0.0
    %4825 = vmatpush1.xpose.msra.mxu0 0.0
    %4826 = vmatprep.subr.mxu0 0.0
    %4827 = vmatpush1.xpose.msra.mxu0 0.0
    %4828 = vmatprep.subr.mxu0 0.0
    %4829 = vmatpush1.xpose.msra.mxu0 0.0
    %4830 = vmatprep.subr.mxu0 0.0
    %4831 = vmatpush1.xpose.msra.mxu0 0.0
    %4832 = vmatprep.subr.mxu0 0.0
    %4833 = vmatpush1.xpose.msra.mxu0 0.0
    %4834 = vmatprep.subr.mxu0 0.0
    %4835 = vmatpush1.xpose.msra.mxu0 0.0
    %4836 = vmatprep.subr.mxu0 0.0
    %4837 = vmatpush1.xpose.msra.mxu0 %v4804
    %4838 = vmatprep.subr.mxu0 0.0
    %4839 = vmatpush2.xpose.msra.mxu0 0.0
    %4840 = vmatprep.subr.mxu0 0.0
    %4841 = vmatpush2.xpose.msra.mxu0 0.0
    %4842 = vmatprep.subr.mxu0 0.0
    %4843 = vmatpush2.xpose.msra.mxu0 0.0
    %4844 = vmatprep.subr.mxu0 0.0
    %4845 = vmatpush2.xpose.msra.mxu0 0.0
    %4846 = vmatprep.subr.mxu0 0.0
    %4847 = vmatpush2.xpose.msra.mxu0 0.0
    %4848 = vmatprep.subr.mxu0 0.0
    %4849 = vmatpush2.xpose.msra.mxu0 0.0
    %4850 = vmatprep.subr.mxu0 0.0
    %4851 = vmatpush2.xpose.msra.mxu0 0.0
    %4852 = vmatprep.subr.mxu0 0.0
    %4853 = vmatpush2.xpose.msra.mxu0 0.0
    %4854 = vmatprep.subr.mxu0 0.0
    %4855 = vmatpush2.xpose.msra.mxu0 0.0
    %4856 = vmatprep.subr.mxu0 0.0
    %4857 = vmatpush2.xpose.msra.mxu0 0.0
    %4858 = vmatprep.subr.mxu0 0.0
    %4859 = vmatpush2.xpose.msra.mxu0 0.0
    %4860 = vmatprep.subr.mxu0 0.0
    %4861 = vmatpush2.xpose.msra.mxu0 0.0
    %4862 = vmatprep.subr.mxu0 0.0
    %4863 = vmatpush2.xpose.msra.mxu0 0.0
    %4864 = vmatprep.subr.mxu0 0.0
    %4865 = vmatpush2.xpose.msra.mxu0 0.0
    %4866 = vmatprep.subr.mxu0 0.0
    %4867 = vmatpush2.xpose.msra.mxu0 0.0
    %4868 = vmatprep.subr.mxu0 0.0
    %4869 = vmatpush2.xpose.msra.mxu0 0.0
    %4870 = vmatprep.mubr.f32.mxu0 0.0
    %4871 = vmatmul.mubr.f32.gmra.mxu0 %v4802
    %v4872 = vpop.f32.mrf.mxu0
    %v4873 = vadd.f32 0.0, %v4872
    %v4874 = vpop.f32.mrf.mxu0
    %4875 = vdwg.mxu0
    %4876 = vrot.lane.b32.xlu0 %v3801, 104
    %v4877 = vpop.permute.xlu0 %4876
    %4878 = vrot.lane.b32.xlu0 %v3801, 72
    %v4879 = vpop.permute.xlu0 %4878
    %v4880 = vsel %vm130, %v4877, 0
    %v4882 = vsel %vm130, %v4879, 0
    %4884 = vmatprep.subr.mxu0 0.0
    %4885 = vmatpush1.xpose.msra.mxu0 0.0
    %4886 = vmatprep.subr.mxu0 0.0
    %4887 = vmatpush1.xpose.msra.mxu0 0.0
    %4888 = vmatprep.subr.mxu0 0.0
    %4889 = vmatpush1.xpose.msra.mxu0 0.0
    %4890 = vmatprep.subr.mxu0 0.0
    %4891 = vmatpush1.xpose.msra.mxu0 0.0
    %4892 = vmatprep.subr.mxu0 0.0
    %4893 = vmatpush1.xpose.msra.mxu0 0.0
    %4894 = vmatprep.subr.mxu0 0.0
    %4895 = vmatpush1.xpose.msra.mxu0 0.0
    %4896 = vmatprep.subr.mxu0 0.0
    %4897 = vmatpush1.xpose.msra.mxu0 0.0
    %4898 = vmatprep.subr.mxu0 0.0
    %4899 = vmatpush1.xpose.msra.mxu0 0.0
    %4900 = vmatprep.subr.mxu0 0.0
    %4901 = vmatpush1.xpose.msra.mxu0 0.0
    %4902 = vmatprep.subr.mxu0 0.0
    %4903 = vmatpush1.xpose.msra.mxu0 0.0
    %4904 = vmatprep.subr.mxu0 0.0
    %4905 = vmatpush1.xpose.msra.mxu0 0.0
    %4906 = vmatprep.subr.mxu0 0.0
    %4907 = vmatpush1.xpose.msra.mxu0 0.0
    %4908 = vmatprep.subr.mxu0 0.0
    %4909 = vmatpush1.xpose.msra.mxu0 0.0
    %4910 = vmatprep.subr.mxu0 0.0
    %4911 = vmatpush1.xpose.msra.mxu0 0.0
    %4912 = vmatprep.subr.mxu0 0.0
    %4913 = vmatpush1.xpose.msra.mxu0 0.0
    %4914 = vmatprep.subr.mxu0 0.0
    %4915 = vmatpush1.xpose.msra.mxu0 %v4882
    %4916 = vmatprep.subr.mxu0 0.0
    %4917 = vmatpush2.xpose.msra.mxu0 0.0
    %4918 = vmatprep.subr.mxu0 0.0
    %4919 = vmatpush2.xpose.msra.mxu0 0.0
    %4920 = vmatprep.subr.mxu0 0.0
    %4921 = vmatpush2.xpose.msra.mxu0 0.0
    %4922 = vmatprep.subr.mxu0 0.0
    %4923 = vmatpush2.xpose.msra.mxu0 0.0
    %4924 = vmatprep.subr.mxu0 0.0
    %4925 = vmatpush2.xpose.msra.mxu0 0.0
    %4926 = vmatprep.subr.mxu0 0.0
    %4927 = vmatpush2.xpose.msra.mxu0 0.0
    %4928 = vmatprep.subr.mxu0 0.0
    %4929 = vmatpush2.xpose.msra.mxu0 0.0
    %4930 = vmatprep.subr.mxu0 0.0
    %4931 = vmatpush2.xpose.msra.mxu0 0.0
    %4932 = vmatprep.subr.mxu0 0.0
    %4933 = vmatpush2.xpose.msra.mxu0 0.0
    %4934 = vmatprep.subr.mxu0 0.0
    %4935 = vmatpush2.xpose.msra.mxu0 0.0
    %4936 = vmatprep.subr.mxu0 0.0
    %4937 = vmatpush2.xpose.msra.mxu0 0.0
    %4938 = vmatprep.subr.mxu0 0.0
    %4939 = vmatpush2.xpose.msra.mxu0 0.0
    %4940 = vmatprep.subr.mxu0 0.0
    %4941 = vmatpush2.xpose.msra.mxu0 0.0
    %4942 = vmatprep.subr.mxu0 0.0
    %4943 = vmatpush2.xpose.msra.mxu0 0.0
    %4944 = vmatprep.subr.mxu0 0.0
    %4945 = vmatpush2.xpose.msra.mxu0 0.0
    %4946 = vmatprep.subr.mxu0 0.0
    %4947 = vmatpush2.xpose.msra.mxu0 0.0
    %4948 = vmatprep.mubr.f32.mxu0 0.0
    %4949 = vmatmul.mubr.f32.gmra.mxu0 %v4880
    %v4950 = vpop.f32.mrf.mxu0
    %v4951 = vadd.f32 0.0, %v4950
    %v4952 = vpop.f32.mrf.mxu0
    %4953 = vdwg.mxu0
    %v4954 = vmul.f32 %v4873, 0.35355338
    %v4955 = vmul.f32 %v4951, 0.35355338
    %v4956 = vsel %vm130, %v4954, -inf
    %4957 = vmax.xlane.f32.xlu0 %v4956
    %v4958 = vpop.xlane.xlu0 %4957
    %v4959 = vsel %vm130, %v4955, -inf
    %4960 = vmax.xlane.f32.xlu0 %v4959
    %v4961 = vpop.xlane.xlu0 %4960
    %v4962 = vsub.f32 %v4954, %v4958
    %v4963 = vsub.f32 %v4955, %v4961
    %v4964 = vmul.f32 %v4962, 1.442695
    %v4965 = vpow.pop %v4964
    %v4966 = vmul.f32 %v4963, 1.442695
    %v4967 = vpow.pop %v4966
    %v4968 = vsel %vm130, %v4965, 0.0
    %4969 = vadd.xlane.f32.xlu0 %v4968
    %v4970 = vpop.xlane.xlu0 %4969
    %v4971 = vsel %vm130, %v4967, 0.0
    %4972 = vadd.xlane.f32.xlu0 %v4971
    %v4973 = vpop.xlane.xlu0 %4972
    %v4974 = vrcp.pop %v4970
    %v4975 = vrcp.pop %v4973
    %v4976 = vmul.f32 %v4965, %v4974
    %v4977 = vmul.f32 %v4967, %v4975
    %4978 = vrot.lane.b32.xlu0 %v3796, 40
    %v4979 = vpop.permute.xlu0 %4978
    %v4982 = vsel %vm130, %v4976, 0
    %4984 = vmatprep.subr.mxu0 0.0
    %4985 = vmatpush1.msra.mxu0 0.0
    %4986 = vmatprep.subr.mxu0 0.0
    %4987 = vmatpush1.msra.mxu0 0.0
    %4988 = vmatprep.subr.mxu0 0.0
    %4989 = vmatpush1.msra.mxu0 0.0
    %4990 = vmatprep.subr.mxu0 0.0
    %4991 = vmatpush1.msra.mxu0 0.0
    %4992 = vmatprep.subr.mxu0 0.0
    %4993 = vmatpush1.msra.mxu0 0.0
    %4994 = vmatprep.subr.mxu0 0.0
    %4995 = vmatpush1.msra.mxu0 0.0
    %4996 = vmatprep.subr.mxu0 0.0
    %4997 = vmatpush1.msra.mxu0 0.0
    %4998 = vmatprep.subr.mxu0 0.0
    %4999 = vmatpush1.msra.mxu0 0.0
    %5000 = vmatprep.subr.mxu0 0.0
    %5001 = vmatpush1.msra.mxu0 0.0
    %5002 = vmatprep.subr.mxu0 0.0
    %5003 = vmatpush1.msra.mxu0 0.0
    %5004 = vmatprep.subr.mxu0 0.0
    %5005 = vmatpush1.msra.mxu0 0.0
    %5006 = vmatprep.subr.mxu0 0.0
    %5007 = vmatpush1.msra.mxu0 0.0
    %5008 = vmatprep.subr.mxu0 0.0
    %5009 = vmatpush1.msra.mxu0 0.0
    %5010 = vmatprep.subr.mxu0 0.0
    %5011 = vmatpush1.msra.mxu0 0.0
    %5012 = vmatprep.subr.mxu0 0.0
    %5013 = vmatpush1.msra.mxu0 0.0
    %5014 = vmatprep.subr.mxu0 0.0
    %5015 = vmatpush1.msra.mxu0 %v4979
    %5016 = vmatprep.subr.mxu0 0.0
    %5017 = vmatpush2.msra.mxu0 0.0
    %5018 = vmatprep.subr.mxu0 0.0
    %5019 = vmatpush2.msra.mxu0 0.0
    %5020 = vmatprep.subr.mxu0 0.0
    %5021 = vmatpush2.msra.mxu0 0.0
    %5022 = vmatprep.subr.mxu0 0.0
    %5023 = vmatpush2.msra.mxu0 0.0
    %5024 = vmatprep.subr.mxu0 0.0
    %5025 = vmatpush2.msra.mxu0 0.0
    %5026 = vmatprep.subr.mxu0 0.0
    %5027 = vmatpush2.msra.mxu0 0.0
    %5028 = vmatprep.subr.mxu0 0.0
    %5029 = vmatpush2.msra.mxu0 0.0
    %5030 = vmatprep.subr.mxu0 0.0
    %5031 = vmatpush2.msra.mxu0 0.0
    %5032 = vmatprep.subr.mxu0 0.0
    %5033 = vmatpush2.msra.mxu0 0.0
    %5034 = vmatprep.subr.mxu0 0.0
    %5035 = vmatpush2.msra.mxu0 0.0
    %5036 = vmatprep.subr.mxu0 0.0
    %5037 = vmatpush2.msra.mxu0 0.0
    %5038 = vmatprep.subr.mxu0 0.0
    %5039 = vmatpush2.msra.mxu0 0.0
    %5040 = vmatprep.subr.mxu0 0.0
    %5041 = vmatpush2.msra.mxu0 0.0
    %5042 = vmatprep.subr.mxu0 0.0
    %5043 = vmatpush2.msra.mxu0 0.0
    %5044 = vmatprep.subr.mxu0 0.0
    %5045 = vmatpush2.msra.mxu0 0.0
    %5046 = vmatprep.subr.mxu0 0.0
    %5047 = vmatpush2.msra.mxu0 0.0
    %5048 = vmatprep.mubr.f32.mxu0 0.0
    %5049 = vmatmul.mubr.f32.gmra.mxu0 %v4982
    %v5050 = vpop.f32.mrf.mxu0
    %v5051 = vadd.f32 0.0, %v5050
    %v5052 = vpop.f32.mrf.mxu0
    %5053 = vdwg.mxu0
    %5054 = vrot.lane.b32.xlu0 %v3801, 40
    %v5055 = vpop.permute.xlu0 %5054
    %v5058 = vsel %vm130, %v4977, 0
    %5060 = vmatprep.subr.mxu0 0.0
    %5061 = vmatpush1.msra.mxu0 0.0
    %5062 = vmatprep.subr.mxu0 0.0
    %5063 = vmatpush1.msra.mxu0 0.0
    %5064 = vmatprep.subr.mxu0 0.0
    %5065 = vmatpush1.msra.mxu0 0.0
    %5066 = vmatprep.subr.mxu0 0.0
    %5067 = vmatpush1.msra.mxu0 0.0
    %5068 = vmatprep.subr.mxu0 0.0
    %5069 = vmatpush1.msra.mxu0 0.0
    %5070 = vmatprep.subr.mxu0 0.0
    %5071 = vmatpush1.msra.mxu0 0.0
    %5072 = vmatprep.subr.mxu0 0.0
    %5073 = vmatpush1.msra.mxu0 0.0
    %5074 = vmatprep.subr.mxu0 0.0
    %5075 = vmatpush1.msra.mxu0 0.0
    %5076 = vmatprep.subr.mxu0 0.0
    %5077 = vmatpush1.msra.mxu0 0.0
    %5078 = vmatprep.subr.mxu0 0.0
    %5079 = vmatpush1.msra.mxu0 0.0
    %5080 = vmatprep.subr.mxu0 0.0
    %5081 = vmatpush1.msra.mxu0 0.0
    %5082 = vmatprep.subr.mxu0 0.0
    %5083 = vmatpush1.msra.mxu0 0.0
    %5084 = vmatprep.subr.mxu0 0.0
    %5085 = vmatpush1.msra.mxu0 0.0
    %5086 = vmatprep.subr.mxu0 0.0
    %5087 = vmatpush1.msra.mxu0 0.0
    %5088 = vmatprep.subr.mxu0 0.0
    %5089 = vmatpush1.msra.mxu0 0.0
    %5090 = vmatprep.subr.mxu0 0.0
    %5091 = vmatpush1.msra.mxu0 %v5055
    %5092 = vmatprep.subr.mxu0 0.0
    %5093 = vmatpush2.msra.mxu0 0.0
    %5094 = vmatprep.subr.mxu0 0.0
    %5095 = vmatpush2.msra.mxu0 0.0
    %5096 = vmatprep.subr.mxu0 0.0
    %5097 = vmatpush2.msra.mxu0 0.0
    %5098 = vmatprep.subr.mxu0 0.0
    %5099 = vmatpush2.msra.mxu0 0.0
    %5100 = vmatprep.subr.mxu0 0.0
    %5101 = vmatpush2.msra.mxu0 0.0
    %5102 = vmatprep.subr.mxu0 0.0
    %5103 = vmatpush2.msra.mxu0 0.0
    %5104 = vmatprep.subr.mxu0 0.0
    %5105 = vmatpush2.msra.mxu0 0.0
    %5106 = vmatprep.subr.mxu0 0.0
    %5107 = vmatpush2.msra.mxu0 0.0
    %5108 = vmatprep.subr.mxu0 0.0
    %5109 = vmatpush2.msra.mxu0 0.0
    %5110 = vmatprep.subr.mxu0 0.0
    %5111 = vmatpush2.msra.mxu0 0.0
    %5112 = vmatprep.subr.mxu0 0.0
    %5113 = vmatpush2.msra.mxu0 0.0
    %5114 = vmatprep.subr.mxu0 0.0
    %5115 = vmatpush2.msra.mxu0 0.0
    %5116 = vmatprep.subr.mxu0 0.0
    %5117 = vmatpush2.msra.mxu0 0.0
    %5118 = vmatprep.subr.mxu0 0.0
    %5119 = vmatpush2.msra.mxu0 0.0
    %5120 = vmatprep.subr.mxu0 0.0
    %5121 = vmatpush2.msra.mxu0 0.0
    %5122 = vmatprep.subr.mxu0 0.0
    %5123 = vmatpush2.msra.mxu0 0.0
    %5124 = vmatprep.mubr.f32.mxu0 0.0
    %5125 = vmatmul.mubr.f32.gmra.mxu0 %v5058
    %v5126 = vpop.f32.mrf.mxu0
    %v5127 = vadd.f32 0.0, %v5126
    %v5128 = vpop.f32.mrf.mxu0
    %5129 = vdwg.mxu0
    %5132 = vrot.lane.b32.xlu0 %v4387, 8
    %v5133 = vpop.permute.xlu0 %5132
    %5134 = vrot.lane.b32.xlu0 %v4463, 8
    %v5135 = vpop.permute.xlu0 %5134
    %5140 = vrot.lane.b32.xlu0 %v4719, 16
    %v5141 = vpop.permute.xlu0 %5140
    %5142 = vrot.lane.b32.xlu0 %v4795, 16
    %v5143 = vpop.permute.xlu0 %5142
    %5148 = vrot.lane.b32.xlu0 %v5051, 24
    %v5149 = vpop.permute.xlu0 %5148
    %5150 = vrot.lane.b32.xlu0 %v5127, 24
    %v5151 = vpop.permute.xlu0 %5150
    %v5154 = vsel %vm130, %v4055, %v5133
    %v5155 = vsel %vm130, %v4131, %v5135
    %v5156 = vsel %vm1480, %v5154, %v5141
    %v5157 = vsel %vm1480, %v5155, %v5143
    %v5158 = vsel %vm1483, %v5156, %v5149
    %v5159 = vsel %vm1483, %v5157, %v5151
    %s5160 = scalar_lea.vmem %s2, 32
    %v5161 = vld [vmem:[%s5160] sm:$0xff]
    %v5162 = vld [vmem:[%s5160 + $0x8] sm:$0xff]
    %v5163 = vld [vmem:[%s5160 + $0x10] sm:$0xff]
    %v5164 = vld [vmem:[%s5160 + $0x18] sm:$0xff]
    %v5165 = vlaneseq
    %v5166 = vshrl.u32 %v5165, 7
    %v5167 = vsub.s32 1, %v5166
    %v5168 = vrot.slane %v3713, %v5167
    %v5170 = vsel %vm45, %v5158, 0
    %v5173 = vsel %vm45, %v5159, 0
    %5175 = vmatprep.subr.mxu0 0.0
    %5176 = vmatpush1.msra.mxu0 0.0
    %5177 = vmatprep.subr.mxu0 0.0
    %5178 = vmatpush1.msra.mxu0 0.0
    %5179 = vmatprep.subr.mxu0 0.0
    %5180 = vmatpush1.msra.mxu0 0.0
    %5181 = vmatprep.subr.mxu0 0.0
    %5182 = vmatpush1.msra.mxu0 0.0
    %5183 = vmatprep.subr.mxu0 0.0
    %5184 = vmatpush1.msra.mxu0 0.0
    %5185 = vmatprep.subr.mxu0 0.0
    %5186 = vmatpush1.msra.mxu0 0.0
    %5187 = vmatprep.subr.mxu0 0.0
    %5188 = vmatpush1.msra.mxu0 0.0
    %5189 = vmatprep.subr.mxu0 0.0
    %5190 = vmatpush1.msra.mxu0 0.0
    %5191 = vmatprep.subr.mxu0 0.0
    %5192 = vmatpush1.msra.mxu0 0.0
    %5193 = vmatprep.subr.mxu0 0.0
    %5194 = vmatpush1.msra.mxu0 0.0
    %5195 = vmatprep.subr.mxu0 0.0
    %5196 = vmatpush1.msra.mxu0 0.0
    %5197 = vmatprep.subr.mxu0 0.0
    %5198 = vmatpush1.msra.mxu0 0.0
    %5199 = vmatprep.subr.mxu0 0.0
    %5200 = vmatpush1.msra.mxu0 %v5164
    %5201 = vmatprep.subr.mxu0 0.0
    %5202 = vmatpush1.msra.mxu0 %v5163
    %5203 = vmatprep.subr.mxu0 0.0
    %5204 = vmatpush1.msra.mxu0 %v5162
    %5205 = vmatprep.subr.mxu0 0.0
    %5206 = vmatpush1.msra.mxu0 %v5161
    %5207 = vmatprep.subr.mxu0 0.0
    %5208 = vmatpush2.msra.mxu0 0.0
    %5209 = vmatprep.subr.mxu0 0.0
    %5210 = vmatpush2.msra.mxu0 0.0
    %5211 = vmatprep.subr.mxu0 0.0
    %5212 = vmatpush2.msra.mxu0 0.0
    %5213 = vmatprep.subr.mxu0 0.0
    %5214 = vmatpush2.msra.mxu0 0.0
    %5215 = vmatprep.subr.mxu0 0.0
    %5216 = vmatpush2.msra.mxu0 0.0
    %5217 = vmatprep.subr.mxu0 0.0
    %5218 = vmatpush2.msra.mxu0 0.0
    %5219 = vmatprep.subr.mxu0 0.0
    %5220 = vmatpush2.msra.mxu0 0.0
    %5221 = vmatprep.subr.mxu0 0.0
    %5222 = vmatpush2.msra.mxu0 0.0
    %5223 = vmatprep.subr.mxu0 0.0
    %5224 = vmatpush2.msra.mxu0 0.0
    %5225 = vmatprep.subr.mxu0 0.0
    %5226 = vmatpush2.msra.mxu0 0.0
    %5227 = vmatprep.subr.mxu0 0.0
    %5228 = vmatpush2.msra.mxu0 0.0
    %5229 = vmatprep.subr.mxu0 0.0
    %5230 = vmatpush2.msra.mxu0 0.0
    %5231 = vmatprep.subr.mxu0 0.0
    %5232 = vmatpush2.msra.mxu0 0.0
    %5233 = vmatprep.subr.mxu0 0.0
    %5234 = vmatpush2.msra.mxu0 0.0
    %5235 = vmatprep.subr.mxu0 0.0
    %5236 = vmatpush2.msra.mxu0 0.0
    %5237 = vmatprep.subr.mxu0 0.0
    %5238 = vmatpush2.msra.mxu0 0.0
    %5239 = vmatprep.mubr.f32.mxu0 0.0
    %5240 = vmatmul.mubr.f32.gmra.mxu0 %v5170
    %v5241 = vpop.f32.mrf.mxu0
    %v5242 = vadd.f32 %v5168, %v5241
    %v5243 = vpop.f32.mrf.mxu0
    %5244 = vmatprep.mubr.f32.mxu0 0.0
    %5245 = vmatmul.mubr.f32.gmra.mxu0 %v5173
    %v5246 = vpop.f32.mrf.mxu0
    %v5247 = vadd.f32 %v5168, %v5246
    %v5248 = vpop.f32.mrf.mxu0
    %5249 = vdwg.mxu0
    %v5250 = vadd.f32 %v3710, %v5242
    %v5251 = vadd.f32 %v3711, %v5247
    %v5252 = vsel %vm45, %v5250, 0.0
    %5253 = vadd.xlane.f32.xlu0 %v5252
    %v5254 = vpop.xlane.xlu0 %5253
    %v5255 = vsel %vm45, %v5251, 0.0
    %5256 = vadd.xlane.f32.xlu0 %v5255
    %v5257 = vpop.xlane.xlu0 %5256
    %v5258 = vmul.f32 %v5254, %v1583
    %v5259 = vmul.f32 %v5257, %v1583
    %v5260 = vsub.f32 %v5250, %v5258
    %v5261 = vsub.f32 %v5251, %v5259
    %v5262 = vmul.f32 %v5260, %v5260
    %v5263 = vmul.f32 %v5261, %v5261
    %v5264 = vsel %vm45, %v5262, 0.0
    %5265 = vadd.xlane.f32.xlu0 %v5264
    %v5266 = vpop.xlane.xlu0 %5265
    %v5267 = vsel %vm45, %v5263, 0.0
    %5268 = vadd.xlane.f32.xlu0 %v5267
    %v5269 = vpop.xlane.xlu0 %5268
    %v5270 = vmul.f32 %v5266, %v1583
    %v5271 = vmul.f32 %v5269, %v1583
    %v5272 = vadd.f32 %v5270, 1e-05
    %v5273 = vadd.f32 %v5271, 1e-05
    %v5274 = vrsqrt.pop %v5272
    %v5275 = vrsqrt.pop %v5273
    %v5276 = vmul.f32 %v5260, %v5274
    %v5277 = vmul.f32 %v5261, %v5275
    %v5278 = vlaneseq
    %v5279 = vshrl.u32 %v5278, 7
    %v5280 = vsub.s32 2, %v5279
    %v5281 = vrot.slane %v3713, %v5280
    %v5282 = vmul.f32 %v5276, %v5281
    %v5283 = vmul.f32 %v5277, %v5281
    %v5284 = vlaneseq
    %v5285 = vshrl.u32 %v5284, 7
    %v5286 = vsub.s32 3, %v5285
    %v5287 = vrot.slane %v3713, %v5286
    %v5288 = vadd.f32 %v5282, %v5287
    %v5289 = vadd.f32 %v5283, %v5287
    %v5290 = vpack.c.bf16 %v5289, %v5288
    %v5291 = vlaneseq
    %v5292 = vshrl.u32 %v5291, 7
    %v5293 = vsub.s32 4, %v5292
    %v5294 = vrot.slane %v3713, %v5293
    %s5295 = scalar_lea.vmem %s3, 256
    %v5296 = vld [vmem:[%s5295] sm:$0xff]
    %v5297 = vld [vmem:[%s5295 + $0x40] sm:$0xff]
    %v5298 = vld [vmem:[%s5295 + $0x80] sm:$0xff]
    %v5299 = vld [vmem:[%s5295 + $0xc0] sm:$0xff]
    %s5300 = scalar_lea.vmem %s5, 16
    %v5301 = vld [vmem:[%s5300] sm:$0x3]
    %v5303 = vlaneseq
    %v5304 = vshrl.u32 %v5303, 7
    %v5305 = vsub.s32 0, %v5304
    %v5306 = vrot.slane %v5301, %v5305
    %v5307 = vlaneseq
    %v5308 = vshrl.u32 %v5307, 7
    %v5309 = vsub.s32 1, %v5308
    %v5310 = vrot.slane %v5301, %v5309
    %v5317 = vunpack.c.l.b16 %v5296
    %v5318 = vunpack.c.h.b16 %v5296
    %v5319 = vunpack.c.l.b16 %v5297
    %v5320 = vunpack.c.h.b16 %v5297
    %v5321 = vunpack.c.l.b16 %v5298
    %v5322 = vunpack.c.h.b16 %v5298
    %v5323 = vunpack.c.l.b16 %v5299
    %v5324 = vunpack.c.h.b16 %v5299
    %v5325 = vpack.c.b16 %v5319, %v5317
    %v5326 = vpack.c.b16 %v5320, %v5318
    %v5327 = vpack.c.b16 %v5323, %v5321
    %v5328 = vpack.c.b16 %v5324, %v5322
    %v5334 = vsel %vm45, %v5290, 0
    %5336 = vmatprep.subr.bf16.mxu0 0
    %5337 = vmatpush1.bf16.msra.mxu0 0
    %5338 = vmatprep.subr.bf16.mxu0 0
    %5339 = vmatpush1.bf16.msra.mxu0 0
    %5340 = vmatprep.subr.bf16.mxu0 0
    %5341 = vmatpush1.bf16.msra.mxu0 0
    %5342 = vmatprep.subr.bf16.mxu0 0
    %5343 = vmatpush1.bf16.msra.mxu0 0
    %5344 = vmatprep.subr.bf16.mxu0 0
    %5345 = vmatpush1.bf16.msra.mxu0 0
    %5346 = vmatprep.subr.bf16.mxu0 0
    %5347 = vmatpush1.bf16.msra.mxu0 0
    %5348 = vmatprep.subr.bf16.mxu0 %v5328
    %5349 = vmatpush1.bf16.msra.mxu0 %v5327
    %5350 = vmatprep.subr.bf16.mxu0 %v5326
    %5351 = vmatpush1.bf16.msra.mxu0 %v5325
    %5352 = vmatprep.subr.bf16.mxu0 0
    %5353 = vmatpush2.bf16.msra.mxu0 0
    %5354 = vmatprep.subr.bf16.mxu0 0
    %5355 = vmatpush2.bf16.msra.mxu0 0
    %5356 = vmatprep.subr.bf16.mxu0 0
    %5357 = vmatpush2.bf16.msra.mxu0 0
    %5358 = vmatprep.subr.bf16.mxu0 0
    %5359 = vmatpush2.bf16.msra.mxu0 0
    %5360 = vmatprep.subr.bf16.mxu0 0
    %5361 = vmatpush2.bf16.msra.mxu0 0
    %5362 = vmatprep.subr.bf16.mxu0 0
    %5363 = vmatpush2.bf16.msra.mxu0 0
    %5364 = vmatprep.subr.bf16.mxu0 0
    %5365 = vmatpush2.bf16.msra.mxu0 0
    %5366 = vmatprep.subr.bf16.mxu0 0
    %5367 = vmatpush2.bf16.msra.mxu0 0
    %5368 = vmatprep.mubr.bf16.mxu0 0
    %5369 = vmatmul.mubr.bf16.gmra.mxu0 %v5334
    %v5370 = vpop.f32.mrf.mxu0
    %v5371 = vadd.f32 %v5306, %v5370
    %v5372 = vpop.f32.mrf.mxu0
    %v5373 = vadd.f32 %v5310, %v5372
    %v5374 = vpop.f32.mrf.mxu0
    %v5375 = vadd.f32 %v5306, %v5374
    %v5376 = vpop.f32.mrf.mxu0
    %v5377 = vadd.f32 %v5310, %v5376
    %5378 = vdwg.mxu0
    %v5379 = vmax.f32 %v5371, 0.0
    %v5380 = vmax.f32 %v5373, 0.0
    %v5381 = vmax.f32 %v5375, 0.0
    %v5382 = vmax.f32 %v5377, 0.0
    %v5383 = vpack.c.bf16 %v5381, %v5379
    %v5384 = vpack.c.bf16 %v5382, %v5380
    %s5385 = scalar_lea.vmem %s4, 1024
    %v5386 = vld [vmem:[%s5385] sm:$0xf]
    %v5387 = vld [vmem:[%s5385 + $0x4] sm:$0xf]
    %v5388 = vld [vmem:[%s5385 + $0x8] sm:$0xf]
    %v5389 = vld [vmem:[%s5385 + $0xc] sm:$0xf]
    %v5390 = vld [vmem:[%s5385 + $0x10] sm:$0xf]
    %v5391 = vld [vmem:[%s5385 + $0x14] sm:$0xf]
    %v5392 = vld [vmem:[%s5385 + $0x18] sm:$0xf]
    %v5393 = vld [vmem:[%s5385 + $0x1c] sm:$0xf]
    %v5394 = vld [vmem:[%s5385 + $0x20] sm:$0xf]
    %v5395 = vld [vmem:[%s5385 + $0x24] sm:$0xf]
    %v5396 = vld [vmem:[%s5385 + $0x28] sm:$0xf]
    %v5397 = vld [vmem:[%s5385 + $0x2c] sm:$0xf]
    %v5398 = vld [vmem:[%s5385 + $0x30] sm:$0xf]
    %v5399 = vld [vmem:[%s5385 + $0x34] sm:$0xf]
    %v5400 = vld [vmem:[%s5385 + $0x38] sm:$0xf]
    %v5401 = vld [vmem:[%s5385 + $0x3c] sm:$0xf]
    %v5402 = vld [vmem:[%s5385 + $0x40] sm:$0xf]
    %v5403 = vld [vmem:[%s5385 + $0x44] sm:$0xf]
    %v5404 = vld [vmem:[%s5385 + $0x48] sm:$0xf]
    %v5405 = vld [vmem:[%s5385 + $0x4c] sm:$0xf]
    %v5406 = vld [vmem:[%s5385 + $0x50] sm:$0xf]
    %v5407 = vld [vmem:[%s5385 + $0x54] sm:$0xf]
    %v5408 = vld [vmem:[%s5385 + $0x58] sm:$0xf]
    %v5409 = vld [vmem:[%s5385 + $0x5c] sm:$0xf]
    %v5410 = vld [vmem:[%s5385 + $0x60] sm:$0xf]
    %v5411 = vld [vmem:[%s5385 + $0x64] sm:$0xf]
    %v5412 = vld [vmem:[%s5385 + $0x68] sm:$0xf]
    %v5413 = vld [vmem:[%s5385 + $0x6c] sm:$0xf]
    %v5414 = vld [vmem:[%s5385 + $0x70] sm:$0xf]
    %v5415 = vld [vmem:[%s5385 + $0x74] sm:$0xf]
    %v5416 = vld [vmem:[%s5385 + $0x78] sm:$0xf]
    %v5417 = vld [vmem:[%s5385 + $0x7c] sm:$0xf]
    %v5450 = vunpack.c.l.b16 %v5386
    %v5451 = vunpack.c.l.b16 %v5387
    %v5452 = vunpack.c.l.b16 %v5388
    %v5453 = vunpack.c.l.b16 %v5389
    %v5454 = vunpack.c.l.b16 %v5390
    %v5455 = vunpack.c.l.b16 %v5391
    %v5456 = vunpack.c.l.b16 %v5392
    %v5457 = vunpack.c.l.b16 %v5393
    %v5458 = vunpack.c.l.b16 %v5394
    %v5459 = vunpack.c.l.b16 %v5395
    %v5460 = vunpack.c.l.b16 %v5396
    %v5461 = vunpack.c.l.b16 %v5397
    %v5462 = vunpack.c.l.b16 %v5398
    %v5463 = vunpack.c.l.b16 %v5399
    %v5464 = vunpack.c.l.b16 %v5400
    %v5465 = vunpack.c.l.b16 %v5401
    %v5466 = vunpack.c.l.b16 %v5402
    %v5467 = vunpack.c.l.b16 %v5403
    %v5468 = vunpack.c.l.b16 %v5404
    %v5469 = vunpack.c.l.b16 %v5405
    %v5470 = vunpack.c.l.b16 %v5406
    %v5471 = vunpack.c.l.b16 %v5407
    %v5472 = vunpack.c.l.b16 %v5408
    %v5473 = vunpack.c.l.b16 %v5409
    %v5474 = vunpack.c.l.b16 %v5410
    %v5475 = vunpack.c.l.b16 %v5411
    %v5476 = vunpack.c.l.b16 %v5412
    %v5477 = vunpack.c.l.b16 %v5413
    %v5478 = vunpack.c.l.b16 %v5414
    %v5479 = vunpack.c.l.b16 %v5415
    %v5480 = vunpack.c.l.b16 %v5416
    %v5481 = vunpack.c.l.b16 %v5417
    %v5482 = vpack.c.b16 %v5451, %v5450
    %v5483 = vpack.c.b16 %v5453, %v5452
    %v5484 = vpack.c.b16 %v5455, %v5454
    %v5485 = vpack.c.b16 %v5457, %v5456
    %v5486 = vpack.c.b16 %v5459, %v5458
    %v5487 = vpack.c.b16 %v5461, %v5460
    %v5488 = vpack.c.b16 %v5463, %v5462
    %v5489 = vpack.c.b16 %v5465, %v5464
    %v5490 = vpack.c.b16 %v5467, %v5466
    %v5491 = vpack.c.b16 %v5469, %v5468
    %v5492 = vpack.c.b16 %v5471, %v5470
    %v5493 = vpack.c.b16 %v5473, %v5472
    %v5494 = vpack.c.b16 %v5475, %v5474
    %v5495 = vpack.c.b16 %v5477, %v5476
    %v5496 = vpack.c.b16 %v5479, %v5478
    %v5497 = vpack.c.b16 %v5481, %v5480
    %5514 = vmatprep.subr.bf16.mxu0 0
    %5515 = vmatpush1.bf16.msra.mxu0 %v5489
    %5516 = vmatprep.subr.bf16.mxu0 0
    %5517 = vmatpush1.bf16.msra.mxu0 %v5488
    %5518 = vmatprep.subr.bf16.mxu0 0
    %5519 = vmatpush1.bf16.msra.mxu0 %v5487
    %5520 = vmatprep.subr.bf16.mxu0 0
    %5521 = vmatpush1.bf16.msra.mxu0 %v5486
    %5522 = vmatprep.subr.bf16.mxu0 0
    %5523 = vmatpush1.bf16.msra.mxu0 %v5485
    %5524 = vmatprep.subr.bf16.mxu0 0
    %5525 = vmatpush1.bf16.msra.mxu0 %v5484
    %5526 = vmatprep.subr.bf16.mxu0 0
    %5527 = vmatpush1.bf16.msra.mxu0 %v5483
    %5528 = vmatprep.subr.bf16.mxu0 0
    %5529 = vmatpush1.bf16.msra.mxu0 %v5482
    %5530 = vmatprep.subr.bf16.mxu0 0
    %5531 = vmatpush2.bf16.msra.mxu0 %v5497
    %5532 = vmatprep.subr.bf16.mxu0 0
    %5533 = vmatpush2.bf16.msra.mxu0 %v5496
    %5534 = vmatprep.subr.bf16.mxu0 0
    %5535 = vmatpush2.bf16.msra.mxu0 %v5495
    %5536 = vmatprep.subr.bf16.mxu0 0
    %5537 = vmatpush2.bf16.msra.mxu0 %v5494
    %5538 = vmatprep.subr.bf16.mxu0 0
    %5539 = vmatpush2.bf16.msra.mxu0 %v5493
    %5540 = vmatprep.subr.bf16.mxu0 0
    %5541 = vmatpush2.bf16.msra.mxu0 %v5492
    %5542 = vmatprep.subr.bf16.mxu0 0
    %5543 = vmatpush2.bf16.msra.mxu0 %v5491
    %5544 = vmatprep.subr.bf16.mxu0 0
    %5545 = vmatpush2.bf16.msra.mxu0 %v5490
    %5546 = vmatprep.mubr.bf16.mxu0 %v5384
    %5547 = vmatmul.mubr.bf16.gmra.mxu0 %v5383
    %v5548 = vpop.f32.mrf.mxu0
    %v5549 = vadd.f32 0.0, %v5548
    %v5550 = vpop.f32.mrf.mxu0
    %v5551 = vpop.f32.mrf.mxu0
    %v5552 = vadd.f32 0.0, %v5551
    %v5553 = vpop.f32.mrf.mxu0
    %5554 = vdwg.mxu0
    %v5555 = vadd.f32 %v5294, %v5549
    %v5556 = vadd.f32 %v5294, %v5552
    %v5557 = vld [vmem:[%s5295 + $0x8] sm:$0xff]
    %v5558 = vld [vmem:[%s5295 + $0x48] sm:$0xff]
    %v5559 = vld [vmem:[%s5295 + $0x88] sm:$0xff]
    %v5560 = vld [vmem:[%s5295 + $0xc8] sm:$0xff]
    %v5561 = vld [vmem:[%s5300 + $0x2] sm:$0x3]
    %v5563 = vlaneseq
    %v5564 = vshrl.u32 %v5563, 7
    %v5565 = vsub.s32 0, %v5564
    %v5566 = vrot.slane %v5561, %v5565
    %v5567 = vlaneseq
    %v5568 = vshrl.u32 %v5567, 7
    %v5569 = vsub.s32 1, %v5568
    %v5570 = vrot.slane %v5561, %v5569
    %v5577 = vunpack.c.l.b16 %v5557
    %v5578 = vunpack.c.h.b16 %v5557
    %v5579 = vunpack.c.l.b16 %v5558
    %v5580 = vunpack.c.h.b16 %v5558
    %v5581 = vunpack.c.l.b16 %v5559
    %v5582 = vunpack.c.h.b16 %v5559
    %v5583 = vunpack.c.l.b16 %v5560
    %v5584 = vunpack.c.h.b16 %v5560
    %v5585 = vpack.c.b16 %v5579, %v5577
    %v5586 = vpack.c.b16 %v5580, %v5578
    %v5587 = vpack.c.b16 %v5583, %v5581
    %v5588 = vpack.c.b16 %v5584, %v5582
    %5593 = vmatprep.subr.bf16.mxu0 0
    %5594 = vmatpush1.bf16.msra.mxu0 0
    %5595 = vmatprep.subr.bf16.mxu0 0
    %5596 = vmatpush1.bf16.msra.mxu0 0
    %5597 = vmatprep.subr.bf16.mxu0 0
    %5598 = vmatpush1.bf16.msra.mxu0 0
    %5599 = vmatprep.subr.bf16.mxu0 0
    %5600 = vmatpush1.bf16.msra.mxu0 0
    %5601 = vmatprep.subr.bf16.mxu0 0
    %5602 = vmatpush1.bf16.msra.mxu0 0
    %5603 = vmatprep.subr.bf16.mxu0 0
    %5604 = vmatpush1.bf16.msra.mxu0 0
    %5605 = vmatprep.subr.bf16.mxu0 %v5588
    %5606 = vmatpush1.bf16.msra.mxu0 %v5587
    %5607 = vmatprep.subr.bf16.mxu0 %v5586
    %5608 = vmatpush1.bf16.msra.mxu0 %v5585
    %5609 = vmatprep.subr.bf16.mxu0 0
    %5610 = vmatpush2.bf16.msra.mxu0 0
    %5611 = vmatprep.subr.bf16.mxu0 0
    %5612 = vmatpush2.bf16.msra.mxu0 0
    %5613 = vmatprep.subr.bf16.mxu0 0
    %5614 = vmatpush2.bf16.msra.mxu0 0
    %5615 = vmatprep.subr.bf16.mxu0 0
    %5616 = vmatpush2.bf16.msra.mxu0 0
    %5617 = vmatprep.subr.bf16.mxu0 0
    %5618 = vmatpush2.bf16.msra.mxu0 0
    %5619 = vmatprep.subr.bf16.mxu0 0
    %5620 = vmatpush2.bf16.msra.mxu0 0
    %5621 = vmatprep.subr.bf16.mxu0 0
    %5622 = vmatpush2.bf16.msra.mxu0 0
    %5623 = vmatprep.subr.bf16.mxu0 0
    %5624 = vmatpush2.bf16.msra.mxu0 0
    %5625 = vmatprep.mubr.bf16.mxu0 0
    %5626 = vmatmul.mubr.bf16.gmra.mxu0 %v5334
    %v5627 = vpop.f32.mrf.mxu0
    %v5628 = vadd.f32 %v5566, %v5627
    %v5629 = vpop.f32.mrf.mxu0
    %v5630 = vadd.f32 %v5570, %v5629
    %v5631 = vpop.f32.mrf.mxu0
    %v5632 = vadd.f32 %v5566, %v5631
    %v5633 = vpop.f32.mrf.mxu0
    %v5634 = vadd.f32 %v5570, %v5633
    %5635 = vdwg.mxu0
    %v5636 = vmax.f32 %v5628, 0.0
    %v5637 = vmax.f32 %v5630, 0.0
    %v5638 = vmax.f32 %v5632, 0.0
    %v5639 = vmax.f32 %v5634, 0.0
    %v5640 = vpack.c.bf16 %v5638, %v5636
    %v5641 = vpack.c.bf16 %v5639, %v5637
    %v5642 = vld [vmem:[%s5385 + $0x80] sm:$0xf]
    %v5643 = vld [vmem:[%s5385 + $0x84] sm:$0xf]
    %v5644 = vld [vmem:[%s5385 + $0x88] sm:$0xf]
    %v5645 = vld [vmem:[%s5385 + $0x8c] sm:$0xf]
    %v5646 = vld [vmem:[%s5385 + $0x90] sm:$0xf]
    %v5647 = vld [vmem:[%s5385 + $0x94] sm:$0xf]
    %v5648 = vld [vmem:[%s5385 + $0x98] sm:$0xf]
    %v5649 = vld [vmem:[%s5385 + $0x9c] sm:$0xf]
    %v5650 = vld [vmem:[%s5385 + $0xa0] sm:$0xf]
    %v5651 = vld [vmem:[%s5385 + $0xa4] sm:$0xf]
    %v5652 = vld [vmem:[%s5385 + $0xa8] sm:$0xf]
    %v5653 = vld [vmem:[%s5385 + $0xac] sm:$0xf]
    %v5654 = vld [vmem:[%s5385 + $0xb0] sm:$0xf]
    %v5655 = vld [vmem:[%s5385 + $0xb4] sm:$0xf]
    %v5656 = vld [vmem:[%s5385 + $0xb8] sm:$0xf]
    %v5657 = vld [vmem:[%s5385 + $0xbc] sm:$0xf]
    %v5658 = vld [vmem:[%s5385 + $0xc0] sm:$0xf]
    %v5659 = vld [vmem:[%s5385 + $0xc4] sm:$0xf]
    %v5660 = vld [vmem:[%s5385 + $0xc8] sm:$0xf]
    %v5661 = vld [vmem:[%s5385 + $0xcc] sm:$0xf]
    %v5662 = vld [vmem:[%s5385 + $0xd0] sm:$0xf]
    %v5663 = vld [vmem:[%s5385 + $0xd4] sm:$0xf]
    %v5664 = vld [vmem:[%s5385 + $0xd8] sm:$0xf]
    %v5665 = vld [vmem:[%s5385 + $0xdc] sm:$0xf]
    %v5666 = vld [vmem:[%s5385 + $0xe0] sm:$0xf]
    %v5667 = vld [vmem:[%s5385 + $0xe4] sm:$0xf]
    %v5668 = vld [vmem:[%s5385 + $0xe8] sm:$0xf]
    %v5669 = vld [vmem:[%s5385 + $0xec] sm:$0xf]
    %v5670 = vld [vmem:[%s5385 + $0xf0] sm:$0xf]
    %v5671 = vld [vmem:[%s5385 + $0xf4] sm:$0xf]
    %v5672 = vld [vmem:[%s5385 + $0xf8] sm:$0xf]
    %v5673 = vld [vmem:[%s5385 + $0xfc] sm:$0xf]
    %v5706 = vunpack.c.l.b16 %v5642
    %v5707 = vunpack.c.l.b16 %v5643
    %v5708 = vunpack.c.l.b16 %v5644
    %v5709 = vunpack.c.l.b16 %v5645
    %v5710 = vunpack.c.l.b16 %v5646
    %v5711 = vunpack.c.l.b16 %v5647
    %v5712 = vunpack.c.l.b16 %v5648
    %v5713 = vunpack.c.l.b16 %v5649
    %v5714 = vunpack.c.l.b16 %v5650
    %v5715 = vunpack.c.l.b16 %v5651
    %v5716 = vunpack.c.l.b16 %v5652
    %v5717 = vunpack.c.l.b16 %v5653
    %v5718 = vunpack.c.l.b16 %v5654
    %v5719 = vunpack.c.l.b16 %v5655
    %v5720 = vunpack.c.l.b16 %v5656
    %v5721 = vunpack.c.l.b16 %v5657
    %v5722 = vunpack.c.l.b16 %v5658
    %v5723 = vunpack.c.l.b16 %v5659
    %v5724 = vunpack.c.l.b16 %v5660
    %v5725 = vunpack.c.l.b16 %v5661
    %v5726 = vunpack.c.l.b16 %v5662
    %v5727 = vunpack.c.l.b16 %v5663
    %v5728 = vunpack.c.l.b16 %v5664
    %v5729 = vunpack.c.l.b16 %v5665
    %v5730 = vunpack.c.l.b16 %v5666
    %v5731 = vunpack.c.l.b16 %v5667
    %v5732 = vunpack.c.l.b16 %v5668
    %v5733 = vunpack.c.l.b16 %v5669
    %v5734 = vunpack.c.l.b16 %v5670
    %v5735 = vunpack.c.l.b16 %v5671
    %v5736 = vunpack.c.l.b16 %v5672
    %v5737 = vunpack.c.l.b16 %v5673
    %v5738 = vpack.c.b16 %v5707, %v5706
    %v5739 = vpack.c.b16 %v5709, %v5708
    %v5740 = vpack.c.b16 %v5711, %v5710
    %v5741 = vpack.c.b16 %v5713, %v5712
    %v5742 = vpack.c.b16 %v5715, %v5714
    %v5743 = vpack.c.b16 %v5717, %v5716
    %v5744 = vpack.c.b16 %v5719, %v5718
    %v5745 = vpack.c.b16 %v5721, %v5720
    %v5746 = vpack.c.b16 %v5723, %v5722
    %v5747 = vpack.c.b16 %v5725, %v5724
    %v5748 = vpack.c.b16 %v5727, %v5726
    %v5749 = vpack.c.b16 %v5729, %v5728
    %v5750 = vpack.c.b16 %v5731, %v5730
    %v5751 = vpack.c.b16 %v5733, %v5732
    %v5752 = vpack.c.b16 %v5735, %v5734
    %v5753 = vpack.c.b16 %v5737, %v5736
    %5770 = vmatprep.subr.bf16.mxu0 0
    %5771 = vmatpush1.bf16.msra.mxu0 %v5745
    %5772 = vmatprep.subr.bf16.mxu0 0
    %5773 = vmatpush1.bf16.msra.mxu0 %v5744
    %5774 = vmatprep.subr.bf16.mxu0 0
    %5775 = vmatpush1.bf16.msra.mxu0 %v5743
    %5776 = vmatprep.subr.bf16.mxu0 0
    %5777 = vmatpush1.bf16.msra.mxu0 %v5742
    %5778 = vmatprep.subr.bf16.mxu0 0
    %5779 = vmatpush1.bf16.msra.mxu0 %v5741
    %5780 = vmatprep.subr.bf16.mxu0 0
    %5781 = vmatpush1.bf16.msra.mxu0 %v5740
    %5782 = vmatprep.subr.bf16.mxu0 0
    %5783 = vmatpush1.bf16.msra.mxu0 %v5739
    %5784 = vmatprep.subr.bf16.mxu0 0
    %5785 = vmatpush1.bf16.msra.mxu0 %v5738
    %5786 = vmatprep.subr.bf16.mxu0 0
    %5787 = vmatpush2.bf16.msra.mxu0 %v5753
    %5788 = vmatprep.subr.bf16.mxu0 0
    %5789 = vmatpush2.bf16.msra.mxu0 %v5752
    %5790 = vmatprep.subr.bf16.mxu0 0
    %5791 = vmatpush2.bf16.msra.mxu0 %v5751
    %5792 = vmatprep.subr.bf16.mxu0 0
    %5793 = vmatpush2.bf16.msra.mxu0 %v5750
    %5794 = vmatprep.subr.bf16.mxu0 0
    %5795 = vmatpush2.bf16.msra.mxu0 %v5749
    %5796 = vmatprep.subr.bf16.mxu0 0
    %5797 = vmatpush2.bf16.msra.mxu0 %v5748
    %5798 = vmatprep.subr.bf16.mxu0 0
    %5799 = vmatpush2.bf16.msra.mxu0 %v5747
    %5800 = vmatprep.subr.bf16.mxu0 0
    %5801 = vmatpush2.bf16.msra.mxu0 %v5746
    %5802 = vmatprep.mubr.bf16.mxu0 %v5641
    %5803 = vmatmul.mubr.bf16.gmra.mxu0 %v5640
    %v5804 = vpop.f32.mrf.mxu0
    %v5805 = vadd.f32 0.0, %v5804
    %v5806 = vpop.f32.mrf.mxu0
    %v5807 = vpop.f32.mrf.mxu0
    %v5808 = vadd.f32 0.0, %v5807
    %v5809 = vpop.f32.mrf.mxu0
    %5810 = vdwg.mxu0
    %v5811 = vadd.f32 %v5555, %v5805
    %v5812 = vadd.f32 %v5556, %v5808
    %v5813 = vld [vmem:[%s5295 + $0x10] sm:$0xff]
    %v5814 = vld [vmem:[%s5295 + $0x50] sm:$0xff]
    %v5815 = vld [vmem:[%s5295 + $0x90] sm:$0xff]
    %v5816 = vld [vmem:[%s5295 + $0xd0] sm:$0xff]
    %v5817 = vld [vmem:[%s5300 + $0x4] sm:$0x3]
    %v5819 = vlaneseq
    %v5820 = vshrl.u32 %v5819, 7
    %v5821 = vsub.s32 0, %v5820
    %v5822 = vrot.slane %v5817, %v5821
    %v5823 = vlaneseq
    %v5824 = vshrl.u32 %v5823, 7
    %v5825 = vsub.s32 1, %v5824
    %v5826 = vrot.slane %v5817, %v5825
    %v5833 = vunpack.c.l.b16 %v5813
    %v5834 = vunpack.c.h.b16 %v5813
    %v5835 = vunpack.c.l.b16 %v5814
    %v5836 = vunpack.c.h.b16 %v5814
    %v5837 = vunpack.c.l.b16 %v5815
    %v5838 = vunpack.c.h.b16 %v5815
    %v5839 = vunpack.c.l.b16 %v5816
    %v5840 = vunpack.c.h.b16 %v5816
    %v5841 = vpack.c.b16 %v5835, %v5833
    %v5842 = vpack.c.b16 %v5836, %v5834
    %v5843 = vpack.c.b16 %v5839, %v5837
    %v5844 = vpack.c.b16 %v5840, %v5838
    %5849 = vmatprep.subr.bf16.mxu0 0
    %5850 = vmatpush1.bf16.msra.mxu0 0
    %5851 = vmatprep.subr.bf16.mxu0 0
    %5852 = vmatpush1.bf16.msra.mxu0 0
    %5853 = vmatprep.subr.bf16.mxu0 0
    %5854 = vmatpush1.bf16.msra.mxu0 0
    %5855 = vmatprep.subr.bf16.mxu0 0
    %5856 = vmatpush1.bf16.msra.mxu0 0
    %5857 = vmatprep.subr.bf16.mxu0 0
    %5858 = vmatpush1.bf16.msra.mxu0 0
    %5859 = vmatprep.subr.bf16.mxu0 0
    %5860 = vmatpush1.bf16.msra.mxu0 0
    %5861 = vmatprep.subr.bf16.mxu0 %v5844
    %5862 = vmatpush1.bf16.msra.mxu0 %v5843
    %5863 = vmatprep.subr.bf16.mxu0 %v5842
    %5864 = vmatpush1.bf16.msra.mxu0 %v5841
    %5865 = vmatprep.subr.bf16.mxu0 0
    %5866 = vmatpush2.bf16.msra.mxu0 0
    %5867 = vmatprep.subr.bf16.mxu0 0
    %5868 = vmatpush2.bf16.msra.mxu0 0
    %5869 = vmatprep.subr.bf16.mxu0 0
    %5870 = vmatpush2.bf16.msra.mxu0 0
    %5871 = vmatprep.subr.bf16.mxu0 0
    %5872 = vmatpush2.bf16.msra.mxu0 0
    %5873 = vmatprep.subr.bf16.mxu0 0
    %5874 = vmatpush2.bf16.msra.mxu0 0
    %5875 = vmatprep.subr.bf16.mxu0 0
    %5876 = vmatpush2.bf16.msra.mxu0 0
    %5877 = vmatprep.subr.bf16.mxu0 0
    %5878 = vmatpush2.bf16.msra.mxu0 0
    %5879 = vmatprep.subr.bf16.mxu0 0
    %5880 = vmatpush2.bf16.msra.mxu0 0
    %5881 = vmatprep.mubr.bf16.mxu0 0
    %5882 = vmatmul.mubr.bf16.gmra.mxu0 %v5334
    %v5883 = vpop.f32.mrf.mxu0
    %v5884 = vadd.f32 %v5822, %v5883
    %v5885 = vpop.f32.mrf.mxu0
    %v5886 = vadd.f32 %v5826, %v5885
    %v5887 = vpop.f32.mrf.mxu0
    %v5888 = vadd.f32 %v5822, %v5887
    %v5889 = vpop.f32.mrf.mxu0
    %v5890 = vadd.f32 %v5826, %v5889
    %5891 = vdwg.mxu0
    %v5892 = vmax.f32 %v5884, 0.0
    %v5893 = vmax.f32 %v5886, 0.0
    %v5894 = vmax.f32 %v5888, 0.0
    %v5895 = vmax.f32 %v5890, 0.0
    %v5896 = vpack.c.bf16 %v5894, %v5892
    %v5897 = vpack.c.bf16 %v5895, %v5893
    %v5898 = vld [vmem:[%s5385 + $0x100] sm:$0xf]
    %v5899 = vld [vmem:[%s5385 + $0x104] sm:$0xf]
    %v5900 = vld [vmem:[%s5385 + $0x108] sm:$0xf]
    %v5901 = vld [vmem:[%s5385 + $0x10c] sm:$0xf]
    %v5902 = vld [vmem:[%s5385 + $0x110] sm:$0xf]
    %v5903 = vld [vmem:[%s5385 + $0x114] sm:$0xf]
    %v5904 = vld [vmem:[%s5385 + $0x118] sm:$0xf]
    %v5905 = vld [vmem:[%s5385 + $0x11c] sm:$0xf]
    %v5906 = vld [vmem:[%s5385 + $0x120] sm:$0xf]
    %v5907 = vld [vmem:[%s5385 + $0x124] sm:$0xf]
    %v5908 = vld [vmem:[%s5385 + $0x128] sm:$0xf]
    %v5909 = vld [vmem:[%s5385 + $0x12c] sm:$0xf]
    %v5910 = vld [vmem:[%s5385 + $0x130] sm:$0xf]
    %v5911 = vld [vmem:[%s5385 + $0x134] sm:$0xf]
    %v5912 = vld [vmem:[%s5385 + $0x138] sm:$0xf]
    %v5913 = vld [vmem:[%s5385 + $0x13c] sm:$0xf]
    %v5914 = vld [vmem:[%s5385 + $0x140] sm:$0xf]
    %v5915 = vld [vmem:[%s5385 + $0x144] sm:$0xf]
    %v5916 = vld [vmem:[%s5385 + $0x148] sm:$0xf]
    %v5917 = vld [vmem:[%s5385 + $0x14c] sm:$0xf]
    %v5918 = vld [vmem:[%s5385 + $0x150] sm:$0xf]
    %v5919 = vld [vmem:[%s5385 + $0x154] sm:$0xf]
    %v5920 = vld [vmem:[%s5385 + $0x158] sm:$0xf]
    %v5921 = vld [vmem:[%s5385 + $0x15c] sm:$0xf]
    %v5922 = vld [vmem:[%s5385 + $0x160] sm:$0xf]
    %v5923 = vld [vmem:[%s5385 + $0x164] sm:$0xf]
    %v5924 = vld [vmem:[%s5385 + $0x168] sm:$0xf]
    %v5925 = vld [vmem:[%s5385 + $0x16c] sm:$0xf]
    %v5926 = vld [vmem:[%s5385 + $0x170] sm:$0xf]
    %v5927 = vld [vmem:[%s5385 + $0x174] sm:$0xf]
    %v5928 = vld [vmem:[%s5385 + $0x178] sm:$0xf]
    %v5929 = vld [vmem:[%s5385 + $0x17c] sm:$0xf]
    %v5962 = vunpack.c.l.b16 %v5898
    %v5963 = vunpack.c.l.b16 %v5899
    %v5964 = vunpack.c.l.b16 %v5900
    %v5965 = vunpack.c.l.b16 %v5901
    %v5966 = vunpack.c.l.b16 %v5902
    %v5967 = vunpack.c.l.b16 %v5903
    %v5968 = vunpack.c.l.b16 %v5904
    %v5969 = vunpack.c.l.b16 %v5905
    %v5970 = vunpack.c.l.b16 %v5906
    %v5971 = vunpack.c.l.b16 %v5907
    %v5972 = vunpack.c.l.b16 %v5908
    %v5973 = vunpack.c.l.b16 %v5909
    %v5974 = vunpack.c.l.b16 %v5910
    %v5975 = vunpack.c.l.b16 %v5911
    %v5976 = vunpack.c.l.b16 %v5912
    %v5977 = vunpack.c.l.b16 %v5913
    %v5978 = vunpack.c.l.b16 %v5914
    %v5979 = vunpack.c.l.b16 %v5915
    %v5980 = vunpack.c.l.b16 %v5916
    %v5981 = vunpack.c.l.b16 %v5917
    %v5982 = vunpack.c.l.b16 %v5918
    %v5983 = vunpack.c.l.b16 %v5919
    %v5984 = vunpack.c.l.b16 %v5920
    %v5985 = vunpack.c.l.b16 %v5921
    %v5986 = vunpack.c.l.b16 %v5922
    %v5987 = vunpack.c.l.b16 %v5923
    %v5988 = vunpack.c.l.b16 %v5924
    %v5989 = vunpack.c.l.b16 %v5925
    %v5990 = vunpack.c.l.b16 %v5926
    %v5991 = vunpack.c.l.b16 %v5927
    %v5992 = vunpack.c.l.b16 %v5928
    %v5993 = vunpack.c.l.b16 %v5929
    %v5994 = vpack.c.b16 %v5963, %v5962
    %v5995 = vpack.c.b16 %v5965, %v5964
    %v5996 = vpack.c.b16 %v5967, %v5966
    %v5997 = vpack.c.b16 %v5969, %v5968
    %v5998 = vpack.c.b16 %v5971, %v5970
    %v5999 = vpack.c.b16 %v5973, %v5972
    %v6000 = vpack.c.b16 %v5975, %v5974
    %v6001 = vpack.c.b16 %v5977, %v5976
    %v6002 = vpack.c.b16 %v5979, %v5978
    %v6003 = vpack.c.b16 %v5981, %v5980
    %v6004 = vpack.c.b16 %v5983, %v5982
    %v6005 = vpack.c.b16 %v5985, %v5984
    %v6006 = vpack.c.b16 %v5987, %v5986
    %v6007 = vpack.c.b16 %v5989, %v5988
    %v6008 = vpack.c.b16 %v5991, %v5990
    %v6009 = vpack.c.b16 %v5993, %v5992
    %6026 = vmatprep.subr.bf16.mxu0 0
    %6027 = vmatpush1.bf16.msra.mxu0 %v6001
    %6028 = vmatprep.subr.bf16.mxu0 0
    %6029 = vmatpush1.bf16.msra.mxu0 %v6000
    %6030 = vmatprep.subr.bf16.mxu0 0
    %6031 = vmatpush1.bf16.msra.mxu0 %v5999
    %6032 = vmatprep.subr.bf16.mxu0 0
    %6033 = vmatpush1.bf16.msra.mxu0 %v5998
    %6034 = vmatprep.subr.bf16.mxu0 0
    %6035 = vmatpush1.bf16.msra.mxu0 %v5997
    %6036 = vmatprep.subr.bf16.mxu0 0
    %6037 = vmatpush1.bf16.msra.mxu0 %v5996
    %6038 = vmatprep.subr.bf16.mxu0 0
    %6039 = vmatpush1.bf16.msra.mxu0 %v5995
    %6040 = vmatprep.subr.bf16.mxu0 0
    %6041 = vmatpush1.bf16.msra.mxu0 %v5994
    %6042 = vmatprep.subr.bf16.mxu0 0
    %6043 = vmatpush2.bf16.msra.mxu0 %v6009
    %6044 = vmatprep.subr.bf16.mxu0 0
    %6045 = vmatpush2.bf16.msra.mxu0 %v6008
    %6046 = vmatprep.subr.bf16.mxu0 0
    %6047 = vmatpush2.bf16.msra.mxu0 %v6007
    %6048 = vmatprep.subr.bf16.mxu0 0
    %6049 = vmatpush2.bf16.msra.mxu0 %v6006
    %6050 = vmatprep.subr.bf16.mxu0 0
    %6051 = vmatpush2.bf16.msra.mxu0 %v6005
    %6052 = vmatprep.subr.bf16.mxu0 0
    %6053 = vmatpush2.bf16.msra.mxu0 %v6004
    %6054 = vmatprep.subr.bf16.mxu0 0
    %6055 = vmatpush2.bf16.msra.mxu0 %v6003
    %6056 = vmatprep.subr.bf16.mxu0 0
    %6057 = vmatpush2.bf16.msra.mxu0 %v6002
    %6058 = vmatprep.mubr.bf16.mxu0 %v5897
    %6059 = vmatmul.mubr.bf16.gmra.mxu0 %v5896
    %v6060 = vpop.f32.mrf.mxu0
    %v6061 = vadd.f32 0.0, %v6060
    %v6062 = vpop.f32.mrf.mxu0
    %v6063 = vpop.f32.mrf.mxu0
    %v6064 = vadd.f32 0.0, %v6063
    %v6065 = vpop.f32.mrf.mxu0
    %6066 = vdwg.mxu0
    %v6067 = vadd.f32 %v5811, %v6061
    %v6068 = vadd.f32 %v5812, %v6064
    %v6069 = vld [vmem:[%s5295 + $0x18] sm:$0xff]
    %v6070 = vld [vmem:[%s5295 + $0x58] sm:$0xff]
    %v6071 = vld [vmem:[%s5295 + $0x98] sm:$0xff]
    %v6072 = vld [vmem:[%s5295 + $0xd8] sm:$0xff]
    %v6073 = vld [vmem:[%s5300 + $0x6] sm:$0x3]
    %v6075 = vlaneseq
    %v6076 = vshrl.u32 %v6075, 7
    %v6077 = vsub.s32 0, %v6076
    %v6078 = vrot.slane %v6073, %v6077
    %v6079 = vlaneseq
    %v6080 = vshrl.u32 %v6079, 7
    %v6081 = vsub.s32 1, %v6080
    %v6082 = vrot.slane %v6073, %v6081
    %v6089 = vunpack.c.l.b16 %v6069
    %v6090 = vunpack.c.h.b16 %v6069
    %v6091 = vunpack.c.l.b16 %v6070
    %v6092 = vunpack.c.h.b16 %v6070
    %v6093 = vunpack.c.l.b16 %v6071
    %v6094 = vunpack.c.h.b16 %v6071
    %v6095 = vunpack.c.l.b16 %v6072
    %v6096 = vunpack.c.h.b16 %v6072
    %v6097 = vpack.c.b16 %v6091, %v6089
    %v6098 = vpack.c.b16 %v6092, %v6090
    %v6099 = vpack.c.b16 %v6095, %v6093
    %v6100 = vpack.c.b16 %v6096, %v6094
    %6105 = vmatprep.subr.bf16.mxu0 0
    %6106 = vmatpush1.bf16.msra.mxu0 0
    %6107 = vmatprep.subr.bf16.mxu0 0
    %6108 = vmatpush1.bf16.msra.mxu0 0
    %6109 = vmatprep.subr.bf16.mxu0 0
    %6110 = vmatpush1.bf16.msra.mxu0 0
    %6111 = vmatprep.subr.bf16.mxu0 0
    %6112 = vmatpush1.bf16.msra.mxu0 0
    %6113 = vmatprep.subr.bf16.mxu0 0
    %6114 = vmatpush1.bf16.msra.mxu0 0
    %6115 = vmatprep.subr.bf16.mxu0 0
    %6116 = vmatpush1.bf16.msra.mxu0 0
    %6117 = vmatprep.subr.bf16.mxu0 %v6100
    %6118 = vmatpush1.bf16.msra.mxu0 %v6099
    %6119 = vmatprep.subr.bf16.mxu0 %v6098
    %6120 = vmatpush1.bf16.msra.mxu0 %v6097
    %6121 = vmatprep.subr.bf16.mxu0 0
    %6122 = vmatpush2.bf16.msra.mxu0 0
    %6123 = vmatprep.subr.bf16.mxu0 0
    %6124 = vmatpush2.bf16.msra.mxu0 0
    %6125 = vmatprep.subr.bf16.mxu0 0
    %6126 = vmatpush2.bf16.msra.mxu0 0
    %6127 = vmatprep.subr.bf16.mxu0 0
    %6128 = vmatpush2.bf16.msra.mxu0 0
    %6129 = vmatprep.subr.bf16.mxu0 0
    %6130 = vmatpush2.bf16.msra.mxu0 0
    %6131 = vmatprep.subr.bf16.mxu0 0
    %6132 = vmatpush2.bf16.msra.mxu0 0
    %6133 = vmatprep.subr.bf16.mxu0 0
    %6134 = vmatpush2.bf16.msra.mxu0 0
    %6135 = vmatprep.subr.bf16.mxu0 0
    %6136 = vmatpush2.bf16.msra.mxu0 0
    %6137 = vmatprep.mubr.bf16.mxu0 0
    %6138 = vmatmul.mubr.bf16.gmra.mxu0 %v5334
    %v6139 = vpop.f32.mrf.mxu0
    %v6140 = vadd.f32 %v6078, %v6139
    %v6141 = vpop.f32.mrf.mxu0
    %v6142 = vadd.f32 %v6082, %v6141
    %v6143 = vpop.f32.mrf.mxu0
    %v6144 = vadd.f32 %v6078, %v6143
    %v6145 = vpop.f32.mrf.mxu0
    %v6146 = vadd.f32 %v6082, %v6145
    %6147 = vdwg.mxu0
    %v6148 = vmax.f32 %v6140, 0.0
    %v6149 = vmax.f32 %v6142, 0.0
    %v6150 = vmax.f32 %v6144, 0.0
    %v6151 = vmax.f32 %v6146, 0.0
    %v6152 = vpack.c.bf16 %v6150, %v6148
    %v6153 = vpack.c.bf16 %v6151, %v6149
    %v6154 = vld [vmem:[%s5385 + $0x180] sm:$0xf]
    %v6155 = vld [vmem:[%s5385 + $0x184] sm:$0xf]
    %v6156 = vld [vmem:[%s5385 + $0x188] sm:$0xf]
    %v6157 = vld [vmem:[%s5385 + $0x18c] sm:$0xf]
    %v6158 = vld [vmem:[%s5385 + $0x190] sm:$0xf]
    %v6159 = vld [vmem:[%s5385 + $0x194] sm:$0xf]
    %v6160 = vld [vmem:[%s5385 + $0x198] sm:$0xf]
    %v6161 = vld [vmem:[%s5385 + $0x19c] sm:$0xf]
    %v6162 = vld [vmem:[%s5385 + $0x1a0] sm:$0xf]
    %v6163 = vld [vmem:[%s5385 + $0x1a4] sm:$0xf]
    %v6164 = vld [vmem:[%s5385 + $0x1a8] sm:$0xf]
    %v6165 = vld [vmem:[%s5385 + $0x1ac] sm:$0xf]
    %v6166 = vld [vmem:[%s5385 + $0x1b0] sm:$0xf]
    %v6167 = vld [vmem:[%s5385 + $0x1b4] sm:$0xf]
    %v6168 = vld [vmem:[%s5385 + $0x1b8] sm:$0xf]
    %v6169 = vld [vmem:[%s5385 + $0x1bc] sm:$0xf]
    %v6170 = vld [vmem:[%s5385 + $0x1c0] sm:$0xf]
    %v6171 = vld [vmem:[%s5385 + $0x1c4] sm:$0xf]
    %v6172 = vld [vmem:[%s5385 + $0x1c8] sm:$0xf]
    %v6173 = vld [vmem:[%s5385 + $0x1cc] sm:$0xf]
    %v6174 = vld [vmem:[%s5385 + $0x1d0] sm:$0xf]
    %v6175 = vld [vmem:[%s5385 + $0x1d4] sm:$0xf]
    %v6176 = vld [vmem:[%s5385 + $0x1d8] sm:$0xf]
    %v6177 = vld [vmem:[%s5385 + $0x1dc] sm:$0xf]
    %v6178 = vld [vmem:[%s5385 + $0x1e0] sm:$0xf]
    %v6179 = vld [vmem:[%s5385 + $0x1e4] sm:$0xf]
    %v6180 = vld [vmem:[%s5385 + $0x1e8] sm:$0xf]
    %v6181 = vld [vmem:[%s5385 + $0x1ec] sm:$0xf]
    %v6182 = vld [vmem:[%s5385 + $0x1f0] sm:$0xf]
    %v6183 = vld [vmem:[%s5385 + $0x1f4] sm:$0xf]
    %v6184 = vld [vmem:[%s5385 + $0x1f8] sm:$0xf]
    %v6185 = vld [vmem:[%s5385 + $0x1fc] sm:$0xf]
    %v6218 = vunpack.c.l.b16 %v6154
    %v6219 = vunpack.c.l.b16 %v6155
    %v6220 = vunpack.c.l.b16 %v6156
    %v6221 = vunpack.c.l.b16 %v6157
    %v6222 = vunpack.c.l.b16 %v6158
    %v6223 = vunpack.c.l.b16 %v6159
    %v6224 = vunpack.c.l.b16 %v6160
    %v6225 = vunpack.c.l.b16 %v6161
    %v6226 = vunpack.c.l.b16 %v6162
    %v6227 = vunpack.c.l.b16 %v6163
    %v6228 = vunpack.c.l.b16 %v6164
    %v6229 = vunpack.c.l.b16 %v6165
    %v6230 = vunpack.c.l.b16 %v6166
    %v6231 = vunpack.c.l.b16 %v6167
    %v6232 = vunpack.c.l.b16 %v6168
    %v6233 = vunpack.c.l.b16 %v6169
    %v6234 = vunpack.c.l.b16 %v6170
    %v6235 = vunpack.c.l.b16 %v6171
    %v6236 = vunpack.c.l.b16 %v6172
    %v6237 = vunpack.c.l.b16 %v6173
    %v6238 = vunpack.c.l.b16 %v6174
    %v6239 = vunpack.c.l.b16 %v6175
    %v6240 = vunpack.c.l.b16 %v6176
    %v6241 = vunpack.c.l.b16 %v6177
    %v6242 = vunpack.c.l.b16 %v6178
    %v6243 = vunpack.c.l.b16 %v6179
    %v6244 = vunpack.c.l.b16 %v6180
    %v6245 = vunpack.c.l.b16 %v6181
    %v6246 = vunpack.c.l.b16 %v6182
    %v6247 = vunpack.c.l.b16 %v6183
    %v6248 = vunpack.c.l.b16 %v6184
    %v6249 = vunpack.c.l.b16 %v6185
    %v6250 = vpack.c.b16 %v6219, %v6218
    %v6251 = vpack.c.b16 %v6221, %v6220
    %v6252 = vpack.c.b16 %v6223, %v6222
    %v6253 = vpack.c.b16 %v6225, %v6224
    %v6254 = vpack.c.b16 %v6227, %v6226
    %v6255 = vpack.c.b16 %v6229, %v6228
    %v6256 = vpack.c.b16 %v6231, %v6230
    %v6257 = vpack.c.b16 %v6233, %v6232
    %v6258 = vpack.c.b16 %v6235, %v6234
    %v6259 = vpack.c.b16 %v6237, %v6236
    %v6260 = vpack.c.b16 %v6239, %v6238
    %v6261 = vpack.c.b16 %v6241, %v6240
    %v6262 = vpack.c.b16 %v6243, %v6242
    %v6263 = vpack.c.b16 %v6245, %v6244
    %v6264 = vpack.c.b16 %v6247, %v6246
    %v6265 = vpack.c.b16 %v6249, %v6248
    %6282 = vmatprep.subr.bf16.mxu0 0
    %6283 = vmatpush1.bf16.msra.mxu0 %v6257
    %6284 = vmatprep.subr.bf16.mxu0 0
    %6285 = vmatpush1.bf16.msra.mxu0 %v6256
    %6286 = vmatprep.subr.bf16.mxu0 0
    %6287 = vmatpush1.bf16.msra.mxu0 %v6255
    %6288 = vmatprep.subr.bf16.mxu0 0
    %6289 = vmatpush1.bf16.msra.mxu0 %v6254
    %6290 = vmatprep.subr.bf16.mxu0 0
    %6291 = vmatpush1.bf16.msra.mxu0 %v6253
    %6292 = vmatprep.subr.bf16.mxu0 0
    %6293 = vmatpush1.bf16.msra.mxu0 %v6252
    %6294 = vmatprep.subr.bf16.mxu0 0
    %6295 = vmatpush1.bf16.msra.mxu0 %v6251
    %6296 = vmatprep.subr.bf16.mxu0 0
    %6297 = vmatpush1.bf16.msra.mxu0 %v6250
    %6298 = vmatprep.subr.bf16.mxu0 0
    %6299 = vmatpush2.bf16.msra.mxu0 %v6265
    %6300 = vmatprep.subr.bf16.mxu0 0
    %6301 = vmatpush2.bf16.msra.mxu0 %v6264
    %6302 = vmatprep.subr.bf16.mxu0 0
    %6303 = vmatpush2.bf16.msra.mxu0 %v6263
    %6304 = vmatprep.subr.bf16.mxu0 0
    %6305 = vmatpush2.bf16.msra.mxu0 %v6262
    %6306 = vmatprep.subr.bf16.mxu0 0
    %6307 = vmatpush2.bf16.msra.mxu0 %v6261
    %6308 = vmatprep.subr.bf16.mxu0 0
    %6309 = vmatpush2.bf16.msra.mxu0 %v6260
    %6310 = vmatprep.subr.bf16.mxu0 0
    %6311 = vmatpush2.bf16.msra.mxu0 %v6259
    %6312 = vmatprep.subr.bf16.mxu0 0
    %6313 = vmatpush2.bf16.msra.mxu0 %v6258
    %6314 = vmatprep.mubr.bf16.mxu0 %v6153
    %6315 = vmatmul.mubr.bf16.gmra.mxu0 %v6152
    %v6316 = vpop.f32.mrf.mxu0
    %v6317 = vadd.f32 0.0, %v6316
    %v6318 = vpop.f32.mrf.mxu0
    %v6319 = vpop.f32.mrf.mxu0
    %v6320 = vadd.f32 0.0, %v6319
    %v6321 = vpop.f32.mrf.mxu0
    %6322 = vdwg.mxu0
    %v6323 = vadd.f32 %v6067, %v6317
    %v6324 = vadd.f32 %v6068, %v6320
    %v6325 = vld [vmem:[%s5295 + $0x20] sm:$0xff]
    %v6326 = vld [vmem:[%s5295 + $0x60] sm:$0xff]
    %v6327 = vld [vmem:[%s5295 + $0xa0] sm:$0xff]
    %v6328 = vld [vmem:[%s5295 + $0xe0] sm:$0xff]
    %v6329 = vld [vmem:[%s5300 + $0x8] sm:$0x3]
    %v6331 = vlaneseq
    %v6332 = vshrl.u32 %v6331, 7
    %v6333 = vsub.s32 0, %v6332
    %v6334 = vrot.slane %v6329, %v6333
    %v6335 = vlaneseq
    %v6336 = vshrl.u32 %v6335, 7
    %v6337 = vsub.s32 1, %v6336
    %v6338 = vrot.slane %v6329, %v6337
    %v6345 = vunpack.c.l.b16 %v6325
    %v6346 = vunpack.c.h.b16 %v6325
    %v6347 = vunpack.c.l.b16 %v6326
    %v6348 = vunpack.c.h.b16 %v6326
    %v6349 = vunpack.c.l.b16 %v6327
    %v6350 = vunpack.c.h.b16 %v6327
    %v6351 = vunpack.c.l.b16 %v6328
    %v6352 = vunpack.c.h.b16 %v6328
    %v6353 = vpack.c.b16 %v6347, %v6345
    %v6354 = vpack.c.b16 %v6348, %v6346
    %v6355 = vpack.c.b16 %v6351, %v6349
    %v6356 = vpack.c.b16 %v6352, %v6350
    %6361 = vmatprep.subr.bf16.mxu0 0
    %6362 = vmatpush1.bf16.msra.mxu0 0
    %6363 = vmatprep.subr.bf16.mxu0 0
    %6364 = vmatpush1.bf16.msra.mxu0 0
    %6365 = vmatprep.subr.bf16.mxu0 0
    %6366 = vmatpush1.bf16.msra.mxu0 0
    %6367 = vmatprep.subr.bf16.mxu0 0
    %6368 = vmatpush1.bf16.msra.mxu0 0
    %6369 = vmatprep.subr.bf16.mxu0 0
    %6370 = vmatpush1.bf16.msra.mxu0 0
    %6371 = vmatprep.subr.bf16.mxu0 0
    %6372 = vmatpush1.bf16.msra.mxu0 0
    %6373 = vmatprep.subr.bf16.mxu0 %v6356
    %6374 = vmatpush1.bf16.msra.mxu0 %v6355
    %6375 = vmatprep.subr.bf16.mxu0 %v6354
    %6376 = vmatpush1.bf16.msra.mxu0 %v6353
    %6377 = vmatprep.subr.bf16.mxu0 0
    %6378 = vmatpush2.bf16.msra.mxu0 0
    %6379 = vmatprep.subr.bf16.mxu0 0
    %6380 = vmatpush2.bf16.msra.mxu0 0
    %6381 = vmatprep.subr.bf16.mxu0 0
    %6382 = vmatpush2.bf16.msra.mxu0 0
    %6383 = vmatprep.subr.bf16.mxu0 0
    %6384 = vmatpush2.bf16.msra.mxu0 0
    %6385 = vmatprep.subr.bf16.mxu0 0
    %6386 = vmatpush2.bf16.msra.mxu0 0
    %6387 = vmatprep.subr.bf16.mxu0 0
    %6388 = vmatpush2.bf16.msra.mxu0 0
    %6389 = vmatprep.subr.bf16.mxu0 0
    %6390 = vmatpush2.bf16.msra.mxu0 0
    %6391 = vmatprep.subr.bf16.mxu0 0
    %6392 = vmatpush2.bf16.msra.mxu0 0
    %6393 = vmatprep.mubr.bf16.mxu0 0
    %6394 = vmatmul.mubr.bf16.gmra.mxu0 %v5334
    %v6395 = vpop.f32.mrf.mxu0
    %v6396 = vadd.f32 %v6334, %v6395
    %v6397 = vpop.f32.mrf.mxu0
    %v6398 = vadd.f32 %v6338, %v6397
    %v6399 = vpop.f32.mrf.mxu0
    %v6400 = vadd.f32 %v6334, %v6399
    %v6401 = vpop.f32.mrf.mxu0
    %v6402 = vadd.f32 %v6338, %v6401
    %6403 = vdwg.mxu0
    %v6404 = vmax.f32 %v6396, 0.0
    %v6405 = vmax.f32 %v6398, 0.0
    %v6406 = vmax.f32 %v6400, 0.0
    %v6407 = vmax.f32 %v6402, 0.0
    %v6408 = vpack.c.bf16 %v6406, %v6404
    %v6409 = vpack.c.bf16 %v6407, %v6405
    %v6410 = vld [vmem:[%s5385 + $0x200] sm:$0xf]
    %v6411 = vld [vmem:[%s5385 + $0x204] sm:$0xf]
    %v6412 = vld [vmem:[%s5385 + $0x208] sm:$0xf]
    %v6413 = vld [vmem:[%s5385 + $0x20c] sm:$0xf]
    %v6414 = vld [vmem:[%s5385 + $0x210] sm:$0xf]
    %v6415 = vld [vmem:[%s5385 + $0x214] sm:$0xf]
    %v6416 = vld [vmem:[%s5385 + $0x218] sm:$0xf]
    %v6417 = vld [vmem:[%s5385 + $0x21c] sm:$0xf]
    %v6418 = vld [vmem:[%s5385 + $0x220] sm:$0xf]
    %v6419 = vld [vmem:[%s5385 + $0x224] sm:$0xf]
    %v6420 = vld [vmem:[%s5385 + $0x228] sm:$0xf]
    %v6421 = vld [vmem:[%s5385 + $0x22c] sm:$0xf]
    %v6422 = vld [vmem:[%s5385 + $0x230] sm:$0xf]
    %v6423 = vld [vmem:[%s5385 + $0x234] sm:$0xf]
    %v6424 = vld [vmem:[%s5385 + $0x238] sm:$0xf]
    %v6425 = vld [vmem:[%s5385 + $0x23c] sm:$0xf]
    %v6426 = vld [vmem:[%s5385 + $0x240] sm:$0xf]
    %v6427 = vld [vmem:[%s5385 + $0x244] sm:$0xf]
    %v6428 = vld [vmem:[%s5385 + $0x248] sm:$0xf]
    %v6429 = vld [vmem:[%s5385 + $0x24c] sm:$0xf]
    %v6430 = vld [vmem:[%s5385 + $0x250] sm:$0xf]
    %v6431 = vld [vmem:[%s5385 + $0x254] sm:$0xf]
    %v6432 = vld [vmem:[%s5385 + $0x258] sm:$0xf]
    %v6433 = vld [vmem:[%s5385 + $0x25c] sm:$0xf]
    %v6434 = vld [vmem:[%s5385 + $0x260] sm:$0xf]
    %v6435 = vld [vmem:[%s5385 + $0x264] sm:$0xf]
    %v6436 = vld [vmem:[%s5385 + $0x268] sm:$0xf]
    %v6437 = vld [vmem:[%s5385 + $0x26c] sm:$0xf]
    %v6438 = vld [vmem:[%s5385 + $0x270] sm:$0xf]
    %v6439 = vld [vmem:[%s5385 + $0x274] sm:$0xf]
    %v6440 = vld [vmem:[%s5385 + $0x278] sm:$0xf]
    %v6441 = vld [vmem:[%s5385 + $0x27c] sm:$0xf]
    %v6474 = vunpack.c.l.b16 %v6410
    %v6475 = vunpack.c.l.b16 %v6411
    %v6476 = vunpack.c.l.b16 %v6412
    %v6477 = vunpack.c.l.b16 %v6413
    %v6478 = vunpack.c.l.b16 %v6414
    %v6479 = vunpack.c.l.b16 %v6415
    %v6480 = vunpack.c.l.b16 %v6416
    %v6481 = vunpack.c.l.b16 %v6417
    %v6482 = vunpack.c.l.b16 %v6418
    %v6483 = vunpack.c.l.b16 %v6419
    %v6484 = vunpack.c.l.b16 %v6420
    %v6485 = vunpack.c.l.b16 %v6421
    %v6486 = vunpack.c.l.b16 %v6422
    %v6487 = vunpack.c.l.b16 %v6423
    %v6488 = vunpack.c.l.b16 %v6424
    %v6489 = vunpack.c.l.b16 %v6425
    %v6490 = vunpack.c.l.b16 %v6426
    %v6491 = vunpack.c.l.b16 %v6427
    %v6492 = vunpack.c.l.b16 %v6428
    %v6493 = vunpack.c.l.b16 %v6429
    %v6494 = vunpack.c.l.b16 %v6430
    %v6495 = vunpack.c.l.b16 %v6431
    %v6496 = vunpack.c.l.b16 %v6432
    %v6497 = vunpack.c.l.b16 %v6433
    %v6498 = vunpack.c.l.b16 %v6434
    %v6499 = vunpack.c.l.b16 %v6435
    %v6500 = vunpack.c.l.b16 %v6436
    %v6501 = vunpack.c.l.b16 %v6437
    %v6502 = vunpack.c.l.b16 %v6438
    %v6503 = vunpack.c.l.b16 %v6439
    %v6504 = vunpack.c.l.b16 %v6440
    %v6505 = vunpack.c.l.b16 %v6441
    %v6506 = vpack.c.b16 %v6475, %v6474
    %v6507 = vpack.c.b16 %v6477, %v6476
    %v6508 = vpack.c.b16 %v6479, %v6478
    %v6509 = vpack.c.b16 %v6481, %v6480
    %v6510 = vpack.c.b16 %v6483, %v6482
    %v6511 = vpack.c.b16 %v6485, %v6484
    %v6512 = vpack.c.b16 %v6487, %v6486
    %v6513 = vpack.c.b16 %v6489, %v6488
    %v6514 = vpack.c.b16 %v6491, %v6490
    %v6515 = vpack.c.b16 %v6493, %v6492
    %v6516 = vpack.c.b16 %v6495, %v6494
    %v6517 = vpack.c.b16 %v6497, %v6496
    %v6518 = vpack.c.b16 %v6499, %v6498
    %v6519 = vpack.c.b16 %v6501, %v6500
    %v6520 = vpack.c.b16 %v6503, %v6502
    %v6521 = vpack.c.b16 %v6505, %v6504
    %6538 = vmatprep.subr.bf16.mxu0 0
    %6539 = vmatpush1.bf16.msra.mxu0 %v6513
    %6540 = vmatprep.subr.bf16.mxu0 0
    %6541 = vmatpush1.bf16.msra.mxu0 %v6512
    %6542 = vmatprep.subr.bf16.mxu0 0
    %6543 = vmatpush1.bf16.msra.mxu0 %v6511
    %6544 = vmatprep.subr.bf16.mxu0 0
    %6545 = vmatpush1.bf16.msra.mxu0 %v6510
    %6546 = vmatprep.subr.bf16.mxu0 0
    %6547 = vmatpush1.bf16.msra.mxu0 %v6509
    %6548 = vmatprep.subr.bf16.mxu0 0
    %6549 = vmatpush1.bf16.msra.mxu0 %v6508
    %6550 = vmatprep.subr.bf16.mxu0 0
    %6551 = vmatpush1.bf16.msra.mxu0 %v6507
    %6552 = vmatprep.subr.bf16.mxu0 0
    %6553 = vmatpush1.bf16.msra.mxu0 %v6506
    %6554 = vmatprep.subr.bf16.mxu0 0
    %6555 = vmatpush2.bf16.msra.mxu0 %v6521
    %6556 = vmatprep.subr.bf16.mxu0 0
    %6557 = vmatpush2.bf16.msra.mxu0 %v6520
    %6558 = vmatprep.subr.bf16.mxu0 0
    %6559 = vmatpush2.bf16.msra.mxu0 %v6519
    %6560 = vmatprep.subr.bf16.mxu0 0
    %6561 = vmatpush2.bf16.msra.mxu0 %v6518
    %6562 = vmatprep.subr.bf16.mxu0 0
    %6563 = vmatpush2.bf16.msra.mxu0 %v6517
    %6564 = vmatprep.subr.bf16.mxu0 0
    %6565 = vmatpush2.bf16.msra.mxu0 %v6516
    %6566 = vmatprep.subr.bf16.mxu0 0
    %6567 = vmatpush2.bf16.msra.mxu0 %v6515
    %6568 = vmatprep.subr.bf16.mxu0 0
    %6569 = vmatpush2.bf16.msra.mxu0 %v6514
    %6570 = vmatprep.mubr.bf16.mxu0 %v6409
    %6571 = vmatmul.mubr.bf16.gmra.mxu0 %v6408
    %v6572 = vpop.f32.mrf.mxu0
    %v6573 = vadd.f32 0.0, %v6572
    %v6574 = vpop.f32.mrf.mxu0
    %v6575 = vpop.f32.mrf.mxu0
    %v6576 = vadd.f32 0.0, %v6575
    %v6577 = vpop.f32.mrf.mxu0
    %6578 = vdwg.mxu0
    %v6579 = vadd.f32 %v6323, %v6573
    %v6580 = vadd.f32 %v6324, %v6576
    %v6581 = vld [vmem:[%s5295 + $0x28] sm:$0xff]
    %v6582 = vld [vmem:[%s5295 + $0x68] sm:$0xff]
    %v6583 = vld [vmem:[%s5295 + $0xa8] sm:$0xff]
    %v6584 = vld [vmem:[%s5295 + $0xe8] sm:$0xff]
    %v6585 = vld [vmem:[%s5300 + $0xa] sm:$0x3]
    %v6587 = vlaneseq
    %v6588 = vshrl.u32 %v6587, 7
    %v6589 = vsub.s32 0, %v6588
    %v6590 = vrot.slane %v6585, %v6589
    %v6591 = vlaneseq
    %v6592 = vshrl.u32 %v6591, 7
    %v6593 = vsub.s32 1, %v6592
    %v6594 = vrot.slane %v6585, %v6593
    %v6601 = vunpack.c.l.b16 %v6581
    %v6602 = vunpack.c.h.b16 %v6581
    %v6603 = vunpack.c.l.b16 %v6582
    %v6604 = vunpack.c.h.b16 %v6582
    %v6605 = vunpack.c.l.b16 %v6583
    %v6606 = vunpack.c.h.b16 %v6583
    %v6607 = vunpack.c.l.b16 %v6584
    %v6608 = vunpack.c.h.b16 %v6584
    %v6609 = vpack.c.b16 %v6603, %v6601
    %v6610 = vpack.c.b16 %v6604, %v6602
    %v6611 = vpack.c.b16 %v6607, %v6605
    %v6612 = vpack.c.b16 %v6608, %v6606
    %6617 = vmatprep.subr.bf16.mxu0 0
    %6618 = vmatpush1.bf16.msra.mxu0 0
    %6619 = vmatprep.subr.bf16.mxu0 0
    %6620 = vmatpush1.bf16.msra.mxu0 0
    %6621 = vmatprep.subr.bf16.mxu0 0
    %6622 = vmatpush1.bf16.msra.mxu0 0
    %6623 = vmatprep.subr.bf16.mxu0 0
    %6624 = vmatpush1.bf16.msra.mxu0 0
    %6625 = vmatprep.subr.bf16.mxu0 0
    %6626 = vmatpush1.bf16.msra.mxu0 0
    %6627 = vmatprep.subr.bf16.mxu0 0
    %6628 = vmatpush1.bf16.msra.mxu0 0
    %6629 = vmatprep.subr.bf16.mxu0 %v6612
    %6630 = vmatpush1.bf16.msra.mxu0 %v6611
    %6631 = vmatprep.subr.bf16.mxu0 %v6610
    %6632 = vmatpush1.bf16.msra.mxu0 %v6609
    %6633 = vmatprep.subr.bf16.mxu0 0
    %6634 = vmatpush2.bf16.msra.mxu0 0
    %6635 = vmatprep.subr.bf16.mxu0 0
    %6636 = vmatpush2.bf16.msra.mxu0 0
    %6637 = vmatprep.subr.bf16.mxu0 0
    %6638 = vmatpush2.bf16.msra.mxu0 0
    %6639 = vmatprep.subr.bf16.mxu0 0
    %6640 = vmatpush2.bf16.msra.mxu0 0
    %6641 = vmatprep.subr.bf16.mxu0 0
    %6642 = vmatpush2.bf16.msra.mxu0 0
    %6643 = vmatprep.subr.bf16.mxu0 0
    %6644 = vmatpush2.bf16.msra.mxu0 0
    %6645 = vmatprep.subr.bf16.mxu0 0
    %6646 = vmatpush2.bf16.msra.mxu0 0
    %6647 = vmatprep.subr.bf16.mxu0 0
    %6648 = vmatpush2.bf16.msra.mxu0 0
    %6649 = vmatprep.mubr.bf16.mxu0 0
    %6650 = vmatmul.mubr.bf16.gmra.mxu0 %v5334
    %v6651 = vpop.f32.mrf.mxu0
    %v6652 = vadd.f32 %v6590, %v6651
    %v6653 = vpop.f32.mrf.mxu0
    %v6654 = vadd.f32 %v6594, %v6653
    %v6655 = vpop.f32.mrf.mxu0
    %v6656 = vadd.f32 %v6590, %v6655
    %v6657 = vpop.f32.mrf.mxu0
    %v6658 = vadd.f32 %v6594, %v6657
    %6659 = vdwg.mxu0
    %v6660 = vmax.f32 %v6652, 0.0
    %v6661 = vmax.f32 %v6654, 0.0
    %v6662 = vmax.f32 %v6656, 0.0
    %v6663 = vmax.f32 %v6658, 0.0
    %v6664 = vpack.c.bf16 %v6662, %v6660
    %v6665 = vpack.c.bf16 %v6663, %v6661
    %v6666 = vld [vmem:[%s5385 + $0x280] sm:$0xf]
    %v6667 = vld [vmem:[%s5385 + $0x284] sm:$0xf]
    %v6668 = vld [vmem:[%s5385 + $0x288] sm:$0xf]
    %v6669 = vld [vmem:[%s5385 + $0x28c] sm:$0xf]
    %v6670 = vld [vmem:[%s5385 + $0x290] sm:$0xf]
    %v6671 = vld [vmem:[%s5385 + $0x294] sm:$0xf]
    %v6672 = vld [vmem:[%s5385 + $0x298] sm:$0xf]
    %v6673 = vld [vmem:[%s5385 + $0x29c] sm:$0xf]
    %v6674 = vld [vmem:[%s5385 + $0x2a0] sm:$0xf]
    %v6675 = vld [vmem:[%s5385 + $0x2a4] sm:$0xf]
    %v6676 = vld [vmem:[%s5385 + $0x2a8] sm:$0xf]
    %v6677 = vld [vmem:[%s5385 + $0x2ac] sm:$0xf]
    %v6678 = vld [vmem:[%s5385 + $0x2b0] sm:$0xf]
    %v6679 = vld [vmem:[%s5385 + $0x2b4] sm:$0xf]
    %v6680 = vld [vmem:[%s5385 + $0x2b8] sm:$0xf]
    %v6681 = vld [vmem:[%s5385 + $0x2bc] sm:$0xf]
    %v6682 = vld [vmem:[%s5385 + $0x2c0] sm:$0xf]
    %v6683 = vld [vmem:[%s5385 + $0x2c4] sm:$0xf]
    %v6684 = vld [vmem:[%s5385 + $0x2c8] sm:$0xf]
    %v6685 = vld [vmem:[%s5385 + $0x2cc] sm:$0xf]
    %v6686 = vld [vmem:[%s5385 + $0x2d0] sm:$0xf]
    %v6687 = vld [vmem:[%s5385 + $0x2d4] sm:$0xf]
    %v6688 = vld [vmem:[%s5385 + $0x2d8] sm:$0xf]
    %v6689 = vld [vmem:[%s5385 + $0x2dc] sm:$0xf]
    %v6690 = vld [vmem:[%s5385 + $0x2e0] sm:$0xf]
    %v6691 = vld [vmem:[%s5385 + $0x2e4] sm:$0xf]
    %v6692 = vld [vmem:[%s5385 + $0x2e8] sm:$0xf]
    %v6693 = vld [vmem:[%s5385 + $0x2ec] sm:$0xf]
    %v6694 = vld [vmem:[%s5385 + $0x2f0] sm:$0xf]
    %v6695 = vld [vmem:[%s5385 + $0x2f4] sm:$0xf]
    %v6696 = vld [vmem:[%s5385 + $0x2f8] sm:$0xf]
    %v6697 = vld [vmem:[%s5385 + $0x2fc] sm:$0xf]
    %v6730 = vunpack.c.l.b16 %v6666
    %v6731 = vunpack.c.l.b16 %v6667
    %v6732 = vunpack.c.l.b16 %v6668
    %v6733 = vunpack.c.l.b16 %v6669
    %v6734 = vunpack.c.l.b16 %v6670
    %v6735 = vunpack.c.l.b16 %v6671
    %v6736 = vunpack.c.l.b16 %v6672
    %v6737 = vunpack.c.l.b16 %v6673
    %v6738 = vunpack.c.l.b16 %v6674
    %v6739 = vunpack.c.l.b16 %v6675
    %v6740 = vunpack.c.l.b16 %v6676
    %v6741 = vunpack.c.l.b16 %v6677
    %v6742 = vunpack.c.l.b16 %v6678
    %v6743 = vunpack.c.l.b16 %v6679
    %v6744 = vunpack.c.l.b16 %v6680
    %v6745 = vunpack.c.l.b16 %v6681
    %v6746 = vunpack.c.l.b16 %v6682
    %v6747 = vunpack.c.l.b16 %v6683
    %v6748 = vunpack.c.l.b16 %v6684
    %v6749 = vunpack.c.l.b16 %v6685
    %v6750 = vunpack.c.l.b16 %v6686
    %v6751 = vunpack.c.l.b16 %v6687
    %v6752 = vunpack.c.l.b16 %v6688
    %v6753 = vunpack.c.l.b16 %v6689
    %v6754 = vunpack.c.l.b16 %v6690
    %v6755 = vunpack.c.l.b16 %v6691
    %v6756 = vunpack.c.l.b16 %v6692
    %v6757 = vunpack.c.l.b16 %v6693
    %v6758 = vunpack.c.l.b16 %v6694
    %v6759 = vunpack.c.l.b16 %v6695
    %v6760 = vunpack.c.l.b16 %v6696
    %v6761 = vunpack.c.l.b16 %v6697
    %v6762 = vpack.c.b16 %v6731, %v6730
    %v6763 = vpack.c.b16 %v6733, %v6732
    %v6764 = vpack.c.b16 %v6735, %v6734
    %v6765 = vpack.c.b16 %v6737, %v6736
    %v6766 = vpack.c.b16 %v6739, %v6738
    %v6767 = vpack.c.b16 %v6741, %v6740
    %v6768 = vpack.c.b16 %v6743, %v6742
    %v6769 = vpack.c.b16 %v6745, %v6744
    %v6770 = vpack.c.b16 %v6747, %v6746
    %v6771 = vpack.c.b16 %v6749, %v6748
    %v6772 = vpack.c.b16 %v6751, %v6750
    %v6773 = vpack.c.b16 %v6753, %v6752
    %v6774 = vpack.c.b16 %v6755, %v6754
    %v6775 = vpack.c.b16 %v6757, %v6756
    %v6776 = vpack.c.b16 %v6759, %v6758
    %v6777 = vpack.c.b16 %v6761, %v6760
    %6794 = vmatprep.subr.bf16.mxu0 0
    %6795 = vmatpush1.bf16.msra.mxu0 %v6769
    %6796 = vmatprep.subr.bf16.mxu0 0
    %6797 = vmatpush1.bf16.msra.mxu0 %v6768
    %6798 = vmatprep.subr.bf16.mxu0 0
    %6799 = vmatpush1.bf16.msra.mxu0 %v6767
    %6800 = vmatprep.subr.bf16.mxu0 0
    %6801 = vmatpush1.bf16.msra.mxu0 %v6766
    %6802 = vmatprep.subr.bf16.mxu0 0
    %6803 = vmatpush1.bf16.msra.mxu0 %v6765
    %6804 = vmatprep.subr.bf16.mxu0 0
    %6805 = vmatpush1.bf16.msra.mxu0 %v6764
    %6806 = vmatprep.subr.bf16.mxu0 0
    %6807 = vmatpush1.bf16.msra.mxu0 %v6763
    %6808 = vmatprep.subr.bf16.mxu0 0
    %6809 = vmatpush1.bf16.msra.mxu0 %v6762
    %6810 = vmatprep.subr.bf16.mxu0 0
    %6811 = vmatpush2.bf16.msra.mxu0 %v6777
    %6812 = vmatprep.subr.bf16.mxu0 0
    %6813 = vmatpush2.bf16.msra.mxu0 %v6776
    %6814 = vmatprep.subr.bf16.mxu0 0
    %6815 = vmatpush2.bf16.msra.mxu0 %v6775
    %6816 = vmatprep.subr.bf16.mxu0 0
    %6817 = vmatpush2.bf16.msra.mxu0 %v6774
    %6818 = vmatprep.subr.bf16.mxu0 0
    %6819 = vmatpush2.bf16.msra.mxu0 %v6773
    %6820 = vmatprep.subr.bf16.mxu0 0
    %6821 = vmatpush2.bf16.msra.mxu0 %v6772
    %6822 = vmatprep.subr.bf16.mxu0 0
    %6823 = vmatpush2.bf16.msra.mxu0 %v6771
    %6824 = vmatprep.subr.bf16.mxu0 0
    %6825 = vmatpush2.bf16.msra.mxu0 %v6770
    %6826 = vmatprep.mubr.bf16.mxu0 %v6665
    %6827 = vmatmul.mubr.bf16.gmra.mxu0 %v6664
    %v6828 = vpop.f32.mrf.mxu0
    %v6829 = vadd.f32 0.0, %v6828
    %v6830 = vpop.f32.mrf.mxu0
    %v6831 = vpop.f32.mrf.mxu0
    %v6832 = vadd.f32 0.0, %v6831
    %v6833 = vpop.f32.mrf.mxu0
    %6834 = vdwg.mxu0
    %v6835 = vadd.f32 %v6579, %v6829
    %v6836 = vadd.f32 %v6580, %v6832
    %v6837 = vld [vmem:[%s5295 + $0x30] sm:$0xff]
    %v6838 = vld [vmem:[%s5295 + $0x70] sm:$0xff]
    %v6839 = vld [vmem:[%s5295 + $0xb0] sm:$0xff]
    %v6840 = vld [vmem:[%s5295 + $0xf0] sm:$0xff]
    %v6841 = vld [vmem:[%s5300 + $0xc] sm:$0x3]
    %v6843 = vlaneseq
    %v6844 = vshrl.u32 %v6843, 7
    %v6845 = vsub.s32 0, %v6844
    %v6846 = vrot.slane %v6841, %v6845
    %v6847 = vlaneseq
    %v6848 = vshrl.u32 %v6847, 7
    %v6849 = vsub.s32 1, %v6848
    %v6850 = vrot.slane %v6841, %v6849
    %v6857 = vunpack.c.l.b16 %v6837
    %v6858 = vunpack.c.h.b16 %v6837
    %v6859 = vunpack.c.l.b16 %v6838
    %v6860 = vunpack.c.h.b16 %v6838
    %v6861 = vunpack.c.l.b16 %v6839
    %v6862 = vunpack.c.h.b16 %v6839
    %v6863 = vunpack.c.l.b16 %v6840
    %v6864 = vunpack.c.h.b16 %v6840
    %v6865 = vpack.c.b16 %v6859, %v6857
    %v6866 = vpack.c.b16 %v6860, %v6858
    %v6867 = vpack.c.b16 %v6863, %v6861
    %v6868 = vpack.c.b16 %v6864, %v6862
    %6873 = vmatprep.subr.bf16.mxu0 0
    %6874 = vmatpush1.bf16.msra.mxu0 0
    %6875 = vmatprep.subr.bf16.mxu0 0
    %6876 = vmatpush1.bf16.msra.mxu0 0
    %6877 = vmatprep.subr.bf16.mxu0 0
    %6878 = vmatpush1.bf16.msra.mxu0 0
    %6879 = vmatprep.subr.bf16.mxu0 0
    %6880 = vmatpush1.bf16.msra.mxu0 0
    %6881 = vmatprep.subr.bf16.mxu0 0
    %6882 = vmatpush1.bf16.msra.mxu0 0
    %6883 = vmatprep.subr.bf16.mxu0 0
    %6884 = vmatpush1.bf16.msra.mxu0 0
    %6885 = vmatprep.subr.bf16.mxu0 %v6868
    %6886 = vmatpush1.bf16.msra.mxu0 %v6867
    %6887 = vmatprep.subr.bf16.mxu0 %v6866
    %6888 = vmatpush1.bf16.msra.mxu0 %v6865
    %6889 = vmatprep.subr.bf16.mxu0 0
    %6890 = vmatpush2.bf16.msra.mxu0 0
    %6891 = vmatprep.subr.bf16.mxu0 0
    %6892 = vmatpush2.bf16.msra.mxu0 0
    %6893 = vmatprep.subr.bf16.mxu0 0
    %6894 = vmatpush2.bf16.msra.mxu0 0
    %6895 = vmatprep.subr.bf16.mxu0 0
    %6896 = vmatpush2.bf16.msra.mxu0 0
    %6897 = vmatprep.subr.bf16.mxu0 0
    %6898 = vmatpush2.bf16.msra.mxu0 0
    %6899 = vmatprep.subr.bf16.mxu0 0
    %6900 = vmatpush2.bf16.msra.mxu0 0
    %6901 = vmatprep.subr.bf16.mxu0 0
    %6902 = vmatpush2.bf16.msra.mxu0 0
    %6903 = vmatprep.subr.bf16.mxu0 0
    %6904 = vmatpush2.bf16.msra.mxu0 0
    %6905 = vmatprep.mubr.bf16.mxu0 0
    %6906 = vmatmul.mubr.bf16.gmra.mxu0 %v5334
    %v6907 = vpop.f32.mrf.mxu0
    %v6908 = vadd.f32 %v6846, %v6907
    %v6909 = vpop.f32.mrf.mxu0
    %v6910 = vadd.f32 %v6850, %v6909
    %v6911 = vpop.f32.mrf.mxu0
    %v6912 = vadd.f32 %v6846, %v6911
    %v6913 = vpop.f32.mrf.mxu0
    %v6914 = vadd.f32 %v6850, %v6913
    %6915 = vdwg.mxu0
    %v6916 = vmax.f32 %v6908, 0.0
    %v6917 = vmax.f32 %v6910, 0.0
    %v6918 = vmax.f32 %v6912, 0.0
    %v6919 = vmax.f32 %v6914, 0.0
    %v6920 = vpack.c.bf16 %v6918, %v6916
    %v6921 = vpack.c.bf16 %v6919, %v6917
    %v6922 = vld [vmem:[%s5385 + $0x300] sm:$0xf]
    %v6923 = vld [vmem:[%s5385 + $0x304] sm:$0xf]
    %v6924 = vld [vmem:[%s5385 + $0x308] sm:$0xf]
    %v6925 = vld [vmem:[%s5385 + $0x30c] sm:$0xf]
    %v6926 = vld [vmem:[%s5385 + $0x310] sm:$0xf]
    %v6927 = vld [vmem:[%s5385 + $0x314] sm:$0xf]
    %v6928 = vld [vmem:[%s5385 + $0x318] sm:$0xf]
    %v6929 = vld [vmem:[%s5385 + $0x31c] sm:$0xf]
    %v6930 = vld [vmem:[%s5385 + $0x320] sm:$0xf]
    %v6931 = vld [vmem:[%s5385 + $0x324] sm:$0xf]
    %v6932 = vld [vmem:[%s5385 + $0x328] sm:$0xf]
    %v6933 = vld [vmem:[%s5385 + $0x32c] sm:$0xf]
    %v6934 = vld [vmem:[%s5385 + $0x330] sm:$0xf]
    %v6935 = vld [vmem:[%s5385 + $0x334] sm:$0xf]
    %v6936 = vld [vmem:[%s5385 + $0x338] sm:$0xf]
    %v6937 = vld [vmem:[%s5385 + $0x33c] sm:$0xf]
    %v6938 = vld [vmem:[%s5385 + $0x340] sm:$0xf]
    %v6939 = vld [vmem:[%s5385 + $0x344] sm:$0xf]
    %v6940 = vld [vmem:[%s5385 + $0x348] sm:$0xf]
    %v6941 = vld [vmem:[%s5385 + $0x34c] sm:$0xf]
    %v6942 = vld [vmem:[%s5385 + $0x350] sm:$0xf]
    %v6943 = vld [vmem:[%s5385 + $0x354] sm:$0xf]
    %v6944 = vld [vmem:[%s5385 + $0x358] sm:$0xf]
    %v6945 = vld [vmem:[%s5385 + $0x35c] sm:$0xf]
    %v6946 = vld [vmem:[%s5385 + $0x360] sm:$0xf]
    %v6947 = vld [vmem:[%s5385 + $0x364] sm:$0xf]
    %v6948 = vld [vmem:[%s5385 + $0x368] sm:$0xf]
    %v6949 = vld [vmem:[%s5385 + $0x36c] sm:$0xf]
    %v6950 = vld [vmem:[%s5385 + $0x370] sm:$0xf]
    %v6951 = vld [vmem:[%s5385 + $0x374] sm:$0xf]
    %v6952 = vld [vmem:[%s5385 + $0x378] sm:$0xf]
    %v6953 = vld [vmem:[%s5385 + $0x37c] sm:$0xf]
    %v6986 = vunpack.c.l.b16 %v6922
    %v6987 = vunpack.c.l.b16 %v6923
    %v6988 = vunpack.c.l.b16 %v6924
    %v6989 = vunpack.c.l.b16 %v6925
    %v6990 = vunpack.c.l.b16 %v6926
    %v6991 = vunpack.c.l.b16 %v6927
    %v6992 = vunpack.c.l.b16 %v6928
    %v6993 = vunpack.c.l.b16 %v6929
    %v6994 = vunpack.c.l.b16 %v6930
    %v6995 = vunpack.c.l.b16 %v6931
    %v6996 = vunpack.c.l.b16 %v6932
    %v6997 = vunpack.c.l.b16 %v6933
    %v6998 = vunpack.c.l.b16 %v6934
    %v6999 = vunpack.c.l.b16 %v6935
    %v7000 = vunpack.c.l.b16 %v6936
    %v7001 = vunpack.c.l.b16 %v6937
    %v7002 = vunpack.c.l.b16 %v6938
    %v7003 = vunpack.c.l.b16 %v6939
    %v7004 = vunpack.c.l.b16 %v6940
    %v7005 = vunpack.c.l.b16 %v6941
    %v7006 = vunpack.c.l.b16 %v6942
    %v7007 = vunpack.c.l.b16 %v6943
    %v7008 = vunpack.c.l.b16 %v6944
    %v7009 = vunpack.c.l.b16 %v6945
    %v7010 = vunpack.c.l.b16 %v6946
    %v7011 = vunpack.c.l.b16 %v6947
    %v7012 = vunpack.c.l.b16 %v6948
    %v7013 = vunpack.c.l.b16 %v6949
    %v7014 = vunpack.c.l.b16 %v6950
    %v7015 = vunpack.c.l.b16 %v6951
    %v7016 = vunpack.c.l.b16 %v6952
    %v7017 = vunpack.c.l.b16 %v6953
    %v7018 = vpack.c.b16 %v6987, %v6986
    %v7019 = vpack.c.b16 %v6989, %v6988
    %v7020 = vpack.c.b16 %v6991, %v6990
    %v7021 = vpack.c.b16 %v6993, %v6992
    %v7022 = vpack.c.b16 %v6995, %v6994
    %v7023 = vpack.c.b16 %v6997, %v6996
    %v7024 = vpack.c.b16 %v6999, %v6998
    %v7025 = vpack.c.b16 %v7001, %v7000
    %v7026 = vpack.c.b16 %v7003, %v7002
    %v7027 = vpack.c.b16 %v7005, %v7004
    %v7028 = vpack.c.b16 %v7007, %v7006
    %v7029 = vpack.c.b16 %v7009, %v7008
    %v7030 = vpack.c.b16 %v7011, %v7010
    %v7031 = vpack.c.b16 %v7013, %v7012
    %v7032 = vpack.c.b16 %v7015, %v7014
    %v7033 = vpack.c.b16 %v7017, %v7016
    %7050 = vmatprep.subr.bf16.mxu0 0
    %7051 = vmatpush1.bf16.msra.mxu0 %v7025
    %7052 = vmatprep.subr.bf16.mxu0 0
    %7053 = vmatpush1.bf16.msra.mxu0 %v7024
    %7054 = vmatprep.subr.bf16.mxu0 0
    %7055 = vmatpush1.bf16.msra.mxu0 %v7023
    %7056 = vmatprep.subr.bf16.mxu0 0
    %7057 = vmatpush1.bf16.msra.mxu0 %v7022
    %7058 = vmatprep.subr.bf16.mxu0 0
    %7059 = vmatpush1.bf16.msra.mxu0 %v7021
    %7060 = vmatprep.subr.bf16.mxu0 0
    %7061 = vmatpush1.bf16.msra.mxu0 %v7020
    %7062 = vmatprep.subr.bf16.mxu0 0
    %7063 = vmatpush1.bf16.msra.mxu0 %v7019
    %7064 = vmatprep.subr.bf16.mxu0 0
    %7065 = vmatpush1.bf16.msra.mxu0 %v7018
    %7066 = vmatprep.subr.bf16.mxu0 0
    %7067 = vmatpush2.bf16.msra.mxu0 %v7033
    %7068 = vmatprep.subr.bf16.mxu0 0
    %7069 = vmatpush2.bf16.msra.mxu0 %v7032
    %7070 = vmatprep.subr.bf16.mxu0 0
    %7071 = vmatpush2.bf16.msra.mxu0 %v7031
    %7072 = vmatprep.subr.bf16.mxu0 0
    %7073 = vmatpush2.bf16.msra.mxu0 %v7030
    %7074 = vmatprep.subr.bf16.mxu0 0
    %7075 = vmatpush2.bf16.msra.mxu0 %v7029
    %7076 = vmatprep.subr.bf16.mxu0 0
    %7077 = vmatpush2.bf16.msra.mxu0 %v7028
    %7078 = vmatprep.subr.bf16.mxu0 0
    %7079 = vmatpush2.bf16.msra.mxu0 %v7027
    %7080 = vmatprep.subr.bf16.mxu0 0
    %7081 = vmatpush2.bf16.msra.mxu0 %v7026
    %7082 = vmatprep.mubr.bf16.mxu0 %v6921
    %7083 = vmatmul.mubr.bf16.gmra.mxu0 %v6920
    %v7084 = vpop.f32.mrf.mxu0
    %v7085 = vadd.f32 0.0, %v7084
    %v7086 = vpop.f32.mrf.mxu0
    %v7087 = vpop.f32.mrf.mxu0
    %v7088 = vadd.f32 0.0, %v7087
    %v7089 = vpop.f32.mrf.mxu0
    %7090 = vdwg.mxu0
    %v7091 = vadd.f32 %v6835, %v7085
    %v7092 = vadd.f32 %v6836, %v7088
    %v7093 = vld [vmem:[%s5295 + $0x38] sm:$0xff]
    %v7094 = vld [vmem:[%s5295 + $0x78] sm:$0xff]
    %v7095 = vld [vmem:[%s5295 + $0xb8] sm:$0xff]
    %v7096 = vld [vmem:[%s5295 + $0xf8] sm:$0xff]
    %v7097 = vld [vmem:[%s5300 + $0xe] sm:$0x3]
    %v7099 = vlaneseq
    %v7100 = vshrl.u32 %v7099, 7
    %v7101 = vsub.s32 0, %v7100
    %v7102 = vrot.slane %v7097, %v7101
    %v7103 = vlaneseq
    %v7104 = vshrl.u32 %v7103, 7
    %v7105 = vsub.s32 1, %v7104
    %v7106 = vrot.slane %v7097, %v7105
    %v7113 = vunpack.c.l.b16 %v7093
    %v7114 = vunpack.c.h.b16 %v7093
    %v7115 = vunpack.c.l.b16 %v7094
    %v7116 = vunpack.c.h.b16 %v7094
    %v7117 = vunpack.c.l.b16 %v7095
    %v7118 = vunpack.c.h.b16 %v7095
    %v7119 = vunpack.c.l.b16 %v7096
    %v7120 = vunpack.c.h.b16 %v7096
    %v7121 = vpack.c.b16 %v7115, %v7113
    %v7122 = vpack.c.b16 %v7116, %v7114
    %v7123 = vpack.c.b16 %v7119, %v7117
    %v7124 = vpack.c.b16 %v7120, %v7118
    %7129 = vmatprep.subr.bf16.mxu0 0
    %7130 = vmatpush1.bf16.msra.mxu0 0
    %7131 = vmatprep.subr.bf16.mxu0 0
    %7132 = vmatpush1.bf16.msra.mxu0 0
    %7133 = vmatprep.subr.bf16.mxu0 0
    %7134 = vmatpush1.bf16.msra.mxu0 0
    %7135 = vmatprep.subr.bf16.mxu0 0
    %7136 = vmatpush1.bf16.msra.mxu0 0
    %7137 = vmatprep.subr.bf16.mxu0 0
    %7138 = vmatpush1.bf16.msra.mxu0 0
    %7139 = vmatprep.subr.bf16.mxu0 0
    %7140 = vmatpush1.bf16.msra.mxu0 0
    %7141 = vmatprep.subr.bf16.mxu0 %v7124
    %7142 = vmatpush1.bf16.msra.mxu0 %v7123
    %7143 = vmatprep.subr.bf16.mxu0 %v7122
    %7144 = vmatpush1.bf16.msra.mxu0 %v7121
    %7145 = vmatprep.subr.bf16.mxu0 0
    %7146 = vmatpush2.bf16.msra.mxu0 0
    %7147 = vmatprep.subr.bf16.mxu0 0
    %7148 = vmatpush2.bf16.msra.mxu0 0
    %7149 = vmatprep.subr.bf16.mxu0 0
    %7150 = vmatpush2.bf16.msra.mxu0 0
    %7151 = vmatprep.subr.bf16.mxu0 0
    %7152 = vmatpush2.bf16.msra.mxu0 0
    %7153 = vmatprep.subr.bf16.mxu0 0
    %7154 = vmatpush2.bf16.msra.mxu0 0
    %7155 = vmatprep.subr.bf16.mxu0 0
    %7156 = vmatpush2.bf16.msra.mxu0 0
    %7157 = vmatprep.subr.bf16.mxu0 0
    %7158 = vmatpush2.bf16.msra.mxu0 0
    %7159 = vmatprep.subr.bf16.mxu0 0
    %7160 = vmatpush2.bf16.msra.mxu0 0
    %7161 = vmatprep.mubr.bf16.mxu0 0
    %7162 = vmatmul.mubr.bf16.gmra.mxu0 %v5334
    %v7163 = vpop.f32.mrf.mxu0
    %v7164 = vadd.f32 %v7102, %v7163
    %v7165 = vpop.f32.mrf.mxu0
    %v7166 = vadd.f32 %v7106, %v7165
    %v7167 = vpop.f32.mrf.mxu0
    %v7168 = vadd.f32 %v7102, %v7167
    %v7169 = vpop.f32.mrf.mxu0
    %v7170 = vadd.f32 %v7106, %v7169
    %7171 = vdwg.mxu0
    %v7172 = vmax.f32 %v7164, 0.0
    %v7173 = vmax.f32 %v7166, 0.0
    %v7174 = vmax.f32 %v7168, 0.0
    %v7175 = vmax.f32 %v7170, 0.0
    %v7176 = vpack.c.bf16 %v7174, %v7172
    %v7177 = vpack.c.bf16 %v7175, %v7173
    %v7178 = vld [vmem:[%s5385 + $0x380] sm:$0xf]
    %v7179 = vld [vmem:[%s5385 + $0x384] sm:$0xf]
    %v7180 = vld [vmem:[%s5385 + $0x388] sm:$0xf]
    %v7181 = vld [vmem:[%s5385 + $0x38c] sm:$0xf]
    %v7182 = vld [vmem:[%s5385 + $0x390] sm:$0xf]
    %v7183 = vld [vmem:[%s5385 + $0x394] sm:$0xf]
    %v7184 = vld [vmem:[%s5385 + $0x398] sm:$0xf]
    %v7185 = vld [vmem:[%s5385 + $0x39c] sm:$0xf]
    %v7186 = vld [vmem:[%s5385 + $0x3a0] sm:$0xf]
    %v7187 = vld [vmem:[%s5385 + $0x3a4] sm:$0xf]
    %v7188 = vld [vmem:[%s5385 + $0x3a8] sm:$0xf]
    %v7189 = vld [vmem:[%s5385 + $0x3ac] sm:$0xf]
    %v7190 = vld [vmem:[%s5385 + $0x3b0] sm:$0xf]
    %v7191 = vld [vmem:[%s5385 + $0x3b4] sm:$0xf]
    %v7192 = vld [vmem:[%s5385 + $0x3b8] sm:$0xf]
    %v7193 = vld [vmem:[%s5385 + $0x3bc] sm:$0xf]
    %v7194 = vld [vmem:[%s5385 + $0x3c0] sm:$0xf]
    %v7195 = vld [vmem:[%s5385 + $0x3c4] sm:$0xf]
    %v7196 = vld [vmem:[%s5385 + $0x3c8] sm:$0xf]
    %v7197 = vld [vmem:[%s5385 + $0x3cc] sm:$0xf]
    %v7198 = vld [vmem:[%s5385 + $0x3d0] sm:$0xf]
    %v7199 = vld [vmem:[%s5385 + $0x3d4] sm:$0xf]
    %v7200 = vld [vmem:[%s5385 + $0x3d8] sm:$0xf]
    %v7201 = vld [vmem:[%s5385 + $0x3dc] sm:$0xf]
    %v7202 = vld [vmem:[%s5385 + $0x3e0] sm:$0xf]
    %v7203 = vld [vmem:[%s5385 + $0x3e4] sm:$0xf]
    %v7204 = vld [vmem:[%s5385 + $0x3e8] sm:$0xf]
    %v7205 = vld [vmem:[%s5385 + $0x3ec] sm:$0xf]
    %v7206 = vld [vmem:[%s5385 + $0x3f0] sm:$0xf]
    %v7207 = vld [vmem:[%s5385 + $0x3f4] sm:$0xf]
    %v7208 = vld [vmem:[%s5385 + $0x3f8] sm:$0xf]
    %v7209 = vld [vmem:[%s5385 + $0x3fc] sm:$0xf]
    %v7242 = vunpack.c.l.b16 %v7178
    %v7243 = vunpack.c.l.b16 %v7179
    %v7244 = vunpack.c.l.b16 %v7180
    %v7245 = vunpack.c.l.b16 %v7181
    %v7246 = vunpack.c.l.b16 %v7182
    %v7247 = vunpack.c.l.b16 %v7183
    %v7248 = vunpack.c.l.b16 %v7184
    %v7249 = vunpack.c.l.b16 %v7185
    %v7250 = vunpack.c.l.b16 %v7186
    %v7251 = vunpack.c.l.b16 %v7187
    %v7252 = vunpack.c.l.b16 %v7188
    %v7253 = vunpack.c.l.b16 %v7189
    %v7254 = vunpack.c.l.b16 %v7190
    %v7255 = vunpack.c.l.b16 %v7191
    %v7256 = vunpack.c.l.b16 %v7192
    %v7257 = vunpack.c.l.b16 %v7193
    %v7258 = vunpack.c.l.b16 %v7194
    %v7259 = vunpack.c.l.b16 %v7195
    %v7260 = vunpack.c.l.b16 %v7196
    %v7261 = vunpack.c.l.b16 %v7197
    %v7262 = vunpack.c.l.b16 %v7198
    %v7263 = vunpack.c.l.b16 %v7199
    %v7264 = vunpack.c.l.b16 %v7200
    %v7265 = vunpack.c.l.b16 %v7201
    %v7266 = vunpack.c.l.b16 %v7202
    %v7267 = vunpack.c.l.b16 %v7203
    %v7268 = vunpack.c.l.b16 %v7204
    %v7269 = vunpack.c.l.b16 %v7205
    %v7270 = vunpack.c.l.b16 %v7206
    %v7271 = vunpack.c.l.b16 %v7207
    %v7272 = vunpack.c.l.b16 %v7208
    %v7273 = vunpack.c.l.b16 %v7209
    %v7274 = vpack.c.b16 %v7243, %v7242
    %v7275 = vpack.c.b16 %v7245, %v7244
    %v7276 = vpack.c.b16 %v7247, %v7246
    %v7277 = vpack.c.b16 %v7249, %v7248
    %v7278 = vpack.c.b16 %v7251, %v7250
    %v7279 = vpack.c.b16 %v7253, %v7252
    %v7280 = vpack.c.b16 %v7255, %v7254
    %v7281 = vpack.c.b16 %v7257, %v7256
    %v7282 = vpack.c.b16 %v7259, %v7258
    %v7283 = vpack.c.b16 %v7261, %v7260
    %v7284 = vpack.c.b16 %v7263, %v7262
    %v7285 = vpack.c.b16 %v7265, %v7264
    %v7286 = vpack.c.b16 %v7267, %v7266
    %v7287 = vpack.c.b16 %v7269, %v7268
    %v7288 = vpack.c.b16 %v7271, %v7270
    %v7289 = vpack.c.b16 %v7273, %v7272
    %7306 = vmatprep.subr.bf16.mxu0 0
    %7307 = vmatpush1.bf16.msra.mxu0 %v7281
    %7308 = vmatprep.subr.bf16.mxu0 0
    %7309 = vmatpush1.bf16.msra.mxu0 %v7280
    %7310 = vmatprep.subr.bf16.mxu0 0
    %7311 = vmatpush1.bf16.msra.mxu0 %v7279
    %7312 = vmatprep.subr.bf16.mxu0 0
    %7313 = vmatpush1.bf16.msra.mxu0 %v7278
    %7314 = vmatprep.subr.bf16.mxu0 0
    %7315 = vmatpush1.bf16.msra.mxu0 %v7277
    %7316 = vmatprep.subr.bf16.mxu0 0
    %7317 = vmatpush1.bf16.msra.mxu0 %v7276
    %7318 = vmatprep.subr.bf16.mxu0 0
    %7319 = vmatpush1.bf16.msra.mxu0 %v7275
    %7320 = vmatprep.subr.bf16.mxu0 0
    %7321 = vmatpush1.bf16.msra.mxu0 %v7274
    %7322 = vmatprep.subr.bf16.mxu0 0
    %7323 = vmatpush2.bf16.msra.mxu0 %v7289
    %7324 = vmatprep.subr.bf16.mxu0 0
    %7325 = vmatpush2.bf16.msra.mxu0 %v7288
    %7326 = vmatprep.subr.bf16.mxu0 0
    %7327 = vmatpush2.bf16.msra.mxu0 %v7287
    %7328 = vmatprep.subr.bf16.mxu0 0
    %7329 = vmatpush2.bf16.msra.mxu0 %v7286
    %7330 = vmatprep.subr.bf16.mxu0 0
    %7331 = vmatpush2.bf16.msra.mxu0 %v7285
    %7332 = vmatprep.subr.bf16.mxu0 0
    %7333 = vmatpush2.bf16.msra.mxu0 %v7284
    %7334 = vmatprep.subr.bf16.mxu0 0
    %7335 = vmatpush2.bf16.msra.mxu0 %v7283
    %7336 = vmatprep.subr.bf16.mxu0 0
    %7337 = vmatpush2.bf16.msra.mxu0 %v7282
    %7338 = vmatprep.mubr.bf16.mxu0 %v7177
    %7339 = vmatmul.mubr.bf16.gmra.mxu0 %v7176
    %v7340 = vpop.f32.mrf.mxu0
    %v7341 = vadd.f32 0.0, %v7340
    %v7342 = vpop.f32.mrf.mxu0
    %v7343 = vpop.f32.mrf.mxu0
    %v7344 = vadd.f32 0.0, %v7343
    %v7345 = vpop.f32.mrf.mxu0
    %7346 = vdwg.mxu0
    %v7347 = vadd.f32 %v7091, %v7341
    %v7348 = vadd.f32 %v7092, %v7344
    %v7349 = vadd.f32 %v5288, %v7347
    %v7350 = vadd.f32 %v5289, %v7348
    %v7351 = vsel %vm45, %v7349, 0.0
    %7352 = vadd.xlane.f32.xlu0 %v7351
    %v7353 = vpop.xlane.xlu0 %7352
    %v7354 = vsel %vm45, %v7350, 0.0
    %7355 = vadd.xlane.f32.xlu0 %v7354
    %v7356 = vpop.xlane.xlu0 %7355
    %v7357 = vmul.f32 %v7353, %v1583
    %v7358 = vmul.f32 %v7356, %v1583
    %v7359 = vsub.f32 %v7349, %v7357
    %v7360 = vsub.f32 %v7350, %v7358
    %v7361 = vmul.f32 %v7359, %v7359
    %v7362 = vmul.f32 %v7360, %v7360
    %v7363 = vsel %vm45, %v7361, 0.0
    %7364 = vadd.xlane.f32.xlu0 %v7363
    %v7365 = vpop.xlane.xlu0 %7364
    %v7366 = vsel %vm45, %v7362, 0.0
    %7367 = vadd.xlane.f32.xlu0 %v7366
    %v7368 = vpop.xlane.xlu0 %7367
    %v7369 = vmul.f32 %v7365, %v1583
    %v7370 = vmul.f32 %v7368, %v1583
    %v7371 = vadd.f32 %v7369, 1e-05
    %v7372 = vadd.f32 %v7370, 1e-05
    %v7373 = vrsqrt.pop %v7371
    %v7374 = vrsqrt.pop %v7372
    %v7375 = vmul.f32 %v7359, %v7373
    %v7376 = vmul.f32 %v7360, %v7374
    %v7377 = vlaneseq
    %v7378 = vshrl.u32 %v7377, 7
    %v7379 = vsub.s32 5, %v7378
    %v7380 = vrot.slane %v3713, %v7379
    %v7381 = vmul.f32 %v7375, %v7380
    %v7382 = vmul.f32 %v7376, %v7380
    %v7383 = vlaneseq
    %v7384 = vshrl.u32 %v7383, 7
    %v7385 = vsub.s32 6, %v7384
    %v7386 = vrot.slane %v3713, %v7385
    %v7387 = vadd.f32 %v7381, %v7386
    %v7388 = vadd.f32 %v7382, %v7386
    %v7390 = vrot.slane %v7387, 7
    %v7393 = vrot.slane %v7388, 6
    %vm7395 = vcmask 1040384
    %v7396 = vsel %vm7395, %v7390, %v7393
    %v7397 = vld [vmem:[%s7] sm:$0xff]
    %v7398 = vld [vmem:[%s7 + $0x8] sm:$0xff]
    %v7399 = vld [vmem:[%s7 + $0x10] sm:$0xff]
    %v7400 = vld [vmem:[%s7 + $0x18] sm:$0xff]
    %v7401 = vld [vmem:[%s8] sm:$0x1]
    %v7403 = vlaneseq
    %v7404 = vshrl.u32 %v7403, 7
    %v7405 = vsub.s32 0, %v7404
    %v7406 = vrot.slane %v7401, %v7405
    %v7409 = vsel %vm45, %v7396, 0
    %7411 = vmatprep.subr.mxu0 0.0
    %7412 = vmatpush1.msra.mxu0 0.0
    %7413 = vmatprep.subr.mxu0 0.0
    %7414 = vmatpush1.msra.mxu0 0.0
    %7415 = vmatprep.subr.mxu0 0.0
    %7416 = vmatpush1.msra.mxu0 0.0
    %7417 = vmatprep.subr.mxu0 0.0
    %7418 = vmatpush1.msra.mxu0 0.0
    %7419 = vmatprep.subr.mxu0 0.0
    %7420 = vmatpush1.msra.mxu0 0.0
    %7421 = vmatprep.subr.mxu0 0.0
    %7422 = vmatpush1.msra.mxu0 0.0
    %7423 = vmatprep.subr.mxu0 0.0
    %7424 = vmatpush1.msra.mxu0 0.0
    %7425 = vmatprep.subr.mxu0 0.0
    %7426 = vmatpush1.msra.mxu0 0.0
    %7427 = vmatprep.subr.mxu0 0.0
    %7428 = vmatpush1.msra.mxu0 0.0
    %7429 = vmatprep.subr.mxu0 0.0
    %7430 = vmatpush1.msra.mxu0 0.0
    %7431 = vmatprep.subr.mxu0 0.0
    %7432 = vmatpush1.msra.mxu0 0.0
    %7433 = vmatprep.subr.mxu0 0.0
    %7434 = vmatpush1.msra.mxu0 0.0
    %7435 = vmatprep.subr.mxu0 0.0
    %7436 = vmatpush1.msra.mxu0 %v7400
    %7437 = vmatprep.subr.mxu0 0.0
    %7438 = vmatpush1.msra.mxu0 %v7399
    %7439 = vmatprep.subr.mxu0 0.0
    %7440 = vmatpush1.msra.mxu0 %v7398
    %7441 = vmatprep.subr.mxu0 0.0
    %7442 = vmatpush1.msra.mxu0 %v7397
    %7443 = vmatprep.subr.mxu0 0.0
    %7444 = vmatpush2.msra.mxu0 0.0
    %7445 = vmatprep.subr.mxu0 0.0
    %7446 = vmatpush2.msra.mxu0 0.0
    %7447 = vmatprep.subr.mxu0 0.0
    %7448 = vmatpush2.msra.mxu0 0.0
    %7449 = vmatprep.subr.mxu0 0.0
    %7450 = vmatpush2.msra.mxu0 0.0
    %7451 = vmatprep.subr.mxu0 0.0
    %7452 = vmatpush2.msra.mxu0 0.0
    %7453 = vmatprep.subr.mxu0 0.0
    %7454 = vmatpush2.msra.mxu0 0.0
    %7455 = vmatprep.subr.mxu0 0.0
    %7456 = vmatpush2.msra.mxu0 0.0
    %7457 = vmatprep.subr.mxu0 0.0
    %7458 = vmatpush2.msra.mxu0 0.0
    %7459 = vmatprep.subr.mxu0 0.0
    %7460 = vmatpush2.msra.mxu0 0.0
    %7461 = vmatprep.subr.mxu0 0.0
    %7462 = vmatpush2.msra.mxu0 0.0
    %7463 = vmatprep.subr.mxu0 0.0
    %7464 = vmatpush2.msra.mxu0 0.0
    %7465 = vmatprep.subr.mxu0 0.0
    %7466 = vmatpush2.msra.mxu0 0.0
    %7467 = vmatprep.subr.mxu0 0.0
    %7468 = vmatpush2.msra.mxu0 0.0
    %7469 = vmatprep.subr.mxu0 0.0
    %7470 = vmatpush2.msra.mxu0 0.0
    %7471 = vmatprep.subr.mxu0 0.0
    %7472 = vmatpush2.msra.mxu0 0.0
    %7473 = vmatprep.subr.mxu0 0.0
    %7474 = vmatpush2.msra.mxu0 0.0
    %7475 = vmatprep.mubr.f32.mxu0 0.0
    %7476 = vmatmul.mubr.f32.gmra.mxu0 %v7409
    %v7477 = vpop.f32.mrf.mxu0
    %v7478 = vadd.f32 %v7406, %v7477
    %v7479 = vpop.f32.mrf.mxu0
    %7480 = vdwg.mxu0
    %vm7481 = vcmask 123904
    %7482 = vst.msk [vmem:[#allocation2] sm:$0x3] %vm7481, %v7478
    // Predicated region
    $region38: #{tpu_custom_call.1} parent=1 // pred_check
      _
    $region39: #{tpu_custom_call.1} parent=1 // pred_check_branch
      %7484 = sbr.rel (0) target = $region41
    $region40: #{tpu_custom_call.1} parent=1 // pred_region
      %s7486 = ssub.s32 32, 32
      %7487 = vsyncadd [#allocation3], %s7486
      %s7489 = sshll.u32 [#allocation2], 4
      %s7490 = int_to_ptr.vmem [resolvable:$true] %s7489
      %7492 = dma.vmem_to_hbm [thread:$0]  %s7490, 32, %s9, [#allocation3]
    $region41: #{tpu_custom_call.1} parent=1 // pred_fallthru
      _
    // Predicated region
    $region42: #{tpu_custom_call.1} parent=1 // pred_check
      _
    $region43: #{tpu_custom_call.1} parent=1 // pred_check_branch
      %7494 = sbr.rel (0) target = $region45
    $region44: #{tpu_custom_call.1} parent=1 // pred_region
      %7495 = dma.done [#allocation3], 32
    $region45: #{tpu_custom_call.1} parent=1 // pred_fallthru
      _
    %7496 = vsyncpa [#allocation3], 1

</llo_original>
